<compile_context>
chip_gen: v7x
topology: tpu7x:2x2x1
jax: 0.10.0
libtpu: 0.0.40
codegen_flags: <defaults>
</compile_context>

<pallas_src>
import jax
import jax.numpy as jnp
from jax.experimental import pallas as pl
from jax.experimental.pallas import tpu as pltpu


def _ftb_kernel(x_ref, w2_ref, wfc_ref, bfc_ref, b2_ref,
                w1_ref, b1_ref, w3a_ref, w3b_ref, b3_ref,
                out_ref, pad_ref, str_ref):
    """Fused FTB forward for one batch element (grid=(B,)).

    x_ref   : (1, C*F, T)       input, x.reshape(B, C*F, T) view (VMEM); row c*F+f == x[c,f,:]
    w2_ref  : (K, C, Cr*F)      folded Conv1d weights, one (C, Cr*F) matrix per tap (VMEM)
    wfc_ref : (F, F)            FreqFC weight (VMEM)
    bfc_ref : (F, 1)            FreqFC bias (VMEM)
    b2_ref  : (C, 1)            folded Conv1d + BN1d bias (VMEM)
    w1_ref  : (Cr, C)           folded 1x1 conv1 weights (SMEM scalars)
    b1_ref  : (Cr,)             folded conv1 bias (SMEM)
    w3a_ref : (C, C)            folded out_conv weights applied to Str (SMEM)
    w3b_ref : (C, C)            folded out_conv weights applied to x   (SMEM)
    b3_ref  : (C,)              folded out_conv bias (SMEM)
    out_ref : (1, C*F, T)       output (VMEM), reshaped back to (B, C, F, T) by the wrapper
    pad_ref : (Cr*F, T+2*pad)   VMEM scratch: time-zero-padded Conv1d input
    str_ref : (C*F, T)          VMEM scratch: FreqFC output, staged per channel
    """
    CF = x_ref.shape[1]
    T = x_ref.shape[2]
    C = b3_ref.shape[0]
    F = CF // C
    Cr = w1_ref.shape[0]
    K = w2_ref.shape[0]
    pad = (K - 1) // 2
    CrF = Cr * F

    # ---- Conv1d pad strips only (interior is fully overwritten every step) --
    pad_ref[:, :pad] = jnp.zeros((CrF, pad), jnp.float32)
    pad_ref[:, pad + T:] = jnp.zeros((CrF, pad), jnp.float32)

    # ---- conv1: 1x1 Conv2d (C -> Cr) + folded BN + ReLU ---------------------
    # Tiny channel mix (Cr*C = 45 MACs over lane-dense (F, T) slabs) on the VPU;
    # each x slab is loaded once (c-outer) and the result is written straight into
    # the zero-padded Conv1d input buffer (== Sa_tmp.view(Cr*F, T)).
    accs = [jnp.zeros((F, T), jnp.float32) for _ in range(Cr)]
    for c in range(C):
        xc = x_ref[0, c * F:(c + 1) * F, :]
        for r in range(Cr):
            accs[r] = accs[r] + w1_ref[r, c] * xc
    for r in range(Cr):
        pad_ref[r * F:(r + 1) * F, pad:pad + T] = jnp.maximum(accs[r] + b1_ref[r], 0.0)

    # ---- conv2: Conv1d(Cr*F -> C, kernel=K, padding=pad) + BN1d + ReLU ------
    # One lane-dense (C, Cr*F) @ (Cr*F, T) MXU matmul per tap on the padded buffer.
    acc = jnp.zeros((C, T), jnp.float32)
    for k in range(K):
        acc = acc + jnp.dot(w2_ref[k], pad_ref[:, k:k + T],
                            preferred_element_type=jnp.float32)
    sa = jnp.maximum(acc + b2_ref[...], 0.0)              # (C, T) attention over time

    # ---- T-F attention multiply + FreqFC (Linear over the frequency axis) ---
    # Per channel: (F, F) @ (F, T>=128) MXU matmul; results staged in VMEM scratch
    # (no long-lived per-channel register slabs).
    wfc = wfc_ref[...]
    bfc = bfc_ref[...]                                    # (F, 1)
    for c in range(C):
        s_c = x_ref[0, c * F:(c + 1) * F, :] * sa[c:c + 1, :]   # broadcast over freq rows
        str_ref[c * F:(c + 1) * F, :] = (
            jnp.dot(wfc, s_c, preferred_element_type=jnp.float32) + bfc)

    # ---- out_conv: 1x1 Conv2d on concat([Str, x]) + folded BN + ReLU --------
    # == W3a @ Str + W3b @ x ; concat never materialized.  2*C*C = 162 scalar MACs
    # over lane-dense slabs, reloading slabs from VMEM so the live vreg set stays small.
    for o in range(C):
        acc_o = jnp.zeros((F, T), jnp.float32)
        for i in range(C):
            acc_o = (acc_o
                     + w3a_ref[o, i] * str_ref[i * F:(i + 1) * F, :]
                     + w3b_ref[o, i] * x_ref[0, i * F:(i + 1) * F, :])
        out_ref[0, o * F:(o + 1) * F, :] = jnp.maximum(
            acc_o + b3_ref[o], 0.0).astype(out_ref.dtype)


@jax.jit
def ftb_forward(x, w1e, b1e, w2e, b2e, wfc, bfc, w3a, w3b, b3e):
    """x: (B, C, F, T) float32 -> (B, C, F, T), matching FTB.forward (eval-mode BN)."""
    B, C, F, T = x.shape
    K, _, CrF = w2e.shape
    Cr = w1e.shape[0]
    pad = (K - 1) // 2
    CF = C * F

    # Free, contiguous reshape: (B, C, F, T) -> (B, C*F, T). Row c*F+f is x[:, c, f, :].
    x_cf = x.reshape(B, CF, T)

    flops = 2 * B * T * (Cr * C * F + K * C * CrF + C * F * F + 2 * C * C * F)
    bytes_accessed = 4 * (x.size + x.size + w2e.size + wfc.size)
    cost = pl.CostEstimate(flops=int(flops), transcendentals=0,
                           bytes_accessed=int(bytes_accessed))

    grid_spec = pltpu.PrefetchScalarGridSpec(
        num_scalar_prefetch=0,
        grid=(B,),                                         # one batch item per grid step
        in_specs=[
            pl.BlockSpec((1, CF, T), lambda b: (b, 0, 0)),          # x (C*F, T) view
            pl.BlockSpec((K, C, CrF), lambda b: (0, 0, 0)),         # w2e (per-tap)
            pl.BlockSpec((F, F), lambda b: (0, 0)),                 # wfc
            pl.BlockSpec((F, 1), lambda b: (0, 0)),                 # bfc
            pl.BlockSpec((C, 1), lambda b: (0, 0)),                 # b2e
            pl.BlockSpec(memory_space=pltpu.MemorySpace.SMEM),      # w1e (Cr, C)
            pl.BlockSpec(memory_space=pltpu.MemorySpace.SMEM),      # b1e (Cr,)
            pl.BlockSpec(memory_space=pltpu.MemorySpace.SMEM),      # w3a (C, C)
            pl.BlockSpec(memory_space=pltpu.MemorySpace.SMEM),      # w3b (C, C)
            pl.BlockSpec(memory_space=pltpu.MemorySpace.SMEM),      # b3e (C,)
        ],
        out_specs=pl.BlockSpec((1, CF, T), lambda b: (b, 0, 0)),
        scratch_shapes=[
            pltpu.VMEM((CrF, T + 2 * pad), jnp.float32),            # padded Conv1d input
            pltpu.VMEM((CF, T), jnp.float32),                       # staged FreqFC output
        ],
    )

    out_cf = pl.pallas_call(
        _ftb_kernel,
        out_shape=jax.ShapeDtypeStruct((B, CF, T), x.dtype),
        grid_spec=grid_spec,
        compiler_params=pltpu.CompilerParams(
            dimension_semantics=("parallel",)),
        cost_estimate=cost,
    )(x_cf, w2e, wfc, bfc, b2e, w1e, b1e, w3a, w3b, b3e)

    return out_cf.reshape(B, C, F, T)                      # free reshape back


# ---------------- pure-JAX reference (mirrors the PyTorch forward) -----------

def ftb_reference(x, p, eps=1e-5):
    B, C, F, T = x.shape

    def bn(y, g, bt, m, v, axis):
        shape = [1] * y.ndim
        shape[axis] = -1
        rs = lambda a: a.reshape(shape)
        return rs(g) * (y - rs(m)) / jnp.sqrt(rs(v) + eps) + rs(bt)

    # conv1 (1x1) + BN2d + ReLU
    y = jnp.einsum('rc,bcft->brft', p['w1'], x) + p['cb1'][None, :, None, None]
    y = jnp.maximum(bn(y, p['g1'], p['bt1'], p['m1'], p['v1'], 1), 0.0)   # (B, Cr, F, T)
    Cr = y.shape[1]

    # view + Conv1d(k, padding) + BN1d + ReLU
    K = p['w2'].shape[-1]
    pad = (K - 1) // 2
    yf = y.reshape(B, Cr * F, T)
    yp = jnp.pad(yf, ((0, 0), (0, 0), (pad, pad)))
    sa = jnp.zeros((B, C, T), x.dtype)
    for k in range(K):
        sa = sa + jnp.einsum('oc,bct->bot', p['w2'][:, :, k], yp[:, :, k:k + T])
    sa = sa + p['cb2'][None, :, None]
    sa = jnp.maximum(bn(sa, p['g2'], p['bt2'], p['m2'], p['v2'], 1), 0.0)  # (B, C, T)

    # T-F attention + FreqFC over the frequency axis
    s = x * sa[:, :, None, :]
    s_tr = jnp.einsum('gf,bcft->bcgt', p['wfc'], s) + p['bfc'][None, None, :, None]

    # out_conv (1x1 on channel concat) + BN2d + ReLU
    cat = jnp.concatenate([s_tr, x], axis=1)
    o = jnp.einsum('oc,bcft->boft', p['w3'], cat) + p['cb3'][None, :, None, None]
    return jnp.maximum(bn(o, p['g3'], p['bt3'], p['m3'], p['v3'], 1), 0.0)


# ------------------------------ main -----------------------------------------

if __name__ == "__main__":
    # Shapes consistent with FTB.forward: x is (batch, in_channel, fre_dim, time).
    # T is chosen >= 128 so the lane (time) axis is dense per the TPU vreg layout.
    B, C, Cr, F, T, K = 2, 9, 5, 32, 128, 9
    eps = 1e-5
    dtype = jnp.float32

    keys = jax.random.split(jax.random.PRNGKey(0), 21)

    x = jax.random.normal(keys[0], (B, C, F, T), dtype)

    # conv1: Conv2d(C -> Cr, 1x1) + BatchNorm2d(Cr)
    w1 = jax.random.normal(keys[1], (Cr, C), dtype) * 0.3
    cb1 = jax.random.normal(keys[2], (Cr,), dtype) * 0.1
    g1 = jax.random.uniform(keys[3], (Cr,), dtype, 0.5, 1.5)
    bt1 = jax.random.normal(keys[4], (Cr,), dtype) * 0.1
    m1 = jax.random.normal(keys[5], (Cr,), dtype) * 0.1
    v1 = jax.random.uniform(keys[6], (Cr,), dtype, 0.5, 1.5)

    # conv2: Conv1d(Cr*F -> C, kernel=9, padding=4) + BatchNorm1d(C)
    w2 = jax.random.normal(keys[7], (C, Cr * F, K), dtype) * (Cr * F * K) ** -0.5
    cb2 = jax.random.normal(keys[8], (C,), dtype) * 0.1
    g2 = jax.random.uniform(keys[9], (C,), dtype, 0.5, 1.5)
    bt2 = jax.random.normal(keys[10], (C,), dtype) * 0.1
    m2 = jax.random.normal(keys[11], (C,), dtype) * 0.1
    v2 = jax.random.uniform(keys[12], (C,), dtype, 0.5, 1.5)

    # FreqFC: Linear(F, F)
    wfc = jax.random.normal(keys[13], (F, F), dtype) * F ** -0.5
    bfc = jax.random.normal(keys[14], (F,), dtype) * 0.1

    # out_conv: Conv2d(2C -> C, 1x1) + BatchNorm2d(C)
    w3 = jax.random.normal(keys[15], (C, 2 * C), dtype) * 0.2
    cb3 = jax.random.normal(keys[16], (C,), dtype) * 0.1
    g3 = jax.random.uniform(keys[17], (C,), dtype, 0.5, 1.5)
    bt3 = jax.random.normal(keys[18], (C,), dtype) * 0.1
    m3 = jax.random.normal(keys[19], (C,), dtype) * 0.1
    v3 = jax.random.uniform(keys[20], (C,), dtype, 0.5, 1.5)

    # ---- fold eval-mode BatchNorm (+ conv bias) into the conv weights -------
    def fold(w, cb, g, bt, m, v):
        s = g / jnp.sqrt(v + eps)
        return w * s.reshape((-1,) + (1,) * (w.ndim - 1)), (cb - m) * s + bt

    w1e, b1e = fold(w1, cb1, g1, bt1, m1, v1)                 # (Cr, C), (Cr,)
    w2f, b2f = fold(w2, cb2, g2, bt2, m2, v2)                 # (C, Cr*F, K), (C,)
    w2e = jnp.transpose(w2f, (2, 0, 1))                       # (K, C, Cr*F) per-tap
    b2e = b2f.reshape(C, 1)
    w3f, b3e = fold(w3, cb3, g3, bt3, m3, v3)                 # (C, 2C), (C,)
    w3a, w3b = w3f[:, :C], w3f[:, C:]
    bfc2 = bfc.reshape(F, 1)

    y = ftb_forward(x, w1e, b1e, w2e, b2e, wfc, bfc2, w3a, w3b, b3e)
    jax.block_until_ready(y)

    params = dict(w1=w1, cb1=cb1, g1=g1, bt1=bt1, m1=m1, v1=v1,
                  w2=w2, cb2=cb2, g2=g2, bt2=bt2, m2=m2, v2=v2,
                  wfc=wfc, bfc=bfc,
                  w3=w3, cb3=cb3, g3=g3, bt3=bt3, m3=m3, v3=v3)
    y_ref = ftb_reference(x, params, eps=eps)

    assert y.shape == (B, C, F, T), y.shape
    err = float(jnp.max(jnp.abs(y - y_ref)))
    assert err < 2e-3, f"mismatch vs reference, max abs err = {err}"

    print("KERNEL_OK")
</pallas_src>

<mosaic_0001>
module attributes {stable_mosaic.version = 11 : i64} {
  func.func @_ftb_kernel(%arg0: i32, %arg1: memref<1x288x128xf32, #tpu.memory_space<vmem>>, %arg2: memref<9x9x160xf32, #tpu.memory_space<vmem>>, %arg3: memref<32x32xf32, #tpu.memory_space<vmem>>, %arg4: memref<32x1xf32, #tpu.memory_space<vmem>>, %arg5: memref<9x1xf32, #tpu.memory_space<vmem>>, %arg6: memref<5x9xf32, #tpu.memory_space<smem>>, %arg7: memref<5xf32, #tpu.memory_space<smem>>, %arg8: memref<9x9xf32, #tpu.memory_space<smem>>, %arg9: memref<9x9xf32, #tpu.memory_space<smem>>, %arg10: memref<9xf32, #tpu.memory_space<smem>>, %arg11: memref<1x288x128xf32, #tpu.memory_space<vmem>>, %arg12: memref<160x136xf32, #tpu.memory_space<vmem>>, %arg13: memref<288x128xf32, #tpu.memory_space<vmem>>) attributes {dimension_semantics = [#tpu.dimension_semantics<parallel>], iteration_bounds = array<i64: 2>, scalar_prefetch = 0 : i64, scratch_operands = 2 : i64, tpu.core_type = #tpu.core_type<tc>, window_params = [{transform_indices = @transform_0, window_bounds = array<i64: 1, 288, 128>}, {pipeline_mode = #tpu.pipeline_mode<synchronous>, transform_indices = @transform_1, window_bounds = array<i64: 9, 9, 160>}, {pipeline_mode = #tpu.pipeline_mode<synchronous>, transform_indices = @transform_2, window_bounds = array<i64: 32, 32>}, {pipeline_mode = #tpu.pipeline_mode<synchronous>, transform_indices = @transform_3, window_bounds = array<i64: 32, 1>}, {pipeline_mode = #tpu.pipeline_mode<synchronous>, transform_indices = @transform_4, window_bounds = array<i64: 9, 1>}, {transform_indices = @transform_5, window_bounds = array<i64: 5, 9>}, {transform_indices = @transform_6, window_bounds = array<i64: 5>}, {transform_indices = @transform_7, window_bounds = array<i64: 9, 9>}, {transform_indices = @transform_8, window_bounds = array<i64: 9, 9>}, {transform_indices = @transform_9, window_bounds = array<i64: 9>}, {transform_indices = @transform_10, window_bounds = array<i64: 1, 288, 128>}]} {
    %cst = arith.constant 0.000000e+00 : f32
    %0 = vector.broadcast %cst : f32 to vector<160x4xf32>
    %c0 = arith.constant 0 : index
    %c0_0 = arith.constant 0 : index
    %1 = vector.load %arg12[%c0, %c0_0] : memref<160x136xf32, #tpu.memory_space<vmem>>, vector<160x4xf32>
    tpu.vector_store %arg12[%c0, %c0_0], %0 {strides = array<i32>} : memref<160x136xf32, #tpu.memory_space<vmem>>, vector<160x4xf32>,
    %cst_1 = arith.constant 0.000000e+00 : f32
    %2 = vector.broadcast %cst_1 : f32 to vector<160x4xf32>
    %c0_2 = arith.constant 0 : index
    %c132 = arith.constant 132 : index
    %3 = vector.load %arg12[%c0_2, %c132] : memref<160x136xf32, #tpu.memory_space<vmem>>, vector<160x4xf32>
    tpu.vector_store %arg12[%c0_2, %c132], %2 {strides = array<i32>} : memref<160x136xf32, #tpu.memory_space<vmem>>, vector<160x4xf32>,
    %cst_3 = arith.constant 0.000000e+00 : f32
    %4 = vector.broadcast %cst_3 : f32 to vector<32x128xf32>
    %cst_4 = arith.constant 0.000000e+00 : f32
    %5 = vector.broadcast %cst_4 : f32 to vector<32x128xf32>
    %cst_5 = arith.constant 0.000000e+00 : f32
    %6 = vector.broadcast %cst_5 : f32 to vector<32x128xf32>
    %cst_6 = arith.constant 0.000000e+00 : f32
    %7 = vector.broadcast %cst_6 : f32 to vector<32x128xf32>
    %cst_7 = arith.constant 0.000000e+00 : f32
    %8 = vector.broadcast %cst_7 : f32 to vector<32x128xf32>
    %c0_8 = arith.constant 0 : index
    %c0_9 = arith.constant 0 : index
    %c0_10 = arith.constant 0 : index
    %9 = vector.load %arg1[%c0_8, %c0_9, %c0_10] : memref<1x288x128xf32, #tpu.memory_space<vmem>>, vector<1x32x128xf32>
    %10 = vector.shape_cast %9 : vector<1x32x128xf32> to vector<32x128xf32>
    %c0_11 = arith.constant 0 : index
    %c0_12 = arith.constant 0 : index
    %11 = memref.load %arg6[%c0_11, %c0_12] : memref<5x9xf32, #tpu.memory_space<smem>>
    %12 = vector.broadcast %11 : f32 to vector<32x128xf32>
    %13 = arith.mulf %12, %10 : vector<32x128xf32>
    %14 = arith.addf %4, %13 : vector<32x128xf32>
    %c1 = arith.constant 1 : index
    %c0_13 = arith.constant 0 : index
    %15 = memref.load %arg6[%c1, %c0_13] : memref<5x9xf32, #tpu.memory_space<smem>>
    %16 = vector.broadcast %15 : f32 to vector<32x128xf32>
    %17 = arith.mulf %16, %10 : vector<32x128xf32>
    %18 = arith.addf %5, %17 : vector<32x128xf32>
    %c2 = arith.constant 2 : index
    %c0_14 = arith.constant 0 : index
    %19 = memref.load %arg6[%c2, %c0_14] : memref<5x9xf32, #tpu.memory_space<smem>>
    %20 = vector.broadcast %19 : f32 to vector<32x128xf32>
    %21 = arith.mulf %20, %10 : vector<32x128xf32>
    %22 = arith.addf %6, %21 : vector<32x128xf32>
    %c3 = arith.constant 3 : index
    %c0_15 = arith.constant 0 : index
    %23 = memref.load %arg6[%c3, %c0_15] : memref<5x9xf32, #tpu.memory_space<smem>>
    %24 = vector.broadcast %23 : f32 to vector<32x128xf32>
    %25 = arith.mulf %24, %10 : vector<32x128xf32>
    %26 = arith.addf %7, %25 : vector<32x128xf32>
    %c4 = arith.constant 4 : index
    %c0_16 = arith.constant 0 : index
    %27 = memref.load %arg6[%c4, %c0_16] : memref<5x9xf32, #tpu.memory_space<smem>>
    %28 = vector.broadcast %27 : f32 to vector<32x128xf32>
    %29 = arith.mulf %28, %10 : vector<32x128xf32>
    %30 = arith.addf %8, %29 : vector<32x128xf32>
    %c0_17 = arith.constant 0 : index
    %c32 = arith.constant 32 : index
    %c0_18 = arith.constant 0 : index
    %31 = vector.load %arg1[%c0_17, %c32, %c0_18] : memref<1x288x128xf32, #tpu.memory_space<vmem>>, vector<1x32x128xf32>
    %32 = vector.shape_cast %31 : vector<1x32x128xf32> to vector<32x128xf32>
    %c0_19 = arith.constant 0 : index
    %c1_20 = arith.constant 1 : index
    %33 = memref.load %arg6[%c0_19, %c1_20] : memref<5x9xf32, #tpu.memory_space<smem>>
    %34 = vector.broadcast %33 : f32 to vector<32x128xf32>
    %35 = arith.mulf %34, %32 : vector<32x128xf32>
    %36 = arith.addf %14, %35 : vector<32x128xf32>
    %c1_21 = arith.constant 1 : index
    %c1_22 = arith.constant 1 : index
    %37 = memref.load %arg6[%c1_21, %c1_22] : memref<5x9xf32, #tpu.memory_space<smem>>
    %38 = vector.broadcast %37 : f32 to vector<32x128xf32>
    %39 = arith.mulf %38, %32 : vector<32x128xf32>
    %40 = arith.addf %18, %39 : vector<32x128xf32>
    %c2_23 = arith.constant 2 : index
    %c1_24 = arith.constant 1 : index
    %41 = memref.load %arg6[%c2_23, %c1_24] : memref<5x9xf32, #tpu.memory_space<smem>>
    %42 = vector.broadcast %41 : f32 to vector<32x128xf32>
    %43 = arith.mulf %42, %32 : vector<32x128xf32>
    %44 = arith.addf %22, %43 : vector<32x128xf32>
    %c3_25 = arith.constant 3 : index
    %c1_26 = arith.constant 1 : index
    %45 = memref.load %arg6[%c3_25, %c1_26] : memref<5x9xf32, #tpu.memory_space<smem>>
    %46 = vector.broadcast %45 : f32 to vector<32x128xf32>
    %47 = arith.mulf %46, %32 : vector<32x128xf32>
    %48 = arith.addf %26, %47 : vector<32x128xf32>
    %c4_27 = arith.constant 4 : index
    %c1_28 = arith.constant 1 : index
    %49 = memref.load %arg6[%c4_27, %c1_28] : memref<5x9xf32, #tpu.memory_space<smem>>
    %50 = vector.broadcast %49 : f32 to vector<32x128xf32>
    %51 = arith.mulf %50, %32 : vector<32x128xf32>
    %52 = arith.addf %30, %51 : vector<32x128xf32>
    %c0_29 = arith.constant 0 : index
    %c64 = arith.constant 64 : index
    %c0_30 = arith.constant 0 : index
    %53 = vector.load %arg1[%c0_29, %c64, %c0_30] : memref<1x288x128xf32, #tpu.memory_space<vmem>>, vector<1x32x128xf32>
    %54 = vector.shape_cast %53 : vector<1x32x128xf32> to vector<32x128xf32>
    %c0_31 = arith.constant 0 : index
    %c2_32 = arith.constant 2 : index
    %55 = memref.load %arg6[%c0_31, %c2_32] : memref<5x9xf32, #tpu.memory_space<smem>>
    %56 = vector.broadcast %55 : f32 to vector<32x128xf32>
    %57 = arith.mulf %56, %54 : vector<32x128xf32>
    %58 = arith.addf %36, %57 : vector<32x128xf32>
    %c1_33 = arith.constant 1 : index
    %c2_34 = arith.constant 2 : index
    %59 = memref.load %arg6[%c1_33, %c2_34] : memref<5x9xf32, #tpu.memory_space<smem>>
    %60 = vector.broadcast %59 : f32 to vector<32x128xf32>
    %61 = arith.mulf %60, %54 : vector<32x128xf32>
    %62 = arith.addf %40, %61 : vector<32x128xf32>
    %c2_35 = arith.constant 2 : index
    %c2_36 = arith.constant 2 : index
    %63 = memref.load %arg6[%c2_35, %c2_36] : memref<5x9xf32, #tpu.memory_space<smem>>
    %64 = vector.broadcast %63 : f32 to vector<32x128xf32>
    %65 = arith.mulf %64, %54 : vector<32x128xf32>
    %66 = arith.addf %44, %65 : vector<32x128xf32>
    %c3_37 = arith.constant 3 : index
    %c2_38 = arith.constant 2 : index
    %67 = memref.load %arg6[%c3_37, %c2_38] : memref<5x9xf32, #tpu.memory_space<smem>>
    %68 = vector.broadcast %67 : f32 to vector<32x128xf32>
    %69 = arith.mulf %68, %54 : vector<32x128xf32>
    %70 = arith.addf %48, %69 : vector<32x128xf32>
    %c4_39 = arith.constant 4 : index
    %c2_40 = arith.constant 2 : index
    %71 = memref.load %arg6[%c4_39, %c2_40] : memref<5x9xf32, #tpu.memory_space<smem>>
    %72 = vector.broadcast %71 : f32 to vector<32x128xf32>
    %73 = arith.mulf %72, %54 : vector<32x128xf32>
    %74 = arith.addf %52, %73 : vector<32x128xf32>
    %c0_41 = arith.constant 0 : index
    %c96 = arith.constant 96 : index
    %c0_42 = arith.constant 0 : index
    %75 = vector.load %arg1[%c0_41, %c96, %c0_42] : memref<1x288x128xf32, #tpu.memory_space<vmem>>, vector<1x32x128xf32>
    %76 = vector.shape_cast %75 : vector<1x32x128xf32> to vector<32x128xf32>
    %c0_43 = arith.constant 0 : index
    %c3_44 = arith.constant 3 : index
    %77 = memref.load %arg6[%c0_43, %c3_44] : memref<5x9xf32, #tpu.memory_space<smem>>
    %78 = vector.broadcast %77 : f32 to vector<32x128xf32>
    %79 = arith.mulf %78, %76 : vector<32x128xf32>
    %80 = arith.addf %58, %79 : vector<32x128xf32>
    %c1_45 = arith.constant 1 : index
    %c3_46 = arith.constant 3 : index
    %81 = memref.load %arg6[%c1_45, %c3_46] : memref<5x9xf32, #tpu.memory_space<smem>>
    %82 = vector.broadcast %81 : f32 to vector<32x128xf32>
    %83 = arith.mulf %82, %76 : vector<32x128xf32>
    %84 = arith.addf %62, %83 : vector<32x128xf32>
    %c2_47 = arith.constant 2 : index
    %c3_48 = arith.constant 3 : index
    %85 = memref.load %arg6[%c2_47, %c3_48] : memref<5x9xf32, #tpu.memory_space<smem>>
    %86 = vector.broadcast %85 : f32 to vector<32x128xf32>
    %87 = arith.mulf %86, %76 : vector<32x128xf32>
    %88 = arith.addf %66, %87 : vector<32x128xf32>
    %c3_49 = arith.constant 3 : index
    %c3_50 = arith.constant 3 : index
    %89 = memref.load %arg6[%c3_49, %c3_50] : memref<5x9xf32, #tpu.memory_space<smem>>
    %90 = vector.broadcast %89 : f32 to vector<32x128xf32>
    %91 = arith.mulf %90, %76 : vector<32x128xf32>
    %92 = arith.addf %70, %91 : vector<32x128xf32>
    %c4_51 = arith.constant 4 : index
    %c3_52 = arith.constant 3 : index
    %93 = memref.load %arg6[%c4_51, %c3_52] : memref<5x9xf32, #tpu.memory_space<smem>>
    %94 = vector.broadcast %93 : f32 to vector<32x128xf32>
    %95 = arith.mulf %94, %76 : vector<32x128xf32>
    %96 = arith.addf %74, %95 : vector<32x128xf32>
    %c0_53 = arith.constant 0 : index
    %c128 = arith.constant 128 : index
    %c0_54 = arith.constant 0 : index
    %97 = vector.load %arg1[%c0_53, %c128, %c0_54] : memref<1x288x128xf32, #tpu.memory_space<vmem>>, vector<1x32x128xf32>
    %98 = vector.shape_cast %97 : vector<1x32x128xf32> to vector<32x128xf32>
    %c0_55 = arith.constant 0 : index
    %c4_56 = arith.constant 4 : index
    %99 = memref.load %arg6[%c0_55, %c4_56] : memref<5x9xf32, #tpu.memory_space<smem>>
    %100 = vector.broadcast %99 : f32 to vector<32x128xf32>
    %101 = arith.mulf %100, %98 : vector<32x128xf32>
    %102 = arith.addf %80, %101 : vector<32x128xf32>
    %c1_57 = arith.constant 1 : index
    %c4_58 = arith.constant 4 : index
    %103 = memref.load %arg6[%c1_57, %c4_58] : memref<5x9xf32, #tpu.memory_space<smem>>
    %104 = vector.broadcast %103 : f32 to vector<32x128xf32>
    %105 = arith.mulf %104, %98 : vector<32x128xf32>
    %106 = arith.addf %84, %105 : vector<32x128xf32>
    %c2_59 = arith.constant 2 : index
    %c4_60 = arith.constant 4 : index
    %107 = memref.load %arg6[%c2_59, %c4_60] : memref<5x9xf32, #tpu.memory_space<smem>>
    %108 = vector.broadcast %107 : f32 to vector<32x128xf32>
    %109 = arith.mulf %108, %98 : vector<32x128xf32>
    %110 = arith.addf %88, %109 : vector<32x128xf32>
    %c3_61 = arith.constant 3 : index
    %c4_62 = arith.constant 4 : index
    %111 = memref.load %arg6[%c3_61, %c4_62] : memref<5x9xf32, #tpu.memory_space<smem>>
    %112 = vector.broadcast %111 : f32 to vector<32x128xf32>
    %113 = arith.mulf %112, %98 : vector<32x128xf32>
    %114 = arith.addf %92, %113 : vector<32x128xf32>
    %c4_63 = arith.constant 4 : index
    %c4_64 = arith.constant 4 : index
    %115 = memref.load %arg6[%c4_63, %c4_64] : memref<5x9xf32, #tpu.memory_space<smem>>
    %116 = vector.broadcast %115 : f32 to vector<32x128xf32>
    %117 = arith.mulf %116, %98 : vector<32x128xf32>
    %118 = arith.addf %96, %117 : vector<32x128xf32>
    %c0_65 = arith.constant 0 : index
    %c160 = arith.constant 160 : index
    %c0_66 = arith.constant 0 : index
    %119 = vector.load %arg1[%c0_65, %c160, %c0_66] : memref<1x288x128xf32, #tpu.memory_space<vmem>>, vector<1x32x128xf32>
    %120 = vector.shape_cast %119 : vector<1x32x128xf32> to vector<32x128xf32>
    %c0_67 = arith.constant 0 : index
    %c5 = arith.constant 5 : index
    %121 = memref.load %arg6[%c0_67, %c5] : memref<5x9xf32, #tpu.memory_space<smem>>
    %122 = vector.broadcast %121 : f32 to vector<32x128xf32>
    %123 = arith.mulf %122, %120 : vector<32x128xf32>
    %124 = arith.addf %102, %123 : vector<32x128xf32>
    %c1_68 = arith.constant 1 : index
    %c5_69 = arith.constant 5 : index
    %125 = memref.load %arg6[%c1_68, %c5_69] : memref<5x9xf32, #tpu.memory_space<smem>>
    %126 = vector.broadcast %125 : f32 to vector<32x128xf32>
    %127 = arith.mulf %126, %120 : vector<32x128xf32>
    %128 = arith.addf %106, %127 : vector<32x128xf32>
    %c2_70 = arith.constant 2 : index
    %c5_71 = arith.constant 5 : index
    %129 = memref.load %arg6[%c2_70, %c5_71] : memref<5x9xf32, #tpu.memory_space<smem>>
    %130 = vector.broadcast %129 : f32 to vector<32x128xf32>
    %131 = arith.mulf %130, %120 : vector<32x128xf32>
    %132 = arith.addf %110, %131 : vector<32x128xf32>
    %c3_72 = arith.constant 3 : index
    %c5_73 = arith.constant 5 : index
    %133 = memref.load %arg6[%c3_72, %c5_73] : memref<5x9xf32, #tpu.memory_space<smem>>
    %134 = vector.broadcast %133 : f32 to vector<32x128xf32>
    %135 = arith.mulf %134, %120 : vector<32x128xf32>
    %136 = arith.addf %114, %135 : vector<32x128xf32>
    %c4_74 = arith.constant 4 : index
    %c5_75 = arith.constant 5 : index
    %137 = memref.load %arg6[%c4_74, %c5_75] : memref<5x9xf32, #tpu.memory_space<smem>>
    %138 = vector.broadcast %137 : f32 to vector<32x128xf32>
    %139 = arith.mulf %138, %120 : vector<32x128xf32>
    %140 = arith.addf %118, %139 : vector<32x128xf32>
    %c0_76 = arith.constant 0 : index
    %c192 = arith.constant 192 : index
    %c0_77 = arith.constant 0 : index
    %141 = vector.load %arg1[%c0_76, %c192, %c0_77] : memref<1x288x128xf32, #tpu.memory_space<vmem>>, vector<1x32x128xf32>
    %142 = vector.shape_cast %141 : vector<1x32x128xf32> to vector<32x128xf32>
    %c0_78 = arith.constant 0 : index
    %c6 = arith.constant 6 : index
    %143 = memref.load %arg6[%c0_78, %c6] : memref<5x9xf32, #tpu.memory_space<smem>>
    %144 = vector.broadcast %143 : f32 to vector<32x128xf32>
    %145 = arith.mulf %144, %142 : vector<32x128xf32>
    %146 = arith.addf %124, %145 : vector<32x128xf32>
    %c1_79 = arith.constant 1 : index
    %c6_80 = arith.constant 6 : index
    %147 = memref.load %arg6[%c1_79, %c6_80] : memref<5x9xf32, #tpu.memory_space<smem>>
    %148 = vector.broadcast %147 : f32 to vector<32x128xf32>
    %149 = arith.mulf %148, %142 : vector<32x128xf32>
    %150 = arith.addf %128, %149 : vector<32x128xf32>
    %c2_81 = arith.constant 2 : index
    %c6_82 = arith.constant 6 : index
    %151 = memref.load %arg6[%c2_81, %c6_82] : memref<5x9xf32, #tpu.memory_space<smem>>
    %152 = vector.broadcast %151 : f32 to vector<32x128xf32>
    %153 = arith.mulf %152, %142 : vector<32x128xf32>
    %154 = arith.addf %132, %153 : vector<32x128xf32>
    %c3_83 = arith.constant 3 : index
    %c6_84 = arith.constant 6 : index
    %155 = memref.load %arg6[%c3_83, %c6_84] : memref<5x9xf32, #tpu.memory_space<smem>>
    %156 = vector.broadcast %155 : f32 to vector<32x128xf32>
    %157 = arith.mulf %156, %142 : vector<32x128xf32>
    %158 = arith.addf %136, %157 : vector<32x128xf32>
    %c4_85 = arith.constant 4 : index
    %c6_86 = arith.constant 6 : index
    %159 = memref.load %arg6[%c4_85, %c6_86] : memref<5x9xf32, #tpu.memory_space<smem>>
    %160 = vector.broadcast %159 : f32 to vector<32x128xf32>
    %161 = arith.mulf %160, %142 : vector<32x128xf32>
    %162 = arith.addf %140, %161 : vector<32x128xf32>
    %c0_87 = arith.constant 0 : index
    %c224 = arith.constant 224 : index
    %c0_88 = arith.constant 0 : index
    %163 = vector.load %arg1[%c0_87, %c224, %c0_88] : memref<1x288x128xf32, #tpu.memory_space<vmem>>, vector<1x32x128xf32>
    %164 = vector.shape_cast %163 : vector<1x32x128xf32> to vector<32x128xf32>
    %c0_89 = arith.constant 0 : index
    %c7 = arith.constant 7 : index
    %165 = memref.load %arg6[%c0_89, %c7] : memref<5x9xf32, #tpu.memory_space<smem>>
    %166 = vector.broadcast %165 : f32 to vector<32x128xf32>
    %167 = arith.mulf %166, %164 : vector<32x128xf32>
    %168 = arith.addf %146, %167 : vector<32x128xf32>
    %c1_90 = arith.constant 1 : index
    %c7_91 = arith.constant 7 : index
    %169 = memref.load %arg6[%c1_90, %c7_91] : memref<5x9xf32, #tpu.memory_space<smem>>
    %170 = vector.broadcast %169 : f32 to vector<32x128xf32>
    %171 = arith.mulf %170, %164 : vector<32x128xf32>
    %172 = arith.addf %150, %171 : vector<32x128xf32>
    %c2_92 = arith.constant 2 : index
    %c7_93 = arith.constant 7 : index
    %173 = memref.load %arg6[%c2_92, %c7_93] : memref<5x9xf32, #tpu.memory_space<smem>>
    %174 = vector.broadcast %173 : f32 to vector<32x128xf32>
    %175 = arith.mulf %174, %164 : vector<32x128xf32>
    %176 = arith.addf %154, %175 : vector<32x128xf32>
    %c3_94 = arith.constant 3 : index
    %c7_95 = arith.constant 7 : index
    %177 = memref.load %arg6[%c3_94, %c7_95] : memref<5x9xf32, #tpu.memory_space<smem>>
    %178 = vector.broadcast %177 : f32 to vector<32x128xf32>
    %179 = arith.mulf %178, %164 : vector<32x128xf32>
    %180 = arith.addf %158, %179 : vector<32x128xf32>
    %c4_96 = arith.constant 4 : index
    %c7_97 = arith.constant 7 : index
    %181 = memref.load %arg6[%c4_96, %c7_97] : memref<5x9xf32, #tpu.memory_space<smem>>
    %182 = vector.broadcast %181 : f32 to vector<32x128xf32>
    %183 = arith.mulf %182, %164 : vector<32x128xf32>
    %184 = arith.addf %162, %183 : vector<32x128xf32>
    %c0_98 = arith.constant 0 : index
    %c256 = arith.constant 256 : index
    %c0_99 = arith.constant 0 : index
    %185 = vector.load %arg1[%c0_98, %c256, %c0_99] : memref<1x288x128xf32, #tpu.memory_space<vmem>>, vector<1x32x128xf32>
    %186 = vector.shape_cast %185 : vector<1x32x128xf32> to vector<32x128xf32>
    %c0_100 = arith.constant 0 : index
    %c8 = arith.constant 8 : index
    %187 = memref.load %arg6[%c0_100, %c8] : memref<5x9xf32, #tpu.memory_space<smem>>
    %188 = vector.broadcast %187 : f32 to vector<32x128xf32>
    %189 = arith.mulf %188, %186 : vector<32x128xf32>
    %190 = arith.addf %168, %189 : vector<32x128xf32>
    %c1_101 = arith.constant 1 : index
    %c8_102 = arith.constant 8 : index
    %191 = memref.load %arg6[%c1_101, %c8_102] : memref<5x9xf32, #tpu.memory_space<smem>>
    %192 = vector.broadcast %191 : f32 to vector<32x128xf32>
    %193 = arith.mulf %192, %186 : vector<32x128xf32>
    %194 = arith.addf %172, %193 : vector<32x128xf32>
    %c2_103 = arith.constant 2 : index
    %c8_104 = arith.constant 8 : index
    %195 = memref.load %arg6[%c2_103, %c8_104] : memref<5x9xf32, #tpu.memory_space<smem>>
    %196 = vector.broadcast %195 : f32 to vector<32x128xf32>
    %197 = arith.mulf %196, %186 : vector<32x128xf32>
    %198 = arith.addf %176, %197 : vector<32x128xf32>
    %c3_105 = arith.constant 3 : index
    %c8_106 = arith.constant 8 : index
    %199 = memref.load %arg6[%c3_105, %c8_106] : memref<5x9xf32, #tpu.memory_space<smem>>
    %200 = vector.broadcast %199 : f32 to vector<32x128xf32>
    %201 = arith.mulf %200, %186 : vector<32x128xf32>
    %202 = arith.addf %180, %201 : vector<32x128xf32>
    %c4_107 = arith.constant 4 : index
    %c8_108 = arith.constant 8 : index
    %203 = memref.load %arg6[%c4_107, %c8_108] : memref<5x9xf32, #tpu.memory_space<smem>>
    %204 = vector.broadcast %203 : f32 to vector<32x128xf32>
    %205 = arith.mulf %204, %186 : vector<32x128xf32>
    %206 = arith.addf %184, %205 : vector<32x128xf32>
    %c0_109 = arith.constant 0 : index
    %207 = memref.load %arg7[%c0_109] : memref<5xf32, #tpu.memory_space<smem>>
    %208 = vector.broadcast %207 : f32 to vector<32x128xf32>
    %209 = arith.addf %190, %208 : vector<32x128xf32>
    %cst_110 = arith.constant 0.000000e+00 : f32
    %210 = vector.broadcast %cst_110 : f32 to vector<32x128xf32>
    %211 = arith.maximumf %209, %210 : vector<32x128xf32>
    %c0_111 = arith.constant 0 : index
    %c4_112 = arith.constant 4 : index
    %212 = vector.load %arg12[%c0_111, %c4_112] : memref<160x136xf32, #tpu.memory_space<vmem>>, vector<32x128xf32>
    tpu.vector_store %arg12[%c0_111, %c4_112], %211 {strides = array<i32>} : memref<160x136xf32, #tpu.memory_space<vmem>>, vector<32x128xf32>,
    %c1_113 = arith.constant 1 : index
    %213 = memref.load %arg7[%c1_113] : memref<5xf32, #tpu.memory_space<smem>>
    %214 = vector.broadcast %213 : f32 to vector<32x128xf32>
    %215 = arith.addf %194, %214 : vector<32x128xf32>
    %cst_114 = arith.constant 0.000000e+00 : f32
    %216 = vector.broadcast %cst_114 : f32 to vector<32x128xf32>
    %217 = arith.maximumf %215, %216 : vector<32x128xf32>
    %c32_115 = arith.constant 32 : index
    %c4_116 = arith.constant 4 : index
    %218 = vector.load %arg12[%c32_115, %c4_116] : memref<160x136xf32, #tpu.memory_space<vmem>>, vector<32x128xf32>
    tpu.vector_store %arg12[%c32_115, %c4_116], %217 {strides = array<i32>} : memref<160x136xf32, #tpu.memory_space<vmem>>, vector<32x128xf32>,
    %c2_117 = arith.constant 2 : index
    %219 = memref.load %arg7[%c2_117] : memref<5xf32, #tpu.memory_space<smem>>
    %220 = vector.broadcast %219 : f32 to vector<32x128xf32>
    %221 = arith.addf %198, %220 : vector<32x128xf32>
    %cst_118 = arith.constant 0.000000e+00 : f32
    %222 = vector.broadcast %cst_118 : f32 to vector<32x128xf32>
    %223 = arith.maximumf %221, %222 : vector<32x128xf32>
    %c64_119 = arith.constant 64 : index
    %c4_120 = arith.constant 4 : index
    %224 = vector.load %arg12[%c64_119, %c4_120] : memref<160x136xf32, #tpu.memory_space<vmem>>, vector<32x128xf32>
    tpu.vector_store %arg12[%c64_119, %c4_120], %223 {strides = array<i32>} : memref<160x136xf32, #tpu.memory_space<vmem>>, vector<32x128xf32>,
    %c3_121 = arith.constant 3 : index
    %225 = memref.load %arg7[%c3_121] : memref<5xf32, #tpu.memory_space<smem>>
    %226 = vector.broadcast %225 : f32 to vector<32x128xf32>
    %227 = arith.addf %202, %226 : vector<32x128xf32>
    %cst_122 = arith.constant 0.000000e+00 : f32
    %228 = vector.broadcast %cst_122 : f32 to vector<32x128xf32>
    %229 = arith.maximumf %227, %228 : vector<32x128xf32>
    %c96_123 = arith.constant 96 : index
    %c4_124 = arith.constant 4 : index
    %230 = vector.load %arg12[%c96_123, %c4_124] : memref<160x136xf32, #tpu.memory_space<vmem>>, vector<32x128xf32>
    tpu.vector_store %arg12[%c96_123, %c4_124], %229 {strides = array<i32>} : memref<160x136xf32, #tpu.memory_space<vmem>>, vector<32x128xf32>,
    %c4_125 = arith.constant 4 : index
    %231 = memref.load %arg7[%c4_125] : memref<5xf32, #tpu.memory_space<smem>>
    %232 = vector.broadcast %231 : f32 to vector<32x128xf32>
    %233 = arith.addf %206, %232 : vector<32x128xf32>
    %cst_126 = arith.constant 0.000000e+00 : f32
    %234 = vector.broadcast %cst_126 : f32 to vector<32x128xf32>
    %235 = arith.maximumf %233, %234 : vector<32x128xf32>
    %c128_127 = arith.constant 128 : index
    %c4_128 = arith.constant 4 : index
    %236 = vector.load %arg12[%c128_127, %c4_128] : memref<160x136xf32, #tpu.memory_space<vmem>>, vector<32x128xf32>
    tpu.vector_store %arg12[%c128_127, %c4_128], %235 {strides = array<i32>} : memref<160x136xf32, #tpu.memory_space<vmem>>, vector<32x128xf32>,
    %cst_129 = arith.constant 0.000000e+00 : f32
    %237 = vector.broadcast %cst_129 : f32 to vector<9x128xf32>
    %c0_130 = arith.constant 0 : index
    %c0_131 = arith.constant 0 : index
    %c0_132 = arith.constant 0 : index
    %238 = vector.load %arg2[%c0_130, %c0_131, %c0_132] : memref<9x9x160xf32, #tpu.memory_space<vmem>>, vector<1x9x160xf32>
    %239 = vector.shape_cast %238 : vector<1x9x160xf32> to vector<9x160xf32>
    %c0_133 = arith.constant 0 : index
    %c0_134 = arith.constant 0 : index
    %240 = vector.load %arg12[%c0_133, %c0_134] : memref<160x136xf32, #tpu.memory_space<vmem>>, vector<160x128xf32>
    %cst_135 = arith.constant dense<0.000000e+00> : vector<9x128xf32>
    %241 = tpu.matmul %239, %240, %cst_135 {dimension_numbers = #tpu.dot_dimension_numbers<[1], [0], [0], [1], [0, 0, 1, 1], [], []>} : vector<9x160xf32>, vector<160x128xf32>, vector<9x128xf32> -> vector<9x128xf32>
    %242 = arith.addf %237, %241 : vector<9x128xf32>
    %c1_136 = arith.constant 1 : index
    %c0_137 = arith.constant 0 : index
    %c0_138 = arith.constant 0 : index
    %243 = vector.load %arg2[%c1_136, %c0_137, %c0_138] : memref<9x9x160xf32, #tpu.memory_space<vmem>>, vector<1x9x160xf32>
    %244 = vector.shape_cast %243 : vector<1x9x160xf32> to vector<9x160xf32>
    %c0_139 = arith.constant 0 : index
    %c1_140 = arith.constant 1 : index
    %245 = vector.load %arg12[%c0_139, %c1_140] : memref<160x136xf32, #tpu.memory_space<vmem>>, vector<160x128xf32>
    %cst_141 = arith.constant dense<0.000000e+00> : vector<9x128xf32>
    %246 = tpu.matmul %244, %245, %cst_141 {dimension_numbers = #tpu.dot_dimension_numbers<[1], [0], [0], [1], [0, 0, 1, 1], [], []>} : vector<9x160xf32>, vector<160x128xf32>, vector<9x128xf32> -> vector<9x128xf32>
    %247 = arith.addf %242, %246 : vector<9x128xf32>
    %c2_142 = arith.constant 2 : index
    %c0_143 = arith.constant 0 : index
    %c0_144 = arith.constant 0 : index
    %248 = vector.load %arg2[%c2_142, %c0_143, %c0_144] : memref<9x9x160xf32, #tpu.memory_space<vmem>>, vector<1x9x160xf32>
    %249 = vector.shape_cast %248 : vector<1x9x160xf32> to vector<9x160xf32>
    %c0_145 = arith.constant 0 : index
    %c2_146 = arith.constant 2 : index
    %250 = vector.load %arg12[%c0_145, %c2_146] : memref<160x136xf32, #tpu.memory_space<vmem>>, vector<160x128xf32>
    %cst_147 = arith.constant dense<0.000000e+00> : vector<9x128xf32>
    %251 = tpu.matmul %249, %250, %cst_147 {dimension_numbers = #tpu.dot_dimension_numbers<[1], [0], [0], [1], [0, 0, 1, 1], [], []>} : vector<9x160xf32>, vector<160x128xf32>, vector<9x128xf32> -> vector<9x128xf32>
    %252 = arith.addf %247, %251 : vector<9x128xf32>
    %c3_148 = arith.constant 3 : index
    %c0_149 = arith.constant 0 : index
    %c0_150 = arith.constant 0 : index
    %253 = vector.load %arg2[%c3_148, %c0_149, %c0_150] : memref<9x9x160xf32, #tpu.memory_space<vmem>>, vector<1x9x160xf32>
    %254 = vector.shape_cast %253 : vector<1x9x160xf32> to vector<9x160xf32>
    %c0_151 = arith.constant 0 : index
    %c3_152 = arith.constant 3 : index
    %255 = vector.load %arg12[%c0_151, %c3_152] : memref<160x136xf32, #tpu.memory_space<vmem>>, vector<160x128xf32>
    %cst_153 = arith.constant dense<0.000000e+00> : vector<9x128xf32>
    %256 = tpu.matmul %254, %255, %cst_153 {dimension_numbers = #tpu.dot_dimension_numbers<[1], [0], [0], [1], [0, 0, 1, 1], [], []>} : vector<9x160xf32>, vector<160x128xf32>, vector<9x128xf32> -> vector<9x128xf32>
    %257 = arith.addf %252, %256 : vector<9x128xf32>
    %c4_154 = arith.constant 4 : index
    %c0_155 = arith.constant 0 : index
    %c0_156 = arith.constant 0 : index
    %258 = vector.load %arg2[%c4_154, %c0_155, %c0_156] : memref<9x9x160xf32, #tpu.memory_space<vmem>>, vector<1x9x160xf32>
    %259 = vector.shape_cast %258 : vector<1x9x160xf32> to vector<9x160xf32>
    %c0_157 = arith.constant 0 : index
    %c4_158 = arith.constant 4 : index
    %260 = vector.load %arg12[%c0_157, %c4_158] : memref<160x136xf32, #tpu.memory_space<vmem>>, vector<160x128xf32>
    %cst_159 = arith.constant dense<0.000000e+00> : vector<9x128xf32>
    %261 = tpu.matmul %259, %260, %cst_159 {dimension_numbers = #tpu.dot_dimension_numbers<[1], [0], [0], [1], [0, 0, 1, 1], [], []>} : vector<9x160xf32>, vector<160x128xf32>, vector<9x128xf32> -> vector<9x128xf32>
    %262 = arith.addf %257, %261 : vector<9x128xf32>
    %c5_160 = arith.constant 5 : index
    %c0_161 = arith.constant 0 : index
    %c0_162 = arith.constant 0 : index
    %263 = vector.load %arg2[%c5_160, %c0_161, %c0_162] : memref<9x9x160xf32, #tpu.memory_space<vmem>>, vector<1x9x160xf32>
    %264 = vector.shape_cast %263 : vector<1x9x160xf32> to vector<9x160xf32>
    %c0_163 = arith.constant 0 : index
    %c5_164 = arith.constant 5 : index
    %265 = vector.load %arg12[%c0_163, %c5_164] : memref<160x136xf32, #tpu.memory_space<vmem>>, vector<160x128xf32>
    %cst_165 = arith.constant dense<0.000000e+00> : vector<9x128xf32>
    %266 = tpu.matmul %264, %265, %cst_165 {dimension_numbers = #tpu.dot_dimension_numbers<[1], [0], [0], [1], [0, 0, 1, 1], [], []>} : vector<9x160xf32>, vector<160x128xf32>, vector<9x128xf32> -> vector<9x128xf32>
    %267 = arith.addf %262, %266 : vector<9x128xf32>
    %c6_166 = arith.constant 6 : index
    %c0_167 = arith.constant 0 : index
    %c0_168 = arith.constant 0 : index
    %268 = vector.load %arg2[%c6_166, %c0_167, %c0_168] : memref<9x9x160xf32, #tpu.memory_space<vmem>>, vector<1x9x160xf32>
    %269 = vector.shape_cast %268 : vector<1x9x160xf32> to vector<9x160xf32>
    %c0_169 = arith.constant 0 : index
    %c6_170 = arith.constant 6 : index
    %270 = vector.load %arg12[%c0_169, %c6_170] : memref<160x136xf32, #tpu.memory_space<vmem>>, vector<160x128xf32>
    %cst_171 = arith.constant dense<0.000000e+00> : vector<9x128xf32>
    %271 = tpu.matmul %269, %270, %cst_171 {dimension_numbers = #tpu.dot_dimension_numbers<[1], [0], [0], [1], [0, 0, 1, 1], [], []>} : vector<9x160xf32>, vector<160x128xf32>, vector<9x128xf32> -> vector<9x128xf32>
    %272 = arith.addf %267, %271 : vector<9x128xf32>
    %c7_172 = arith.constant 7 : index
    %c0_173 = arith.constant 0 : index
    %c0_174 = arith.constant 0 : index
    %273 = vector.load %arg2[%c7_172, %c0_173, %c0_174] : memref<9x9x160xf32, #tpu.memory_space<vmem>>, vector<1x9x160xf32>
    %274 = vector.shape_cast %273 : vector<1x9x160xf32> to vector<9x160xf32>
    %c0_175 = arith.constant 0 : index
    %c7_176 = arith.constant 7 : index
    %275 = vector.load %arg12[%c0_175, %c7_176] : memref<160x136xf32, #tpu.memory_space<vmem>>, vector<160x128xf32>
    %cst_177 = arith.constant dense<0.000000e+00> : vector<9x128xf32>
    %276 = tpu.matmul %274, %275, %cst_177 {dimension_numbers = #tpu.dot_dimension_numbers<[1], [0], [0], [1], [0, 0, 1, 1], [], []>} : vector<9x160xf32>, vector<160x128xf32>, vector<9x128xf32> -> vector<9x128xf32>
    %277 = arith.addf %272, %276 : vector<9x128xf32>
    %c8_178 = arith.constant 8 : index
    %c0_179 = arith.constant 0 : index
    %c0_180 = arith.constant 0 : index
    %278 = vector.load %arg2[%c8_178, %c0_179, %c0_180] : memref<9x9x160xf32, #tpu.memory_space<vmem>>, vector<1x9x160xf32>
    %279 = vector.shape_cast %278 : vector<1x9x160xf32> to vector<9x160xf32>
    %c0_181 = arith.constant 0 : index
    %c8_182 = arith.constant 8 : index
    %280 = vector.load %arg12[%c0_181, %c8_182] : memref<160x136xf32, #tpu.memory_space<vmem>>, vector<160x128xf32>
    %cst_183 = arith.constant dense<0.000000e+00> : vector<9x128xf32>
    %281 = tpu.matmul %279, %280, %cst_183 {dimension_numbers = #tpu.dot_dimension_numbers<[1], [0], [0], [1], [0, 0, 1, 1], [], []>} : vector<9x160xf32>, vector<160x128xf32>, vector<9x128xf32> -> vector<9x128xf32>
    %282 = arith.addf %277, %281 : vector<9x128xf32>
    %c0_184 = arith.constant 0 : index
    %c0_185 = arith.constant 0 : index
    %283 = vector.load %arg5[%c0_184, %c0_185] : memref<9x1xf32, #tpu.memory_space<vmem>>, vector<9x1xf32>
    %284 = vector.broadcast %283 : vector<9x1xf32> to vector<9x128xf32>
    %285 = arith.addf %282, %284 : vector<9x128xf32>
    %cst_186 = arith.constant 0.000000e+00 : f32
    %286 = vector.broadcast %cst_186 : f32 to vector<9x128xf32>
    %287 = arith.maximumf %285, %286 : vector<9x128xf32>
    %c0_187 = arith.constant 0 : index
    %c0_188 = arith.constant 0 : index
    %288 = vector.load %arg3[%c0_187, %c0_188] : memref<32x32xf32, #tpu.memory_space<vmem>>, vector<32x32xf32>
    %c0_189 = arith.constant 0 : index
    %c0_190 = arith.constant 0 : index
    %289 = vector.load %arg4[%c0_189, %c0_190] : memref<32x1xf32, #tpu.memory_space<vmem>>, vector<32x1xf32>
    %c0_191 = arith.constant 0 : index
    %c0_192 = arith.constant 0 : index
    %c0_193 = arith.constant 0 : index
    %290 = vector.load %arg1[%c0_191, %c0_192, %c0_193] : memref<1x288x128xf32, #tpu.memory_space<vmem>>, vector<1x32x128xf32>
    %291 = vector.shape_cast %290 : vector<1x32x128xf32> to vector<32x128xf32>
    %292 = vector.extract_strided_slice %287 {offsets = [0, 0], sizes = [1, 128], strides = [1, 1]} : vector<9x128xf32> to vector<1x128xf32>
    %293 = vector.broadcast %292 : vector<1x128xf32> to vector<32x128xf32>
    %294 = arith.mulf %291, %293 : vector<32x128xf32>
    %cst_194 = arith.constant dense<0.000000e+00> : vector<32x128xf32>
    %295 = tpu.matmul %288, %294, %cst_194 {dimension_numbers = #tpu.dot_dimension_numbers<[1], [0], [0], [1], [0, 0, 1, 1], [], []>} : vector<32x32xf32>, vector<32x128xf32>, vector<32x128xf32> -> vector<32x128xf32>
    %296 = vector.broadcast %289 : vector<32x1xf32> to vector<32x128xf32>
    %297 = arith.addf %295, %296 : vector<32x128xf32>
    %c0_195 = arith.constant 0 : index
    %c0_196 = arith.constant 0 : index
    %298 = vector.load %arg13[%c0_195, %c0_196] : memref<288x128xf32, #tpu.memory_space<vmem>>, vector<32x128xf32>
    tpu.vector_store %arg13[%c0_195, %c0_196], %297 {strides = array<i32>} : memref<288x128xf32, #tpu.memory_space<vmem>>, vector<32x128xf32>,
    %c0_197 = arith.constant 0 : index
    %c32_198 = arith.constant 32 : index
    %c0_199 = arith.constant 0 : index
    %299 = vector.load %arg1[%c0_197, %c32_198, %c0_199] : memref<1x288x128xf32, #tpu.memory_space<vmem>>, vector<1x32x128xf32>
    %300 = vector.shape_cast %299 : vector<1x32x128xf32> to vector<32x128xf32>
    %301 = vector.extract_strided_slice %287 {offsets = [1, 0], sizes = [1, 128], strides = [1, 1]} : vector<9x128xf32> to vector<1x128xf32>
    %302 = vector.broadcast %301 : vector<1x128xf32> to vector<32x128xf32>
    %303 = arith.mulf %300, %302 : vector<32x128xf32>
    %cst_200 = arith.constant dense<0.000000e+00> : vector<32x128xf32>
    %304 = tpu.matmul %288, %303, %cst_200 {dimension_numbers = #tpu.dot_dimension_numbers<[1], [0], [0], [1], [0, 0, 1, 1], [], []>} : vector<32x32xf32>, vector<32x128xf32>, vector<32x128xf32> -> vector<32x128xf32>
    %305 = vector.broadcast %289 : vector<32x1xf32> to vector<32x128xf32>
    %306 = arith.addf %304, %305 : vector<32x128xf32>
    %c32_201 = arith.constant 32 : index
    %c0_202 = arith.constant 0 : index
    %307 = vector.load %arg13[%c32_201, %c0_202] : memref<288x128xf32, #tpu.memory_space<vmem>>, vector<32x128xf32>
    tpu.vector_store %arg13[%c32_201, %c0_202], %306 {strides = array<i32>} : memref<288x128xf32, #tpu.memory_space<vmem>>, vector<32x128xf32>,
    %c0_203 = arith.constant 0 : index
    %c64_204 = arith.constant 64 : index
    %c0_205 = arith.constant 0 : index
    %308 = vector.load %arg1[%c0_203, %c64_204, %c0_205] : memref<1x288x128xf32, #tpu.memory_space<vmem>>, vector<1x32x128xf32>
    %309 = vector.shape_cast %308 : vector<1x32x128xf32> to vector<32x128xf32>
    %310 = vector.extract_strided_slice %287 {offsets = [2, 0], sizes = [1, 128], strides = [1, 1]} : vector<9x128xf32> to vector<1x128xf32>
    %311 = vector.broadcast %310 : vector<1x128xf32> to vector<32x128xf32>
    %312 = arith.mulf %309, %311 : vector<32x128xf32>
    %cst_206 = arith.constant dense<0.000000e+00> : vector<32x128xf32>
    %313 = tpu.matmul %288, %312, %cst_206 {dimension_numbers = #tpu.dot_dimension_numbers<[1], [0], [0], [1], [0, 0, 1, 1], [], []>} : vector<32x32xf32>, vector<32x128xf32>, vector<32x128xf32> -> vector<32x128xf32>
    %314 = vector.broadcast %289 : vector<32x1xf32> to vector<32x128xf32>
    %315 = arith.addf %313, %314 : vector<32x128xf32>
    %c64_207 = arith.constant 64 : index
    %c0_208 = arith.constant 0 : index
    %316 = vector.load %arg13[%c64_207, %c0_208] : memref<288x128xf32, #tpu.memory_space<vmem>>, vector<32x128xf32>
    tpu.vector_store %arg13[%c64_207, %c0_208], %315 {strides = array<i32>} : memref<288x128xf32, #tpu.memory_space<vmem>>, vector<32x128xf32>,
    %c0_209 = arith.constant 0 : index
    %c96_210 = arith.constant 96 : index
    %c0_211 = arith.constant 0 : index
    %317 = vector.load %arg1[%c0_209, %c96_210, %c0_211] : memref<1x288x128xf32, #tpu.memory_space<vmem>>, vector<1x32x128xf32>
    %318 = vector.shape_cast %317 : vector<1x32x128xf32> to vector<32x128xf32>
    %319 = vector.extract_strided_slice %287 {offsets = [3, 0], sizes = [1, 128], strides = [1, 1]} : vector<9x128xf32> to vector<1x128xf32>
    %320 = vector.broadcast %319 : vector<1x128xf32> to vector<32x128xf32>
    %321 = arith.mulf %318, %320 : vector<32x128xf32>
    %cst_212 = arith.constant dense<0.000000e+00> : vector<32x128xf32>
    %322 = tpu.matmul %288, %321, %cst_212 {dimension_numbers = #tpu.dot_dimension_numbers<[1], [0], [0], [1], [0, 0, 1, 1], [], []>} : vector<32x32xf32>, vector<32x128xf32>, vector<32x128xf32> -> vector<32x128xf32>
    %323 = vector.broadcast %289 : vector<32x1xf32> to vector<32x128xf32>
    %324 = arith.addf %322, %323 : vector<32x128xf32>
    %c96_213 = arith.constant 96 : index
    %c0_214 = arith.constant 0 : index
    %325 = vector.load %arg13[%c96_213, %c0_214] : memref<288x128xf32, #tpu.memory_space<vmem>>, vector<32x128xf32>
    tpu.vector_store %arg13[%c96_213, %c0_214], %324 {strides = array<i32>} : memref<288x128xf32, #tpu.memory_space<vmem>>, vector<32x128xf32>,
    %c0_215 = arith.constant 0 : index
    %c128_216 = arith.constant 128 : index
    %c0_217 = arith.constant 0 : index
    %326 = vector.load %arg1[%c0_215, %c128_216, %c0_217] : memref<1x288x128xf32, #tpu.memory_space<vmem>>, vector<1x32x128xf32>
    %327 = vector.shape_cast %326 : vector<1x32x128xf32> to vector<32x128xf32>
    %328 = vector.extract_strided_slice %287 {offsets = [4, 0], sizes = [1, 128], strides = [1, 1]} : vector<9x128xf32> to vector<1x128xf32>
    %329 = vector.broadcast %328 : vector<1x128xf32> to vector<32x128xf32>
    %330 = arith.mulf %327, %329 : vector<32x128xf32>
    %cst_218 = arith.constant dense<0.000000e+00> : vector<32x128xf32>
    %331 = tpu.matmul %288, %330, %cst_218 {dimension_numbers = #tpu.dot_dimension_numbers<[1], [0], [0], [1], [0, 0, 1, 1], [], []>} : vector<32x32xf32>, vector<32x128xf32>, vector<32x128xf32> -> vector<32x128xf32>
    %332 = vector.broadcast %289 : vector<32x1xf32> to vector<32x128xf32>
    %333 = arith.addf %331, %332 : vector<32x128xf32>
    %c128_219 = arith.constant 128 : index
    %c0_220 = arith.constant 0 : index
    %334 = vector.load %arg13[%c128_219, %c0_220] : memref<288x128xf32, #tpu.memory_space<vmem>>, vector<32x128xf32>
    tpu.vector_store %arg13[%c128_219, %c0_220], %333 {strides = array<i32>} : memref<288x128xf32, #tpu.memory_space<vmem>>, vector<32x128xf32>,
    %c0_221 = arith.constant 0 : index
    %c160_222 = arith.constant 160 : index
    %c0_223 = arith.constant 0 : index
    %335 = vector.load %arg1[%c0_221, %c160_222, %c0_223] : memref<1x288x128xf32, #tpu.memory_space<vmem>>, vector<1x32x128xf32>
    %336 = vector.shape_cast %335 : vector<1x32x128xf32> to vector<32x128xf32>
    %337 = vector.extract_strided_slice %287 {offsets = [5, 0], sizes = [1, 128], strides = [1, 1]} : vector<9x128xf32> to vector<1x128xf32>
    %338 = vector.broadcast %337 : vector<1x128xf32> to vector<32x128xf32>
    %339 = arith.mulf %336, %338 : vector<32x128xf32>
    %cst_224 = arith.constant dense<0.000000e+00> : vector<32x128xf32>
    %340 = tpu.matmul %288, %339, %cst_224 {dimension_numbers = #tpu.dot_dimension_numbers<[1], [0], [0], [1], [0, 0, 1, 1], [], []>} : vector<32x32xf32>, vector<32x128xf32>, vector<32x128xf32> -> vector<32x128xf32>
    %341 = vector.broadcast %289 : vector<32x1xf32> to vector<32x128xf32>
    %342 = arith.addf %340, %341 : vector<32x128xf32>
    %c160_225 = arith.constant 160 : index
    %c0_226 = arith.constant 0 : index
    %343 = vector.load %arg13[%c160_225, %c0_226] : memref<288x128xf32, #tpu.memory_space<vmem>>, vector<32x128xf32>
    tpu.vector_store %arg13[%c160_225, %c0_226], %342 {strides = array<i32>} : memref<288x128xf32, #tpu.memory_space<vmem>>, vector<32x128xf32>,
    %c0_227 = arith.constant 0 : index
    %c192_228 = arith.constant 192 : index
    %c0_229 = arith.constant 0 : index
    %344 = vector.load %arg1[%c0_227, %c192_228, %c0_229] : memref<1x288x128xf32, #tpu.memory_space<vmem>>, vector<1x32x128xf32>
    %345 = vector.shape_cast %344 : vector<1x32x128xf32> to vector<32x128xf32>
    %346 = vector.extract_strided_slice %287 {offsets = [6, 0], sizes = [1, 128], strides = [1, 1]} : vector<9x128xf32> to vector<1x128xf32>
    %347 = vector.broadcast %346 : vector<1x128xf32> to vector<32x128xf32>
    %348 = arith.mulf %345, %347 : vector<32x128xf32>
    %cst_230 = arith.constant dense<0.000000e+00> : vector<32x128xf32>
    %349 = tpu.matmul %288, %348, %cst_230 {dimension_numbers = #tpu.dot_dimension_numbers<[1], [0], [0], [1], [0, 0, 1, 1], [], []>} : vector<32x32xf32>, vector<32x128xf32>, vector<32x128xf32> -> vector<32x128xf32>
    %350 = vector.broadcast %289 : vector<32x1xf32> to vector<32x128xf32>
    %351 = arith.addf %349, %350 : vector<32x128xf32>
    %c192_231 = arith.constant 192 : index
    %c0_232 = arith.constant 0 : index
    %352 = vector.load %arg13[%c192_231, %c0_232] : memref<288x128xf32, #tpu.memory_space<vmem>>, vector<32x128xf32>
    tpu.vector_store %arg13[%c192_231, %c0_232], %351 {strides = array<i32>} : memref<288x128xf32, #tpu.memory_space<vmem>>, vector<32x128xf32>,
    %c0_233 = arith.constant 0 : index
    %c224_234 = arith.constant 224 : index
    %c0_235 = arith.constant 0 : index
    %353 = vector.load %arg1[%c0_233, %c224_234, %c0_235] : memref<1x288x128xf32, #tpu.memory_space<vmem>>, vector<1x32x128xf32>
    %354 = vector.shape_cast %353 : vector<1x32x128xf32> to vector<32x128xf32>
    %355 = vector.extract_strided_slice %287 {offsets = [7, 0], sizes = [1, 128], strides = [1, 1]} : vector<9x128xf32> to vector<1x128xf32>
    %356 = vector.broadcast %355 : vector<1x128xf32> to vector<32x128xf32>
    %357 = arith.mulf %354, %356 : vector<32x128xf32>
    %cst_236 = arith.constant dense<0.000000e+00> : vector<32x128xf32>
    %358 = tpu.matmul %288, %357, %cst_236 {dimension_numbers = #tpu.dot_dimension_numbers<[1], [0], [0], [1], [0, 0, 1, 1], [], []>} : vector<32x32xf32>, vector<32x128xf32>, vector<32x128xf32> -> vector<32x128xf32>
    %359 = vector.broadcast %289 : vector<32x1xf32> to vector<32x128xf32>
    %360 = arith.addf %358, %359 : vector<32x128xf32>
    %c224_237 = arith.constant 224 : index
    %c0_238 = arith.constant 0 : index
    %361 = vector.load %arg13[%c224_237, %c0_238] : memref<288x128xf32, #tpu.memory_space<vmem>>, vector<32x128xf32>
    tpu.vector_store %arg13[%c224_237, %c0_238], %360 {strides = array<i32>} : memref<288x128xf32, #tpu.memory_space<vmem>>, vector<32x128xf32>,
    %c0_239 = arith.constant 0 : index
    %c256_240 = arith.constant 256 : index
    %c0_241 = arith.constant 0 : index
    %362 = vector.load %arg1[%c0_239, %c256_240, %c0_241] : memref<1x288x128xf32, #tpu.memory_space<vmem>>, vector<1x32x128xf32>
    %363 = vector.shape_cast %362 : vector<1x32x128xf32> to vector<32x128xf32>
    %364 = vector.extract_strided_slice %287 {offsets = [8, 0], sizes = [1, 128], strides = [1, 1]} : vector<9x128xf32> to vector<1x128xf32>
    %365 = vector.broadcast %364 : vector<1x128xf32> to vector<32x128xf32>
    %366 = arith.mulf %363, %365 : vector<32x128xf32>
    %cst_242 = arith.constant dense<0.000000e+00> : vector<32x128xf32>
    %367 = tpu.matmul %288, %366, %cst_242 {dimension_numbers = #tpu.dot_dimension_numbers<[1], [0], [0], [1], [0, 0, 1, 1], [], []>} : vector<32x32xf32>, vector<32x128xf32>, vector<32x128xf32> -> vector<32x128xf32>
    %368 = vector.broadcast %289 : vector<32x1xf32> to vector<32x128xf32>
    %369 = arith.addf %367, %368 : vector<32x128xf32>
    %c256_243 = arith.constant 256 : index
    %c0_244 = arith.constant 0 : index
    %370 = vector.load %arg13[%c256_243, %c0_244] : memref<288x128xf32, #tpu.memory_space<vmem>>, vector<32x128xf32>
    tpu.vector_store %arg13[%c256_243, %c0_244], %369 {strides = array<i32>} : memref<288x128xf32, #tpu.memory_space<vmem>>, vector<32x128xf32>,
    %cst_245 = arith.constant 0.000000e+00 : f32
    %371 = vector.broadcast %cst_245 : f32 to vector<32x128xf32>
    %c0_246 = arith.constant 0 : index
    %c0_247 = arith.constant 0 : index
    %372 = memref.load %arg8[%c0_246, %c0_247] : memref<9x9xf32, #tpu.memory_space<smem>>
    %c0_248 = arith.constant 0 : index
    %c0_249 = arith.constant 0 : index
    %373 = vector.load %arg13[%c0_248, %c0_249] : memref<288x128xf32, #tpu.memory_space<vmem>>, vector<32x128xf32>
    %374 = vector.broadcast %372 : f32 to vector<32x128xf32>
    %375 = arith.mulf %374, %373 : vector<32x128xf32>
    %376 = arith.addf %371, %375 : vector<32x128xf32>
    %c0_250 = arith.constant 0 : index
    %c0_251 = arith.constant 0 : index
    %377 = memref.load %arg9[%c0_250, %c0_251] : memref<9x9xf32, #tpu.memory_space<smem>>
    %c0_252 = arith.constant 0 : index
    %c0_253 = arith.constant 0 : index
    %c0_254 = arith.constant 0 : index
    %378 = vector.load %arg1[%c0_252, %c0_253, %c0_254] : memref<1x288x128xf32, #tpu.memory_space<vmem>>, vector<1x32x128xf32>
    %379 = vector.shape_cast %378 : vector<1x32x128xf32> to vector<32x128xf32>
    %380 = vector.broadcast %377 : f32 to vector<32x128xf32>
    %381 = arith.mulf %380, %379 : vector<32x128xf32>
    %382 = arith.addf %376, %381 : vector<32x128xf32>
    %c0_255 = arith.constant 0 : index
    %c1_256 = arith.constant 1 : index
    %383 = memref.load %arg8[%c0_255, %c1_256] : memref<9x9xf32, #tpu.memory_space<smem>>
    %c32_257 = arith.constant 32 : index
    %c0_258 = arith.constant 0 : index
    %384 = vector.load %arg13[%c32_257, %c0_258] : memref<288x128xf32, #tpu.memory_space<vmem>>, vector<32x128xf32>
    %385 = vector.broadcast %383 : f32 to vector<32x128xf32>
    %386 = arith.mulf %385, %384 : vector<32x128xf32>
    %387 = arith.addf %382, %386 : vector<32x128xf32>
    %c0_259 = arith.constant 0 : index
    %c1_260 = arith.constant 1 : index
    %388 = memref.load %arg9[%c0_259, %c1_260] : memref<9x9xf32, #tpu.memory_space<smem>>
    %c0_261 = arith.constant 0 : index
    %c32_262 = arith.constant 32 : index
    %c0_263 = arith.constant 0 : index
    %389 = vector.load %arg1[%c0_261, %c32_262, %c0_263] : memref<1x288x128xf32, #tpu.memory_space<vmem>>, vector<1x32x128xf32>
    %390 = vector.shape_cast %389 : vector<1x32x128xf32> to vector<32x128xf32>
    %391 = vector.broadcast %388 : f32 to vector<32x128xf32>
    %392 = arith.mulf %391, %390 : vector<32x128xf32>
    %393 = arith.addf %387, %392 : vector<32x128xf32>
    %c0_264 = arith.constant 0 : index
    %c2_265 = arith.constant 2 : index
    %394 = memref.load %arg8[%c0_264, %c2_265] : memref<9x9xf32, #tpu.memory_space<smem>>
    %c64_266 = arith.constant 64 : index
    %c0_267 = arith.constant 0 : index
    %395 = vector.load %arg13[%c64_266, %c0_267] : memref<288x128xf32, #tpu.memory_space<vmem>>, vector<32x128xf32>
    %396 = vector.broadcast %394 : f32 to vector<32x128xf32>
    %397 = arith.mulf %396, %395 : vector<32x128xf32>
    %398 = arith.addf %393, %397 : vector<32x128xf32>
    %c0_268 = arith.constant 0 : index
    %c2_269 = arith.constant 2 : index
    %399 = memref.load %arg9[%c0_268, %c2_269] : memref<9x9xf32, #tpu.memory_space<smem>>
    %c0_270 = arith.constant 0 : index
    %c64_271 = arith.constant 64 : index
    %c0_272 = arith.constant 0 : index
    %400 = vector.load %arg1[%c0_270, %c64_271, %c0_272] : memref<1x288x128xf32, #tpu.memory_space<vmem>>, vector<1x32x128xf32>
    %401 = vector.shape_cast %400 : vector<1x32x128xf32> to vector<32x128xf32>
    %402 = vector.broadcast %399 : f32 to vector<32x128xf32>
    %403 = arith.mulf %402, %401 : vector<32x128xf32>
    %404 = arith.addf %398, %403 : vector<32x128xf32>
    %c0_273 = arith.constant 0 : index
    %c3_274 = arith.constant 3 : index
    %405 = memref.load %arg8[%c0_273, %c3_274] : memref<9x9xf32, #tpu.memory_space<smem>>
    %c96_275 = arith.constant 96 : index
    %c0_276 = arith.constant 0 : index
    %406 = vector.load %arg13[%c96_275, %c0_276] : memref<288x128xf32, #tpu.memory_space<vmem>>, vector<32x128xf32>
    %407 = vector.broadcast %405 : f32 to vector<32x128xf32>
    %408 = arith.mulf %407, %406 : vector<32x128xf32>
    %409 = arith.addf %404, %408 : vector<32x128xf32>
    %c0_277 = arith.constant 0 : index
    %c3_278 = arith.constant 3 : index
    %410 = memref.load %arg9[%c0_277, %c3_278] : memref<9x9xf32, #tpu.memory_space<smem>>
    %c0_279 = arith.constant 0 : index
    %c96_280 = arith.constant 96 : index
    %c0_281 = arith.constant 0 : index
    %411 = vector.load %arg1[%c0_279, %c96_280, %c0_281] : memref<1x288x128xf32, #tpu.memory_space<vmem>>, vector<1x32x128xf32>
    %412 = vector.shape_cast %411 : vector<1x32x128xf32> to vector<32x128xf32>
    %413 = vector.broadcast %410 : f32 to vector<32x128xf32>
    %414 = arith.mulf %413, %412 : vector<32x128xf32>
    %415 = arith.addf %409, %414 : vector<32x128xf32>
    %c0_282 = arith.constant 0 : index
    %c4_283 = arith.constant 4 : index
    %416 = memref.load %arg8[%c0_282, %c4_283] : memref<9x9xf32, #tpu.memory_space<smem>>
    %c128_284 = arith.constant 128 : index
    %c0_285 = arith.constant 0 : index
    %417 = vector.load %arg13[%c128_284, %c0_285] : memref<288x128xf32, #tpu.memory_space<vmem>>, vector<32x128xf32>
    %418 = vector.broadcast %416 : f32 to vector<32x128xf32>
    %419 = arith.mulf %418, %417 : vector<32x128xf32>
    %420 = arith.addf %415, %419 : vector<32x128xf32>
    %c0_286 = arith.constant 0 : index
    %c4_287 = arith.constant 4 : index
    %421 = memref.load %arg9[%c0_286, %c4_287] : memref<9x9xf32, #tpu.memory_space<smem>>
    %c0_288 = arith.constant 0 : index
    %c128_289 = arith.constant 128 : index
    %c0_290 = arith.constant 0 : index
    %422 = vector.load %arg1[%c0_288, %c128_289, %c0_290] : memref<1x288x128xf32, #tpu.memory_space<vmem>>, vector<1x32x128xf32>
    %423 = vector.shape_cast %422 : vector<1x32x128xf32> to vector<32x128xf32>
    %424 = vector.broadcast %421 : f32 to vector<32x128xf32>
    %425 = arith.mulf %424, %423 : vector<32x128xf32>
    %426 = arith.addf %420, %425 : vector<32x128xf32>
    %c0_291 = arith.constant 0 : index
    %c5_292 = arith.constant 5 : index
    %427 = memref.load %arg8[%c0_291, %c5_292] : memref<9x9xf32, #tpu.memory_space<smem>>
    %c160_293 = arith.constant 160 : index
    %c0_294 = arith.constant 0 : index
    %428 = vector.load %arg13[%c160_293, %c0_294] : memref<288x128xf32, #tpu.memory_space<vmem>>, vector<32x128xf32>
    %429 = vector.broadcast %427 : f32 to vector<32x128xf32>
    %430 = arith.mulf %429, %428 : vector<32x128xf32>
    %431 = arith.addf %426, %430 : vector<32x128xf32>
    %c0_295 = arith.constant 0 : index
    %c5_296 = arith.constant 5 : index
    %432 = memref.load %arg9[%c0_295, %c5_296] : memref<9x9xf32, #tpu.memory_space<smem>>
    %c0_297 = arith.constant 0 : index
    %c160_298 = arith.constant 160 : index
    %c0_299 = arith.constant 0 : index
    %433 = vector.load %arg1[%c0_297, %c160_298, %c0_299] : memref<1x288x128xf32, #tpu.memory_space<vmem>>, vector<1x32x128xf32>
    %434 = vector.shape_cast %433 : vector<1x32x128xf32> to vector<32x128xf32>
    %435 = vector.broadcast %432 : f32 to vector<32x128xf32>
    %436 = arith.mulf %435, %434 : vector<32x128xf32>
    %437 = arith.addf %431, %436 : vector<32x128xf32>
    %c0_300 = arith.constant 0 : index
    %c6_301 = arith.constant 6 : index
    %438 = memref.load %arg8[%c0_300, %c6_301] : memref<9x9xf32, #tpu.memory_space<smem>>
    %c192_302 = arith.constant 192 : index
    %c0_303 = arith.constant 0 : index
    %439 = vector.load %arg13[%c192_302, %c0_303] : memref<288x128xf32, #tpu.memory_space<vmem>>, vector<32x128xf32>
    %440 = vector.broadcast %438 : f32 to vector<32x128xf32>
    %441 = arith.mulf %440, %439 : vector<32x128xf32>
    %442 = arith.addf %437, %441 : vector<32x128xf32>
    %c0_304 = arith.constant 0 : index
    %c6_305 = arith.constant 6 : index
    %443 = memref.load %arg9[%c0_304, %c6_305] : memref<9x9xf32, #tpu.memory_space<smem>>
    %c0_306 = arith.constant 0 : index
    %c192_307 = arith.constant 192 : index
    %c0_308 = arith.constant 0 : index
    %444 = vector.load %arg1[%c0_306, %c192_307, %c0_308] : memref<1x288x128xf32, #tpu.memory_space<vmem>>, vector<1x32x128xf32>
    %445 = vector.shape_cast %444 : vector<1x32x128xf32> to vector<32x128xf32>
    %446 = vector.broadcast %443 : f32 to vector<32x128xf32>
    %447 = arith.mulf %446, %445 : vector<32x128xf32>
    %448 = arith.addf %442, %447 : vector<32x128xf32>
    %c0_309 = arith.constant 0 : index
    %c7_310 = arith.constant 7 : index
    %449 = memref.load %arg8[%c0_309, %c7_310] : memref<9x9xf32, #tpu.memory_space<smem>>
    %c224_311 = arith.constant 224 : index
    %c0_312 = arith.constant 0 : index
    %450 = vector.load %arg13[%c224_311, %c0_312] : memref<288x128xf32, #tpu.memory_space<vmem>>, vector<32x128xf32>
    %451 = vector.broadcast %449 : f32 to vector<32x128xf32>
    %452 = arith.mulf %451, %450 : vector<32x128xf32>
    %453 = arith.addf %448, %452 : vector<32x128xf32>
    %c0_313 = arith.constant 0 : index
    %c7_314 = arith.constant 7 : index
    %454 = memref.load %arg9[%c0_313, %c7_314] : memref<9x9xf32, #tpu.memory_space<smem>>
    %c0_315 = arith.constant 0 : index
    %c224_316 = arith.constant 224 : index
    %c0_317 = arith.constant 0 : index
    %455 = vector.load %arg1[%c0_315, %c224_316, %c0_317] : memref<1x288x128xf32, #tpu.memory_space<vmem>>, vector<1x32x128xf32>
    %456 = vector.shape_cast %455 : vector<1x32x128xf32> to vector<32x128xf32>
    %457 = vector.broadcast %454 : f32 to vector<32x128xf32>
    %458 = arith.mulf %457, %456 : vector<32x128xf32>
    %459 = arith.addf %453, %458 : vector<32x128xf32>
    %c0_318 = arith.constant 0 : index
    %c8_319 = arith.constant 8 : index
    %460 = memref.load %arg8[%c0_318, %c8_319] : memref<9x9xf32, #tpu.memory_space<smem>>
    %c256_320 = arith.constant 256 : index
    %c0_321 = arith.constant 0 : index
    %461 = vector.load %arg13[%c256_320, %c0_321] : memref<288x128xf32, #tpu.memory_space<vmem>>, vector<32x128xf32>
    %462 = vector.broadcast %460 : f32 to vector<32x128xf32>
    %463 = arith.mulf %462, %461 : vector<32x128xf32>
    %464 = arith.addf %459, %463 : vector<32x128xf32>
    %c0_322 = arith.constant 0 : index
    %c8_323 = arith.constant 8 : index
    %465 = memref.load %arg9[%c0_322, %c8_323] : memref<9x9xf32, #tpu.memory_space<smem>>
    %c0_324 = arith.constant 0 : index
    %c256_325 = arith.constant 256 : index
    %c0_326 = arith.constant 0 : index
    %466 = vector.load %arg1[%c0_324, %c256_325, %c0_326] : memref<1x288x128xf32, #tpu.memory_space<vmem>>, vector<1x32x128xf32>
    %467 = vector.shape_cast %466 : vector<1x32x128xf32> to vector<32x128xf32>
    %468 = vector.broadcast %465 : f32 to vector<32x128xf32>
    %469 = arith.mulf %468, %467 : vector<32x128xf32>
    %470 = arith.addf %464, %469 : vector<32x128xf32>
    %c0_327 = arith.constant 0 : index
    %471 = memref.load %arg10[%c0_327] : memref<9xf32, #tpu.memory_space<smem>>
    %472 = vector.broadcast %471 : f32 to vector<32x128xf32>
    %473 = arith.addf %470, %472 : vector<32x128xf32>
    %cst_328 = arith.constant 0.000000e+00 : f32
    %474 = vector.broadcast %cst_328 : f32 to vector<32x128xf32>
    %475 = arith.maximumf %473, %474 : vector<32x128xf32>
    %c0_329 = arith.constant 0 : index
    %c0_330 = arith.constant 0 : index
    %c0_331 = arith.constant 0 : index
    %476 = vector.load %arg11[%c0_329, %c0_330, %c0_331] : memref<1x288x128xf32, #tpu.memory_space<vmem>>, vector<1x32x128xf32>
    %477 = vector.shape_cast %476 : vector<1x32x128xf32> to vector<32x128xf32>
    %478 = vector.shape_cast %475 : vector<32x128xf32> to vector<1x32x128xf32>
    tpu.vector_store %arg11[%c0_329, %c0_330, %c0_331], %478 {strides = array<i32>} : memref<1x288x128xf32, #tpu.memory_space<vmem>>, vector<1x32x128xf32>,
    %cst_332 = arith.constant 0.000000e+00 : f32
    %479 = vector.broadcast %cst_332 : f32 to vector<32x128xf32>
    %c1_333 = arith.constant 1 : index
    %c0_334 = arith.constant 0 : index
    %480 = memref.load %arg8[%c1_333, %c0_334] : memref<9x9xf32, #tpu.memory_space<smem>>
    %c0_335 = arith.constant 0 : index
    %c0_336 = arith.constant 0 : index
    %481 = vector.load %arg13[%c0_335, %c0_336] : memref<288x128xf32, #tpu.memory_space<vmem>>, vector<32x128xf32>
    %482 = vector.broadcast %480 : f32 to vector<32x128xf32>
    %483 = arith.mulf %482, %481 : vector<32x128xf32>
    %484 = arith.addf %479, %483 : vector<32x128xf32>
    %c1_337 = arith.constant 1 : index
    %c0_338 = arith.constant 0 : index
    %485 = memref.load %arg9[%c1_337, %c0_338] : memref<9x9xf32, #tpu.memory_space<smem>>
    %c0_339 = arith.constant 0 : index
    %c0_340 = arith.constant 0 : index
    %c0_341 = arith.constant 0 : index
    %486 = vector.load %arg1[%c0_339, %c0_340, %c0_341] : memref<1x288x128xf32, #tpu.memory_space<vmem>>, vector<1x32x128xf32>
    %487 = vector.shape_cast %486 : vector<1x32x128xf32> to vector<32x128xf32>
    %488 = vector.broadcast %485 : f32 to vector<32x128xf32>
    %489 = arith.mulf %488, %487 : vector<32x128xf32>
    %490 = arith.addf %484, %489 : vector<32x128xf32>
    %c1_342 = arith.constant 1 : index
    %c1_343 = arith.constant 1 : index
    %491 = memref.load %arg8[%c1_342, %c1_343] : memref<9x9xf32, #tpu.memory_space<smem>>
    %c32_344 = arith.constant 32 : index
    %c0_345 = arith.constant 0 : index
    %492 = vector.load %arg13[%c32_344, %c0_345] : memref<288x128xf32, #tpu.memory_space<vmem>>, vector<32x128xf32>
    %493 = vector.broadcast %491 : f32 to vector<32x128xf32>
    %494 = arith.mulf %493, %492 : vector<32x128xf32>
    %495 = arith.addf %490, %494 : vector<32x128xf32>
    %c1_346 = arith.constant 1 : index
    %c1_347 = arith.constant 1 : index
    %496 = memref.load %arg9[%c1_346, %c1_347] : memref<9x9xf32, #tpu.memory_space<smem>>
    %c0_348 = arith.constant 0 : index
    %c32_349 = arith.constant 32 : index
    %c0_350 = arith.constant 0 : index
    %497 = vector.load %arg1[%c0_348, %c32_349, %c0_350] : memref<1x288x128xf32, #tpu.memory_space<vmem>>, vector<1x32x128xf32>
    %498 = vector.shape_cast %497 : vector<1x32x128xf32> to vector<32x128xf32>
    %499 = vector.broadcast %496 : f32 to vector<32x128xf32>
    %500 = arith.mulf %499, %498 : vector<32x128xf32>
    %501 = arith.addf %495, %500 : vector<32x128xf32>
    %c1_351 = arith.constant 1 : index
    %c2_352 = arith.constant 2 : index
    %502 = memref.load %arg8[%c1_351, %c2_352] : memref<9x9xf32, #tpu.memory_space<smem>>
    %c64_353 = arith.constant 64 : index
    %c0_354 = arith.constant 0 : index
    %503 = vector.load %arg13[%c64_353, %c0_354] : memref<288x128xf32, #tpu.memory_space<vmem>>, vector<32x128xf32>
    %504 = vector.broadcast %502 : f32 to vector<32x128xf32>
    %505 = arith.mulf %504, %503 : vector<32x128xf32>
    %506 = arith.addf %501, %505 : vector<32x128xf32>
    %c1_355 = arith.constant 1 : index
    %c2_356 = arith.constant 2 : index
    %507 = memref.load %arg9[%c1_355, %c2_356] : memref<9x9xf32, #tpu.memory_space<smem>>
    %c0_357 = arith.constant 0 : index
    %c64_358 = arith.constant 64 : index
    %c0_359 = arith.constant 0 : index
    %508 = vector.load %arg1[%c0_357, %c64_358, %c0_359] : memref<1x288x128xf32, #tpu.memory_space<vmem>>, vector<1x32x128xf32>
    %509 = vector.shape_cast %508 : vector<1x32x128xf32> to vector<32x128xf32>
    %510 = vector.broadcast %507 : f32 to vector<32x128xf32>
    %511 = arith.mulf %510, %509 : vector<32x128xf32>
    %512 = arith.addf %506, %511 : vector<32x128xf32>
    %c1_360 = arith.constant 1 : index
    %c3_361 = arith.constant 3 : index
    %513 = memref.load %arg8[%c1_360, %c3_361] : memref<9x9xf32, #tpu.memory_space<smem>>
    %c96_362 = arith.constant 96 : index
    %c0_363 = arith.constant 0 : index
    %514 = vector.load %arg13[%c96_362, %c0_363] : memref<288x128xf32, #tpu.memory_space<vmem>>, vector<32x128xf32>
    %515 = vector.broadcast %513 : f32 to vector<32x128xf32>
    %516 = arith.mulf %515, %514 : vector<32x128xf32>
    %517 = arith.addf %512, %516 : vector<32x128xf32>
    %c1_364 = arith.constant 1 : index
    %c3_365 = arith.constant 3 : index
    %518 = memref.load %arg9[%c1_364, %c3_365] : memref<9x9xf32, #tpu.memory_space<smem>>
    %c0_366 = arith.constant 0 : index
    %c96_367 = arith.constant 96 : index
    %c0_368 = arith.constant 0 : index
    %519 = vector.load %arg1[%c0_366, %c96_367, %c0_368] : memref<1x288x128xf32, #tpu.memory_space<vmem>>, vector<1x32x128xf32>
    %520 = vector.shape_cast %519 : vector<1x32x128xf32> to vector<32x128xf32>
    %521 = vector.broadcast %518 : f32 to vector<32x128xf32>
    %522 = arith.mulf %521, %520 : vector<32x128xf32>
    %523 = arith.addf %517, %522 : vector<32x128xf32>
    %c1_369 = arith.constant 1 : index
    %c4_370 = arith.constant 4 : index
    %524 = memref.load %arg8[%c1_369, %c4_370] : memref<9x9xf32, #tpu.memory_space<smem>>
    %c128_371 = arith.constant 128 : index
    %c0_372 = arith.constant 0 : index
    %525 = vector.load %arg13[%c128_371, %c0_372] : memref<288x128xf32, #tpu.memory_space<vmem>>, vector<32x128xf32>
    %526 = vector.broadcast %524 : f32 to vector<32x128xf32>
    %527 = arith.mulf %526, %525 : vector<32x128xf32>
    %528 = arith.addf %523, %527 : vector<32x128xf32>
    %c1_373 = arith.constant 1 : index
    %c4_374 = arith.constant 4 : index
    %529 = memref.load %arg9[%c1_373, %c4_374] : memref<9x9xf32, #tpu.memory_space<smem>>
    %c0_375 = arith.constant 0 : index
    %c128_376 = arith.constant 128 : index
    %c0_377 = arith.constant 0 : index
    %530 = vector.load %arg1[%c0_375, %c128_376, %c0_377] : memref<1x288x128xf32, #tpu.memory_space<vmem>>, vector<1x32x128xf32>
    %531 = vector.shape_cast %530 : vector<1x32x128xf32> to vector<32x128xf32>
    %532 = vector.broadcast %529 : f32 to vector<32x128xf32>
    %533 = arith.mulf %532, %531 : vector<32x128xf32>
    %534 = arith.addf %528, %533 : vector<32x128xf32>
    %c1_378 = arith.constant 1 : index
    %c5_379 = arith.constant 5 : index
    %535 = memref.load %arg8[%c1_378, %c5_379] : memref<9x9xf32, #tpu.memory_space<smem>>
    %c160_380 = arith.constant 160 : index
    %c0_381 = arith.constant 0 : index
    %536 = vector.load %arg13[%c160_380, %c0_381] : memref<288x128xf32, #tpu.memory_space<vmem>>, vector<32x128xf32>
    %537 = vector.broadcast %535 : f32 to vector<32x128xf32>
    %538 = arith.mulf %537, %536 : vector<32x128xf32>
    %539 = arith.addf %534, %538 : vector<32x128xf32>
    %c1_382 = arith.constant 1 : index
    %c5_383 = arith.constant 5 : index
    %540 = memref.load %arg9[%c1_382, %c5_383] : memref<9x9xf32, #tpu.memory_space<smem>>
    %c0_384 = arith.constant 0 : index
    %c160_385 = arith.constant 160 : index
    %c0_386 = arith.constant 0 : index
    %541 = vector.load %arg1[%c0_384, %c160_385, %c0_386] : memref<1x288x128xf32, #tpu.memory_space<vmem>>, vector<1x32x128xf32>
    %542 = vector.shape_cast %541 : vector<1x32x128xf32> to vector<32x128xf32>
    %543 = vector.broadcast %540 : f32 to vector<32x128xf32>
    %544 = arith.mulf %543, %542 : vector<32x128xf32>
    %545 = arith.addf %539, %544 : vector<32x128xf32>
    %c1_387 = arith.constant 1 : index
    %c6_388 = arith.constant 6 : index
    %546 = memref.load %arg8[%c1_387, %c6_388] : memref<9x9xf32, #tpu.memory_space<smem>>
    %c192_389 = arith.constant 192 : index
    %c0_390 = arith.constant 0 : index
    %547 = vector.load %arg13[%c192_389, %c0_390] : memref<288x128xf32, #tpu.memory_space<vmem>>, vector<32x128xf32>
    %548 = vector.broadcast %546 : f32 to vector<32x128xf32>
    %549 = arith.mulf %548, %547 : vector<32x128xf32>
    %550 = arith.addf %545, %549 : vector<32x128xf32>
    %c1_391 = arith.constant 1 : index
    %c6_392 = arith.constant 6 : index
    %551 = memref.load %arg9[%c1_391, %c6_392] : memref<9x9xf32, #tpu.memory_space<smem>>
    %c0_393 = arith.constant 0 : index
    %c192_394 = arith.constant 192 : index
    %c0_395 = arith.constant 0 : index
    %552 = vector.load %arg1[%c0_393, %c192_394, %c0_395] : memref<1x288x128xf32, #tpu.memory_space<vmem>>, vector<1x32x128xf32>
    %553 = vector.shape_cast %552 : vector<1x32x128xf32> to vector<32x128xf32>
    %554 = vector.broadcast %551 : f32 to vector<32x128xf32>
    %555 = arith.mulf %554, %553 : vector<32x128xf32>
    %556 = arith.addf %550, %555 : vector<32x128xf32>
    %c1_396 = arith.constant 1 : index
    %c7_397 = arith.constant 7 : index
    %557 = memref.load %arg8[%c1_396, %c7_397] : memref<9x9xf32, #tpu.memory_space<smem>>
    %c224_398 = arith.constant 224 : index
    %c0_399 = arith.constant 0 : index
    %558 = vector.load %arg13[%c224_398, %c0_399] : memref<288x128xf32, #tpu.memory_space<vmem>>, vector<32x128xf32>
    %559 = vector.broadcast %557 : f32 to vector<32x128xf32>
    %560 = arith.mulf %559, %558 : vector<32x128xf32>
    %561 = arith.addf %556, %560 : vector<32x128xf32>
    %c1_400 = arith.constant 1 : index
    %c7_401 = arith.constant 7 : index
    %562 = memref.load %arg9[%c1_400, %c7_401] : memref<9x9xf32, #tpu.memory_space<smem>>
    %c0_402 = arith.constant 0 : index
    %c224_403 = arith.constant 224 : index
    %c0_404 = arith.constant 0 : index
    %563 = vector.load %arg1[%c0_402, %c224_403, %c0_404] : memref<1x288x128xf32, #tpu.memory_space<vmem>>, vector<1x32x128xf32>
    %564 = vector.shape_cast %563 : vector<1x32x128xf32> to vector<32x128xf32>
    %565 = vector.broadcast %562 : f32 to vector<32x128xf32>
    %566 = arith.mulf %565, %564 : vector<32x128xf32>
    %567 = arith.addf %561, %566 : vector<32x128xf32>
    %c1_405 = arith.constant 1 : index
    %c8_406 = arith.constant 8 : index
    %568 = memref.load %arg8[%c1_405, %c8_406] : memref<9x9xf32, #tpu.memory_space<smem>>
    %c256_407 = arith.constant 256 : index
    %c0_408 = arith.constant 0 : index
    %569 = vector.load %arg13[%c256_407, %c0_408] : memref<288x128xf32, #tpu.memory_space<vmem>>, vector<32x128xf32>
    %570 = vector.broadcast %568 : f32 to vector<32x128xf32>
    %571 = arith.mulf %570, %569 : vector<32x128xf32>
    %572 = arith.addf %567, %571 : vector<32x128xf32>
    %c1_409 = arith.constant 1 : index
    %c8_410 = arith.constant 8 : index
    %573 = memref.load %arg9[%c1_409, %c8_410] : memref<9x9xf32, #tpu.memory_space<smem>>
    %c0_411 = arith.constant 0 : index
    %c256_412 = arith.constant 256 : index
    %c0_413 = arith.constant 0 : index
    %574 = vector.load %arg1[%c0_411, %c256_412, %c0_413] : memref<1x288x128xf32, #tpu.memory_space<vmem>>, vector<1x32x128xf32>
    %575 = vector.shape_cast %574 : vector<1x32x128xf32> to vector<32x128xf32>
    %576 = vector.broadcast %573 : f32 to vector<32x128xf32>
    %577 = arith.mulf %576, %575 : vector<32x128xf32>
    %578 = arith.addf %572, %577 : vector<32x128xf32>
    %c1_414 = arith.constant 1 : index
    %579 = memref.load %arg10[%c1_414] : memref<9xf32, #tpu.memory_space<smem>>
    %580 = vector.broadcast %579 : f32 to vector<32x128xf32>
    %581 = arith.addf %578, %580 : vector<32x128xf32>
    %cst_415 = arith.constant 0.000000e+00 : f32
    %582 = vector.broadcast %cst_415 : f32 to vector<32x128xf32>
    %583 = arith.maximumf %581, %582 : vector<32x128xf32>
    %c0_416 = arith.constant 0 : index
    %c32_417 = arith.constant 32 : index
    %c0_418 = arith.constant 0 : index
    %584 = vector.load %arg11[%c0_416, %c32_417, %c0_418] : memref<1x288x128xf32, #tpu.memory_space<vmem>>, vector<1x32x128xf32>
    %585 = vector.shape_cast %584 : vector<1x32x128xf32> to vector<32x128xf32>
    %586 = vector.shape_cast %583 : vector<32x128xf32> to vector<1x32x128xf32>
    tpu.vector_store %arg11[%c0_416, %c32_417, %c0_418], %586 {strides = array<i32>} : memref<1x288x128xf32, #tpu.memory_space<vmem>>, vector<1x32x128xf32>,
    %cst_419 = arith.constant 0.000000e+00 : f32
    %587 = vector.broadcast %cst_419 : f32 to vector<32x128xf32>
    %c2_420 = arith.constant 2 : index
    %c0_421 = arith.constant 0 : index
    %588 = memref.load %arg8[%c2_420, %c0_421] : memref<9x9xf32, #tpu.memory_space<smem>>
    %c0_422 = arith.constant 0 : index
    %c0_423 = arith.constant 0 : index
    %589 = vector.load %arg13[%c0_422, %c0_423] : memref<288x128xf32, #tpu.memory_space<vmem>>, vector<32x128xf32>
    %590 = vector.broadcast %588 : f32 to vector<32x128xf32>
    %591 = arith.mulf %590, %589 : vector<32x128xf32>
    %592 = arith.addf %587, %591 : vector<32x128xf32>
    %c2_424 = arith.constant 2 : index
    %c0_425 = arith.constant 0 : index
    %593 = memref.load %arg9[%c2_424, %c0_425] : memref<9x9xf32, #tpu.memory_space<smem>>
    %c0_426 = arith.constant 0 : index
    %c0_427 = arith.constant 0 : index
    %c0_428 = arith.constant 0 : index
    %594 = vector.load %arg1[%c0_426, %c0_427, %c0_428] : memref<1x288x128xf32, #tpu.memory_space<vmem>>, vector<1x32x128xf32>
    %595 = vector.shape_cast %594 : vector<1x32x128xf32> to vector<32x128xf32>
    %596 = vector.broadcast %593 : f32 to vector<32x128xf32>
    %597 = arith.mulf %596, %595 : vector<32x128xf32>
    %598 = arith.addf %592, %597 : vector<32x128xf32>
    %c2_429 = arith.constant 2 : index
    %c1_430 = arith.constant 1 : index
    %599 = memref.load %arg8[%c2_429, %c1_430] : memref<9x9xf32, #tpu.memory_space<smem>>
    %c32_431 = arith.constant 32 : index
    %c0_432 = arith.constant 0 : index
    %600 = vector.load %arg13[%c32_431, %c0_432] : memref<288x128xf32, #tpu.memory_space<vmem>>, vector<32x128xf32>
    %601 = vector.broadcast %599 : f32 to vector<32x128xf32>
    %602 = arith.mulf %601, %600 : vector<32x128xf32>
    %603 = arith.addf %598, %602 : vector<32x128xf32>
    %c2_433 = arith.constant 2 : index
    %c1_434 = arith.constant 1 : index
    %604 = memref.load %arg9[%c2_433, %c1_434] : memref<9x9xf32, #tpu.memory_space<smem>>
    %c0_435 = arith.constant 0 : index
    %c32_436 = arith.constant 32 : index
    %c0_437 = arith.constant 0 : index
    %605 = vector.load %arg1[%c0_435, %c32_436, %c0_437] : memref<1x288x128xf32, #tpu.memory_space<vmem>>, vector<1x32x128xf32>
    %606 = vector.shape_cast %605 : vector<1x32x128xf32> to vector<32x128xf32>
    %607 = vector.broadcast %604 : f32 to vector<32x128xf32>
    %608 = arith.mulf %607, %606 : vector<32x128xf32>
    %609 = arith.addf %603, %608 : vector<32x128xf32>
    %c2_438 = arith.constant 2 : index
    %c2_439 = arith.constant 2 : index
    %610 = memref.load %arg8[%c2_438, %c2_439] : memref<9x9xf32, #tpu.memory_space<smem>>
    %c64_440 = arith.constant 64 : index
    %c0_441 = arith.constant 0 : index
    %611 = vector.load %arg13[%c64_440, %c0_441] : memref<288x128xf32, #tpu.memory_space<vmem>>, vector<32x128xf32>
    %612 = vector.broadcast %610 : f32 to vector<32x128xf32>
    %613 = arith.mulf %612, %611 : vector<32x128xf32>
    %614 = arith.addf %609, %613 : vector<32x128xf32>
    %c2_442 = arith.constant 2 : index
    %c2_443 = arith.constant 2 : index
    %615 = memref.load %arg9[%c2_442, %c2_443] : memref<9x9xf32, #tpu.memory_space<smem>>
    %c0_444 = arith.constant 0 : index
    %c64_445 = arith.constant 64 : index
    %c0_446 = arith.constant 0 : index
    %616 = vector.load %arg1[%c0_444, %c64_445, %c0_446] : memref<1x288x128xf32, #tpu.memory_space<vmem>>, vector<1x32x128xf32>
    %617 = vector.shape_cast %616 : vector<1x32x128xf32> to vector<32x128xf32>
    %618 = vector.broadcast %615 : f32 to vector<32x128xf32>
    %619 = arith.mulf %618, %617 : vector<32x128xf32>
    %620 = arith.addf %614, %619 : vector<32x128xf32>
    %c2_447 = arith.constant 2 : index
    %c3_448 = arith.constant 3 : index
    %621 = memref.load %arg8[%c2_447, %c3_448] : memref<9x9xf32, #tpu.memory_space<smem>>
    %c96_449 = arith.constant 96 : index
    %c0_450 = arith.constant 0 : index
    %622 = vector.load %arg13[%c96_449, %c0_450] : memref<288x128xf32, #tpu.memory_space<vmem>>, vector<32x128xf32>
    %623 = vector.broadcast %621 : f32 to vector<32x128xf32>
    %624 = arith.mulf %623, %622 : vector<32x128xf32>
    %625 = arith.addf %620, %624 : vector<32x128xf32>
    %c2_451 = arith.constant 2 : index
    %c3_452 = arith.constant 3 : index
    %626 = memref.load %arg9[%c2_451, %c3_452] : memref<9x9xf32, #tpu.memory_space<smem>>
    %c0_453 = arith.constant 0 : index
    %c96_454 = arith.constant 96 : index
    %c0_455 = arith.constant 0 : index
    %627 = vector.load %arg1[%c0_453, %c96_454, %c0_455] : memref<1x288x128xf32, #tpu.memory_space<vmem>>, vector<1x32x128xf32>
    %628 = vector.shape_cast %627 : vector<1x32x128xf32> to vector<32x128xf32>
    %629 = vector.broadcast %626 : f32 to vector<32x128xf32>
    %630 = arith.mulf %629, %628 : vector<32x128xf32>
    %631 = arith.addf %625, %630 : vector<32x128xf32>
    %c2_456 = arith.constant 2 : index
    %c4_457 = arith.constant 4 : index
    %632 = memref.load %arg8[%c2_456, %c4_457] : memref<9x9xf32, #tpu.memory_space<smem>>
    %c128_458 = arith.constant 128 : index
    %c0_459 = arith.constant 0 : index
    %633 = vector.load %arg13[%c128_458, %c0_459] : memref<288x128xf32, #tpu.memory_space<vmem>>, vector<32x128xf32>
    %634 = vector.broadcast %632 : f32 to vector<32x128xf32>
    %635 = arith.mulf %634, %633 : vector<32x128xf32>
    %636 = arith.addf %631, %635 : vector<32x128xf32>
    %c2_460 = arith.constant 2 : index
    %c4_461 = arith.constant 4 : index
    %637 = memref.load %arg9[%c2_460, %c4_461] : memref<9x9xf32, #tpu.memory_space<smem>>
    %c0_462 = arith.constant 0 : index
    %c128_463 = arith.constant 128 : index
    %c0_464 = arith.constant 0 : index
    %638 = vector.load %arg1[%c0_462, %c128_463, %c0_464] : memref<1x288x128xf32, #tpu.memory_space<vmem>>, vector<1x32x128xf32>
    %639 = vector.shape_cast %638 : vector<1x32x128xf32> to vector<32x128xf32>
    %640 = vector.broadcast %637 : f32 to vector<32x128xf32>
    %641 = arith.mulf %640, %639 : vector<32x128xf32>
    %642 = arith.addf %636, %641 : vector<32x128xf32>
    %c2_465 = arith.constant 2 : index
    %c5_466 = arith.constant 5 : index
    %643 = memref.load %arg8[%c2_465, %c5_466] : memref<9x9xf32, #tpu.memory_space<smem>>
    %c160_467 = arith.constant 160 : index
    %c0_468 = arith.constant 0 : index
    %644 = vector.load %arg13[%c160_467, %c0_468] : memref<288x128xf32, #tpu.memory_space<vmem>>, vector<32x128xf32>
    %645 = vector.broadcast %643 : f32 to vector<32x128xf32>
    %646 = arith.mulf %645, %644 : vector<32x128xf32>
    %647 = arith.addf %642, %646 : vector<32x128xf32>
    %c2_469 = arith.constant 2 : index
    %c5_470 = arith.constant 5 : index
    %648 = memref.load %arg9[%c2_469, %c5_470] : memref<9x9xf32, #tpu.memory_space<smem>>
    %c0_471 = arith.constant 0 : index
    %c160_472 = arith.constant 160 : index
    %c0_473 = arith.constant 0 : index
    %649 = vector.load %arg1[%c0_471, %c160_472, %c0_473] : memref<1x288x128xf32, #tpu.memory_space<vmem>>, vector<1x32x128xf32>
    %650 = vector.shape_cast %649 : vector<1x32x128xf32> to vector<32x128xf32>
    %651 = vector.broadcast %648 : f32 to vector<32x128xf32>
    %652 = arith.mulf %651, %650 : vector<32x128xf32>
    %653 = arith.addf %647, %652 : vector<32x128xf32>
    %c2_474 = arith.constant 2 : index
    %c6_475 = arith.constant 6 : index
    %654 = memref.load %arg8[%c2_474, %c6_475] : memref<9x9xf32, #tpu.memory_space<smem>>
    %c192_476 = arith.constant 192 : index
    %c0_477 = arith.constant 0 : index
    %655 = vector.load %arg13[%c192_476, %c0_477] : memref<288x128xf32, #tpu.memory_space<vmem>>, vector<32x128xf32>
    %656 = vector.broadcast %654 : f32 to vector<32x128xf32>
    %657 = arith.mulf %656, %655 : vector<32x128xf32>
    %658 = arith.addf %653, %657 : vector<32x128xf32>
    %c2_478 = arith.constant 2 : index
    %c6_479 = arith.constant 6 : index
    %659 = memref.load %arg9[%c2_478, %c6_479] : memref<9x9xf32, #tpu.memory_space<smem>>
    %c0_480 = arith.constant 0 : index
    %c192_481 = arith.constant 192 : index
    %c0_482 = arith.constant 0 : index
    %660 = vector.load %arg1[%c0_480, %c192_481, %c0_482] : memref<1x288x128xf32, #tpu.memory_space<vmem>>, vector<1x32x128xf32>
    %661 = vector.shape_cast %660 : vector<1x32x128xf32> to vector<32x128xf32>
    %662 = vector.broadcast %659 : f32 to vector<32x128xf32>
    %663 = arith.mulf %662, %661 : vector<32x128xf32>
    %664 = arith.addf %658, %663 : vector<32x128xf32>
    %c2_483 = arith.constant 2 : index
    %c7_484 = arith.constant 7 : index
    %665 = memref.load %arg8[%c2_483, %c7_484] : memref<9x9xf32, #tpu.memory_space<smem>>
    %c224_485 = arith.constant 224 : index
    %c0_486 = arith.constant 0 : index
    %666 = vector.load %arg13[%c224_485, %c0_486] : memref<288x128xf32, #tpu.memory_space<vmem>>, vector<32x128xf32>
    %667 = vector.broadcast %665 : f32 to vector<32x128xf32>
    %668 = arith.mulf %667, %666 : vector<32x128xf32>
    %669 = arith.addf %664, %668 : vector<32x128xf32>
    %c2_487 = arith.constant 2 : index
    %c7_488 = arith.constant 7 : index
    %670 = memref.load %arg9[%c2_487, %c7_488] : memref<9x9xf32, #tpu.memory_space<smem>>
    %c0_489 = arith.constant 0 : index
    %c224_490 = arith.constant 224 : index
    %c0_491 = arith.constant 0 : index
    %671 = vector.load %arg1[%c0_489, %c224_490, %c0_491] : memref<1x288x128xf32, #tpu.memory_space<vmem>>, vector<1x32x128xf32>
    %672 = vector.shape_cast %671 : vector<1x32x128xf32> to vector<32x128xf32>
    %673 = vector.broadcast %670 : f32 to vector<32x128xf32>
    %674 = arith.mulf %673, %672 : vector<32x128xf32>
    %675 = arith.addf %669, %674 : vector<32x128xf32>
    %c2_492 = arith.constant 2 : index
    %c8_493 = arith.constant 8 : index
    %676 = memref.load %arg8[%c2_492, %c8_493] : memref<9x9xf32, #tpu.memory_space<smem>>
    %c256_494 = arith.constant 256 : index
    %c0_495 = arith.constant 0 : index
    %677 = vector.load %arg13[%c256_494, %c0_495] : memref<288x128xf32, #tpu.memory_space<vmem>>, vector<32x128xf32>
    %678 = vector.broadcast %676 : f32 to vector<32x128xf32>
    %679 = arith.mulf %678, %677 : vector<32x128xf32>
    %680 = arith.addf %675, %679 : vector<32x128xf32>
    %c2_496 = arith.constant 2 : index
    %c8_497 = arith.constant 8 : index
    %681 = memref.load %arg9[%c2_496, %c8_497] : memref<9x9xf32, #tpu.memory_space<smem>>
    %c0_498 = arith.constant 0 : index
    %c256_499 = arith.constant 256 : index
    %c0_500 = arith.constant 0 : index
    %682 = vector.load %arg1[%c0_498, %c256_499, %c0_500] : memref<1x288x128xf32, #tpu.memory_space<vmem>>, vector<1x32x128xf32>
    %683 = vector.shape_cast %682 : vector<1x32x128xf32> to vector<32x128xf32>
    %684 = vector.broadcast %681 : f32 to vector<32x128xf32>
    %685 = arith.mulf %684, %683 : vector<32x128xf32>
    %686 = arith.addf %680, %685 : vector<32x128xf32>
    %c2_501 = arith.constant 2 : index
    %687 = memref.load %arg10[%c2_501] : memref<9xf32, #tpu.memory_space<smem>>
    %688 = vector.broadcast %687 : f32 to vector<32x128xf32>
    %689 = arith.addf %686, %688 : vector<32x128xf32>
    %cst_502 = arith.constant 0.000000e+00 : f32
    %690 = vector.broadcast %cst_502 : f32 to vector<32x128xf32>
    %691 = arith.maximumf %689, %690 : vector<32x128xf32>
    %c0_503 = arith.constant 0 : index
    %c64_504 = arith.constant 64 : index
    %c0_505 = arith.constant 0 : index
    %692 = vector.load %arg11[%c0_503, %c64_504, %c0_505] : memref<1x288x128xf32, #tpu.memory_space<vmem>>, vector<1x32x128xf32>
    %693 = vector.shape_cast %692 : vector<1x32x128xf32> to vector<32x128xf32>
    %694 = vector.shape_cast %691 : vector<32x128xf32> to vector<1x32x128xf32>
    tpu.vector_store %arg11[%c0_503, %c64_504, %c0_505], %694 {strides = array<i32>} : memref<1x288x128xf32, #tpu.memory_space<vmem>>, vector<1x32x128xf32>,
    %cst_506 = arith.constant 0.000000e+00 : f32
    %695 = vector.broadcast %cst_506 : f32 to vector<32x128xf32>
    %c3_507 = arith.constant 3 : index
    %c0_508 = arith.constant 0 : index
    %696 = memref.load %arg8[%c3_507, %c0_508] : memref<9x9xf32, #tpu.memory_space<smem>>
    %c0_509 = arith.constant 0 : index
    %c0_510 = arith.constant 0 : index
    %697 = vector.load %arg13[%c0_509, %c0_510] : memref<288x128xf32, #tpu.memory_space<vmem>>, vector<32x128xf32>
    %698 = vector.broadcast %696 : f32 to vector<32x128xf32>
    %699 = arith.mulf %698, %697 : vector<32x128xf32>
    %700 = arith.addf %695, %699 : vector<32x128xf32>
    %c3_511 = arith.constant 3 : index
    %c0_512 = arith.constant 0 : index
    %701 = memref.load %arg9[%c3_511, %c0_512] : memref<9x9xf32, #tpu.memory_space<smem>>
    %c0_513 = arith.constant 0 : index
    %c0_514 = arith.constant 0 : index
    %c0_515 = arith.constant 0 : index
    %702 = vector.load %arg1[%c0_513, %c0_514, %c0_515] : memref<1x288x128xf32, #tpu.memory_space<vmem>>, vector<1x32x128xf32>
    %703 = vector.shape_cast %702 : vector<1x32x128xf32> to vector<32x128xf32>
    %704 = vector.broadcast %701 : f32 to vector<32x128xf32>
    %705 = arith.mulf %704, %703 : vector<32x128xf32>
    %706 = arith.addf %700, %705 : vector<32x128xf32>
    %c3_516 = arith.constant 3 : index
    %c1_517 = arith.constant 1 : index
    %707 = memref.load %arg8[%c3_516, %c1_517] : memref<9x9xf32, #tpu.memory_space<smem>>
    %c32_518 = arith.constant 32 : index
    %c0_519 = arith.constant 0 : index
    %708 = vector.load %arg13[%c32_518, %c0_519] : memref<288x128xf32, #tpu.memory_space<vmem>>, vector<32x128xf32>
    %709 = vector.broadcast %707 : f32 to vector<32x128xf32>
    %710 = arith.mulf %709, %708 : vector<32x128xf32>
    %711 = arith.addf %706, %710 : vector<32x128xf32>
    %c3_520 = arith.constant 3 : index
    %c1_521 = arith.constant 1 : index
    %712 = memref.load %arg9[%c3_520, %c1_521] : memref<9x9xf32, #tpu.memory_space<smem>>
    %c0_522 = arith.constant 0 : index
    %c32_523 = arith.constant 32 : index
    %c0_524 = arith.constant 0 : index
    %713 = vector.load %arg1[%c0_522, %c32_523, %c0_524] : memref<1x288x128xf32, #tpu.memory_space<vmem>>, vector<1x32x128xf32>
    %714 = vector.shape_cast %713 : vector<1x32x128xf32> to vector<32x128xf32>
    %715 = vector.broadcast %712 : f32 to vector<32x128xf32>
    %716 = arith.mulf %715, %714 : vector<32x128xf32>
    %717 = arith.addf %711, %716 : vector<32x128xf32>
    %c3_525 = arith.constant 3 : index
    %c2_526 = arith.constant 2 : index
    %718 = memref.load %arg8[%c3_525, %c2_526] : memref<9x9xf32, #tpu.memory_space<smem>>
    %c64_527 = arith.constant 64 : index
    %c0_528 = arith.constant 0 : index
    %719 = vector.load %arg13[%c64_527, %c0_528] : memref<288x128xf32, #tpu.memory_space<vmem>>, vector<32x128xf32>
    %720 = vector.broadcast %718 : f32 to vector<32x128xf32>
    %721 = arith.mulf %720, %719 : vector<32x128xf32>
    %722 = arith.addf %717, %721 : vector<32x128xf32>
    %c3_529 = arith.constant 3 : index
    %c2_530 = arith.constant 2 : index
    %723 = memref.load %arg9[%c3_529, %c2_530] : memref<9x9xf32, #tpu.memory_space<smem>>
    %c0_531 = arith.constant 0 : index
    %c64_532 = arith.constant 64 : index
    %c0_533 = arith.constant 0 : index
    %724 = vector.load %arg1[%c0_531, %c64_532, %c0_533] : memref<1x288x128xf32, #tpu.memory_space<vmem>>, vector<1x32x128xf32>
    %725 = vector.shape_cast %724 : vector<1x32x128xf32> to vector<32x128xf32>
    %726 = vector.broadcast %723 : f32 to vector<32x128xf32>
    %727 = arith.mulf %726, %725 : vector<32x128xf32>
    %728 = arith.addf %722, %727 : vector<32x128xf32>
    %c3_534 = arith.constant 3 : index
    %c3_535 = arith.constant 3 : index
    %729 = memref.load %arg8[%c3_534, %c3_535] : memref<9x9xf32, #tpu.memory_space<smem>>
    %c96_536 = arith.constant 96 : index
    %c0_537 = arith.constant 0 : index
    %730 = vector.load %arg13[%c96_536, %c0_537] : memref<288x128xf32, #tpu.memory_space<vmem>>, vector<32x128xf32>
    %731 = vector.broadcast %729 : f32 to vector<32x128xf32>
    %732 = arith.mulf %731, %730 : vector<32x128xf32>
    %733 = arith.addf %728, %732 : vector<32x128xf32>
    %c3_538 = arith.constant 3 : index
    %c3_539 = arith.constant 3 : index
    %734 = memref.load %arg9[%c3_538, %c3_539] : memref<9x9xf32, #tpu.memory_space<smem>>
    %c0_540 = arith.constant 0 : index
    %c96_541 = arith.constant 96 : index
    %c0_542 = arith.constant 0 : index
    %735 = vector.load %arg1[%c0_540, %c96_541, %c0_542] : memref<1x288x128xf32, #tpu.memory_space<vmem>>, vector<1x32x128xf32>
    %736 = vector.shape_cast %735 : vector<1x32x128xf32> to vector<32x128xf32>
    %737 = vector.broadcast %734 : f32 to vector<32x128xf32>
    %738 = arith.mulf %737, %736 : vector<32x128xf32>
    %739 = arith.addf %733, %738 : vector<32x128xf32>
    %c3_543 = arith.constant 3 : index
    %c4_544 = arith.constant 4 : index
    %740 = memref.load %arg8[%c3_543, %c4_544] : memref<9x9xf32, #tpu.memory_space<smem>>
    %c128_545 = arith.constant 128 : index
    %c0_546 = arith.constant 0 : index
    %741 = vector.load %arg13[%c128_545, %c0_546] : memref<288x128xf32, #tpu.memory_space<vmem>>, vector<32x128xf32>
    %742 = vector.broadcast %740 : f32 to vector<32x128xf32>
    %743 = arith.mulf %742, %741 : vector<32x128xf32>
    %744 = arith.addf %739, %743 : vector<32x128xf32>
    %c3_547 = arith.constant 3 : index
    %c4_548 = arith.constant 4 : index
    %745 = memref.load %arg9[%c3_547, %c4_548] : memref<9x9xf32, #tpu.memory_space<smem>>
    %c0_549 = arith.constant 0 : index
    %c128_550 = arith.constant 128 : index
    %c0_551 = arith.constant 0 : index
    %746 = vector.load %arg1[%c0_549, %c128_550, %c0_551] : memref<1x288x128xf32, #tpu.memory_space<vmem>>, vector<1x32x128xf32>
    %747 = vector.shape_cast %746 : vector<1x32x128xf32> to vector<32x128xf32>
    %748 = vector.broadcast %745 : f32 to vector<32x128xf32>
    %749 = arith.mulf %748, %747 : vector<32x128xf32>
    %750 = arith.addf %744, %749 : vector<32x128xf32>
    %c3_552 = arith.constant 3 : index
    %c5_553 = arith.constant 5 : index
    %751 = memref.load %arg8[%c3_552, %c5_553] : memref<9x9xf32, #tpu.memory_space<smem>>
    %c160_554 = arith.constant 160 : index
    %c0_555 = arith.constant 0 : index
    %752 = vector.load %arg13[%c160_554, %c0_555] : memref<288x128xf32, #tpu.memory_space<vmem>>, vector<32x128xf32>
    %753 = vector.broadcast %751 : f32 to vector<32x128xf32>
    %754 = arith.mulf %753, %752 : vector<32x128xf32>
    %755 = arith.addf %750, %754 : vector<32x128xf32>
    %c3_556 = arith.constant 3 : index
    %c5_557 = arith.constant 5 : index
    %756 = memref.load %arg9[%c3_556, %c5_557] : memref<9x9xf32, #tpu.memory_space<smem>>
    %c0_558 = arith.constant 0 : index
    %c160_559 = arith.constant 160 : index
    %c0_560 = arith.constant 0 : index
    %757 = vector.load %arg1[%c0_558, %c160_559, %c0_560] : memref<1x288x128xf32, #tpu.memory_space<vmem>>, vector<1x32x128xf32>
    %758 = vector.shape_cast %757 : vector<1x32x128xf32> to vector<32x128xf32>
    %759 = vector.broadcast %756 : f32 to vector<32x128xf32>
    %760 = arith.mulf %759, %758 : vector<32x128xf32>
    %761 = arith.addf %755, %760 : vector<32x128xf32>
    %c3_561 = arith.constant 3 : index
    %c6_562 = arith.constant 6 : index
    %762 = memref.load %arg8[%c3_561, %c6_562] : memref<9x9xf32, #tpu.memory_space<smem>>
    %c192_563 = arith.constant 192 : index
    %c0_564 = arith.constant 0 : index
    %763 = vector.load %arg13[%c192_563, %c0_564] : memref<288x128xf32, #tpu.memory_space<vmem>>, vector<32x128xf32>
    %764 = vector.broadcast %762 : f32 to vector<32x128xf32>
    %765 = arith.mulf %764, %763 : vector<32x128xf32>
    %766 = arith.addf %761, %765 : vector<32x128xf32>
    %c3_565 = arith.constant 3 : index
    %c6_566 = arith.constant 6 : index
    %767 = memref.load %arg9[%c3_565, %c6_566] : memref<9x9xf32, #tpu.memory_space<smem>>
    %c0_567 = arith.constant 0 : index
    %c192_568 = arith.constant 192 : index
    %c0_569 = arith.constant 0 : index
    %768 = vector.load %arg1[%c0_567, %c192_568, %c0_569] : memref<1x288x128xf32, #tpu.memory_space<vmem>>, vector<1x32x128xf32>
    %769 = vector.shape_cast %768 : vector<1x32x128xf32> to vector<32x128xf32>
    %770 = vector.broadcast %767 : f32 to vector<32x128xf32>
    %771 = arith.mulf %770, %769 : vector<32x128xf32>
    %772 = arith.addf %766, %771 : vector<32x128xf32>
    %c3_570 = arith.constant 3 : index
    %c7_571 = arith.constant 7 : index
    %773 = memref.load %arg8[%c3_570, %c7_571] : memref<9x9xf32, #tpu.memory_space<smem>>
    %c224_572 = arith.constant 224 : index
    %c0_573 = arith.constant 0 : index
    %774 = vector.load %arg13[%c224_572, %c0_573] : memref<288x128xf32, #tpu.memory_space<vmem>>, vector<32x128xf32>
    %775 = vector.broadcast %773 : f32 to vector<32x128xf32>
    %776 = arith.mulf %775, %774 : vector<32x128xf32>
    %777 = arith.addf %772, %776 : vector<32x128xf32>
    %c3_574 = arith.constant 3 : index
    %c7_575 = arith.constant 7 : index
    %778 = memref.load %arg9[%c3_574, %c7_575] : memref<9x9xf32, #tpu.memory_space<smem>>
    %c0_576 = arith.constant 0 : index
    %c224_577 = arith.constant 224 : index
    %c0_578 = arith.constant 0 : index
    %779 = vector.load %arg1[%c0_576, %c224_577, %c0_578] : memref<1x288x128xf32, #tpu.memory_space<vmem>>, vector<1x32x128xf32>
    %780 = vector.shape_cast %779 : vector<1x32x128xf32> to vector<32x128xf32>
    %781 = vector.broadcast %778 : f32 to vector<32x128xf32>
    %782 = arith.mulf %781, %780 : vector<32x128xf32>
    %783 = arith.addf %777, %782 : vector<32x128xf32>
    %c3_579 = arith.constant 3 : index
    %c8_580 = arith.constant 8 : index
    %784 = memref.load %arg8[%c3_579, %c8_580] : memref<9x9xf32, #tpu.memory_space<smem>>
    %c256_581 = arith.constant 256 : index
    %c0_582 = arith.constant 0 : index
    %785 = vector.load %arg13[%c256_581, %c0_582] : memref<288x128xf32, #tpu.memory_space<vmem>>, vector<32x128xf32>
    %786 = vector.broadcast %784 : f32 to vector<32x128xf32>
    %787 = arith.mulf %786, %785 : vector<32x128xf32>
    %788 = arith.addf %783, %787 : vector<32x128xf32>
    %c3_583 = arith.constant 3 : index
    %c8_584 = arith.constant 8 : index
    %789 = memref.load %arg9[%c3_583, %c8_584] : memref<9x9xf32, #tpu.memory_space<smem>>
    %c0_585 = arith.constant 0 : index
    %c256_586 = arith.constant 256 : index
    %c0_587 = arith.constant 0 : index
    %790 = vector.load %arg1[%c0_585, %c256_586, %c0_587] : memref<1x288x128xf32, #tpu.memory_space<vmem>>, vector<1x32x128xf32>
    %791 = vector.shape_cast %790 : vector<1x32x128xf32> to vector<32x128xf32>
    %792 = vector.broadcast %789 : f32 to vector<32x128xf32>
    %793 = arith.mulf %792, %791 : vector<32x128xf32>
    %794 = arith.addf %788, %793 : vector<32x128xf32>
    %c3_588 = arith.constant 3 : index
    %795 = memref.load %arg10[%c3_588] : memref<9xf32, #tpu.memory_space<smem>>
    %796 = vector.broadcast %795 : f32 to vector<32x128xf32>
    %797 = arith.addf %794, %796 : vector<32x128xf32>
    %cst_589 = arith.constant 0.000000e+00 : f32
    %798 = vector.broadcast %cst_589 : f32 to vector<32x128xf32>
    %799 = arith.maximumf %797, %798 : vector<32x128xf32>
    %c0_590 = arith.constant 0 : index
    %c96_591 = arith.constant 96 : index
    %c0_592 = arith.constant 0 : index
    %800 = vector.load %arg11[%c0_590, %c96_591, %c0_592] : memref<1x288x128xf32, #tpu.memory_space<vmem>>, vector<1x32x128xf32>
    %801 = vector.shape_cast %800 : vector<1x32x128xf32> to vector<32x128xf32>
    %802 = vector.shape_cast %799 : vector<32x128xf32> to vector<1x32x128xf32>
    tpu.vector_store %arg11[%c0_590, %c96_591, %c0_592], %802 {strides = array<i32>} : memref<1x288x128xf32, #tpu.memory_space<vmem>>, vector<1x32x128xf32>,
    %cst_593 = arith.constant 0.000000e+00 : f32
    %803 = vector.broadcast %cst_593 : f32 to vector<32x128xf32>
    %c4_594 = arith.constant 4 : index
    %c0_595 = arith.constant 0 : index
    %804 = memref.load %arg8[%c4_594, %c0_595] : memref<9x9xf32, #tpu.memory_space<smem>>
    %c0_596 = arith.constant 0 : index
    %c0_597 = arith.constant 0 : index
    %805 = vector.load %arg13[%c0_596, %c0_597] : memref<288x128xf32, #tpu.memory_space<vmem>>, vector<32x128xf32>
    %806 = vector.broadcast %804 : f32 to vector<32x128xf32>
    %807 = arith.mulf %806, %805 : vector<32x128xf32>
    %808 = arith.addf %803, %807 : vector<32x128xf32>
    %c4_598 = arith.constant 4 : index
    %c0_599 = arith.constant 0 : index
    %809 = memref.load %arg9[%c4_598, %c0_599] : memref<9x9xf32, #tpu.memory_space<smem>>
    %c0_600 = arith.constant 0 : index
    %c0_601 = arith.constant 0 : index
    %c0_602 = arith.constant 0 : index
    %810 = vector.load %arg1[%c0_600, %c0_601, %c0_602] : memref<1x288x128xf32, #tpu.memory_space<vmem>>, vector<1x32x128xf32>
    %811 = vector.shape_cast %810 : vector<1x32x128xf32> to vector<32x128xf32>
    %812 = vector.broadcast %809 : f32 to vector<32x128xf32>
    %813 = arith.mulf %812, %811 : vector<32x128xf32>
    %814 = arith.addf %808, %813 : vector<32x128xf32>
    %c4_603 = arith.constant 4 : index
    %c1_604 = arith.constant 1 : index
    %815 = memref.load %arg8[%c4_603, %c1_604] : memref<9x9xf32, #tpu.memory_space<smem>>
    %c32_605 = arith.constant 32 : index
    %c0_606 = arith.constant 0 : index
    %816 = vector.load %arg13[%c32_605, %c0_606] : memref<288x128xf32, #tpu.memory_space<vmem>>, vector<32x128xf32>
    %817 = vector.broadcast %815 : f32 to vector<32x128xf32>
    %818 = arith.mulf %817, %816 : vector<32x128xf32>
    %819 = arith.addf %814, %818 : vector<32x128xf32>
    %c4_607 = arith.constant 4 : index
    %c1_608 = arith.constant 1 : index
    %820 = memref.load %arg9[%c4_607, %c1_608] : memref<9x9xf32, #tpu.memory_space<smem>>
    %c0_609 = arith.constant 0 : index
    %c32_610 = arith.constant 32 : index
    %c0_611 = arith.constant 0 : index
    %821 = vector.load %arg1[%c0_609, %c32_610, %c0_611] : memref<1x288x128xf32, #tpu.memory_space<vmem>>, vector<1x32x128xf32>
    %822 = vector.shape_cast %821 : vector<1x32x128xf32> to vector<32x128xf32>
    %823 = vector.broadcast %820 : f32 to vector<32x128xf32>
    %824 = arith.mulf %823, %822 : vector<32x128xf32>
    %825 = arith.addf %819, %824 : vector<32x128xf32>
    %c4_612 = arith.constant 4 : index
    %c2_613 = arith.constant 2 : index
    %826 = memref.load %arg8[%c4_612, %c2_613] : memref<9x9xf32, #tpu.memory_space<smem>>
    %c64_614 = arith.constant 64 : index
    %c0_615 = arith.constant 0 : index
    %827 = vector.load %arg13[%c64_614, %c0_615] : memref<288x128xf32, #tpu.memory_space<vmem>>, vector<32x128xf32>
    %828 = vector.broadcast %826 : f32 to vector<32x128xf32>
    %829 = arith.mulf %828, %827 : vector<32x128xf32>
    %830 = arith.addf %825, %829 : vector<32x128xf32>
    %c4_616 = arith.constant 4 : index
    %c2_617 = arith.constant 2 : index
    %831 = memref.load %arg9[%c4_616, %c2_617] : memref<9x9xf32, #tpu.memory_space<smem>>
    %c0_618 = arith.constant 0 : index
    %c64_619 = arith.constant 64 : index
    %c0_620 = arith.constant 0 : index
    %832 = vector.load %arg1[%c0_618, %c64_619, %c0_620] : memref<1x288x128xf32, #tpu.memory_space<vmem>>, vector<1x32x128xf32>
    %833 = vector.shape_cast %832 : vector<1x32x128xf32> to vector<32x128xf32>
    %834 = vector.broadcast %831 : f32 to vector<32x128xf32>
    %835 = arith.mulf %834, %833 : vector<32x128xf32>
    %836 = arith.addf %830, %835 : vector<32x128xf32>
    %c4_621 = arith.constant 4 : index
    %c3_622 = arith.constant 3 : index
    %837 = memref.load %arg8[%c4_621, %c3_622] : memref<9x9xf32, #tpu.memory_space<smem>>
    %c96_623 = arith.constant 96 : index
    %c0_624 = arith.constant 0 : index
    %838 = vector.load %arg13[%c96_623, %c0_624] : memref<288x128xf32, #tpu.memory_space<vmem>>, vector<32x128xf32>
    %839 = vector.broadcast %837 : f32 to vector<32x128xf32>
    %840 = arith.mulf %839, %838 : vector<32x128xf32>
    %841 = arith.addf %836, %840 : vector<32x128xf32>
    %c4_625 = arith.constant 4 : index
    %c3_626 = arith.constant 3 : index
    %842 = memref.load %arg9[%c4_625, %c3_626] : memref<9x9xf32, #tpu.memory_space<smem>>
    %c0_627 = arith.constant 0 : index
    %c96_628 = arith.constant 96 : index
    %c0_629 = arith.constant 0 : index
    %843 = vector.load %arg1[%c0_627, %c96_628, %c0_629] : memref<1x288x128xf32, #tpu.memory_space<vmem>>, vector<1x32x128xf32>
    %844 = vector.shape_cast %843 : vector<1x32x128xf32> to vector<32x128xf32>
    %845 = vector.broadcast %842 : f32 to vector<32x128xf32>
    %846 = arith.mulf %845, %844 : vector<32x128xf32>
    %847 = arith.addf %841, %846 : vector<32x128xf32>
    %c4_630 = arith.constant 4 : index
    %c4_631 = arith.constant 4 : index
    %848 = memref.load %arg8[%c4_630, %c4_631] : memref<9x9xf32, #tpu.memory_space<smem>>
    %c128_632 = arith.constant 128 : index
    %c0_633 = arith.constant 0 : index
    %849 = vector.load %arg13[%c128_632, %c0_633] : memref<288x128xf32, #tpu.memory_space<vmem>>, vector<32x128xf32>
    %850 = vector.broadcast %848 : f32 to vector<32x128xf32>
    %851 = arith.mulf %850, %849 : vector<32x128xf32>
    %852 = arith.addf %847, %851 : vector<32x128xf32>
    %c4_634 = arith.constant 4 : index
    %c4_635 = arith.constant 4 : index
    %853 = memref.load %arg9[%c4_634, %c4_635] : memref<9x9xf32, #tpu.memory_space<smem>>
    %c0_636 = arith.constant 0 : index
    %c128_637 = arith.constant 128 : index
    %c0_638 = arith.constant 0 : index
    %854 = vector.load %arg1[%c0_636, %c128_637, %c0_638] : memref<1x288x128xf32, #tpu.memory_space<vmem>>, vector<1x32x128xf32>
    %855 = vector.shape_cast %854 : vector<1x32x128xf32> to vector<32x128xf32>
    %856 = vector.broadcast %853 : f32 to vector<32x128xf32>
    %857 = arith.mulf %856, %855 : vector<32x128xf32>
    %858 = arith.addf %852, %857 : vector<32x128xf32>
    %c4_639 = arith.constant 4 : index
    %c5_640 = arith.constant 5 : index
    %859 = memref.load %arg8[%c4_639, %c5_640] : memref<9x9xf32, #tpu.memory_space<smem>>
    %c160_641 = arith.constant 160 : index
    %c0_642 = arith.constant 0 : index
    %860 = vector.load %arg13[%c160_641, %c0_642] : memref<288x128xf32, #tpu.memory_space<vmem>>, vector<32x128xf32>
    %861 = vector.broadcast %859 : f32 to vector<32x128xf32>
    %862 = arith.mulf %861, %860 : vector<32x128xf32>
    %863 = arith.addf %858, %862 : vector<32x128xf32>
    %c4_643 = arith.constant 4 : index
    %c5_644 = arith.constant 5 : index
    %864 = memref.load %arg9[%c4_643, %c5_644] : memref<9x9xf32, #tpu.memory_space<smem>>
    %c0_645 = arith.constant 0 : index
    %c160_646 = arith.constant 160 : index
    %c0_647 = arith.constant 0 : index
    %865 = vector.load %arg1[%c0_645, %c160_646, %c0_647] : memref<1x288x128xf32, #tpu.memory_space<vmem>>, vector<1x32x128xf32>
    %866 = vector.shape_cast %865 : vector<1x32x128xf32> to vector<32x128xf32>
    %867 = vector.broadcast %864 : f32 to vector<32x128xf32>
    %868 = arith.mulf %867, %866 : vector<32x128xf32>
    %869 = arith.addf %863, %868 : vector<32x128xf32>
    %c4_648 = arith.constant 4 : index
    %c6_649 = arith.constant 6 : index
    %870 = memref.load %arg8[%c4_648, %c6_649] : memref<9x9xf32, #tpu.memory_space<smem>>
    %c192_650 = arith.constant 192 : index
    %c0_651 = arith.constant 0 : index
    %871 = vector.load %arg13[%c192_650, %c0_651] : memref<288x128xf32, #tpu.memory_space<vmem>>, vector<32x128xf32>
    %872 = vector.broadcast %870 : f32 to vector<32x128xf32>
    %873 = arith.mulf %872, %871 : vector<32x128xf32>
    %874 = arith.addf %869, %873 : vector<32x128xf32>
    %c4_652 = arith.constant 4 : index
    %c6_653 = arith.constant 6 : index
    %875 = memref.load %arg9[%c4_652, %c6_653] : memref<9x9xf32, #tpu.memory_space<smem>>
    %c0_654 = arith.constant 0 : index
    %c192_655 = arith.constant 192 : index
    %c0_656 = arith.constant 0 : index
    %876 = vector.load %arg1[%c0_654, %c192_655, %c0_656] : memref<1x288x128xf32, #tpu.memory_space<vmem>>, vector<1x32x128xf32>
    %877 = vector.shape_cast %876 : vector<1x32x128xf32> to vector<32x128xf32>
    %878 = vector.broadcast %875 : f32 to vector<32x128xf32>
    %879 = arith.mulf %878, %877 : vector<32x128xf32>
    %880 = arith.addf %874, %879 : vector<32x128xf32>
    %c4_657 = arith.constant 4 : index
    %c7_658 = arith.constant 7 : index
    %881 = memref.load %arg8[%c4_657, %c7_658] : memref<9x9xf32, #tpu.memory_space<smem>>
    %c224_659 = arith.constant 224 : index
    %c0_660 = arith.constant 0 : index
    %882 = vector.load %arg13[%c224_659, %c0_660] : memref<288x128xf32, #tpu.memory_space<vmem>>, vector<32x128xf32>
    %883 = vector.broadcast %881 : f32 to vector<32x128xf32>
    %884 = arith.mulf %883, %882 : vector<32x128xf32>
    %885 = arith.addf %880, %884 : vector<32x128xf32>
    %c4_661 = arith.constant 4 : index
    %c7_662 = arith.constant 7 : index
    %886 = memref.load %arg9[%c4_661, %c7_662] : memref<9x9xf32, #tpu.memory_space<smem>>
    %c0_663 = arith.constant 0 : index
    %c224_664 = arith.constant 224 : index
    %c0_665 = arith.constant 0 : index
    %887 = vector.load %arg1[%c0_663, %c224_664, %c0_665] : memref<1x288x128xf32, #tpu.memory_space<vmem>>, vector<1x32x128xf32>
    %888 = vector.shape_cast %887 : vector<1x32x128xf32> to vector<32x128xf32>
    %889 = vector.broadcast %886 : f32 to vector<32x128xf32>
    %890 = arith.mulf %889, %888 : vector<32x128xf32>
    %891 = arith.addf %885, %890 : vector<32x128xf32>
    %c4_666 = arith.constant 4 : index
    %c8_667 = arith.constant 8 : index
    %892 = memref.load %arg8[%c4_666, %c8_667] : memref<9x9xf32, #tpu.memory_space<smem>>
    %c256_668 = arith.constant 256 : index
    %c0_669 = arith.constant 0 : index
    %893 = vector.load %arg13[%c256_668, %c0_669] : memref<288x128xf32, #tpu.memory_space<vmem>>, vector<32x128xf32>
    %894 = vector.broadcast %892 : f32 to vector<32x128xf32>
    %895 = arith.mulf %894, %893 : vector<32x128xf32>
    %896 = arith.addf %891, %895 : vector<32x128xf32>
    %c4_670 = arith.constant 4 : index
    %c8_671 = arith.constant 8 : index
    %897 = memref.load %arg9[%c4_670, %c8_671] : memref<9x9xf32, #tpu.memory_space<smem>>
    %c0_672 = arith.constant 0 : index
    %c256_673 = arith.constant 256 : index
    %c0_674 = arith.constant 0 : index
    %898 = vector.load %arg1[%c0_672, %c256_673, %c0_674] : memref<1x288x128xf32, #tpu.memory_space<vmem>>, vector<1x32x128xf32>
    %899 = vector.shape_cast %898 : vector<1x32x128xf32> to vector<32x128xf32>
    %900 = vector.broadcast %897 : f32 to vector<32x128xf32>
    %901 = arith.mulf %900, %899 : vector<32x128xf32>
    %902 = arith.addf %896, %901 : vector<32x128xf32>
    %c4_675 = arith.constant 4 : index
    %903 = memref.load %arg10[%c4_675] : memref<9xf32, #tpu.memory_space<smem>>
    %904 = vector.broadcast %903 : f32 to vector<32x128xf32>
    %905 = arith.addf %902, %904 : vector<32x128xf32>
    %cst_676 = arith.constant 0.000000e+00 : f32
    %906 = vector.broadcast %cst_676 : f32 to vector<32x128xf32>
    %907 = arith.maximumf %905, %906 : vector<32x128xf32>
    %c0_677 = arith.constant 0 : index
    %c128_678 = arith.constant 128 : index
    %c0_679 = arith.constant 0 : index
    %908 = vector.load %arg11[%c0_677, %c128_678, %c0_679] : memref<1x288x128xf32, #tpu.memory_space<vmem>>, vector<1x32x128xf32>
    %909 = vector.shape_cast %908 : vector<1x32x128xf32> to vector<32x128xf32>
    %910 = vector.shape_cast %907 : vector<32x128xf32> to vector<1x32x128xf32>
    tpu.vector_store %arg11[%c0_677, %c128_678, %c0_679], %910 {strides = array<i32>} : memref<1x288x128xf32, #tpu.memory_space<vmem>>, vector<1x32x128xf32>,
    %cst_680 = arith.constant 0.000000e+00 : f32
    %911 = vector.broadcast %cst_680 : f32 to vector<32x128xf32>
    %c5_681 = arith.constant 5 : index
    %c0_682 = arith.constant 0 : index
    %912 = memref.load %arg8[%c5_681, %c0_682] : memref<9x9xf32, #tpu.memory_space<smem>>
    %c0_683 = arith.constant 0 : index
    %c0_684 = arith.constant 0 : index
    %913 = vector.load %arg13[%c0_683, %c0_684] : memref<288x128xf32, #tpu.memory_space<vmem>>, vector<32x128xf32>
    %914 = vector.broadcast %912 : f32 to vector<32x128xf32>
    %915 = arith.mulf %914, %913 : vector<32x128xf32>
    %916 = arith.addf %911, %915 : vector<32x128xf32>
    %c5_685 = arith.constant 5 : index
    %c0_686 = arith.constant 0 : index
    %917 = memref.load %arg9[%c5_685, %c0_686] : memref<9x9xf32, #tpu.memory_space<smem>>
    %c0_687 = arith.constant 0 : index
    %c0_688 = arith.constant 0 : index
    %c0_689 = arith.constant 0 : index
    %918 = vector.load %arg1[%c0_687, %c0_688, %c0_689] : memref<1x288x128xf32, #tpu.memory_space<vmem>>, vector<1x32x128xf32>
    %919 = vector.shape_cast %918 : vector<1x32x128xf32> to vector<32x128xf32>
    %920 = vector.broadcast %917 : f32 to vector<32x128xf32>
    %921 = arith.mulf %920, %919 : vector<32x128xf32>
    %922 = arith.addf %916, %921 : vector<32x128xf32>
    %c5_690 = arith.constant 5 : index
    %c1_691 = arith.constant 1 : index
    %923 = memref.load %arg8[%c5_690, %c1_691] : memref<9x9xf32, #tpu.memory_space<smem>>
    %c32_692 = arith.constant 32 : index
    %c0_693 = arith.constant 0 : index
    %924 = vector.load %arg13[%c32_692, %c0_693] : memref<288x128xf32, #tpu.memory_space<vmem>>, vector<32x128xf32>
    %925 = vector.broadcast %923 : f32 to vector<32x128xf32>
    %926 = arith.mulf %925, %924 : vector<32x128xf32>
    %927 = arith.addf %922, %926 : vector<32x128xf32>
    %c5_694 = arith.constant 5 : index
    %c1_695 = arith.constant 1 : index
    %928 = memref.load %arg9[%c5_694, %c1_695] : memref<9x9xf32, #tpu.memory_space<smem>>
    %c0_696 = arith.constant 0 : index
    %c32_697 = arith.constant 32 : index
    %c0_698 = arith.constant 0 : index
    %929 = vector.load %arg1[%c0_696, %c32_697, %c0_698] : memref<1x288x128xf32, #tpu.memory_space<vmem>>, vector<1x32x128xf32>
    %930 = vector.shape_cast %929 : vector<1x32x128xf32> to vector<32x128xf32>
    %931 = vector.broadcast %928 : f32 to vector<32x128xf32>
    %932 = arith.mulf %931, %930 : vector<32x128xf32>
    %933 = arith.addf %927, %932 : vector<32x128xf32>
    %c5_699 = arith.constant 5 : index
    %c2_700 = arith.constant 2 : index
    %934 = memref.load %arg8[%c5_699, %c2_700] : memref<9x9xf32, #tpu.memory_space<smem>>
    %c64_701 = arith.constant 64 : index
    %c0_702 = arith.constant 0 : index
    %935 = vector.load %arg13[%c64_701, %c0_702] : memref<288x128xf32, #tpu.memory_space<vmem>>, vector<32x128xf32>
    %936 = vector.broadcast %934 : f32 to vector<32x128xf32>
    %937 = arith.mulf %936, %935 : vector<32x128xf32>
    %938 = arith.addf %933, %937 : vector<32x128xf32>
    %c5_703 = arith.constant 5 : index
    %c2_704 = arith.constant 2 : index
    %939 = memref.load %arg9[%c5_703, %c2_704] : memref<9x9xf32, #tpu.memory_space<smem>>
    %c0_705 = arith.constant 0 : index
    %c64_706 = arith.constant 64 : index
    %c0_707 = arith.constant 0 : index
    %940 = vector.load %arg1[%c0_705, %c64_706, %c0_707] : memref<1x288x128xf32, #tpu.memory_space<vmem>>, vector<1x32x128xf32>
    %941 = vector.shape_cast %940 : vector<1x32x128xf32> to vector<32x128xf32>
    %942 = vector.broadcast %939 : f32 to vector<32x128xf32>
    %943 = arith.mulf %942, %941 : vector<32x128xf32>
    %944 = arith.addf %938, %943 : vector<32x128xf32>
    %c5_708 = arith.constant 5 : index
    %c3_709 = arith.constant 3 : index
    %945 = memref.load %arg8[%c5_708, %c3_709] : memref<9x9xf32, #tpu.memory_space<smem>>
    %c96_710 = arith.constant 96 : index
    %c0_711 = arith.constant 0 : index
    %946 = vector.load %arg13[%c96_710, %c0_711] : memref<288x128xf32, #tpu.memory_space<vmem>>, vector<32x128xf32>
    %947 = vector.broadcast %945 : f32 to vector<32x128xf32>
    %948 = arith.mulf %947, %946 : vector<32x128xf32>
    %949 = arith.addf %944, %948 : vector<32x128xf32>
    %c5_712 = arith.constant 5 : index
    %c3_713 = arith.constant 3 : index
    %950 = memref.load %arg9[%c5_712, %c3_713] : memref<9x9xf32, #tpu.memory_space<smem>>
    %c0_714 = arith.constant 0 : index
    %c96_715 = arith.constant 96 : index
    %c0_716 = arith.constant 0 : index
    %951 = vector.load %arg1[%c0_714, %c96_715, %c0_716] : memref<1x288x128xf32, #tpu.memory_space<vmem>>, vector<1x32x128xf32>
    %952 = vector.shape_cast %951 : vector<1x32x128xf32> to vector<32x128xf32>
    %953 = vector.broadcast %950 : f32 to vector<32x128xf32>
    %954 = arith.mulf %953, %952 : vector<32x128xf32>
    %955 = arith.addf %949, %954 : vector<32x128xf32>
    %c5_717 = arith.constant 5 : index
    %c4_718 = arith.constant 4 : index
    %956 = memref.load %arg8[%c5_717, %c4_718] : memref<9x9xf32, #tpu.memory_space<smem>>
    %c128_719 = arith.constant 128 : index
    %c0_720 = arith.constant 0 : index
    %957 = vector.load %arg13[%c128_719, %c0_720] : memref<288x128xf32, #tpu.memory_space<vmem>>, vector<32x128xf32>
    %958 = vector.broadcast %956 : f32 to vector<32x128xf32>
    %959 = arith.mulf %958, %957 : vector<32x128xf32>
    %960 = arith.addf %955, %959 : vector<32x128xf32>
    %c5_721 = arith.constant 5 : index
    %c4_722 = arith.constant 4 : index
    %961 = memref.load %arg9[%c5_721, %c4_722] : memref<9x9xf32, #tpu.memory_space<smem>>
    %c0_723 = arith.constant 0 : index
    %c128_724 = arith.constant 128 : index
    %c0_725 = arith.constant 0 : index
    %962 = vector.load %arg1[%c0_723, %c128_724, %c0_725] : memref<1x288x128xf32, #tpu.memory_space<vmem>>, vector<1x32x128xf32>
    %963 = vector.shape_cast %962 : vector<1x32x128xf32> to vector<32x128xf32>
    %964 = vector.broadcast %961 : f32 to vector<32x128xf32>
    %965 = arith.mulf %964, %963 : vector<32x128xf32>
    %966 = arith.addf %960, %965 : vector<32x128xf32>
    %c5_726 = arith.constant 5 : index
    %c5_727 = arith.constant 5 : index
    %967 = memref.load %arg8[%c5_726, %c5_727] : memref<9x9xf32, #tpu.memory_space<smem>>
    %c160_728 = arith.constant 160 : index
    %c0_729 = arith.constant 0 : index
    %968 = vector.load %arg13[%c160_728, %c0_729] : memref<288x128xf32, #tpu.memory_space<vmem>>, vector<32x128xf32>
    %969 = vector.broadcast %967 : f32 to vector<32x128xf32>
    %970 = arith.mulf %969, %968 : vector<32x128xf32>
    %971 = arith.addf %966, %970 : vector<32x128xf32>
    %c5_730 = arith.constant 5 : index
    %c5_731 = arith.constant 5 : index
    %972 = memref.load %arg9[%c5_730, %c5_731] : memref<9x9xf32, #tpu.memory_space<smem>>
    %c0_732 = arith.constant 0 : index
    %c160_733 = arith.constant 160 : index
    %c0_734 = arith.constant 0 : index
    %973 = vector.load %arg1[%c0_732, %c160_733, %c0_734] : memref<1x288x128xf32, #tpu.memory_space<vmem>>, vector<1x32x128xf32>
    %974 = vector.shape_cast %973 : vector<1x32x128xf32> to vector<32x128xf32>
    %975 = vector.broadcast %972 : f32 to vector<32x128xf32>
    %976 = arith.mulf %975, %974 : vector<32x128xf32>
    %977 = arith.addf %971, %976 : vector<32x128xf32>
    %c5_735 = arith.constant 5 : index
    %c6_736 = arith.constant 6 : index
    %978 = memref.load %arg8[%c5_735, %c6_736] : memref<9x9xf32, #tpu.memory_space<smem>>
    %c192_737 = arith.constant 192 : index
    %c0_738 = arith.constant 0 : index
    %979 = vector.load %arg13[%c192_737, %c0_738] : memref<288x128xf32, #tpu.memory_space<vmem>>, vector<32x128xf32>
    %980 = vector.broadcast %978 : f32 to vector<32x128xf32>
    %981 = arith.mulf %980, %979 : vector<32x128xf32>
    %982 = arith.addf %977, %981 : vector<32x128xf32>
    %c5_739 = arith.constant 5 : index
    %c6_740 = arith.constant 6 : index
    %983 = memref.load %arg9[%c5_739, %c6_740] : memref<9x9xf32, #tpu.memory_space<smem>>
    %c0_741 = arith.constant 0 : index
    %c192_742 = arith.constant 192 : index
    %c0_743 = arith.constant 0 : index
    %984 = vector.load %arg1[%c0_741, %c192_742, %c0_743] : memref<1x288x128xf32, #tpu.memory_space<vmem>>, vector<1x32x128xf32>
    %985 = vector.shape_cast %984 : vector<1x32x128xf32> to vector<32x128xf32>
    %986 = vector.broadcast %983 : f32 to vector<32x128xf32>
    %987 = arith.mulf %986, %985 : vector<32x128xf32>
    %988 = arith.addf %982, %987 : vector<32x128xf32>
    %c5_744 = arith.constant 5 : index
    %c7_745 = arith.constant 7 : index
    %989 = memref.load %arg8[%c5_744, %c7_745] : memref<9x9xf32, #tpu.memory_space<smem>>
    %c224_746 = arith.constant 224 : index
    %c0_747 = arith.constant 0 : index
    %990 = vector.load %arg13[%c224_746, %c0_747] : memref<288x128xf32, #tpu.memory_space<vmem>>, vector<32x128xf32>
    %991 = vector.broadcast %989 : f32 to vector<32x128xf32>
    %992 = arith.mulf %991, %990 : vector<32x128xf32>
    %993 = arith.addf %988, %992 : vector<32x128xf32>
    %c5_748 = arith.constant 5 : index
    %c7_749 = arith.constant 7 : index
    %994 = memref.load %arg9[%c5_748, %c7_749] : memref<9x9xf32, #tpu.memory_space<smem>>
    %c0_750 = arith.constant 0 : index
    %c224_751 = arith.constant 224 : index
    %c0_752 = arith.constant 0 : index
    %995 = vector.load %arg1[%c0_750, %c224_751, %c0_752] : memref<1x288x128xf32, #tpu.memory_space<vmem>>, vector<1x32x128xf32>
    %996 = vector.shape_cast %995 : vector<1x32x128xf32> to vector<32x128xf32>
    %997 = vector.broadcast %994 : f32 to vector<32x128xf32>
    %998 = arith.mulf %997, %996 : vector<32x128xf32>
    %999 = arith.addf %993, %998 : vector<32x128xf32>
    %c5_753 = arith.constant 5 : index
    %c8_754 = arith.constant 8 : index
    %1000 = memref.load %arg8[%c5_753, %c8_754] : memref<9x9xf32, #tpu.memory_space<smem>>
    %c256_755 = arith.constant 256 : index
    %c0_756 = arith.constant 0 : index
    %1001 = vector.load %arg13[%c256_755, %c0_756] : memref<288x128xf32, #tpu.memory_space<vmem>>, vector<32x128xf32>
    %1002 = vector.broadcast %1000 : f32 to vector<32x128xf32>
    %1003 = arith.mulf %1002, %1001 : vector<32x128xf32>
    %1004 = arith.addf %999, %1003 : vector<32x128xf32>
    %c5_757 = arith.constant 5 : index
    %c8_758 = arith.constant 8 : index
    %1005 = memref.load %arg9[%c5_757, %c8_758] : memref<9x9xf32, #tpu.memory_space<smem>>
    %c0_759 = arith.constant 0 : index
    %c256_760 = arith.constant 256 : index
    %c0_761 = arith.constant 0 : index
    %1006 = vector.load %arg1[%c0_759, %c256_760, %c0_761] : memref<1x288x128xf32, #tpu.memory_space<vmem>>, vector<1x32x128xf32>
    %1007 = vector.shape_cast %1006 : vector<1x32x128xf32> to vector<32x128xf32>
    %1008 = vector.broadcast %1005 : f32 to vector<32x128xf32>
    %1009 = arith.mulf %1008, %1007 : vector<32x128xf32>
    %1010 = arith.addf %1004, %1009 : vector<32x128xf32>
    %c5_762 = arith.constant 5 : index
    %1011 = memref.load %arg10[%c5_762] : memref<9xf32, #tpu.memory_space<smem>>
    %1012 = vector.broadcast %1011 : f32 to vector<32x128xf32>
    %1013 = arith.addf %1010, %1012 : vector<32x128xf32>
    %cst_763 = arith.constant 0.000000e+00 : f32
    %1014 = vector.broadcast %cst_763 : f32 to vector<32x128xf32>
    %1015 = arith.maximumf %1013, %1014 : vector<32x128xf32>
    %c0_764 = arith.constant 0 : index
    %c160_765 = arith.constant 160 : index
    %c0_766 = arith.constant 0 : index
    %1016 = vector.load %arg11[%c0_764, %c160_765, %c0_766] : memref<1x288x128xf32, #tpu.memory_space<vmem>>, vector<1x32x128xf32>
    %1017 = vector.shape_cast %1016 : vector<1x32x128xf32> to vector<32x128xf32>
    %1018 = vector.shape_cast %1015 : vector<32x128xf32> to vector<1x32x128xf32>
    tpu.vector_store %arg11[%c0_764, %c160_765, %c0_766], %1018 {strides = array<i32>} : memref<1x288x128xf32, #tpu.memory_space<vmem>>, vector<1x32x128xf32>,
    %cst_767 = arith.constant 0.000000e+00 : f32
    %1019 = vector.broadcast %cst_767 : f32 to vector<32x128xf32>
    %c6_768 = arith.constant 6 : index
    %c0_769 = arith.constant 0 : index
    %1020 = memref.load %arg8[%c6_768, %c0_769] : memref<9x9xf32, #tpu.memory_space<smem>>
    %c0_770 = arith.constant 0 : index
    %c0_771 = arith.constant 0 : index
    %1021 = vector.load %arg13[%c0_770, %c0_771] : memref<288x128xf32, #tpu.memory_space<vmem>>, vector<32x128xf32>
    %1022 = vector.broadcast %1020 : f32 to vector<32x128xf32>
    %1023 = arith.mulf %1022, %1021 : vector<32x128xf32>
    %1024 = arith.addf %1019, %1023 : vector<32x128xf32>
    %c6_772 = arith.constant 6 : index
    %c0_773 = arith.constant 0 : index
    %1025 = memref.load %arg9[%c6_772, %c0_773] : memref<9x9xf32, #tpu.memory_space<smem>>
    %c0_774 = arith.constant 0 : index
    %c0_775 = arith.constant 0 : index
    %c0_776 = arith.constant 0 : index
    %1026 = vector.load %arg1[%c0_774, %c0_775, %c0_776] : memref<1x288x128xf32, #tpu.memory_space<vmem>>, vector<1x32x128xf32>
    %1027 = vector.shape_cast %1026 : vector<1x32x128xf32> to vector<32x128xf32>
    %1028 = vector.broadcast %1025 : f32 to vector<32x128xf32>
    %1029 = arith.mulf %1028, %1027 : vector<32x128xf32>
    %1030 = arith.addf %1024, %1029 : vector<32x128xf32>
    %c6_777 = arith.constant 6 : index
    %c1_778 = arith.constant 1 : index
    %1031 = memref.load %arg8[%c6_777, %c1_778] : memref<9x9xf32, #tpu.memory_space<smem>>
    %c32_779 = arith.constant 32 : index
    %c0_780 = arith.constant 0 : index
    %1032 = vector.load %arg13[%c32_779, %c0_780] : memref<288x128xf32, #tpu.memory_space<vmem>>, vector<32x128xf32>
    %1033 = vector.broadcast %1031 : f32 to vector<32x128xf32>
    %1034 = arith.mulf %1033, %1032 : vector<32x128xf32>
    %1035 = arith.addf %1030, %1034 : vector<32x128xf32>
    %c6_781 = arith.constant 6 : index
    %c1_782 = arith.constant 1 : index
    %1036 = memref.load %arg9[%c6_781, %c1_782] : memref<9x9xf32, #tpu.memory_space<smem>>
    %c0_783 = arith.constant 0 : index
    %c32_784 = arith.constant 32 : index
    %c0_785 = arith.constant 0 : index
    %1037 = vector.load %arg1[%c0_783, %c32_784, %c0_785] : memref<1x288x128xf32, #tpu.memory_space<vmem>>, vector<1x32x128xf32>
    %1038 = vector.shape_cast %1037 : vector<1x32x128xf32> to vector<32x128xf32>
    %1039 = vector.broadcast %1036 : f32 to vector<32x128xf32>
    %1040 = arith.mulf %1039, %1038 : vector<32x128xf32>
    %1041 = arith.addf %1035, %1040 : vector<32x128xf32>
    %c6_786 = arith.constant 6 : index
    %c2_787 = arith.constant 2 : index
    %1042 = memref.load %arg8[%c6_786, %c2_787] : memref<9x9xf32, #tpu.memory_space<smem>>
    %c64_788 = arith.constant 64 : index
    %c0_789 = arith.constant 0 : index
    %1043 = vector.load %arg13[%c64_788, %c0_789] : memref<288x128xf32, #tpu.memory_space<vmem>>, vector<32x128xf32>
    %1044 = vector.broadcast %1042 : f32 to vector<32x128xf32>
    %1045 = arith.mulf %1044, %1043 : vector<32x128xf32>
    %1046 = arith.addf %1041, %1045 : vector<32x128xf32>
    %c6_790 = arith.constant 6 : index
    %c2_791 = arith.constant 2 : index
    %1047 = memref.load %arg9[%c6_790, %c2_791] : memref<9x9xf32, #tpu.memory_space<smem>>
    %c0_792 = arith.constant 0 : index
    %c64_793 = arith.constant 64 : index
    %c0_794 = arith.constant 0 : index
    %1048 = vector.load %arg1[%c0_792, %c64_793, %c0_794] : memref<1x288x128xf32, #tpu.memory_space<vmem>>, vector<1x32x128xf32>
    %1049 = vector.shape_cast %1048 : vector<1x32x128xf32> to vector<32x128xf32>
    %1050 = vector.broadcast %1047 : f32 to vector<32x128xf32>
    %1051 = arith.mulf %1050, %1049 : vector<32x128xf32>
    %1052 = arith.addf %1046, %1051 : vector<32x128xf32>
    %c6_795 = arith.constant 6 : index
    %c3_796 = arith.constant 3 : index
    %1053 = memref.load %arg8[%c6_795, %c3_796] : memref<9x9xf32, #tpu.memory_space<smem>>
    %c96_797 = arith.constant 96 : index
    %c0_798 = arith.constant 0 : index
    %1054 = vector.load %arg13[%c96_797, %c0_798] : memref<288x128xf32, #tpu.memory_space<vmem>>, vector<32x128xf32>
    %1055 = vector.broadcast %1053 : f32 to vector<32x128xf32>
    %1056 = arith.mulf %1055, %1054 : vector<32x128xf32>
    %1057 = arith.addf %1052, %1056 : vector<32x128xf32>
    %c6_799 = arith.constant 6 : index
    %c3_800 = arith.constant 3 : index
    %1058 = memref.load %arg9[%c6_799, %c3_800] : memref<9x9xf32, #tpu.memory_space<smem>>
    %c0_801 = arith.constant 0 : index
    %c96_802 = arith.constant 96 : index
    %c0_803 = arith.constant 0 : index
    %1059 = vector.load %arg1[%c0_801, %c96_802, %c0_803] : memref<1x288x128xf32, #tpu.memory_space<vmem>>, vector<1x32x128xf32>
    %1060 = vector.shape_cast %1059 : vector<1x32x128xf32> to vector<32x128xf32>
    %1061 = vector.broadcast %1058 : f32 to vector<32x128xf32>
    %1062 = arith.mulf %1061, %1060 : vector<32x128xf32>
    %1063 = arith.addf %1057, %1062 : vector<32x128xf32>
    %c6_804 = arith.constant 6 : index
    %c4_805 = arith.constant 4 : index
    %1064 = memref.load %arg8[%c6_804, %c4_805] : memref<9x9xf32, #tpu.memory_space<smem>>
    %c128_806 = arith.constant 128 : index
    %c0_807 = arith.constant 0 : index
    %1065 = vector.load %arg13[%c128_806, %c0_807] : memref<288x128xf32, #tpu.memory_space<vmem>>, vector<32x128xf32>
    %1066 = vector.broadcast %1064 : f32 to vector<32x128xf32>
    %1067 = arith.mulf %1066, %1065 : vector<32x128xf32>
    %1068 = arith.addf %1063, %1067 : vector<32x128xf32>
    %c6_808 = arith.constant 6 : index
    %c4_809 = arith.constant 4 : index
    %1069 = memref.load %arg9[%c6_808, %c4_809] : memref<9x9xf32, #tpu.memory_space<smem>>
    %c0_810 = arith.constant 0 : index
    %c128_811 = arith.constant 128 : index
    %c0_812 = arith.constant 0 : index
    %1070 = vector.load %arg1[%c0_810, %c128_811, %c0_812] : memref<1x288x128xf32, #tpu.memory_space<vmem>>, vector<1x32x128xf32>
    %1071 = vector.shape_cast %1070 : vector<1x32x128xf32> to vector<32x128xf32>
    %1072 = vector.broadcast %1069 : f32 to vector<32x128xf32>
    %1073 = arith.mulf %1072, %1071 : vector<32x128xf32>
    %1074 = arith.addf %1068, %1073 : vector<32x128xf32>
    %c6_813 = arith.constant 6 : index
    %c5_814 = arith.constant 5 : index
    %1075 = memref.load %arg8[%c6_813, %c5_814] : memref<9x9xf32, #tpu.memory_space<smem>>
    %c160_815 = arith.constant 160 : index
    %c0_816 = arith.constant 0 : index
    %1076 = vector.load %arg13[%c160_815, %c0_816] : memref<288x128xf32, #tpu.memory_space<vmem>>, vector<32x128xf32>
    %1077 = vector.broadcast %1075 : f32 to vector<32x128xf32>
    %1078 = arith.mulf %1077, %1076 : vector<32x128xf32>
    %1079 = arith.addf %1074, %1078 : vector<32x128xf32>
    %c6_817 = arith.constant 6 : index
    %c5_818 = arith.constant 5 : index
    %1080 = memref.load %arg9[%c6_817, %c5_818] : memref<9x9xf32, #tpu.memory_space<smem>>
    %c0_819 = arith.constant 0 : index
    %c160_820 = arith.constant 160 : index
    %c0_821 = arith.constant 0 : index
    %1081 = vector.load %arg1[%c0_819, %c160_820, %c0_821] : memref<1x288x128xf32, #tpu.memory_space<vmem>>, vector<1x32x128xf32>
    %1082 = vector.shape_cast %1081 : vector<1x32x128xf32> to vector<32x128xf32>
    %1083 = vector.broadcast %1080 : f32 to vector<32x128xf32>
    %1084 = arith.mulf %1083, %1082 : vector<32x128xf32>
    %1085 = arith.addf %1079, %1084 : vector<32x128xf32>
    %c6_822 = arith.constant 6 : index
    %c6_823 = arith.constant 6 : index
    %1086 = memref.load %arg8[%c6_822, %c6_823] : memref<9x9xf32, #tpu.memory_space<smem>>
    %c192_824 = arith.constant 192 : index
    %c0_825 = arith.constant 0 : index
    %1087 = vector.load %arg13[%c192_824, %c0_825] : memref<288x128xf32, #tpu.memory_space<vmem>>, vector<32x128xf32>
    %1088 = vector.broadcast %1086 : f32 to vector<32x128xf32>
    %1089 = arith.mulf %1088, %1087 : vector<32x128xf32>
    %1090 = arith.addf %1085, %1089 : vector<32x128xf32>
    %c6_826 = arith.constant 6 : index
    %c6_827 = arith.constant 6 : index
    %1091 = memref.load %arg9[%c6_826, %c6_827] : memref<9x9xf32, #tpu.memory_space<smem>>
    %c0_828 = arith.constant 0 : index
    %c192_829 = arith.constant 192 : index
    %c0_830 = arith.constant 0 : index
    %1092 = vector.load %arg1[%c0_828, %c192_829, %c0_830] : memref<1x288x128xf32, #tpu.memory_space<vmem>>, vector<1x32x128xf32>
    %1093 = vector.shape_cast %1092 : vector<1x32x128xf32> to vector<32x128xf32>
    %1094 = vector.broadcast %1091 : f32 to vector<32x128xf32>
    %1095 = arith.mulf %1094, %1093 : vector<32x128xf32>
    %1096 = arith.addf %1090, %1095 : vector<32x128xf32>
    %c6_831 = arith.constant 6 : index
    %c7_832 = arith.constant 7 : index
    %1097 = memref.load %arg8[%c6_831, %c7_832] : memref<9x9xf32, #tpu.memory_space<smem>>
    %c224_833 = arith.constant 224 : index
    %c0_834 = arith.constant 0 : index
    %1098 = vector.load %arg13[%c224_833, %c0_834] : memref<288x128xf32, #tpu.memory_space<vmem>>, vector<32x128xf32>
    %1099 = vector.broadcast %1097 : f32 to vector<32x128xf32>
    %1100 = arith.mulf %1099, %1098 : vector<32x128xf32>
    %1101 = arith.addf %1096, %1100 : vector<32x128xf32>
    %c6_835 = arith.constant 6 : index
    %c7_836 = arith.constant 7 : index
    %1102 = memref.load %arg9[%c6_835, %c7_836] : memref<9x9xf32, #tpu.memory_space<smem>>
    %c0_837 = arith.constant 0 : index
    %c224_838 = arith.constant 224 : index
    %c0_839 = arith.constant 0 : index
    %1103 = vector.load %arg1[%c0_837, %c224_838, %c0_839] : memref<1x288x128xf32, #tpu.memory_space<vmem>>, vector<1x32x128xf32>
    %1104 = vector.shape_cast %1103 : vector<1x32x128xf32> to vector<32x128xf32>
    %1105 = vector.broadcast %1102 : f32 to vector<32x128xf32>
    %1106 = arith.mulf %1105, %1104 : vector<32x128xf32>
    %1107 = arith.addf %1101, %1106 : vector<32x128xf32>
    %c6_840 = arith.constant 6 : index
    %c8_841 = arith.constant 8 : index
    %1108 = memref.load %arg8[%c6_840, %c8_841] : memref<9x9xf32, #tpu.memory_space<smem>>
    %c256_842 = arith.constant 256 : index
    %c0_843 = arith.constant 0 : index
    %1109 = vector.load %arg13[%c256_842, %c0_843] : memref<288x128xf32, #tpu.memory_space<vmem>>, vector<32x128xf32>
    %1110 = vector.broadcast %1108 : f32 to vector<32x128xf32>
    %1111 = arith.mulf %1110, %1109 : vector<32x128xf32>
    %1112 = arith.addf %1107, %1111 : vector<32x128xf32>
    %c6_844 = arith.constant 6 : index
    %c8_845 = arith.constant 8 : index
    %1113 = memref.load %arg9[%c6_844, %c8_845] : memref<9x9xf32, #tpu.memory_space<smem>>
    %c0_846 = arith.constant 0 : index
    %c256_847 = arith.constant 256 : index
    %c0_848 = arith.constant 0 : index
    %1114 = vector.load %arg1[%c0_846, %c256_847, %c0_848] : memref<1x288x128xf32, #tpu.memory_space<vmem>>, vector<1x32x128xf32>
    %1115 = vector.shape_cast %1114 : vector<1x32x128xf32> to vector<32x128xf32>
    %1116 = vector.broadcast %1113 : f32 to vector<32x128xf32>
    %1117 = arith.mulf %1116, %1115 : vector<32x128xf32>
    %1118 = arith.addf %1112, %1117 : vector<32x128xf32>
    %c6_849 = arith.constant 6 : index
    %1119 = memref.load %arg10[%c6_849] : memref<9xf32, #tpu.memory_space<smem>>
    %1120 = vector.broadcast %1119 : f32 to vector<32x128xf32>
    %1121 = arith.addf %1118, %1120 : vector<32x128xf32>
    %cst_850 = arith.constant 0.000000e+00 : f32
    %1122 = vector.broadcast %cst_850 : f32 to vector<32x128xf32>
    %1123 = arith.maximumf %1121, %1122 : vector<32x128xf32>
    %c0_851 = arith.constant 0 : index
    %c192_852 = arith.constant 192 : index
    %c0_853 = arith.constant 0 : index
    %1124 = vector.load %arg11[%c0_851, %c192_852, %c0_853] : memref<1x288x128xf32, #tpu.memory_space<vmem>>, vector<1x32x128xf32>
    %1125 = vector.shape_cast %1124 : vector<1x32x128xf32> to vector<32x128xf32>
    %1126 = vector.shape_cast %1123 : vector<32x128xf32> to vector<1x32x128xf32>
    tpu.vector_store %arg11[%c0_851, %c192_852, %c0_853], %1126 {strides = array<i32>} : memref<1x288x128xf32, #tpu.memory_space<vmem>>, vector<1x32x128xf32>,
    %cst_854 = arith.constant 0.000000e+00 : f32
    %1127 = vector.broadcast %cst_854 : f32 to vector<32x128xf32>
    %c7_855 = arith.constant 7 : index
    %c0_856 = arith.constant 0 : index
    %1128 = memref.load %arg8[%c7_855, %c0_856] : memref<9x9xf32, #tpu.memory_space<smem>>
    %c0_857 = arith.constant 0 : index
    %c0_858 = arith.constant 0 : index
    %1129 = vector.load %arg13[%c0_857, %c0_858] : memref<288x128xf32, #tpu.memory_space<vmem>>, vector<32x128xf32>
    %1130 = vector.broadcast %1128 : f32 to vector<32x128xf32>
    %1131 = arith.mulf %1130, %1129 : vector<32x128xf32>
    %1132 = arith.addf %1127, %1131 : vector<32x128xf32>
    %c7_859 = arith.constant 7 : index
    %c0_860 = arith.constant 0 : index
    %1133 = memref.load %arg9[%c7_859, %c0_860] : memref<9x9xf32, #tpu.memory_space<smem>>
    %c0_861 = arith.constant 0 : index
    %c0_862 = arith.constant 0 : index
    %c0_863 = arith.constant 0 : index
    %1134 = vector.load %arg1[%c0_861, %c0_862, %c0_863] : memref<1x288x128xf32, #tpu.memory_space<vmem>>, vector<1x32x128xf32>
    %1135 = vector.shape_cast %1134 : vector<1x32x128xf32> to vector<32x128xf32>
    %1136 = vector.broadcast %1133 : f32 to vector<32x128xf32>
    %1137 = arith.mulf %1136, %1135 : vector<32x128xf32>
    %1138 = arith.addf %1132, %1137 : vector<32x128xf32>
    %c7_864 = arith.constant 7 : index
    %c1_865 = arith.constant 1 : index
    %1139 = memref.load %arg8[%c7_864, %c1_865] : memref<9x9xf32, #tpu.memory_space<smem>>
    %c32_866 = arith.constant 32 : index
    %c0_867 = arith.constant 0 : index
    %1140 = vector.load %arg13[%c32_866, %c0_867] : memref<288x128xf32, #tpu.memory_space<vmem>>, vector<32x128xf32>
    %1141 = vector.broadcast %1139 : f32 to vector<32x128xf32>
    %1142 = arith.mulf %1141, %1140 : vector<32x128xf32>
    %1143 = arith.addf %1138, %1142 : vector<32x128xf32>
    %c7_868 = arith.constant 7 : index
    %c1_869 = arith.constant 1 : index
    %1144 = memref.load %arg9[%c7_868, %c1_869] : memref<9x9xf32, #tpu.memory_space<smem>>
    %c0_870 = arith.constant 0 : index
    %c32_871 = arith.constant 32 : index
    %c0_872 = arith.constant 0 : index
    %1145 = vector.load %arg1[%c0_870, %c32_871, %c0_872] : memref<1x288x128xf32, #tpu.memory_space<vmem>>, vector<1x32x128xf32>
    %1146 = vector.shape_cast %1145 : vector<1x32x128xf32> to vector<32x128xf32>
    %1147 = vector.broadcast %1144 : f32 to vector<32x128xf32>
    %1148 = arith.mulf %1147, %1146 : vector<32x128xf32>
    %1149 = arith.addf %1143, %1148 : vector<32x128xf32>
    %c7_873 = arith.constant 7 : index
    %c2_874 = arith.constant 2 : index
    %1150 = memref.load %arg8[%c7_873, %c2_874] : memref<9x9xf32, #tpu.memory_space<smem>>
    %c64_875 = arith.constant 64 : index
    %c0_876 = arith.constant 0 : index
    %1151 = vector.load %arg13[%c64_875, %c0_876] : memref<288x128xf32, #tpu.memory_space<vmem>>, vector<32x128xf32>
    %1152 = vector.broadcast %1150 : f32 to vector<32x128xf32>
    %1153 = arith.mulf %1152, %1151 : vector<32x128xf32>
    %1154 = arith.addf %1149, %1153 : vector<32x128xf32>
    %c7_877 = arith.constant 7 : index
    %c2_878 = arith.constant 2 : index
    %1155 = memref.load %arg9[%c7_877, %c2_878] : memref<9x9xf32, #tpu.memory_space<smem>>
    %c0_879 = arith.constant 0 : index
    %c64_880 = arith.constant 64 : index
    %c0_881 = arith.constant 0 : index
    %1156 = vector.load %arg1[%c0_879, %c64_880, %c0_881] : memref<1x288x128xf32, #tpu.memory_space<vmem>>, vector<1x32x128xf32>
    %1157 = vector.shape_cast %1156 : vector<1x32x128xf32> to vector<32x128xf32>
    %1158 = vector.broadcast %1155 : f32 to vector<32x128xf32>
    %1159 = arith.mulf %1158, %1157 : vector<32x128xf32>
    %1160 = arith.addf %1154, %1159 : vector<32x128xf32>
    %c7_882 = arith.constant 7 : index
    %c3_883 = arith.constant 3 : index
    %1161 = memref.load %arg8[%c7_882, %c3_883] : memref<9x9xf32, #tpu.memory_space<smem>>
    %c96_884 = arith.constant 96 : index
    %c0_885 = arith.constant 0 : index
    %1162 = vector.load %arg13[%c96_884, %c0_885] : memref<288x128xf32, #tpu.memory_space<vmem>>, vector<32x128xf32>
    %1163 = vector.broadcast %1161 : f32 to vector<32x128xf32>
    %1164 = arith.mulf %1163, %1162 : vector<32x128xf32>
    %1165 = arith.addf %1160, %1164 : vector<32x128xf32>
    %c7_886 = arith.constant 7 : index
    %c3_887 = arith.constant 3 : index
    %1166 = memref.load %arg9[%c7_886, %c3_887] : memref<9x9xf32, #tpu.memory_space<smem>>
    %c0_888 = arith.constant 0 : index
    %c96_889 = arith.constant 96 : index
    %c0_890 = arith.constant 0 : index
    %1167 = vector.load %arg1[%c0_888, %c96_889, %c0_890] : memref<1x288x128xf32, #tpu.memory_space<vmem>>, vector<1x32x128xf32>
    %1168 = vector.shape_cast %1167 : vector<1x32x128xf32> to vector<32x128xf32>
    %1169 = vector.broadcast %1166 : f32 to vector<32x128xf32>
    %1170 = arith.mulf %1169, %1168 : vector<32x128xf32>
    %1171 = arith.addf %1165, %1170 : vector<32x128xf32>
    %c7_891 = arith.constant 7 : index
    %c4_892 = arith.constant 4 : index
    %1172 = memref.load %arg8[%c7_891, %c4_892] : memref<9x9xf32, #tpu.memory_space<smem>>
    %c128_893 = arith.constant 128 : index
    %c0_894 = arith.constant 0 : index
    %1173 = vector.load %arg13[%c128_893, %c0_894] : memref<288x128xf32, #tpu.memory_space<vmem>>, vector<32x128xf32>
    %1174 = vector.broadcast %1172 : f32 to vector<32x128xf32>
    %1175 = arith.mulf %1174, %1173 : vector<32x128xf32>
    %1176 = arith.addf %1171, %1175 : vector<32x128xf32>
    %c7_895 = arith.constant 7 : index
    %c4_896 = arith.constant 4 : index
    %1177 = memref.load %arg9[%c7_895, %c4_896] : memref<9x9xf32, #tpu.memory_space<smem>>
    %c0_897 = arith.constant 0 : index
    %c128_898 = arith.constant 128 : index
    %c0_899 = arith.constant 0 : index
    %1178 = vector.load %arg1[%c0_897, %c128_898, %c0_899] : memref<1x288x128xf32, #tpu.memory_space<vmem>>, vector<1x32x128xf32>
    %1179 = vector.shape_cast %1178 : vector<1x32x128xf32> to vector<32x128xf32>
    %1180 = vector.broadcast %1177 : f32 to vector<32x128xf32>
    %1181 = arith.mulf %1180, %1179 : vector<32x128xf32>
    %1182 = arith.addf %1176, %1181 : vector<32x128xf32>
    %c7_900 = arith.constant 7 : index
    %c5_901 = arith.constant 5 : index
    %1183 = memref.load %arg8[%c7_900, %c5_901] : memref<9x9xf32, #tpu.memory_space<smem>>
    %c160_902 = arith.constant 160 : index
    %c0_903 = arith.constant 0 : index
    %1184 = vector.load %arg13[%c160_902, %c0_903] : memref<288x128xf32, #tpu.memory_space<vmem>>, vector<32x128xf32>
    %1185 = vector.broadcast %1183 : f32 to vector<32x128xf32>
    %1186 = arith.mulf %1185, %1184 : vector<32x128xf32>
    %1187 = arith.addf %1182, %1186 : vector<32x128xf32>
    %c7_904 = arith.constant 7 : index
    %c5_905 = arith.constant 5 : index
    %1188 = memref.load %arg9[%c7_904, %c5_905] : memref<9x9xf32, #tpu.memory_space<smem>>
    %c0_906 = arith.constant 0 : index
    %c160_907 = arith.constant 160 : index
    %c0_908 = arith.constant 0 : index
    %1189 = vector.load %arg1[%c0_906, %c160_907, %c0_908] : memref<1x288x128xf32, #tpu.memory_space<vmem>>, vector<1x32x128xf32>
    %1190 = vector.shape_cast %1189 : vector<1x32x128xf32> to vector<32x128xf32>
    %1191 = vector.broadcast %1188 : f32 to vector<32x128xf32>
    %1192 = arith.mulf %1191, %1190 : vector<32x128xf32>
    %1193 = arith.addf %1187, %1192 : vector<32x128xf32>
    %c7_909 = arith.constant 7 : index
    %c6_910 = arith.constant 6 : index
    %1194 = memref.load %arg8[%c7_909, %c6_910] : memref<9x9xf32, #tpu.memory_space<smem>>
    %c192_911 = arith.constant 192 : index
    %c0_912 = arith.constant 0 : index
    %1195 = vector.load %arg13[%c192_911, %c0_912] : memref<288x128xf32, #tpu.memory_space<vmem>>, vector<32x128xf32>
    %1196 = vector.broadcast %1194 : f32 to vector<32x128xf32>
    %1197 = arith.mulf %1196, %1195 : vector<32x128xf32>
    %1198 = arith.addf %1193, %1197 : vector<32x128xf32>
    %c7_913 = arith.constant 7 : index
    %c6_914 = arith.constant 6 : index
    %1199 = memref.load %arg9[%c7_913, %c6_914] : memref<9x9xf32, #tpu.memory_space<smem>>
    %c0_915 = arith.constant 0 : index
    %c192_916 = arith.constant 192 : index
    %c0_917 = arith.constant 0 : index
    %1200 = vector.load %arg1[%c0_915, %c192_916, %c0_917] : memref<1x288x128xf32, #tpu.memory_space<vmem>>, vector<1x32x128xf32>
    %1201 = vector.shape_cast %1200 : vector<1x32x128xf32> to vector<32x128xf32>
    %1202 = vector.broadcast %1199 : f32 to vector<32x128xf32>
    %1203 = arith.mulf %1202, %1201 : vector<32x128xf32>
    %1204 = arith.addf %1198, %1203 : vector<32x128xf32>
    %c7_918 = arith.constant 7 : index
    %c7_919 = arith.constant 7 : index
    %1205 = memref.load %arg8[%c7_918, %c7_919] : memref<9x9xf32, #tpu.memory_space<smem>>
    %c224_920 = arith.constant 224 : index
    %c0_921 = arith.constant 0 : index
    %1206 = vector.load %arg13[%c224_920, %c0_921] : memref<288x128xf32, #tpu.memory_space<vmem>>, vector<32x128xf32>
    %1207 = vector.broadcast %1205 : f32 to vector<32x128xf32>
    %1208 = arith.mulf %1207, %1206 : vector<32x128xf32>
    %1209 = arith.addf %1204, %1208 : vector<32x128xf32>
    %c7_922 = arith.constant 7 : index
    %c7_923 = arith.constant 7 : index
    %1210 = memref.load %arg9[%c7_922, %c7_923] : memref<9x9xf32, #tpu.memory_space<smem>>
    %c0_924 = arith.constant 0 : index
    %c224_925 = arith.constant 224 : index
    %c0_926 = arith.constant 0 : index
    %1211 = vector.load %arg1[%c0_924, %c224_925, %c0_926] : memref<1x288x128xf32, #tpu.memory_space<vmem>>, vector<1x32x128xf32>
    %1212 = vector.shape_cast %1211 : vector<1x32x128xf32> to vector<32x128xf32>
    %1213 = vector.broadcast %1210 : f32 to vector<32x128xf32>
    %1214 = arith.mulf %1213, %1212 : vector<32x128xf32>
    %1215 = arith.addf %1209, %1214 : vector<32x128xf32>
    %c7_927 = arith.constant 7 : index
    %c8_928 = arith.constant 8 : index
    %1216 = memref.load %arg8[%c7_927, %c8_928] : memref<9x9xf32, #tpu.memory_space<smem>>
    %c256_929 = arith.constant 256 : index
    %c0_930 = arith.constant 0 : index
    %1217 = vector.load %arg13[%c256_929, %c0_930] : memref<288x128xf32, #tpu.memory_space<vmem>>, vector<32x128xf32>
    %1218 = vector.broadcast %1216 : f32 to vector<32x128xf32>
    %1219 = arith.mulf %1218, %1217 : vector<32x128xf32>
    %1220 = arith.addf %1215, %1219 : vector<32x128xf32>
    %c7_931 = arith.constant 7 : index
    %c8_932 = arith.constant 8 : index
    %1221 = memref.load %arg9[%c7_931, %c8_932] : memref<9x9xf32, #tpu.memory_space<smem>>
    %c0_933 = arith.constant 0 : index
    %c256_934 = arith.constant 256 : index
    %c0_935 = arith.constant 0 : index
    %1222 = vector.load %arg1[%c0_933, %c256_934, %c0_935] : memref<1x288x128xf32, #tpu.memory_space<vmem>>, vector<1x32x128xf32>
    %1223 = vector.shape_cast %1222 : vector<1x32x128xf32> to vector<32x128xf32>
    %1224 = vector.broadcast %1221 : f32 to vector<32x128xf32>
    %1225 = arith.mulf %1224, %1223 : vector<32x128xf32>
    %1226 = arith.addf %1220, %1225 : vector<32x128xf32>
    %c7_936 = arith.constant 7 : index
    %1227 = memref.load %arg10[%c7_936] : memref<9xf32, #tpu.memory_space<smem>>
    %1228 = vector.broadcast %1227 : f32 to vector<32x128xf32>
    %1229 = arith.addf %1226, %1228 : vector<32x128xf32>
    %cst_937 = arith.constant 0.000000e+00 : f32
    %1230 = vector.broadcast %cst_937 : f32 to vector<32x128xf32>
    %1231 = arith.maximumf %1229, %1230 : vector<32x128xf32>
    %c0_938 = arith.constant 0 : index
    %c224_939 = arith.constant 224 : index
    %c0_940 = arith.constant 0 : index
    %1232 = vector.load %arg11[%c0_938, %c224_939, %c0_940] : memref<1x288x128xf32, #tpu.memory_space<vmem>>, vector<1x32x128xf32>
    %1233 = vector.shape_cast %1232 : vector<1x32x128xf32> to vector<32x128xf32>
    %1234 = vector.shape_cast %1231 : vector<32x128xf32> to vector<1x32x128xf32>
    tpu.vector_store %arg11[%c0_938, %c224_939, %c0_940], %1234 {strides = array<i32>} : memref<1x288x128xf32, #tpu.memory_space<vmem>>, vector<1x32x128xf32>,
    %cst_941 = arith.constant 0.000000e+00 : f32
    %1235 = vector.broadcast %cst_941 : f32 to vector<32x128xf32>
    %c8_942 = arith.constant 8 : index
    %c0_943 = arith.constant 0 : index
    %1236 = memref.load %arg8[%c8_942, %c0_943] : memref<9x9xf32, #tpu.memory_space<smem>>
    %c0_944 = arith.constant 0 : index
    %c0_945 = arith.constant 0 : index
    %1237 = vector.load %arg13[%c0_944, %c0_945] : memref<288x128xf32, #tpu.memory_space<vmem>>, vector<32x128xf32>
    %1238 = vector.broadcast %1236 : f32 to vector<32x128xf32>
    %1239 = arith.mulf %1238, %1237 : vector<32x128xf32>
    %1240 = arith.addf %1235, %1239 : vector<32x128xf32>
    %c8_946 = arith.constant 8 : index
    %c0_947 = arith.constant 0 : index
    %1241 = memref.load %arg9[%c8_946, %c0_947] : memref<9x9xf32, #tpu.memory_space<smem>>
    %c0_948 = arith.constant 0 : index
    %c0_949 = arith.constant 0 : index
    %c0_950 = arith.constant 0 : index
    %1242 = vector.load %arg1[%c0_948, %c0_949, %c0_950] : memref<1x288x128xf32, #tpu.memory_space<vmem>>, vector<1x32x128xf32>
    %1243 = vector.shape_cast %1242 : vector<1x32x128xf32> to vector<32x128xf32>
    %1244 = vector.broadcast %1241 : f32 to vector<32x128xf32>
    %1245 = arith.mulf %1244, %1243 : vector<32x128xf32>
    %1246 = arith.addf %1240, %1245 : vector<32x128xf32>
    %c8_951 = arith.constant 8 : index
    %c1_952 = arith.constant 1 : index
    %1247 = memref.load %arg8[%c8_951, %c1_952] : memref<9x9xf32, #tpu.memory_space<smem>>
    %c32_953 = arith.constant 32 : index
    %c0_954 = arith.constant 0 : index
    %1248 = vector.load %arg13[%c32_953, %c0_954] : memref<288x128xf32, #tpu.memory_space<vmem>>, vector<32x128xf32>
    %1249 = vector.broadcast %1247 : f32 to vector<32x128xf32>
    %1250 = arith.mulf %1249, %1248 : vector<32x128xf32>
    %1251 = arith.addf %1246, %1250 : vector<32x128xf32>
    %c8_955 = arith.constant 8 : index
    %c1_956 = arith.constant 1 : index
    %1252 = memref.load %arg9[%c8_955, %c1_956] : memref<9x9xf32, #tpu.memory_space<smem>>
    %c0_957 = arith.constant 0 : index
    %c32_958 = arith.constant 32 : index
    %c0_959 = arith.constant 0 : index
    %1253 = vector.load %arg1[%c0_957, %c32_958, %c0_959] : memref<1x288x128xf32, #tpu.memory_space<vmem>>, vector<1x32x128xf32>
    %1254 = vector.shape_cast %1253 : vector<1x32x128xf32> to vector<32x128xf32>
    %1255 = vector.broadcast %1252 : f32 to vector<32x128xf32>
    %1256 = arith.mulf %1255, %1254 : vector<32x128xf32>
    %1257 = arith.addf %1251, %1256 : vector<32x128xf32>
    %c8_960 = arith.constant 8 : index
    %c2_961 = arith.constant 2 : index
    %1258 = memref.load %arg8[%c8_960, %c2_961] : memref<9x9xf32, #tpu.memory_space<smem>>
    %c64_962 = arith.constant 64 : index
    %c0_963 = arith.constant 0 : index
    %1259 = vector.load %arg13[%c64_962, %c0_963] : memref<288x128xf32, #tpu.memory_space<vmem>>, vector<32x128xf32>
    %1260 = vector.broadcast %1258 : f32 to vector<32x128xf32>
    %1261 = arith.mulf %1260, %1259 : vector<32x128xf32>
    %1262 = arith.addf %1257, %1261 : vector<32x128xf32>
    %c8_964 = arith.constant 8 : index
    %c2_965 = arith.constant 2 : index
    %1263 = memref.load %arg9[%c8_964, %c2_965] : memref<9x9xf32, #tpu.memory_space<smem>>
    %c0_966 = arith.constant 0 : index
    %c64_967 = arith.constant 64 : index
    %c0_968 = arith.constant 0 : index
    %1264 = vector.load %arg1[%c0_966, %c64_967, %c0_968] : memref<1x288x128xf32, #tpu.memory_space<vmem>>, vector<1x32x128xf32>
    %1265 = vector.shape_cast %1264 : vector<1x32x128xf32> to vector<32x128xf32>
    %1266 = vector.broadcast %1263 : f32 to vector<32x128xf32>
    %1267 = arith.mulf %1266, %1265 : vector<32x128xf32>
    %1268 = arith.addf %1262, %1267 : vector<32x128xf32>
    %c8_969 = arith.constant 8 : index
    %c3_970 = arith.constant 3 : index
    %1269 = memref.load %arg8[%c8_969, %c3_970] : memref<9x9xf32, #tpu.memory_space<smem>>
    %c96_971 = arith.constant 96 : index
    %c0_972 = arith.constant 0 : index
    %1270 = vector.load %arg13[%c96_971, %c0_972] : memref<288x128xf32, #tpu.memory_space<vmem>>, vector<32x128xf32>
    %1271 = vector.broadcast %1269 : f32 to vector<32x128xf32>
    %1272 = arith.mulf %1271, %1270 : vector<32x128xf32>
    %1273 = arith.addf %1268, %1272 : vector<32x128xf32>
    %c8_973 = arith.constant 8 : index
    %c3_974 = arith.constant 3 : index
    %1274 = memref.load %arg9[%c8_973, %c3_974] : memref<9x9xf32, #tpu.memory_space<smem>>
    %c0_975 = arith.constant 0 : index
    %c96_976 = arith.constant 96 : index
    %c0_977 = arith.constant 0 : index
    %1275 = vector.load %arg1[%c0_975, %c96_976, %c0_977] : memref<1x288x128xf32, #tpu.memory_space<vmem>>, vector<1x32x128xf32>
    %1276 = vector.shape_cast %1275 : vector<1x32x128xf32> to vector<32x128xf32>
    %1277 = vector.broadcast %1274 : f32 to vector<32x128xf32>
    %1278 = arith.mulf %1277, %1276 : vector<32x128xf32>
    %1279 = arith.addf %1273, %1278 : vector<32x128xf32>
    %c8_978 = arith.constant 8 : index
    %c4_979 = arith.constant 4 : index
    %1280 = memref.load %arg8[%c8_978, %c4_979] : memref<9x9xf32, #tpu.memory_space<smem>>
    %c128_980 = arith.constant 128 : index
    %c0_981 = arith.constant 0 : index
    %1281 = vector.load %arg13[%c128_980, %c0_981] : memref<288x128xf32, #tpu.memory_space<vmem>>, vector<32x128xf32>
    %1282 = vector.broadcast %1280 : f32 to vector<32x128xf32>
    %1283 = arith.mulf %1282, %1281 : vector<32x128xf32>
    %1284 = arith.addf %1279, %1283 : vector<32x128xf32>
    %c8_982 = arith.constant 8 : index
    %c4_983 = arith.constant 4 : index
    %1285 = memref.load %arg9[%c8_982, %c4_983] : memref<9x9xf32, #tpu.memory_space<smem>>
    %c0_984 = arith.constant 0 : index
    %c128_985 = arith.constant 128 : index
    %c0_986 = arith.constant 0 : index
    %1286 = vector.load %arg1[%c0_984, %c128_985, %c0_986] : memref<1x288x128xf32, #tpu.memory_space<vmem>>, vector<1x32x128xf32>
    %1287 = vector.shape_cast %1286 : vector<1x32x128xf32> to vector<32x128xf32>
    %1288 = vector.broadcast %1285 : f32 to vector<32x128xf32>
    %1289 = arith.mulf %1288, %1287 : vector<32x128xf32>
    %1290 = arith.addf %1284, %1289 : vector<32x128xf32>
    %c8_987 = arith.constant 8 : index
    %c5_988 = arith.constant 5 : index
    %1291 = memref.load %arg8[%c8_987, %c5_988] : memref<9x9xf32, #tpu.memory_space<smem>>
    %c160_989 = arith.constant 160 : index
    %c0_990 = arith.constant 0 : index
    %1292 = vector.load %arg13[%c160_989, %c0_990] : memref<288x128xf32, #tpu.memory_space<vmem>>, vector<32x128xf32>
    %1293 = vector.broadcast %1291 : f32 to vector<32x128xf32>
    %1294 = arith.mulf %1293, %1292 : vector<32x128xf32>
    %1295 = arith.addf %1290, %1294 : vector<32x128xf32>
    %c8_991 = arith.constant 8 : index
    %c5_992 = arith.constant 5 : index
    %1296 = memref.load %arg9[%c8_991, %c5_992] : memref<9x9xf32, #tpu.memory_space<smem>>
    %c0_993 = arith.constant 0 : index
    %c160_994 = arith.constant 160 : index
    %c0_995 = arith.constant 0 : index
    %1297 = vector.load %arg1[%c0_993, %c160_994, %c0_995] : memref<1x288x128xf32, #tpu.memory_space<vmem>>, vector<1x32x128xf32>
    %1298 = vector.shape_cast %1297 : vector<1x32x128xf32> to vector<32x128xf32>
    %1299 = vector.broadcast %1296 : f32 to vector<32x128xf32>
    %1300 = arith.mulf %1299, %1298 : vector<32x128xf32>
    %1301 = arith.addf %1295, %1300 : vector<32x128xf32>
    %c8_996 = arith.constant 8 : index
    %c6_997 = arith.constant 6 : index
    %1302 = memref.load %arg8[%c8_996, %c6_997] : memref<9x9xf32, #tpu.memory_space<smem>>
    %c192_998 = arith.constant 192 : index
    %c0_999 = arith.constant 0 : index
    %1303 = vector.load %arg13[%c192_998, %c0_999] : memref<288x128xf32, #tpu.memory_space<vmem>>, vector<32x128xf32>
    %1304 = vector.broadcast %1302 : f32 to vector<32x128xf32>
    %1305 = arith.mulf %1304, %1303 : vector<32x128xf32>
    %1306 = arith.addf %1301, %1305 : vector<32x128xf32>
    %c8_1000 = arith.constant 8 : index
    %c6_1001 = arith.constant 6 : index
    %1307 = memref.load %arg9[%c8_1000, %c6_1001] : memref<9x9xf32, #tpu.memory_space<smem>>
    %c0_1002 = arith.constant 0 : index
    %c192_1003 = arith.constant 192 : index
    %c0_1004 = arith.constant 0 : index
    %1308 = vector.load %arg1[%c0_1002, %c192_1003, %c0_1004] : memref<1x288x128xf32, #tpu.memory_space<vmem>>, vector<1x32x128xf32>
    %1309 = vector.shape_cast %1308 : vector<1x32x128xf32> to vector<32x128xf32>
    %1310 = vector.broadcast %1307 : f32 to vector<32x128xf32>
    %1311 = arith.mulf %1310, %1309 : vector<32x128xf32>
    %1312 = arith.addf %1306, %1311 : vector<32x128xf32>
    %c8_1005 = arith.constant 8 : index
    %c7_1006 = arith.constant 7 : index
    %1313 = memref.load %arg8[%c8_1005, %c7_1006] : memref<9x9xf32, #tpu.memory_space<smem>>
    %c224_1007 = arith.constant 224 : index
    %c0_1008 = arith.constant 0 : index
    %1314 = vector.load %arg13[%c224_1007, %c0_1008] : memref<288x128xf32, #tpu.memory_space<vmem>>, vector<32x128xf32>
    %1315 = vector.broadcast %1313 : f32 to vector<32x128xf32>
    %1316 = arith.mulf %1315, %1314 : vector<32x128xf32>
    %1317 = arith.addf %1312, %1316 : vector<32x128xf32>
    %c8_1009 = arith.constant 8 : index
    %c7_1010 = arith.constant 7 : index
    %1318 = memref.load %arg9[%c8_1009, %c7_1010] : memref<9x9xf32, #tpu.memory_space<smem>>
    %c0_1011 = arith.constant 0 : index
    %c224_1012 = arith.constant 224 : index
    %c0_1013 = arith.constant 0 : index
    %1319 = vector.load %arg1[%c0_1011, %c224_1012, %c0_1013] : memref<1x288x128xf32, #tpu.memory_space<vmem>>, vector<1x32x128xf32>
    %1320 = vector.shape_cast %1319 : vector<1x32x128xf32> to vector<32x128xf32>
    %1321 = vector.broadcast %1318 : f32 to vector<32x128xf32>
    %1322 = arith.mulf %1321, %1320 : vector<32x128xf32>
    %1323 = arith.addf %1317, %1322 : vector<32x128xf32>
    %c8_1014 = arith.constant 8 : index
    %c8_1015 = arith.constant 8 : index
    %1324 = memref.load %arg8[%c8_1014, %c8_1015] : memref<9x9xf32, #tpu.memory_space<smem>>
    %c256_1016 = arith.constant 256 : index
    %c0_1017 = arith.constant 0 : index
    %1325 = vector.load %arg13[%c256_1016, %c0_1017] : memref<288x128xf32, #tpu.memory_space<vmem>>, vector<32x128xf32>
    %1326 = vector.broadcast %1324 : f32 to vector<32x128xf32>
    %1327 = arith.mulf %1326, %1325 : vector<32x128xf32>
    %1328 = arith.addf %1323, %1327 : vector<32x128xf32>
    %c8_1018 = arith.constant 8 : index
    %c8_1019 = arith.constant 8 : index
    %1329 = memref.load %arg9[%c8_1018, %c8_1019] : memref<9x9xf32, #tpu.memory_space<smem>>
    %c0_1020 = arith.constant 0 : index
    %c256_1021 = arith.constant 256 : index
    %c0_1022 = arith.constant 0 : index
    %1330 = vector.load %arg1[%c0_1020, %c256_1021, %c0_1022] : memref<1x288x128xf32, #tpu.memory_space<vmem>>, vector<1x32x128xf32>
    %1331 = vector.shape_cast %1330 : vector<1x32x128xf32> to vector<32x128xf32>
    %1332 = vector.broadcast %1329 : f32 to vector<32x128xf32>
    %1333 = arith.mulf %1332, %1331 : vector<32x128xf32>
    %1334 = arith.addf %1328, %1333 : vector<32x128xf32>
    %c8_1023 = arith.constant 8 : index
    %1335 = memref.load %arg10[%c8_1023] : memref<9xf32, #tpu.memory_space<smem>>
    %1336 = vector.broadcast %1335 : f32 to vector<32x128xf32>
    %1337 = arith.addf %1334, %1336 : vector<32x128xf32>
    %cst_1024 = arith.constant 0.000000e+00 : f32
    %1338 = vector.broadcast %cst_1024 : f32 to vector<32x128xf32>
    %1339 = arith.maximumf %1337, %1338 : vector<32x128xf32>
    %c0_1025 = arith.constant 0 : index
    %c256_1026 = arith.constant 256 : index
    %c0_1027 = arith.constant 0 : index
    %1340 = vector.load %arg11[%c0_1025, %c256_1026, %c0_1027] : memref<1x288x128xf32, #tpu.memory_space<vmem>>, vector<1x32x128xf32>
    %1341 = vector.shape_cast %1340 : vector<1x32x128xf32> to vector<32x128xf32>
    %1342 = vector.shape_cast %1339 : vector<32x128xf32> to vector<1x32x128xf32>
    tpu.vector_store %arg11[%c0_1025, %c256_1026, %c0_1027], %1342 {strides = array<i32>} : memref<1x288x128xf32, #tpu.memory_space<vmem>>, vector<1x32x128xf32>,
    return
  }
  func.func @transform_0(%arg0: i32) -> (i32, i32, i32) {
    %c0_i32 = arith.constant 0 : i32
    %c0_i32_0 = arith.constant 0 : i32
    %c0_i32_1 = arith.constant 0 : i32
    return %arg0, %c0_i32, %c0_i32_0 : i32, i32, i32
  }
  func.func @transform_1(%arg0: i32) -> (i32, i32, i32) {
    %c0_i32 = arith.constant 0 : i32
    %c0_i32_0 = arith.constant 0 : i32
    %c0_i32_1 = arith.constant 0 : i32
    %c0_i32_2 = arith.constant 0 : i32
    return %c0_i32, %c0_i32_0, %c0_i32_1 : i32, i32, i32
  }
  func.func @transform_2(%arg0: i32) -> (i32, i32) {
    %c0_i32 = arith.constant 0 : i32
    %c0_i32_0 = arith.constant 0 : i32
    %c0_i32_1 = arith.constant 0 : i32
    return %c0_i32, %c0_i32_0 : i32, i32
  }
  func.func @transform_3(%arg0: i32) -> (i32, i32) {
    %c0_i32 = arith.constant 0 : i32
    %c0_i32_0 = arith.constant 0 : i32
    %c0_i32_1 = arith.constant 0 : i32
    return %c0_i32, %c0_i32_0 : i32, i32
  }
  func.func @transform_4(%arg0: i32) -> (i32, i32) {
    %c0_i32 = arith.constant 0 : i32
    %c0_i32_0 = arith.constant 0 : i32
    %c0_i32_1 = arith.constant 0 : i32
    return %c0_i32, %c0_i32_0 : i32, i32
  }
  func.func @transform_5(%arg0: i32) -> (i32, i32) {
    %c0_i32 = arith.constant 0 : i32
    %c0_i32_0 = arith.constant 0 : i32
    %c0_i32_1 = arith.constant 0 : i32
    return %c0_i32, %c0_i32_0 : i32, i32
  }
  func.func @transform_6(%arg0: i32) -> i32 {
    %c0_i32 = arith.constant 0 : i32
    %c0_i32_0 = arith.constant 0 : i32
    return %c0_i32 : i32
  }
  func.func @transform_7(%arg0: i32) -> (i32, i32) {
    %c0_i32 = arith.constant 0 : i32
    %c0_i32_0 = arith.constant 0 : i32
    %c0_i32_1 = arith.constant 0 : i32
    return %c0_i32, %c0_i32_0 : i32, i32
  }
  func.func @transform_8(%arg0: i32) -> (i32, i32) {
    %c0_i32 = arith.constant 0 : i32
    %c0_i32_0 = arith.constant 0 : i32
    %c0_i32_1 = arith.constant 0 : i32
    return %c0_i32, %c0_i32_0 : i32, i32
  }
  func.func @transform_9(%arg0: i32) -> i32 {
    %c0_i32 = arith.constant 0 : i32
    %c0_i32_0 = arith.constant 0 : i32
    return %c0_i32 : i32
  }
  func.func @transform_10(%arg0: i32) -> (i32, i32, i32) {
    %c0_i32 = arith.constant 0 : i32
    %c0_i32_0 = arith.constant 0 : i32
    %c0_i32_1 = arith.constant 0 : i32
    return %arg0, %c0_i32, %c0_i32_0 : i32, i32, i32
  }
}

</mosaic_0001>

<llo_original>
// kernel: ftb_forward.1
$region0: #{ftb_forward.1}
  #allocation0 [shape = 'u32[]', space=smem, size = 0x4, offset = 0x4, fixed_abs, tag = 'smem constant byte address 0x4 - core index']
  #allocation1 [shape = 'u32[144,128]{1,0:T(1,128)}', space=vmem, size = 0x12000, scoped, tag = 'internal scratch']
  #allocation2 [shape = 'f32[160,136]{1,0:T(8,128)}', space=vmem, size = 0x28000, scoped, tag = 'scratch operand']
  #allocation3 [shape = 'f32[288,128]{1,0:T(8,128)}', space=vmem, size = 0x24000, scoped, tag = 'scratch operand']
  %s0 = inlined_call_operand.hbm [shape: f32[2,288,128], index: 0, kind: input, shape index: {}]
  %s1 = inlined_call_operand.hbm [shape: f32[9,9,160], index: 1, kind: input, shape index: {}]
  %s2 = inlined_call_operand.vmem [shape: f32[32,32], index: 2, kind: input, shape index: {}]
  %s3 = inlined_call_operand.vmem [shape: f32[32,1], index: 3, kind: input, shape index: {}]
  %s4 = inlined_call_operand.vmem [shape: f32[9,1], index: 4, kind: input, shape index: {}]
  %s5 = inlined_call_operand.hbm [shape: f32[5,9], index: 5, kind: input, shape index: {}]
  %s6 = inlined_call_operand.vmem [shape: f32[5], index: 6, kind: input, shape index: {}]
  %s7 = inlined_call_operand.vmem [shape: f32[9,9], index: 7, kind: input, shape index: {}]
  %s8 = inlined_call_operand.vmem [shape: f32[9,9], index: 8, kind: input, shape index: {}]
  %s9 = inlined_call_operand.vmem [shape: f32[9], index: 9, kind: input, shape index: {}]
  %s10 = inlined_call_operand.hbm [shape: f32[2,288,128], index: 10, kind: output, shape index: {}]
  %s11 = sld [smem:[#allocation0]]
  $region101: #{ftb_forward.1} parent=0
    _
  %s13 = ssub.s32 1, %s11
  %s14 = scalar_select 0, %s13, %s11
  $region1: #{ftb_forward.1} parent=0
    #allocation4 [shape = 'u8[294912]{0}', space=vmem, size = 0x48000, scoped, tag = 'input window, operand 0']
    #allocation5 [shape = 's32[2]{0}', space=sflag, size = 0x8, scoped, tag = 'scoped memory for ftb_forward.1']
    #allocation6 [shape = 's32[2]{0}', space=sflag, size = 0x8, scoped, tag = 'scoped memory for ftb_forward.1']
    #allocation7 [shape = 's32[2]{0}', space=sflag, size = 0x8, scoped, tag = 'scoped memory for ftb_forward.1']
    #allocation8 [shape = 's32[2]{0}', space=sflag, size = 0x8, scoped, tag = 'scoped memory for ftb_forward.1']
    #allocation9 [shape = 'u8[147456]{0}', space=vmem, size = 0x24000, scoped, tag = 'input window, operand 1, single buffered']
    #allocation10 [shape = 's32[1]{0}', space=sflag, size = 0x4, scoped, tag = 'scoped memory for ftb_forward.1']
    #allocation11 [shape = 'u8[4096]{0}', space=smem, size = 0x1000, scoped, tag = 'input window, operand 5, single buffered']
    #allocation12 [shape = 'u8[512]{0}', space=smem, size = 0x200, scoped, tag = 'input window, operand 6, single buffered']
    #allocation13 [shape = 'u8[8192]{0}', space=smem, size = 0x2000, scoped, tag = 'input window, operand 7, single buffered']
    #allocation14 [shape = 's32[1]{0}', space=sflag, size = 0x4, scoped, tag = 'scoped memory for ftb_forward.1']
    #allocation15 [shape = 'u8[8192]{0}', space=smem, size = 0x2000, scoped, tag = 'input window, operand 8, single buffered']
    #allocation16 [shape = 'u8[512]{0}', space=smem, size = 0x200, scoped, tag = 'input window, operand 9, single buffered']
    #allocation17 [shape = 's32[1]{0}', space=sflag, size = 0x4, scoped, tag = 'scoped memory for ftb_forward.1']
    #allocation18 [shape = 'u8[294912]{0}', space=vmem, size = 0x48000, scoped, tag = 'output window, operand 0']
    %15 = vsyncpa [#allocation5], 0
    %s16 = scalar_lea.sflag [#allocation5], 1
    %17 = vsyncpa %s16, 0
    %18 = vsyncpa [#allocation10], 0
    %19 = vsyncpa [#allocation7], 0
    %20 = vsyncpa [#allocation8], 0
    %21 = vsyncpa [#allocation14], 0
    %22 = vsyncpa [#allocation17], 0
    %23 = vsyncpa [#allocation6], 0
    %s24 = scalar_lea.sflag [#allocation6], 1
    %25 = vsyncpa %s24, 0
    loop: start=0, step=1, limit=4
    $region2: #{ftb_forward.1} parent=1 // loop_pre_header
      _
    $region3: #{ftb_forward.1} parent=1 // loop_header
      %s27 = sphi 0, %s31
      %p28 = scmp.ge.s32.totalorder %s27, 4
      %s37 = sphi 0, %s39
      %s40 = sphi 0, %s37
      %s41 = sphi 0, %s40
      %s57 = sphi 0, %s41
      %s61 = sphi 0, %s61
      %s63 = sphi 0, %s61
      %s64 = sphi 0, %s63
      %s78 = sphi 0, %s64
      %s82 = sphi 0, %s82
      %s84 = sphi 0, %s82
      %s85 = sphi 0, %s84
      %s99 = sphi 0, %s85
      %s103 = sphi 0, %s103
      %s105 = sphi 0, %s103
      %s106 = sphi 0, %s105
      %s120 = sphi 0, %s106
      %s124 = sphi 0, %s124
      %s126 = sphi 0, %s124
      %s127 = sphi 0, %s126
      %s141 = sphi 0, %s127
      %s145 = sphi 0, %s145
      %s147 = sphi 0, %s145
      %s148 = sphi 0, %s147
      %s162 = sphi 0, %s148
      %s166 = sphi 0, %s166
      %s168 = sphi 0, %s166
      %s169 = sphi 0, %s168
      %s183 = sphi 0, %s169
      %s187 = sphi 0, %s187
      %s189 = sphi 0, %s187
      %s190 = sphi 0, %s189
      %s204 = sphi 0, %s190
      %s208 = sphi 0, %s208
      %s210 = sphi 0, %s208
      %s211 = sphi 0, %s210
      %s225 = sphi 0, %s211
      %s229 = sphi 0, %s229
      %s231 = sphi 0, %s229
      %s232 = sphi 0, %s231
      %s246 = sphi 0, %s232
      %s252 = sphi 0, %s254
      %s255 = sphi 0, %s252
      %s256 = sphi 0, %s255
      %s272 = sphi 0, %s256
    $region4: #{ftb_forward.1} parent=1 // loop_header_branch
      %30 = sbr.rel (%p28) target = $region8
    $region5: #{ftb_forward.1} parent=1 // loop_body
      %s32 = ssub.s32 %s27, 1
      %s33 = ssub.s32 %s27, 2
      %s34 = sadd.s32 %s27, 1
      %s35 = ssub.s32 %s27, %s34
      %p36 = scmp.eq.s32.totalorder %s35, 0
      %s38 = sadd.s32 %s37, 1
      %s39 = scalar_select %p36, %s37, %s38
      %p42 = pneg %p36
      %p43 = scmp.eq.s32.totalorder %s27, 1
      %p44 = por %p42, %p43
      %p45 = scmp.ne.s32.totalorder %s37, %s40
      %p46 = scmp.eq.s32.totalorder %s27, 0
      %p47 = por %p45, %p46
      %p48 = scmp.ne.s32.totalorder %s37, %s40
      %p49 = scmp.eq.s32.totalorder %s32, 1
      %p50 = por %p48, %p49
      %p51 = scmp.ne.s32.totalorder %s40, %s41
      %p52 = scmp.eq.s32.totalorder %s32, 0
      %p53 = por %p51, %p52
      %p54 = scmp.ne.s32.totalorder %s40, %s41
      %p55 = scmp.eq.s32.totalorder %s33, 1
      %p56 = por %p54, %p55
      %p58 = scmp.ne.s32.totalorder %s41, %s57
      %p59 = scmp.eq.s32.totalorder %s33, 0
      %p60 = por %p58, %p59
      %s62 = sadd.s32 %s61, 1
      %p65 = scmp.eq.s32.totalorder %s27, 1
      %p66 = scmp.ne.s32.totalorder %s61, %s63
      %p67 = scmp.eq.s32.totalorder %s27, 0
      %p68 = por %p66, %p67
      %p69 = scmp.ne.s32.totalorder %s61, %s63
      %p70 = scmp.eq.s32.totalorder %s32, 1
      %p71 = por %p69, %p70
      %p72 = scmp.ne.s32.totalorder %s63, %s64
      %p73 = scmp.eq.s32.totalorder %s32, 0
      %p74 = por %p72, %p73
      %p75 = scmp.ne.s32.totalorder %s63, %s64
      %p76 = scmp.eq.s32.totalorder %s33, 1
      %p77 = por %p75, %p76
      %p79 = scmp.ne.s32.totalorder %s64, %s78
      %p80 = scmp.eq.s32.totalorder %s33, 0
      %p81 = por %p79, %p80
      %s83 = sadd.s32 %s82, 1
      %p86 = scmp.eq.s32.totalorder %s27, 1
      %p87 = scmp.ne.s32.totalorder %s82, %s84
      %p88 = scmp.eq.s32.totalorder %s27, 0
      %p89 = por %p87, %p88
      %p90 = scmp.ne.s32.totalorder %s82, %s84
      %p91 = scmp.eq.s32.totalorder %s32, 1
      %p92 = por %p90, %p91
      %p93 = scmp.ne.s32.totalorder %s84, %s85
      %p94 = scmp.eq.s32.totalorder %s32, 0
      %p95 = por %p93, %p94
      %p96 = scmp.ne.s32.totalorder %s84, %s85
      %p97 = scmp.eq.s32.totalorder %s33, 1
      %p98 = por %p96, %p97
      %p100 = scmp.ne.s32.totalorder %s85, %s99
      %p101 = scmp.eq.s32.totalorder %s33, 0
      %p102 = por %p100, %p101
      %s104 = sadd.s32 %s103, 1
      %p107 = scmp.eq.s32.totalorder %s27, 1
      %p108 = scmp.ne.s32.totalorder %s103, %s105
      %p109 = scmp.eq.s32.totalorder %s27, 0
      %p110 = por %p108, %p109
      %p111 = scmp.ne.s32.totalorder %s103, %s105
      %p112 = scmp.eq.s32.totalorder %s32, 1
      %p113 = por %p111, %p112
      %p114 = scmp.ne.s32.totalorder %s105, %s106
      %p115 = scmp.eq.s32.totalorder %s32, 0
      %p116 = por %p114, %p115
      %p117 = scmp.ne.s32.totalorder %s105, %s106
      %p118 = scmp.eq.s32.totalorder %s33, 1
      %p119 = por %p117, %p118
      %p121 = scmp.ne.s32.totalorder %s106, %s120
      %p122 = scmp.eq.s32.totalorder %s33, 0
      %p123 = por %p121, %p122
      %s125 = sadd.s32 %s124, 1
      %p128 = scmp.eq.s32.totalorder %s27, 1
      %p129 = scmp.ne.s32.totalorder %s124, %s126
      %p130 = scmp.eq.s32.totalorder %s27, 0
      %p131 = por %p129, %p130
      %p132 = scmp.ne.s32.totalorder %s124, %s126
      %p133 = scmp.eq.s32.totalorder %s32, 1
      %p134 = por %p132, %p133
      %p135 = scmp.ne.s32.totalorder %s126, %s127
      %p136 = scmp.eq.s32.totalorder %s32, 0
      %p137 = por %p135, %p136
      %p138 = scmp.ne.s32.totalorder %s126, %s127
      %p139 = scmp.eq.s32.totalorder %s33, 1
      %p140 = por %p138, %p139
      %p142 = scmp.ne.s32.totalorder %s127, %s141
      %p143 = scmp.eq.s32.totalorder %s33, 0
      %p144 = por %p142, %p143
      %s146 = sadd.s32 %s145, 1
      %p149 = scmp.eq.s32.totalorder %s27, 1
      %p150 = scmp.ne.s32.totalorder %s145, %s147
      %p151 = scmp.eq.s32.totalorder %s27, 0
      %p152 = por %p150, %p151
      %p153 = scmp.ne.s32.totalorder %s145, %s147
      %p154 = scmp.eq.s32.totalorder %s32, 1
      %p155 = por %p153, %p154
      %p156 = scmp.ne.s32.totalorder %s147, %s148
      %p157 = scmp.eq.s32.totalorder %s32, 0
      %p158 = por %p156, %p157
      %p159 = scmp.ne.s32.totalorder %s147, %s148
      %p160 = scmp.eq.s32.totalorder %s33, 1
      %p161 = por %p159, %p160
      %p163 = scmp.ne.s32.totalorder %s148, %s162
      %p164 = scmp.eq.s32.totalorder %s33, 0
      %p165 = por %p163, %p164
      %s167 = sadd.s32 %s166, 1
      %p170 = scmp.eq.s32.totalorder %s27, 1
      %p171 = scmp.ne.s32.totalorder %s166, %s168
      %p172 = scmp.eq.s32.totalorder %s27, 0
      %p173 = por %p171, %p172
      %p174 = scmp.ne.s32.totalorder %s166, %s168
      %p175 = scmp.eq.s32.totalorder %s32, 1
      %p176 = por %p174, %p175
      %p177 = scmp.ne.s32.totalorder %s168, %s169
      %p178 = scmp.eq.s32.totalorder %s32, 0
      %p179 = por %p177, %p178
      %p180 = scmp.ne.s32.totalorder %s168, %s169
      %p181 = scmp.eq.s32.totalorder %s33, 1
      %p182 = por %p180, %p181
      %p184 = scmp.ne.s32.totalorder %s169, %s183
      %p185 = scmp.eq.s32.totalorder %s33, 0
      %p186 = por %p184, %p185
      %s188 = sadd.s32 %s187, 1
      %p191 = scmp.eq.s32.totalorder %s27, 1
      %p192 = scmp.ne.s32.totalorder %s187, %s189
      %p193 = scmp.eq.s32.totalorder %s27, 0
      %p194 = por %p192, %p193
      %p195 = scmp.ne.s32.totalorder %s187, %s189
      %p196 = scmp.eq.s32.totalorder %s32, 1
      %p197 = por %p195, %p196
      %p198 = scmp.ne.s32.totalorder %s189, %s190
      %p199 = scmp.eq.s32.totalorder %s32, 0
      %p200 = por %p198, %p199
      %p201 = scmp.ne.s32.totalorder %s189, %s190
      %p202 = scmp.eq.s32.totalorder %s33, 1
      %p203 = por %p201, %p202
      %p205 = scmp.ne.s32.totalorder %s190, %s204
      %p206 = scmp.eq.s32.totalorder %s33, 0
      %p207 = por %p205, %p206
      %s209 = sadd.s32 %s208, 1
      %p212 = scmp.eq.s32.totalorder %s27, 1
      %p213 = scmp.ne.s32.totalorder %s208, %s210
      %p214 = scmp.eq.s32.totalorder %s27, 0
      %p215 = por %p213, %p214
      %p216 = scmp.ne.s32.totalorder %s208, %s210
      %p217 = scmp.eq.s32.totalorder %s32, 1
      %p218 = por %p216, %p217
      %p219 = scmp.ne.s32.totalorder %s210, %s211
      %p220 = scmp.eq.s32.totalorder %s32, 0
      %p221 = por %p219, %p220
      %p222 = scmp.ne.s32.totalorder %s210, %s211
      %p223 = scmp.eq.s32.totalorder %s33, 1
      %p224 = por %p222, %p223
      %p226 = scmp.ne.s32.totalorder %s211, %s225
      %p227 = scmp.eq.s32.totalorder %s33, 0
      %p228 = por %p226, %p227
      %s230 = sadd.s32 %s229, 1
      %p233 = scmp.eq.s32.totalorder %s27, 1
      %p234 = scmp.ne.s32.totalorder %s229, %s231
      %p235 = scmp.eq.s32.totalorder %s27, 0
      %p236 = por %p234, %p235
      %p237 = scmp.ne.s32.totalorder %s229, %s231
      %p238 = scmp.eq.s32.totalorder %s32, 1
      %p239 = por %p237, %p238
      %p240 = scmp.ne.s32.totalorder %s231, %s232
      %p241 = scmp.eq.s32.totalorder %s32, 0
      %p242 = por %p240, %p241
      %p243 = scmp.ne.s32.totalorder %s231, %s232
      %p244 = scmp.eq.s32.totalorder %s33, 1
      %p245 = por %p243, %p244
      %p247 = scmp.ne.s32.totalorder %s232, %s246
      %p248 = scmp.eq.s32.totalorder %s33, 0
      %p249 = por %p247, %p248
      %s250 = ssub.s32 %s27, %s34
      %p251 = scmp.eq.s32.totalorder %s250, 0
      %s253 = sadd.s32 %s252, 1
      %s254 = scalar_select %p251, %s252, %s253
      %p257 = pneg %p251
      %p258 = scmp.eq.s32.totalorder %s27, 1
      %p259 = por %p257, %p258
      %p260 = scmp.ne.s32.totalorder %s252, %s255
      %p261 = scmp.eq.s32.totalorder %s27, 0
      %p262 = por %p260, %p261
      %p263 = scmp.ne.s32.totalorder %s252, %s255
      %p264 = scmp.eq.s32.totalorder %s32, 1
      %p265 = por %p263, %p264
      %p266 = scmp.ne.s32.totalorder %s255, %s256
      %p267 = scmp.eq.s32.totalorder %s32, 0
      %p268 = por %p266, %p267
      %p269 = scmp.ne.s32.totalorder %s255, %s256
      %p270 = scmp.eq.s32.totalorder %s33, 1
      %p271 = por %p269, %p270
      %p273 = scmp.ne.s32.totalorder %s256, %s272
      %p274 = scmp.eq.s32.totalorder %s33, 0
      %p275 = por %p273, %p274
      %p276 = scmp.le.s32.totalorder 1, %s27
      %p277 = scmp.lt.s32.totalorder %s27, 3
      %p278 = pnand %p276, %p277
      %p279 = pneg %p278
      // Predicated region
      $region9: #{ftb_forward.1} parent=5 // pred_check
        _
      $region10: #{ftb_forward.1} parent=5 // pred_check_branch
        %281 = sbr.rel (%p278) target = $region12
      $region11: #{ftb_forward.1} parent=5 // pred_region
        %s282 = ssub.s32 %s27, 1
        // Predicated region
        $region13: #{ftb_forward.1} parent=11 // pred_check
          %p283 = pneg %p74
        $region14: #{ftb_forward.1} parent=11 // pred_check_branch
          %285 = sbr.rel (%p283) target = $region16
        $region15: #{ftb_forward.1} parent=11 // pred_region
          %s287 = ssub.s32 4608, 4608
          %288 = vsyncadd [#allocation10], %s287
          %s289 = sshll.u32 [#allocation9], 4
          %s290 = int_to_ptr.vmem [resolvable:$true] %s289
          %295 = dma.hbm_to_vmem [thread:$0]  %s1, 4608, %s290, [#allocation10], 256, 256, 16
        $region16: #{ftb_forward.1} parent=11 // pred_fallthru
          _
        // Predicated region
        $region17: #{ftb_forward.1} parent=11 // pred_check
          %p296 = pneg %p95
        $region18: #{ftb_forward.1} parent=11 // pred_check_branch
          %298 = sbr.rel (%p296) target = $region20
        $region19: #{ftb_forward.1} parent=11 // pred_region
          _
        $region20: #{ftb_forward.1} parent=11 // pred_fallthru
          _
        // Predicated region
        $region21: #{ftb_forward.1} parent=11 // pred_check
          %p299 = pneg %p116
        $region22: #{ftb_forward.1} parent=11 // pred_check_branch
          %301 = sbr.rel (%p299) target = $region24
        $region23: #{ftb_forward.1} parent=11 // pred_region
          _
        $region24: #{ftb_forward.1} parent=11 // pred_fallthru
          _
        // Predicated region
        $region25: #{ftb_forward.1} parent=11 // pred_check
          %p302 = pneg %p137
        $region26: #{ftb_forward.1} parent=11 // pred_check_branch
          %304 = sbr.rel (%p302) target = $region28
        $region27: #{ftb_forward.1} parent=11 // pred_region
          _
        $region28: #{ftb_forward.1} parent=11 // pred_fallthru
          _
        // Predicated region
        $region29: #{ftb_forward.1} parent=11 // pred_check
          %p305 = pneg %p158
        $region30: #{ftb_forward.1} parent=11 // pred_check_branch
          %307 = sbr.rel (%p305) target = $region32
        $region31: #{ftb_forward.1} parent=11 // pred_region
          %s309 = ssub.s32 128, 128
          %310 = vsyncadd [#allocation7], %s309
          %313 = dma.hbm_to_smem %s5, 128, [#allocation11], [#allocation7]
        $region32: #{ftb_forward.1} parent=11 // pred_fallthru
          _
        // Predicated region
        $region33: #{ftb_forward.1} parent=11 // pred_check
          %p314 = pneg %p179
        $region34: #{ftb_forward.1} parent=11 // pred_check_branch
          %316 = sbr.rel (%p314) target = $region36
        $region35: #{ftb_forward.1} parent=11 // pred_region
          %s318 = ssub.s32 16, 16
          %319 = vsyncadd [#allocation8], %s318
          %s321 = sshll.u32 %s6, 4
          %s322 = int_to_ptr.vmem [resolvable:$true] %s321
          %324 = dma.vmem_to_smem %s322, 16, [#allocation12], [#allocation8]
        $region36: #{ftb_forward.1} parent=11 // pred_fallthru
          _
        // Predicated region
        $region37: #{ftb_forward.1} parent=11 // pred_check
          %p325 = pneg %p200
        $region38: #{ftb_forward.1} parent=11 // pred_check_branch
          %327 = sbr.rel (%p325) target = $region40
        $region39: #{ftb_forward.1} parent=11 // pred_region
          %s329 = ssub.s32 256, 256
          %330 = vsyncadd [#allocation14], %s329
          %s331 = sshll.u32 %s7, 4
          %s332 = int_to_ptr.vmem [resolvable:$true] %s331
          %337 = dma.vmem_to_smem %s332, 256, [#allocation13], [#allocation14], 128, 128, 8
        $region40: #{ftb_forward.1} parent=11 // pred_fallthru
          _
        // Predicated region
        $region41: #{ftb_forward.1} parent=11 // pred_check
          %p338 = pneg %p221
        $region42: #{ftb_forward.1} parent=11 // pred_check_branch
          %340 = sbr.rel (%p338) target = $region44
        $region43: #{ftb_forward.1} parent=11 // pred_region
          %s342 = ssub.s32 256, 256
          %343 = vsyncadd [#allocation14], %s342
          %s344 = sshll.u32 %s8, 4
          %s345 = int_to_ptr.vmem [resolvable:$true] %s344
          %350 = dma.vmem_to_smem %s345, 256, [#allocation15], [#allocation14], 128, 128, 8
        $region44: #{ftb_forward.1} parent=11 // pred_fallthru
          _
        // Predicated region
        $region45: #{ftb_forward.1} parent=11 // pred_check
          %p351 = pneg %p242
        $region46: #{ftb_forward.1} parent=11 // pred_check_branch
          %353 = sbr.rel (%p351) target = $region48
        $region47: #{ftb_forward.1} parent=11 // pred_region
          %s355 = ssub.s32 16, 16
          %356 = vsyncadd [#allocation17], %s355
          %s358 = sshll.u32 %s9, 4
          %s359 = int_to_ptr.vmem [resolvable:$true] %s358
          %361 = dma.vmem_to_smem %s359, 16, [#allocation16], [#allocation17]
        $region48: #{ftb_forward.1} parent=11 // pred_fallthru
          _
      $region12: #{ftb_forward.1} parent=5 // pred_fallthru
        _
      %p362 = scmp.lt.s32.totalorder %s27, 2
      // Predicated region
      $region49: #{ftb_forward.1} parent=5 // pred_check
        %p363 = pneg %p362
      $region50: #{ftb_forward.1} parent=5 // pred_check_branch
        %365 = sbr.rel (%p363) target = $region52
      $region51: #{ftb_forward.1} parent=5 // pred_region
        // Predicated region
        $region53: #{ftb_forward.1} parent=51 // pred_check
          %p366 = pneg %p47
        $region54: #{ftb_forward.1} parent=51 // pred_check_branch
          %368 = sbr.rel (%p366) target = $region56
        $region55: #{ftb_forward.1} parent=51 // pred_region
          %s369 = sand.u32 %s37, 1
          %s370 = scalar_lea.sflag [#allocation5], %s369
          %s371 = sand.u32 %s37, 1
          %s372 = smul.addr %s371, 288
          %s373 = scalar_lea.vmem [#allocation4], %s372
          %s375 = ssub.s32 4608, 4608
          %376 = vsyncadd %s370, %s375
          %s377 = smul.addr %s27, 36
          %s378 = smul.addr %s377, 128
          %s379 = scalar_lea.hbm %s0, %s378
          %s380 = sshll.u32 %s373, 4
          %s381 = int_to_ptr.vmem [resolvable:$true] %s380
          %386 = dma.hbm_to_vmem [thread:$0]  %s379, 4608, %s381, %s370, 128, 128, 8
        $region56: #{ftb_forward.1} parent=51 // pred_fallthru
          _
      $region52: #{ftb_forward.1} parent=5 // pred_fallthru
        _
      %p387 = scmp.le.s32.totalorder 1, %s27
      %p388 = scmp.lt.s32.totalorder %s27, 3
      %p389 = pnand %p387, %p388
      %p390 = pneg %p389
      // Predicated region
      $region57: #{ftb_forward.1} parent=5 // pred_check
        _
      $region58: #{ftb_forward.1} parent=5 // pred_check_branch
        %392 = sbr.rel (%p389) target = $region60
      $region59: #{ftb_forward.1} parent=5 // pred_region
        %s393 = ssub.s32 %s27, 1
        %s394 = sand.u32 %s40, 1
        %s395 = scalar_lea.sflag [#allocation5], %s394
        %s396 = sand.u32 %s40, 1
        %s397 = smul.addr %s396, 288
        %s398 = scalar_lea.vmem [#allocation4], %s397
        // Predicated region
        $region61: #{ftb_forward.1} parent=59 // pred_check
          %p399 = pneg %p53
        $region62: #{ftb_forward.1} parent=59 // pred_check_branch
          %401 = sbr.rel (%p399) target = $region64
        $region63: #{ftb_forward.1} parent=59 // pred_region
          %402 = dma.done %s395, 4608
        $region64: #{ftb_forward.1} parent=59 // pred_fallthru
          _
        // Predicated region
        $region65: #{ftb_forward.1} parent=59 // pred_check
          %p403 = pneg %p74
        $region66: #{ftb_forward.1} parent=59 // pred_check_branch
          %405 = sbr.rel (%p403) target = $region68
        $region67: #{ftb_forward.1} parent=59 // pred_region
          %406 = dma.done [#allocation10], 4608
        $region68: #{ftb_forward.1} parent=59 // pred_fallthru
          _
        // Predicated region
        $region69: #{ftb_forward.1} parent=59 // pred_check
          %p407 = pneg %p158
        $region70: #{ftb_forward.1} parent=59 // pred_check_branch
          %409 = sbr.rel (%p407) target = $region72
        $region71: #{ftb_forward.1} parent=59 // pred_region
          %410 = dma.done [#allocation7], 128
        $region72: #{ftb_forward.1} parent=59 // pred_fallthru
          _
        // Predicated region
        $region73: #{ftb_forward.1} parent=59 // pred_check
          %p411 = pneg %p179
        $region74: #{ftb_forward.1} parent=59 // pred_check_branch
          %413 = sbr.rel (%p411) target = $region76
        $region75: #{ftb_forward.1} parent=59 // pred_region
          %414 = dma.done [#allocation8], 16
        $region76: #{ftb_forward.1} parent=59 // pred_fallthru
          _
        // Predicated region
        $region77: #{ftb_forward.1} parent=59 // pred_check
          %p415 = pneg %p200
        $region78: #{ftb_forward.1} parent=59 // pred_check_branch
          %417 = sbr.rel (%p415) target = $region80
        $region79: #{ftb_forward.1} parent=59 // pred_region
          %418 = dma.done [#allocation14], 256
        $region80: #{ftb_forward.1} parent=59 // pred_fallthru
          _
        // Predicated region
        $region81: #{ftb_forward.1} parent=59 // pred_check
          %p419 = pneg %p221
        $region82: #{ftb_forward.1} parent=59 // pred_check_branch
          %421 = sbr.rel (%p419) target = $region84
        $region83: #{ftb_forward.1} parent=59 // pred_region
          %422 = dma.done [#allocation14], 256
        $region84: #{ftb_forward.1} parent=59 // pred_fallthru
          _
        // Predicated region
        $region85: #{ftb_forward.1} parent=59 // pred_check
          %p423 = pneg %p242
        $region86: #{ftb_forward.1} parent=59 // pred_check_branch
          %425 = sbr.rel (%p423) target = $region88
        $region87: #{ftb_forward.1} parent=59 // pred_region
          %426 = dma.done [#allocation17], 16
        $region88: #{ftb_forward.1} parent=59 // pred_fallthru
          _
        %427 = sfence
        %s428 = sand.u32 %s40, 1
        %s429 = scalar_lea.sflag [#allocation5], %s428
        %s430 = sand.u32 %s40, 1
        %s431 = smul.addr %s430, 288
        %s432 = scalar_lea.vmem [#allocation4], %s431
        %p433 = pneg %p53
        %p434 = pneg %p50
        %p435 = pneg %p74
        %p436 = pneg %p71
        %p437 = pneg %p95
        %p438 = pneg %p92
        %p439 = pneg %p116
        %p440 = pneg %p113
        %p441 = pneg %p137
        %p442 = pneg %p134
        %p443 = pneg %p158
        %p444 = pneg %p155
        %p445 = pneg %p179
        %p446 = pneg %p176
        %p447 = pneg %p200
        %p448 = pneg %p197
        %p449 = pneg %p221
        %p450 = pneg %p218
        %p451 = pneg %p242
        %p452 = pneg %p239
        %p453 = pneg %p268
        %p454 = pneg %p265
        %s455 = sand.u32 %s255, 1
        %s456 = scalar_lea.sflag [#allocation6], %s455
        %s457 = sand.u32 %s255, 1
        %s458 = smul.addr %s457, 288
        %s459 = scalar_lea.vmem [#allocation18], %s458
        %vm460 = vcmask 31744
        %461 = vst.msk [vmem:[#allocation2] sm:$0xff] %vm460, 0.0
        %462 = vst.msk [vmem:[#allocation2 + $0x10] sm:$0xff] %vm460, 0.0
        %463 = vst.msk [vmem:[#allocation2 + $0x20] sm:$0xff] %vm460, 0.0
        %464 = vst.msk [vmem:[#allocation2 + $0x30] sm:$0xff] %vm460, 0.0
        %465 = vst.msk [vmem:[#allocation2 + $0x40] sm:$0xff] %vm460, 0.0
        %466 = vst.msk [vmem:[#allocation2 + $0x50] sm:$0xff] %vm460, 0.0
        %467 = vst.msk [vmem:[#allocation2 + $0x60] sm:$0xff] %vm460, 0.0
        %468 = vst.msk [vmem:[#allocation2 + $0x70] sm:$0xff] %vm460, 0.0
        %469 = vst.msk [vmem:[#allocation2 + $0x80] sm:$0xff] %vm460, 0.0
        %470 = vst.msk [vmem:[#allocation2 + $0x90] sm:$0xff] %vm460, 0.0
        %471 = vst.msk [vmem:[#allocation2 + $0xa0] sm:$0xff] %vm460, 0.0
        %472 = vst.msk [vmem:[#allocation2 + $0xb0] sm:$0xff] %vm460, 0.0
        %473 = vst.msk [vmem:[#allocation2 + $0xc0] sm:$0xff] %vm460, 0.0
        %474 = vst.msk [vmem:[#allocation2 + $0xd0] sm:$0xff] %vm460, 0.0
        %475 = vst.msk [vmem:[#allocation2 + $0xe0] sm:$0xff] %vm460, 0.0
        %476 = vst.msk [vmem:[#allocation2 + $0xf0] sm:$0xff] %vm460, 0.0
        %477 = vst.msk [vmem:[#allocation2 + $0x100] sm:$0xff] %vm460, 0.0
        %478 = vst.msk [vmem:[#allocation2 + $0x110] sm:$0xff] %vm460, 0.0
        %479 = vst.msk [vmem:[#allocation2 + $0x120] sm:$0xff] %vm460, 0.0
        %480 = vst.msk [vmem:[#allocation2 + $0x130] sm:$0xff] %vm460, 0.0
        %vm481 = vcmask 64544
        %482 = vst.msk [vmem:[#allocation2 + $0x8] sm:$0xff] %vm481, 0.0
        %483 = vst.msk [vmem:[#allocation2 + $0x18] sm:$0xff] %vm481, 0.0
        %484 = vst.msk [vmem:[#allocation2 + $0x28] sm:$0xff] %vm481, 0.0
        %485 = vst.msk [vmem:[#allocation2 + $0x38] sm:$0xff] %vm481, 0.0
        %486 = vst.msk [vmem:[#allocation2 + $0x48] sm:$0xff] %vm481, 0.0
        %487 = vst.msk [vmem:[#allocation2 + $0x58] sm:$0xff] %vm481, 0.0
        %488 = vst.msk [vmem:[#allocation2 + $0x68] sm:$0xff] %vm481, 0.0
        %489 = vst.msk [vmem:[#allocation2 + $0x78] sm:$0xff] %vm481, 0.0
        %490 = vst.msk [vmem:[#allocation2 + $0x88] sm:$0xff] %vm481, 0.0
        %491 = vst.msk [vmem:[#allocation2 + $0x98] sm:$0xff] %vm481, 0.0
        %492 = vst.msk [vmem:[#allocation2 + $0xa8] sm:$0xff] %vm481, 0.0
        %493 = vst.msk [vmem:[#allocation2 + $0xb8] sm:$0xff] %vm481, 0.0
        %494 = vst.msk [vmem:[#allocation2 + $0xc8] sm:$0xff] %vm481, 0.0
        %495 = vst.msk [vmem:[#allocation2 + $0xd8] sm:$0xff] %vm481, 0.0
        %496 = vst.msk [vmem:[#allocation2 + $0xe8] sm:$0xff] %vm481, 0.0
        %497 = vst.msk [vmem:[#allocation2 + $0xf8] sm:$0xff] %vm481, 0.0
        %498 = vst.msk [vmem:[#allocation2 + $0x108] sm:$0xff] %vm481, 0.0
        %499 = vst.msk [vmem:[#allocation2 + $0x118] sm:$0xff] %vm481, 0.0
        %500 = vst.msk [vmem:[#allocation2 + $0x128] sm:$0xff] %vm481, 0.0
        %501 = vst.msk [vmem:[#allocation2 + $0x138] sm:$0xff] %vm481, 0.0
        %v502 = vld [vmem:[%s398] sm:$0xff]
        %v503 = vld [vmem:[%s398 + $0x8] sm:$0xff]
        %v504 = vld [vmem:[%s398 + $0x10] sm:$0xff]
        %v505 = vld [vmem:[%s398 + $0x18] sm:$0xff]
        %s506 = sld [smem:[#allocation11]]
        %v507 = vstv %s506
        %v508 = vmul.f32 %v507, %v502
        %v509 = vmul.f32 %v507, %v503
        %v510 = vmul.f32 %v507, %v504
        %v511 = vmul.f32 %v507, %v505
        %v512 = vadd.f32 %v508, 0.0
        %v513 = vadd.f32 %v509, 0.0
        %v514 = vadd.f32 %v510, 0.0
        %v515 = vadd.f32 %v511, 0.0
        %s516 = sld [smem:[#allocation11 + $0x80]]
        %v517 = vstv %s516
        %v518 = vmul.f32 %v517, %v502
        %v519 = vmul.f32 %v517, %v503
        %v520 = vmul.f32 %v517, %v504
        %v521 = vmul.f32 %v517, %v505
        %v522 = vadd.f32 %v518, 0.0
        %v523 = vadd.f32 %v519, 0.0
        %v524 = vadd.f32 %v520, 0.0
        %v525 = vadd.f32 %v521, 0.0
        %s526 = sld [smem:[#allocation11 + $0x100]]
        %v527 = vstv %s526
        %v528 = vmul.f32 %v527, %v502
        %v529 = vmul.f32 %v527, %v503
        %v530 = vmul.f32 %v527, %v504
        %v531 = vmul.f32 %v527, %v505
        %v532 = vadd.f32 %v528, 0.0
        %v533 = vadd.f32 %v529, 0.0
        %v534 = vadd.f32 %v530, 0.0
        %v535 = vadd.f32 %v531, 0.0
        %s536 = sld [smem:[#allocation11 + $0x180]]
        %v537 = vstv %s536
        %v538 = vmul.f32 %v537, %v502
        %v539 = vmul.f32 %v537, %v503
        %v540 = vmul.f32 %v537, %v504
        %v541 = vmul.f32 %v537, %v505
        %v542 = vadd.f32 %v538, 0.0
        %v543 = vadd.f32 %v539, 0.0
        %v544 = vadd.f32 %v540, 0.0
        %v545 = vadd.f32 %v541, 0.0
        %s546 = sld [smem:[#allocation11 + $0x200]]
        %v547 = vstv %s546
        %v548 = vmul.f32 %v547, %v502
        %v549 = vmul.f32 %v547, %v503
        %v550 = vmul.f32 %v547, %v504
        %v551 = vmul.f32 %v547, %v505
        %v552 = vadd.f32 %v548, 0.0
        %v553 = vadd.f32 %v549, 0.0
        %v554 = vadd.f32 %v550, 0.0
        %v555 = vadd.f32 %v551, 0.0
        %v556 = vld [vmem:[%s398 + $0x20] sm:$0xff]
        %v557 = vld [vmem:[%s398 + $0x28] sm:$0xff]
        %v558 = vld [vmem:[%s398 + $0x30] sm:$0xff]
        %v559 = vld [vmem:[%s398 + $0x38] sm:$0xff]
        %s560 = sld [smem:[#allocation11 + $0x1]]
        %v561 = vstv %s560
        %v562 = vmul.f32 %v561, %v556
        %v563 = vmul.f32 %v561, %v557
        %v564 = vmul.f32 %v561, %v558
        %v565 = vmul.f32 %v561, %v559
        %v566 = vadd.f32 %v512, %v562
        %v567 = vadd.f32 %v513, %v563
        %v568 = vadd.f32 %v514, %v564
        %v569 = vadd.f32 %v515, %v565
        %s570 = sld [smem:[#allocation11 + $0x81]]
        %v571 = vstv %s570
        %v572 = vmul.f32 %v571, %v556
        %v573 = vmul.f32 %v571, %v557
        %v574 = vmul.f32 %v571, %v558
        %v575 = vmul.f32 %v571, %v559
        %v576 = vadd.f32 %v522, %v572
        %v577 = vadd.f32 %v523, %v573
        %v578 = vadd.f32 %v524, %v574
        %v579 = vadd.f32 %v525, %v575
        %s580 = sld [smem:[#allocation11 + $0x101]]
        %v581 = vstv %s580
        %v582 = vmul.f32 %v581, %v556
        %v583 = vmul.f32 %v581, %v557
        %v584 = vmul.f32 %v581, %v558
        %v585 = vmul.f32 %v581, %v559
        %v586 = vadd.f32 %v532, %v582
        %v587 = vadd.f32 %v533, %v583
        %v588 = vadd.f32 %v534, %v584
        %v589 = vadd.f32 %v535, %v585
        %s590 = sld [smem:[#allocation11 + $0x181]]
        %v591 = vstv %s590
        %v592 = vmul.f32 %v591, %v556
        %v593 = vmul.f32 %v591, %v557
        %v594 = vmul.f32 %v591, %v558
        %v595 = vmul.f32 %v591, %v559
        %v596 = vadd.f32 %v542, %v592
        %v597 = vadd.f32 %v543, %v593
        %v598 = vadd.f32 %v544, %v594
        %v599 = vadd.f32 %v545, %v595
        %s600 = sld [smem:[#allocation11 + $0x201]]
        %v601 = vstv %s600
        %v602 = vmul.f32 %v601, %v556
        %v603 = vmul.f32 %v601, %v557
        %v604 = vmul.f32 %v601, %v558
        %v605 = vmul.f32 %v601, %v559
        %v606 = vadd.f32 %v552, %v602
        %v607 = vadd.f32 %v553, %v603
        %v608 = vadd.f32 %v554, %v604
        %v609 = vadd.f32 %v555, %v605
        %v610 = vld [vmem:[%s398 + $0x40] sm:$0xff]
        %v611 = vld [vmem:[%s398 + $0x48] sm:$0xff]
        %v612 = vld [vmem:[%s398 + $0x50] sm:$0xff]
        %v613 = vld [vmem:[%s398 + $0x58] sm:$0xff]
        %s614 = sld [smem:[#allocation11 + $0x2]]
        %v615 = vstv %s614
        %v616 = vmul.f32 %v615, %v610
        %v617 = vmul.f32 %v615, %v611
        %v618 = vmul.f32 %v615, %v612
        %v619 = vmul.f32 %v615, %v613
        %v620 = vadd.f32 %v566, %v616
        %v621 = vadd.f32 %v567, %v617
        %v622 = vadd.f32 %v568, %v618
        %v623 = vadd.f32 %v569, %v619
        %s624 = sld [smem:[#allocation11 + $0x82]]
        %v625 = vstv %s624
        %v626 = vmul.f32 %v625, %v610
        %v627 = vmul.f32 %v625, %v611
        %v628 = vmul.f32 %v625, %v612
        %v629 = vmul.f32 %v625, %v613
        %v630 = vadd.f32 %v576, %v626
        %v631 = vadd.f32 %v577, %v627
        %v632 = vadd.f32 %v578, %v628
        %v633 = vadd.f32 %v579, %v629
        %s634 = sld [smem:[#allocation11 + $0x102]]
        %v635 = vstv %s634
        %v636 = vmul.f32 %v635, %v610
        %v637 = vmul.f32 %v635, %v611
        %v638 = vmul.f32 %v635, %v612
        %v639 = vmul.f32 %v635, %v613
        %v640 = vadd.f32 %v586, %v636
        %v641 = vadd.f32 %v587, %v637
        %v642 = vadd.f32 %v588, %v638
        %v643 = vadd.f32 %v589, %v639
        %s644 = sld [smem:[#allocation11 + $0x182]]
        %v645 = vstv %s644
        %v646 = vmul.f32 %v645, %v610
        %v647 = vmul.f32 %v645, %v611
        %v648 = vmul.f32 %v645, %v612
        %v649 = vmul.f32 %v645, %v613
        %v650 = vadd.f32 %v596, %v646
        %v651 = vadd.f32 %v597, %v647
        %v652 = vadd.f32 %v598, %v648
        %v653 = vadd.f32 %v599, %v649
        %s654 = sld [smem:[#allocation11 + $0x202]]
        %v655 = vstv %s654
        %v656 = vmul.f32 %v655, %v610
        %v657 = vmul.f32 %v655, %v611
        %v658 = vmul.f32 %v655, %v612
        %v659 = vmul.f32 %v655, %v613
        %v660 = vadd.f32 %v606, %v656
        %v661 = vadd.f32 %v607, %v657
        %v662 = vadd.f32 %v608, %v658
        %v663 = vadd.f32 %v609, %v659
        %v664 = vld [vmem:[%s398 + $0x60] sm:$0xff]
        %v665 = vld [vmem:[%s398 + $0x68] sm:$0xff]
        %v666 = vld [vmem:[%s398 + $0x70] sm:$0xff]
        %v667 = vld [vmem:[%s398 + $0x78] sm:$0xff]
        %s668 = sld [smem:[#allocation11 + $0x3]]
        %v669 = vstv %s668
        %v670 = vmul.f32 %v669, %v664
        %v671 = vmul.f32 %v669, %v665
        %v672 = vmul.f32 %v669, %v666
        %v673 = vmul.f32 %v669, %v667
        %v674 = vadd.f32 %v620, %v670
        %v675 = vadd.f32 %v621, %v671
        %v676 = vadd.f32 %v622, %v672
        %v677 = vadd.f32 %v623, %v673
        %s678 = sld [smem:[#allocation11 + $0x83]]
        %v679 = vstv %s678
        %v680 = vmul.f32 %v679, %v664
        %v681 = vmul.f32 %v679, %v665
        %v682 = vmul.f32 %v679, %v666
        %v683 = vmul.f32 %v679, %v667
        %v684 = vadd.f32 %v630, %v680
        %v685 = vadd.f32 %v631, %v681
        %v686 = vadd.f32 %v632, %v682
        %v687 = vadd.f32 %v633, %v683
        %s688 = sld [smem:[#allocation11 + $0x103]]
        %v689 = vstv %s688
        %v690 = vmul.f32 %v689, %v664
        %v691 = vmul.f32 %v689, %v665
        %v692 = vmul.f32 %v689, %v666
        %v693 = vmul.f32 %v689, %v667
        %v694 = vadd.f32 %v640, %v690
        %v695 = vadd.f32 %v641, %v691
        %v696 = vadd.f32 %v642, %v692
        %v697 = vadd.f32 %v643, %v693
        %s698 = sld [smem:[#allocation11 + $0x183]]
        %v699 = vstv %s698
        %v700 = vmul.f32 %v699, %v664
        %v701 = vmul.f32 %v699, %v665
        %v702 = vmul.f32 %v699, %v666
        %v703 = vmul.f32 %v699, %v667
        %v704 = vadd.f32 %v650, %v700
        %v705 = vadd.f32 %v651, %v701
        %v706 = vadd.f32 %v652, %v702
        %v707 = vadd.f32 %v653, %v703
        %s708 = sld [smem:[#allocation11 + $0x203]]
        %v709 = vstv %s708
        %v710 = vmul.f32 %v709, %v664
        %v711 = vmul.f32 %v709, %v665
        %v712 = vmul.f32 %v709, %v666
        %v713 = vmul.f32 %v709, %v667
        %v714 = vadd.f32 %v660, %v710
        %v715 = vadd.f32 %v661, %v711
        %v716 = vadd.f32 %v662, %v712
        %v717 = vadd.f32 %v663, %v713
        %v718 = vld [vmem:[%s398 + $0x80] sm:$0xff]
        %v719 = vld [vmem:[%s398 + $0x88] sm:$0xff]
        %v720 = vld [vmem:[%s398 + $0x90] sm:$0xff]
        %v721 = vld [vmem:[%s398 + $0x98] sm:$0xff]
        %s722 = sld [smem:[#allocation11 + $0x4]]
        %v723 = vstv %s722
        %v724 = vmul.f32 %v723, %v718
        %v725 = vmul.f32 %v723, %v719
        %v726 = vmul.f32 %v723, %v720
        %v727 = vmul.f32 %v723, %v721
        %v728 = vadd.f32 %v674, %v724
        %v729 = vadd.f32 %v675, %v725
        %v730 = vadd.f32 %v676, %v726
        %v731 = vadd.f32 %v677, %v727
        %s732 = sld [smem:[#allocation11 + $0x84]]
        %v733 = vstv %s732
        %v734 = vmul.f32 %v733, %v718
        %v735 = vmul.f32 %v733, %v719
        %v736 = vmul.f32 %v733, %v720
        %v737 = vmul.f32 %v733, %v721
        %v738 = vadd.f32 %v684, %v734
        %v739 = vadd.f32 %v685, %v735
        %v740 = vadd.f32 %v686, %v736
        %v741 = vadd.f32 %v687, %v737
        %s742 = sld [smem:[#allocation11 + $0x104]]
        %v743 = vstv %s742
        %v744 = vmul.f32 %v743, %v718
        %v745 = vmul.f32 %v743, %v719
        %v746 = vmul.f32 %v743, %v720
        %v747 = vmul.f32 %v743, %v721
        %v748 = vadd.f32 %v694, %v744
        %v749 = vadd.f32 %v695, %v745
        %v750 = vadd.f32 %v696, %v746
        %v751 = vadd.f32 %v697, %v747
        %s752 = sld [smem:[#allocation11 + $0x184]]
        %v753 = vstv %s752
        %v754 = vmul.f32 %v753, %v718
        %v755 = vmul.f32 %v753, %v719
        %v756 = vmul.f32 %v753, %v720
        %v757 = vmul.f32 %v753, %v721
        %v758 = vadd.f32 %v704, %v754
        %v759 = vadd.f32 %v705, %v755
        %v760 = vadd.f32 %v706, %v756
        %v761 = vadd.f32 %v707, %v757
        %s762 = sld [smem:[#allocation11 + $0x204]]
        %v763 = vstv %s762
        %v764 = vmul.f32 %v763, %v718
        %v765 = vmul.f32 %v763, %v719
        %v766 = vmul.f32 %v763, %v720
        %v767 = vmul.f32 %v763, %v721
        %v768 = vadd.f32 %v714, %v764
        %v769 = vadd.f32 %v715, %v765
        %v770 = vadd.f32 %v716, %v766
        %v771 = vadd.f32 %v717, %v767
        %v772 = vld [vmem:[%s398 + $0xa0] sm:$0xff]
        %v773 = vld [vmem:[%s398 + $0xa8] sm:$0xff]
        %v774 = vld [vmem:[%s398 + $0xb0] sm:$0xff]
        %v775 = vld [vmem:[%s398 + $0xb8] sm:$0xff]
        %s776 = sld [smem:[#allocation11 + $0x5]]
        %v777 = vstv %s776
        %v778 = vmul.f32 %v777, %v772
        %v779 = vmul.f32 %v777, %v773
        %v780 = vmul.f32 %v777, %v774
        %v781 = vmul.f32 %v777, %v775
        %v782 = vadd.f32 %v728, %v778
        %v783 = vadd.f32 %v729, %v779
        %v784 = vadd.f32 %v730, %v780
        %v785 = vadd.f32 %v731, %v781
        %s786 = sld [smem:[#allocation11 + $0x85]]
        %v787 = vstv %s786
        %v788 = vmul.f32 %v787, %v772
        %v789 = vmul.f32 %v787, %v773
        %v790 = vmul.f32 %v787, %v774
        %v791 = vmul.f32 %v787, %v775
        %v792 = vadd.f32 %v738, %v788
        %v793 = vadd.f32 %v739, %v789
        %v794 = vadd.f32 %v740, %v790
        %v795 = vadd.f32 %v741, %v791
        %s796 = sld [smem:[#allocation11 + $0x105]]
        %v797 = vstv %s796
        %v798 = vmul.f32 %v797, %v772
        %v799 = vmul.f32 %v797, %v773
        %v800 = vmul.f32 %v797, %v774
        %v801 = vmul.f32 %v797, %v775
        %v802 = vadd.f32 %v748, %v798
        %v803 = vadd.f32 %v749, %v799
        %v804 = vadd.f32 %v750, %v800
        %v805 = vadd.f32 %v751, %v801
        %s806 = sld [smem:[#allocation11 + $0x185]]
        %v807 = vstv %s806
        %v808 = vmul.f32 %v807, %v772
        %v809 = vmul.f32 %v807, %v773
        %v810 = vmul.f32 %v807, %v774
        %v811 = vmul.f32 %v807, %v775
        %v812 = vadd.f32 %v758, %v808
        %v813 = vadd.f32 %v759, %v809
        %v814 = vadd.f32 %v760, %v810
        %v815 = vadd.f32 %v761, %v811
        %s816 = sld [smem:[#allocation11 + $0x205]]
        %v817 = vstv %s816
        %v818 = vmul.f32 %v817, %v772
        %v819 = vmul.f32 %v817, %v773
        %v820 = vmul.f32 %v817, %v774
        %v821 = vmul.f32 %v817, %v775
        %v822 = vadd.f32 %v768, %v818
        %v823 = vadd.f32 %v769, %v819
        %v824 = vadd.f32 %v770, %v820
        %v825 = vadd.f32 %v771, %v821
        %v826 = vld [vmem:[%s398 + $0xc0] sm:$0xff]
        %v827 = vld [vmem:[%s398 + $0xc8] sm:$0xff]
        %v828 = vld [vmem:[%s398 + $0xd0] sm:$0xff]
        %v829 = vld [vmem:[%s398 + $0xd8] sm:$0xff]
        %s830 = sld [smem:[#allocation11 + $0x6]]
        %v831 = vstv %s830
        %v832 = vmul.f32 %v831, %v826
        %v833 = vmul.f32 %v831, %v827
        %v834 = vmul.f32 %v831, %v828
        %v835 = vmul.f32 %v831, %v829
        %v836 = vadd.f32 %v782, %v832
        %v837 = vadd.f32 %v783, %v833
        %v838 = vadd.f32 %v784, %v834
        %v839 = vadd.f32 %v785, %v835
        %s840 = sld [smem:[#allocation11 + $0x86]]
        %v841 = vstv %s840
        %v842 = vmul.f32 %v841, %v826
        %v843 = vmul.f32 %v841, %v827
        %v844 = vmul.f32 %v841, %v828
        %v845 = vmul.f32 %v841, %v829
        %v846 = vadd.f32 %v792, %v842
        %v847 = vadd.f32 %v793, %v843
        %v848 = vadd.f32 %v794, %v844
        %v849 = vadd.f32 %v795, %v845
        %s850 = sld [smem:[#allocation11 + $0x106]]
        %v851 = vstv %s850
        %v852 = vmul.f32 %v851, %v826
        %v853 = vmul.f32 %v851, %v827
        %v854 = vmul.f32 %v851, %v828
        %v855 = vmul.f32 %v851, %v829
        %v856 = vadd.f32 %v802, %v852
        %v857 = vadd.f32 %v803, %v853
        %v858 = vadd.f32 %v804, %v854
        %v859 = vadd.f32 %v805, %v855
        %s860 = sld [smem:[#allocation11 + $0x186]]
        %v861 = vstv %s860
        %v862 = vmul.f32 %v861, %v826
        %v863 = vmul.f32 %v861, %v827
        %v864 = vmul.f32 %v861, %v828
        %v865 = vmul.f32 %v861, %v829
        %v866 = vadd.f32 %v812, %v862
        %v867 = vadd.f32 %v813, %v863
        %v868 = vadd.f32 %v814, %v864
        %v869 = vadd.f32 %v815, %v865
        %s870 = sld [smem:[#allocation11 + $0x206]]
        %v871 = vstv %s870
        %v872 = vmul.f32 %v871, %v826
        %v873 = vmul.f32 %v871, %v827
        %v874 = vmul.f32 %v871, %v828
        %v875 = vmul.f32 %v871, %v829
        %v876 = vadd.f32 %v822, %v872
        %v877 = vadd.f32 %v823, %v873
        %v878 = vadd.f32 %v824, %v874
        %v879 = vadd.f32 %v825, %v875
        %v880 = vld [vmem:[%s398 + $0xe0] sm:$0xff]
        %v881 = vld [vmem:[%s398 + $0xe8] sm:$0xff]
        %v882 = vld [vmem:[%s398 + $0xf0] sm:$0xff]
        %v883 = vld [vmem:[%s398 + $0xf8] sm:$0xff]
        %s884 = sld [smem:[#allocation11 + $0x7]]
        %v885 = vstv %s884
        %v886 = vmul.f32 %v885, %v880
        %v887 = vmul.f32 %v885, %v881
        %v888 = vmul.f32 %v885, %v882
        %v889 = vmul.f32 %v885, %v883
        %v890 = vadd.f32 %v836, %v886
        %v891 = vadd.f32 %v837, %v887
        %v892 = vadd.f32 %v838, %v888
        %v893 = vadd.f32 %v839, %v889
        %s894 = sld [smem:[#allocation11 + $0x87]]
        %v895 = vstv %s894
        %v896 = vmul.f32 %v895, %v880
        %v897 = vmul.f32 %v895, %v881
        %v898 = vmul.f32 %v895, %v882
        %v899 = vmul.f32 %v895, %v883
        %v900 = vadd.f32 %v846, %v896
        %v901 = vadd.f32 %v847, %v897
        %v902 = vadd.f32 %v848, %v898
        %v903 = vadd.f32 %v849, %v899
        %s904 = sld [smem:[#allocation11 + $0x107]]
        %v905 = vstv %s904
        %v906 = vmul.f32 %v905, %v880
        %v907 = vmul.f32 %v905, %v881
        %v908 = vmul.f32 %v905, %v882
        %v909 = vmul.f32 %v905, %v883
        %v910 = vadd.f32 %v856, %v906
        %v911 = vadd.f32 %v857, %v907
        %v912 = vadd.f32 %v858, %v908
        %v913 = vadd.f32 %v859, %v909
        %s914 = sld [smem:[#allocation11 + $0x187]]
        %v915 = vstv %s914
        %v916 = vmul.f32 %v915, %v880
        %v917 = vmul.f32 %v915, %v881
        %v918 = vmul.f32 %v915, %v882
        %v919 = vmul.f32 %v915, %v883
        %v920 = vadd.f32 %v866, %v916
        %v921 = vadd.f32 %v867, %v917
        %v922 = vadd.f32 %v868, %v918
        %v923 = vadd.f32 %v869, %v919
        %s924 = sld [smem:[#allocation11 + $0x207]]
        %v925 = vstv %s924
        %v926 = vmul.f32 %v925, %v880
        %v927 = vmul.f32 %v925, %v881
        %v928 = vmul.f32 %v925, %v882
        %v929 = vmul.f32 %v925, %v883
        %v930 = vadd.f32 %v876, %v926
        %v931 = vadd.f32 %v877, %v927
        %v932 = vadd.f32 %v878, %v928
        %v933 = vadd.f32 %v879, %v929
        %v934 = vld [vmem:[%s398 + $0x100] sm:$0xff]
        %v935 = vld [vmem:[%s398 + $0x108] sm:$0xff]
        %v936 = vld [vmem:[%s398 + $0x110] sm:$0xff]
        %v937 = vld [vmem:[%s398 + $0x118] sm:$0xff]
        %s938 = sld [smem:[#allocation11 + $0x8]]
        %v939 = vstv %s938
        %v940 = vmul.f32 %v939, %v934
        %v941 = vmul.f32 %v939, %v935
        %v942 = vmul.f32 %v939, %v936
        %v943 = vmul.f32 %v939, %v937
        %v944 = vadd.f32 %v890, %v940
        %v945 = vadd.f32 %v891, %v941
        %v946 = vadd.f32 %v892, %v942
        %v947 = vadd.f32 %v893, %v943
        %s948 = sld [smem:[#allocation11 + $0x88]]
        %v949 = vstv %s948
        %v950 = vmul.f32 %v949, %v934
        %v951 = vmul.f32 %v949, %v935
        %v952 = vmul.f32 %v949, %v936
        %v953 = vmul.f32 %v949, %v937
        %v954 = vadd.f32 %v900, %v950
        %v955 = vadd.f32 %v901, %v951
        %v956 = vadd.f32 %v902, %v952
        %v957 = vadd.f32 %v903, %v953
        %s958 = sld [smem:[#allocation11 + $0x108]]
        %v959 = vstv %s958
        %v960 = vmul.f32 %v959, %v934
        %v961 = vmul.f32 %v959, %v935
        %v962 = vmul.f32 %v959, %v936
        %v963 = vmul.f32 %v959, %v937
        %v964 = vadd.f32 %v910, %v960
        %v965 = vadd.f32 %v911, %v961
        %v966 = vadd.f32 %v912, %v962
        %v967 = vadd.f32 %v913, %v963
        %s968 = sld [smem:[#allocation11 + $0x188]]
        %v969 = vstv %s968
        %v970 = vmul.f32 %v969, %v934
        %v971 = vmul.f32 %v969, %v935
        %v972 = vmul.f32 %v969, %v936
        %v973 = vmul.f32 %v969, %v937
        %v974 = vadd.f32 %v920, %v970
        %v975 = vadd.f32 %v921, %v971
        %v976 = vadd.f32 %v922, %v972
        %v977 = vadd.f32 %v923, %v973
        %s978 = sld [smem:[#allocation11 + $0x208]]
        %v979 = vstv %s978
        %v980 = vmul.f32 %v979, %v934
        %v981 = vmul.f32 %v979, %v935
        %v982 = vmul.f32 %v979, %v936
        %v983 = vmul.f32 %v979, %v937
        %v984 = vadd.f32 %v930, %v980
        %v985 = vadd.f32 %v931, %v981
        %v986 = vadd.f32 %v932, %v982
        %v987 = vadd.f32 %v933, %v983
        %s988 = sld [smem:[#allocation12]]
        %v989 = vstv %s988
        %v990 = vadd.f32 %v944, %v989
        %v991 = vadd.f32 %v945, %v989
        %v992 = vadd.f32 %v946, %v989
        %v993 = vadd.f32 %v947, %v989
        %v994 = vmax.f32 %v990, 0.0
        %v995 = vmax.f32 %v991, 0.0
        %v996 = vmax.f32 %v992, 0.0
        %v997 = vmax.f32 %v993, 0.0
        %1002 = vrot.lane.b32.xlu0 %v994, 4
        %v1003 = vpop.permute.xlu0 %1002
        %1004 = vrot.lane.b32.xlu0 %v995, 4
        %v1005 = vpop.permute.xlu0 %1004
        %1006 = vrot.lane.b32.xlu0 %v996, 4
        %v1007 = vpop.permute.xlu0 %1006
        %1008 = vrot.lane.b32.xlu0 %v997, 4
        %v1009 = vpop.permute.xlu0 %1008
        %vm1014 = vcmask 1047584
        %1015 = vst.msk [vmem:[#allocation2] sm:$0xff] %vm1014, %v1003
        %1016 = vst.msk [vmem:[#allocation2 + $0x8] sm:$0xff] %vm460, %v1003
        %1017 = vst.msk [vmem:[#allocation2 + $0x10] sm:$0xff] %vm1014, %v1005
        %1018 = vst.msk [vmem:[#allocation2 + $0x18] sm:$0xff] %vm460, %v1005
        %1019 = vst.msk [vmem:[#allocation2 + $0x20] sm:$0xff] %vm1014, %v1007
        %1020 = vst.msk [vmem:[#allocation2 + $0x28] sm:$0xff] %vm460, %v1007
        %1021 = vst.msk [vmem:[#allocation2 + $0x30] sm:$0xff] %vm1014, %v1009
        %1022 = vst.msk [vmem:[#allocation2 + $0x38] sm:$0xff] %vm460, %v1009
        %s1023 = sld [smem:[#allocation12 + $0x1]]
        %v1024 = vstv %s1023
        %v1025 = vadd.f32 %v954, %v1024
        %v1026 = vadd.f32 %v955, %v1024
        %v1027 = vadd.f32 %v956, %v1024
        %v1028 = vadd.f32 %v957, %v1024
        %v1029 = vmax.f32 %v1025, 0.0
        %v1030 = vmax.f32 %v1026, 0.0
        %v1031 = vmax.f32 %v1027, 0.0
        %v1032 = vmax.f32 %v1028, 0.0
        %1037 = vrot.lane.b32.xlu0 %v1029, 4
        %v1038 = vpop.permute.xlu0 %1037
        %1039 = vrot.lane.b32.xlu0 %v1030, 4
        %v1040 = vpop.permute.xlu0 %1039
        %1041 = vrot.lane.b32.xlu0 %v1031, 4
        %v1042 = vpop.permute.xlu0 %1041
        %1043 = vrot.lane.b32.xlu0 %v1032, 4
        %v1044 = vpop.permute.xlu0 %1043
        %1049 = vst.msk [vmem:[#allocation2 + $0x40] sm:$0xff] %vm1014, %v1038
        %1050 = vst.msk [vmem:[#allocation2 + $0x48] sm:$0xff] %vm460, %v1038
        %1051 = vst.msk [vmem:[#allocation2 + $0x50] sm:$0xff] %vm1014, %v1040
        %1052 = vst.msk [vmem:[#allocation2 + $0x58] sm:$0xff] %vm460, %v1040
        %1053 = vst.msk [vmem:[#allocation2 + $0x60] sm:$0xff] %vm1014, %v1042
        %1054 = vst.msk [vmem:[#allocation2 + $0x68] sm:$0xff] %vm460, %v1042
        %1055 = vst.msk [vmem:[#allocation2 + $0x70] sm:$0xff] %vm1014, %v1044
        %1056 = vst.msk [vmem:[#allocation2 + $0x78] sm:$0xff] %vm460, %v1044
        %s1057 = sld [smem:[#allocation12 + $0x2]]
        %v1058 = vstv %s1057
        %v1059 = vadd.f32 %v964, %v1058
        %v1060 = vadd.f32 %v965, %v1058
        %v1061 = vadd.f32 %v966, %v1058
        %v1062 = vadd.f32 %v967, %v1058
        %v1063 = vmax.f32 %v1059, 0.0
        %v1064 = vmax.f32 %v1060, 0.0
        %v1065 = vmax.f32 %v1061, 0.0
        %v1066 = vmax.f32 %v1062, 0.0
        %1071 = vrot.lane.b32.xlu0 %v1063, 4
        %v1072 = vpop.permute.xlu0 %1071
        %1073 = vrot.lane.b32.xlu0 %v1064, 4
        %v1074 = vpop.permute.xlu0 %1073
        %1075 = vrot.lane.b32.xlu0 %v1065, 4
        %v1076 = vpop.permute.xlu0 %1075
        %1077 = vrot.lane.b32.xlu0 %v1066, 4
        %v1078 = vpop.permute.xlu0 %1077
        %1083 = vst.msk [vmem:[#allocation2 + $0x80] sm:$0xff] %vm1014, %v1072
        %1084 = vst.msk [vmem:[#allocation2 + $0x88] sm:$0xff] %vm460, %v1072
        %1085 = vst.msk [vmem:[#allocation2 + $0x90] sm:$0xff] %vm1014, %v1074
        %1086 = vst.msk [vmem:[#allocation2 + $0x98] sm:$0xff] %vm460, %v1074
        %1087 = vst.msk [vmem:[#allocation2 + $0xa0] sm:$0xff] %vm1014, %v1076
        %1088 = vst.msk [vmem:[#allocation2 + $0xa8] sm:$0xff] %vm460, %v1076
        %1089 = vst.msk [vmem:[#allocation2 + $0xb0] sm:$0xff] %vm1014, %v1078
        %1090 = vst.msk [vmem:[#allocation2 + $0xb8] sm:$0xff] %vm460, %v1078
        %s1091 = sld [smem:[#allocation12 + $0x3]]
        %v1092 = vstv %s1091
        %v1093 = vadd.f32 %v974, %v1092
        %v1094 = vadd.f32 %v975, %v1092
        %v1095 = vadd.f32 %v976, %v1092
        %v1096 = vadd.f32 %v977, %v1092
        %v1097 = vmax.f32 %v1093, 0.0
        %v1098 = vmax.f32 %v1094, 0.0
        %v1099 = vmax.f32 %v1095, 0.0
        %v1100 = vmax.f32 %v1096, 0.0
        %1105 = vrot.lane.b32.xlu0 %v1097, 4
        %v1106 = vpop.permute.xlu0 %1105
        %1107 = vrot.lane.b32.xlu0 %v1098, 4
        %v1108 = vpop.permute.xlu0 %1107
        %1109 = vrot.lane.b32.xlu0 %v1099, 4
        %v1110 = vpop.permute.xlu0 %1109
        %1111 = vrot.lane.b32.xlu0 %v1100, 4
        %v1112 = vpop.permute.xlu0 %1111
        %1117 = vst.msk [vmem:[#allocation2 + $0xc0] sm:$0xff] %vm1014, %v1106
        %1118 = vst.msk [vmem:[#allocation2 + $0xc8] sm:$0xff] %vm460, %v1106
        %1119 = vst.msk [vmem:[#allocation2 + $0xd0] sm:$0xff] %vm1014, %v1108
        %1120 = vst.msk [vmem:[#allocation2 + $0xd8] sm:$0xff] %vm460, %v1108
        %1121 = vst.msk [vmem:[#allocation2 + $0xe0] sm:$0xff] %vm1014, %v1110
        %1122 = vst.msk [vmem:[#allocation2 + $0xe8] sm:$0xff] %vm460, %v1110
        %1123 = vst.msk [vmem:[#allocation2 + $0xf0] sm:$0xff] %vm1014, %v1112
        %1124 = vst.msk [vmem:[#allocation2 + $0xf8] sm:$0xff] %vm460, %v1112
        %s1125 = sld [smem:[#allocation12 + $0x4]]
        %v1126 = vstv %s1125
        %v1127 = vadd.f32 %v984, %v1126
        %v1128 = vadd.f32 %v985, %v1126
        %v1129 = vadd.f32 %v986, %v1126
        %v1130 = vadd.f32 %v987, %v1126
        %v1131 = vmax.f32 %v1127, 0.0
        %v1132 = vmax.f32 %v1128, 0.0
        %v1133 = vmax.f32 %v1129, 0.0
        %v1134 = vmax.f32 %v1130, 0.0
        %1139 = vrot.lane.b32.xlu0 %v1131, 4
        %v1140 = vpop.permute.xlu0 %1139
        %1141 = vrot.lane.b32.xlu0 %v1132, 4
        %v1142 = vpop.permute.xlu0 %1141
        %1143 = vrot.lane.b32.xlu0 %v1133, 4
        %v1144 = vpop.permute.xlu0 %1143
        %1145 = vrot.lane.b32.xlu0 %v1134, 4
        %v1146 = vpop.permute.xlu0 %1145
        %1151 = vst.msk [vmem:[#allocation2 + $0x100] sm:$0xff] %vm1014, %v1140
        %1152 = vst.msk [vmem:[#allocation2 + $0x108] sm:$0xff] %vm460, %v1140
        %1153 = vst.msk [vmem:[#allocation2 + $0x110] sm:$0xff] %vm1014, %v1142
        %1154 = vst.msk [vmem:[#allocation2 + $0x118] sm:$0xff] %vm460, %v1142
        %1155 = vst.msk [vmem:[#allocation2 + $0x120] sm:$0xff] %vm1014, %v1144
        %1156 = vst.msk [vmem:[#allocation2 + $0x128] sm:$0xff] %vm460, %v1144
        %1157 = vst.msk [vmem:[#allocation2 + $0x130] sm:$0xff] %vm1014, %v1146
        %1158 = vst.msk [vmem:[#allocation2 + $0x138] sm:$0xff] %vm460, %v1146
        %v1159 = vld [vmem:[#allocation9] sm:$0xff]
        %v1160 = vld [vmem:[#allocation9 + $0x8] sm:$0xff]
        %v1161 = vld [vmem:[#allocation9 + $0x10] sm:$0x1]
        %v1162 = vld [vmem:[#allocation9 + $0x18] sm:$0x1]
        %v1163 = vld [vmem:[#allocation2] sm:$0xff]
        %v1164 = vld [vmem:[#allocation2 + $0x10] sm:$0xff]
        %v1165 = vld [vmem:[#allocation2 + $0x20] sm:$0xff]
        %v1166 = vld [vmem:[#allocation2 + $0x30] sm:$0xff]
        %v1167 = vld [vmem:[#allocation2 + $0x40] sm:$0xff]
        %v1168 = vld [vmem:[#allocation2 + $0x50] sm:$0xff]
        %v1169 = vld [vmem:[#allocation2 + $0x60] sm:$0xff]
        %v1170 = vld [vmem:[#allocation2 + $0x70] sm:$0xff]
        %v1171 = vld [vmem:[#allocation2 + $0x80] sm:$0xff]
        %v1172 = vld [vmem:[#allocation2 + $0x90] sm:$0xff]
        %v1173 = vld [vmem:[#allocation2 + $0xa0] sm:$0xff]
        %v1174 = vld [vmem:[#allocation2 + $0xb0] sm:$0xff]
        %v1175 = vld [vmem:[#allocation2 + $0xc0] sm:$0xff]
        %v1176 = vld [vmem:[#allocation2 + $0xd0] sm:$0xff]
        %v1177 = vld [vmem:[#allocation2 + $0xe0] sm:$0xff]
        %v1178 = vld [vmem:[#allocation2 + $0xf0] sm:$0xff]
        %v1179 = vld [vmem:[#allocation2 + $0x100] sm:$0xff]
        %v1180 = vld [vmem:[#allocation2 + $0x110] sm:$0xff]
        %v1181 = vld [vmem:[#allocation2 + $0x120] sm:$0xff]
        %v1182 = vld [vmem:[#allocation2 + $0x130] sm:$0xff]
        %s1183 = scalar_lea.vmem [#allocation9], 32
        %v1184 = vld [vmem:[%s1183] sm:$0xff]
        %v1185 = vld [vmem:[%s1183 + $0x8] sm:$0xff]
        %v1186 = vld [vmem:[%s1183 + $0x10] sm:$0x1]
        %v1187 = vld [vmem:[%s1183 + $0x18] sm:$0x1]
        %v1188 = vld [vmem:[#allocation2 + $0x8] sm:$0xff]
        %v1189 = vld [vmem:[#allocation2 + $0x18] sm:$0xff]
        %v1190 = vld [vmem:[#allocation2 + $0x28] sm:$0xff]
        %v1191 = vld [vmem:[#allocation2 + $0x38] sm:$0xff]
        %v1192 = vld [vmem:[#allocation2 + $0x48] sm:$0xff]
        %v1193 = vld [vmem:[#allocation2 + $0x58] sm:$0xff]
        %v1194 = vld [vmem:[#allocation2 + $0x68] sm:$0xff]
        %v1195 = vld [vmem:[#allocation2 + $0x78] sm:$0xff]
        %v1196 = vld [vmem:[#allocation2 + $0x88] sm:$0xff]
        %v1197 = vld [vmem:[#allocation2 + $0x98] sm:$0xff]
        %v1198 = vld [vmem:[#allocation2 + $0xa8] sm:$0xff]
        %v1199 = vld [vmem:[#allocation2 + $0xb8] sm:$0xff]
        %v1200 = vld [vmem:[#allocation2 + $0xc8] sm:$0xff]
        %v1201 = vld [vmem:[#allocation2 + $0xd8] sm:$0xff]
        %v1202 = vld [vmem:[#allocation2 + $0xe8] sm:$0xff]
        %v1203 = vld [vmem:[#allocation2 + $0xf8] sm:$0xff]
        %v1204 = vld [vmem:[#allocation2 + $0x108] sm:$0xff]
        %v1205 = vld [vmem:[#allocation2 + $0x118] sm:$0xff]
        %v1206 = vld [vmem:[#allocation2 + $0x128] sm:$0xff]
        %v1207 = vld [vmem:[#allocation2 + $0x138] sm:$0xff]
        %1248 = vrot.lane.b32.xlu0 %v1163, 127
        %v1249 = vpop.permute.xlu0 %1248
        %1250 = vrot.lane.b32.xlu0 %v1188, 127
        %v1251 = vpop.permute.xlu0 %1250
        %1252 = vrot.lane.b32.xlu0 %v1164, 127
        %v1253 = vpop.permute.xlu0 %1252
        %1254 = vrot.lane.b32.xlu0 %v1189, 127
        %v1255 = vpop.permute.xlu0 %1254
        %1256 = vrot.lane.b32.xlu0 %v1165, 127
        %v1257 = vpop.permute.xlu0 %1256
        %1258 = vrot.lane.b32.xlu0 %v1190, 127
        %v1259 = vpop.permute.xlu0 %1258
        %1260 = vrot.lane.b32.xlu0 %v1166, 127
        %v1261 = vpop.permute.xlu0 %1260
        %1262 = vrot.lane.b32.xlu0 %v1191, 127
        %v1263 = vpop.permute.xlu0 %1262
        %1264 = vrot.lane.b32.xlu0 %v1167, 127
        %v1265 = vpop.permute.xlu0 %1264
        %1266 = vrot.lane.b32.xlu0 %v1192, 127
        %v1267 = vpop.permute.xlu0 %1266
        %1268 = vrot.lane.b32.xlu0 %v1168, 127
        %v1269 = vpop.permute.xlu0 %1268
        %1270 = vrot.lane.b32.xlu0 %v1193, 127
        %v1271 = vpop.permute.xlu0 %1270
        %1272 = vrot.lane.b32.xlu0 %v1169, 127
        %v1273 = vpop.permute.xlu0 %1272
        %1274 = vrot.lane.b32.xlu0 %v1194, 127
        %v1275 = vpop.permute.xlu0 %1274
        %1276 = vrot.lane.b32.xlu0 %v1170, 127
        %v1277 = vpop.permute.xlu0 %1276
        %1278 = vrot.lane.b32.xlu0 %v1195, 127
        %v1279 = vpop.permute.xlu0 %1278
        %1280 = vrot.lane.b32.xlu0 %v1171, 127
        %v1281 = vpop.permute.xlu0 %1280
        %1282 = vrot.lane.b32.xlu0 %v1196, 127
        %v1283 = vpop.permute.xlu0 %1282
        %1284 = vrot.lane.b32.xlu0 %v1172, 127
        %v1285 = vpop.permute.xlu0 %1284
        %1286 = vrot.lane.b32.xlu0 %v1197, 127
        %v1287 = vpop.permute.xlu0 %1286
        %1288 = vrot.lane.b32.xlu0 %v1173, 127
        %v1289 = vpop.permute.xlu0 %1288
        %1290 = vrot.lane.b32.xlu0 %v1198, 127
        %v1291 = vpop.permute.xlu0 %1290
        %1292 = vrot.lane.b32.xlu0 %v1174, 127
        %v1293 = vpop.permute.xlu0 %1292
        %1294 = vrot.lane.b32.xlu0 %v1199, 127
        %v1295 = vpop.permute.xlu0 %1294
        %1296 = vrot.lane.b32.xlu0 %v1175, 127
        %v1297 = vpop.permute.xlu0 %1296
        %1298 = vrot.lane.b32.xlu0 %v1200, 127
        %v1299 = vpop.permute.xlu0 %1298
        %1300 = vrot.lane.b32.xlu0 %v1176, 127
        %v1301 = vpop.permute.xlu0 %1300
        %1302 = vrot.lane.b32.xlu0 %v1201, 127
        %v1303 = vpop.permute.xlu0 %1302
        %1304 = vrot.lane.b32.xlu0 %v1177, 127
        %v1305 = vpop.permute.xlu0 %1304
        %1306 = vrot.lane.b32.xlu0 %v1202, 127
        %v1307 = vpop.permute.xlu0 %1306
        %1308 = vrot.lane.b32.xlu0 %v1178, 127
        %v1309 = vpop.permute.xlu0 %1308
        %1310 = vrot.lane.b32.xlu0 %v1203, 127
        %v1311 = vpop.permute.xlu0 %1310
        %1312 = vrot.lane.b32.xlu0 %v1179, 127
        %v1313 = vpop.permute.xlu0 %1312
        %1314 = vrot.lane.b32.xlu0 %v1204, 127
        %v1315 = vpop.permute.xlu0 %1314
        %1316 = vrot.lane.b32.xlu0 %v1180, 127
        %v1317 = vpop.permute.xlu0 %1316
        %1318 = vrot.lane.b32.xlu0 %v1205, 127
        %v1319 = vpop.permute.xlu0 %1318
        %1320 = vrot.lane.b32.xlu0 %v1181, 127
        %v1321 = vpop.permute.xlu0 %1320
        %1322 = vrot.lane.b32.xlu0 %v1206, 127
        %v1323 = vpop.permute.xlu0 %1322
        %1324 = vrot.lane.b32.xlu0 %v1182, 127
        %v1325 = vpop.permute.xlu0 %1324
        %1326 = vrot.lane.b32.xlu0 %v1207, 127
        %v1327 = vpop.permute.xlu0 %1326
        %vm1328 = vcmask 1039360
        %v1329 = vsel %vm1328, %v1249, %v1251
        %v1330 = vsel %vm1328, %v1253, %v1255
        %v1331 = vsel %vm1328, %v1257, %v1259
        %v1332 = vsel %vm1328, %v1261, %v1263
        %v1333 = vsel %vm1328, %v1265, %v1267
        %v1334 = vsel %vm1328, %v1269, %v1271
        %v1335 = vsel %vm1328, %v1273, %v1275
        %v1336 = vsel %vm1328, %v1277, %v1279
        %v1337 = vsel %vm1328, %v1281, %v1283
        %v1338 = vsel %vm1328, %v1285, %v1287
        %v1339 = vsel %vm1328, %v1289, %v1291
        %v1340 = vsel %vm1328, %v1293, %v1295
        %v1341 = vsel %vm1328, %v1297, %v1299
        %v1342 = vsel %vm1328, %v1301, %v1303
        %v1343 = vsel %vm1328, %v1305, %v1307
        %v1344 = vsel %vm1328, %v1309, %v1311
        %v1345 = vsel %vm1328, %v1313, %v1315
        %v1346 = vsel %vm1328, %v1317, %v1319
        %v1347 = vsel %vm1328, %v1321, %v1323
        %v1348 = vsel %vm1328, %v1325, %v1327
        %vm1369 = vcmask 261120
        %v1371 = vsel %vm1369, %v1185, 0
        %v1374 = vsel %vm1369, %v1187, 0
        %1376 = vmatprep.subr.mxu0 0.0
        %1377 = vmatpush1.msra.mxu0 %v1329
        %1378 = vmatprep.subr.mxu0 0.0
        %1379 = vmatpush1.msra.mxu0 %v1330
        %1380 = vmatprep.subr.mxu0 0.0
        %1381 = vmatpush1.msra.mxu0 %v1331
        %1382 = vmatprep.subr.mxu0 0.0
        %1383 = vmatpush1.msra.mxu0 %v1332
        %1384 = vmatprep.subr.mxu0 0.0
        %1385 = vmatpush1.msra.mxu0 %v1333
        %1386 = vmatprep.subr.mxu0 0.0
        %1387 = vmatpush1.msra.mxu0 %v1334
        %1388 = vmatprep.subr.mxu0 0.0
        %1389 = vmatpush1.msra.mxu0 %v1335
        %1390 = vmatprep.subr.mxu0 0.0
        %1391 = vmatpush1.msra.mxu0 %v1336
        %1392 = vmatprep.subr.mxu0 0.0
        %1393 = vmatpush1.msra.mxu0 %v1337
        %1394 = vmatprep.subr.mxu0 0.0
        %1395 = vmatpush1.msra.mxu0 %v1338
        %1396 = vmatprep.subr.mxu0 0.0
        %1397 = vmatpush1.msra.mxu0 %v1339
        %1398 = vmatprep.subr.mxu0 0.0
        %1399 = vmatpush1.msra.mxu0 %v1340
        %1400 = vmatprep.subr.mxu0 0.0
        %1401 = vmatpush1.msra.mxu0 %v1341
        %1402 = vmatprep.subr.mxu0 0.0
        %1403 = vmatpush1.msra.mxu0 %v1342
        %1404 = vmatprep.subr.mxu0 0.0
        %1405 = vmatpush1.msra.mxu0 %v1343
        %1406 = vmatprep.subr.mxu0 0.0
        %1407 = vmatpush1.msra.mxu0 %v1344
        %1408 = vmatprep.subr.mxu0 0.0
        %1409 = vmatpush1.msra.mxu0 %v1345
        %1410 = vmatprep.subr.mxu0 0.0
        %1411 = vmatpush1.msra.mxu0 %v1346
        %1412 = vmatprep.subr.mxu0 0.0
        %1413 = vmatpush1.msra.mxu0 %v1347
        %1414 = vmatprep.subr.mxu0 0.0
        %1415 = vmatpush1.msra.mxu0 %v1348
        %1416 = vmatprep.subr.mxu0 0.0
        %1417 = vmatpush1.msra.mxu0 0.0
        %1418 = vmatprep.subr.mxu0 0.0
        %1419 = vmatpush1.msra.mxu0 0.0
        %1420 = vmatprep.subr.mxu0 0.0
        %1421 = vmatpush1.msra.mxu0 0.0
        %1422 = vmatprep.subr.mxu0 0.0
        %1423 = vmatpush1.msra.mxu0 0.0
        %1424 = vmatprep.subr.mxu0 0.0
        %1425 = vmatpush1.msra.mxu0 0.0
        %1426 = vmatprep.subr.mxu0 0.0
        %1427 = vmatpush1.msra.mxu0 0.0
        %1428 = vmatprep.subr.mxu0 0.0
        %1429 = vmatpush1.msra.mxu0 0.0
        %1430 = vmatprep.subr.mxu0 0.0
        %1431 = vmatpush1.msra.mxu0 0.0
        %1432 = vmatprep.subr.mxu0 0.0
        %1433 = vmatpush1.msra.mxu0 0.0
        %1434 = vmatprep.subr.mxu0 0.0
        %1435 = vmatpush1.msra.mxu0 0.0
        %1436 = vmatprep.subr.mxu0 0.0
        %1437 = vmatpush1.msra.mxu0 0.0
        %1438 = vmatprep.subr.mxu0 0.0
        %1439 = vmatpush1.msra.mxu0 0.0
        %1440 = vmatprep.mubr.f32.mxu0 %v1371
        %1441 = vmatmul.mubr.f32.gmra.mrb[0].mxu0 %v1184
        %v1442 = vpop.f32.mrb[0].mxu0
        %v1443 = vadd.f32 0.0, %v1442
        %v1444 = vpop.f32.mrb[0].mxu0
        %1445 = vmatprep.mubr.f32.mxu0 %v1374
        %1446 = vmatmul.mubr.f32.gmra.mrb[0].mxu0 %v1186
        %v1447 = vpop.f32.mrb[0].mxu0
        %v1448 = vadd.f32 0.0, %v1447
        %v1449 = vpop.f32.mrb[0].mxu0
        %1450 = vdwg.mxu0
        %v1452 = vsel %vm1369, %v1160, 0
        %v1455 = vsel %vm1369, %v1162, 0
        %1457 = vmatprep.subr.mxu0 0.0
        %1458 = vmatpush1.msra.mxu0 %v1163
        %1459 = vmatprep.subr.mxu0 0.0
        %1460 = vmatpush1.msra.mxu0 %v1164
        %1461 = vmatprep.subr.mxu0 0.0
        %1462 = vmatpush1.msra.mxu0 %v1165
        %1463 = vmatprep.subr.mxu0 0.0
        %1464 = vmatpush1.msra.mxu0 %v1166
        %1465 = vmatprep.subr.mxu0 0.0
        %1466 = vmatpush1.msra.mxu0 %v1167
        %1467 = vmatprep.subr.mxu0 0.0
        %1468 = vmatpush1.msra.mxu0 %v1168
        %1469 = vmatprep.subr.mxu0 0.0
        %1470 = vmatpush1.msra.mxu0 %v1169
        %1471 = vmatprep.subr.mxu0 0.0
        %1472 = vmatpush1.msra.mxu0 %v1170
        %1473 = vmatprep.subr.mxu0 0.0
        %1474 = vmatpush1.msra.mxu0 %v1171
        %1475 = vmatprep.subr.mxu0 0.0
        %1476 = vmatpush1.msra.mxu0 %v1172
        %1477 = vmatprep.subr.mxu0 0.0
        %1478 = vmatpush1.msra.mxu0 %v1173
        %1479 = vmatprep.subr.mxu0 0.0
        %1480 = vmatpush1.msra.mxu0 %v1174
        %1481 = vmatprep.subr.mxu0 0.0
        %1482 = vmatpush1.msra.mxu0 %v1175
        %1483 = vmatprep.subr.mxu0 0.0
        %1484 = vmatpush1.msra.mxu0 %v1176
        %1485 = vmatprep.subr.mxu0 0.0
        %1486 = vmatpush1.msra.mxu0 %v1177
        %1487 = vmatprep.subr.mxu0 0.0
        %1488 = vmatpush1.msra.mxu0 %v1178
        %1489 = vmatprep.subr.mxu0 0.0
        %1490 = vmatpush1.msra.mxu0 %v1179
        %1491 = vmatprep.subr.mxu0 0.0
        %1492 = vmatpush1.msra.mxu0 %v1180
        %1493 = vmatprep.subr.mxu0 0.0
        %1494 = vmatpush1.msra.mxu0 %v1181
        %1495 = vmatprep.subr.mxu0 0.0
        %1496 = vmatpush1.msra.mxu0 %v1182
        %1497 = vmatprep.subr.mxu0 0.0
        %1498 = vmatpush1.msra.mxu0 0.0
        %1499 = vmatprep.subr.mxu0 0.0
        %1500 = vmatpush1.msra.mxu0 0.0
        %1501 = vmatprep.subr.mxu0 0.0
        %1502 = vmatpush1.msra.mxu0 0.0
        %1503 = vmatprep.subr.mxu0 0.0
        %1504 = vmatpush1.msra.mxu0 0.0
        %1505 = vmatprep.subr.mxu0 0.0
        %1506 = vmatpush1.msra.mxu0 0.0
        %1507 = vmatprep.subr.mxu0 0.0
        %1508 = vmatpush1.msra.mxu0 0.0
        %1509 = vmatprep.subr.mxu0 0.0
        %1510 = vmatpush1.msra.mxu0 0.0
        %1511 = vmatprep.subr.mxu0 0.0
        %1512 = vmatpush1.msra.mxu0 0.0
        %1513 = vmatprep.subr.mxu0 0.0
        %1514 = vmatpush1.msra.mxu0 0.0
        %1515 = vmatprep.subr.mxu0 0.0
        %1516 = vmatpush1.msra.mxu0 0.0
        %1517 = vmatprep.subr.mxu0 0.0
        %1518 = vmatpush1.msra.mxu0 0.0
        %1519 = vmatprep.subr.mxu0 0.0
        %1520 = vmatpush1.msra.mxu0 0.0
        %1521 = vmatprep.mubr.f32.mxu0 %v1452
        %1522 = vmatmul.mubr.f32.gmra.mrb[0].mxu0 %v1159
        %v1523 = vpop.f32.mrb[0].mxu0
        %v1524 = vadd.f32 %v1443, %v1523
        %v1525 = vpop.f32.mrb[0].mxu0
        %1526 = vmatprep.mubr.f32.mxu0 %v1455
        %1527 = vmatmul.mubr.f32.gmra.mrb[0].mxu0 %v1161
        %v1528 = vpop.f32.mrb[0].mxu0
        %v1529 = vadd.f32 %v1448, %v1528
        %v1530 = vpop.f32.mrb[0].mxu0
        %1531 = vdwg.mxu0
        %s1532 = scalar_lea.vmem [#allocation9], 64
        %v1533 = vld [vmem:[%s1532] sm:$0xff]
        %v1534 = vld [vmem:[%s1532 + $0x8] sm:$0xff]
        %v1535 = vld [vmem:[%s1532 + $0x10] sm:$0x1]
        %v1536 = vld [vmem:[%s1532 + $0x18] sm:$0x1]
        %1537 = vrot.lane.b32.xlu0 %v1163, 126
        %v1538 = vpop.permute.xlu0 %1537
        %1539 = vrot.lane.b32.xlu0 %v1188, 126
        %v1540 = vpop.permute.xlu0 %1539
        %1541 = vrot.lane.b32.xlu0 %v1164, 126
        %v1542 = vpop.permute.xlu0 %1541
        %1543 = vrot.lane.b32.xlu0 %v1189, 126
        %v1544 = vpop.permute.xlu0 %1543
        %1545 = vrot.lane.b32.xlu0 %v1165, 126
        %v1546 = vpop.permute.xlu0 %1545
        %1547 = vrot.lane.b32.xlu0 %v1190, 126
        %v1548 = vpop.permute.xlu0 %1547
        %1549 = vrot.lane.b32.xlu0 %v1166, 126
        %v1550 = vpop.permute.xlu0 %1549
        %1551 = vrot.lane.b32.xlu0 %v1191, 126
        %v1552 = vpop.permute.xlu0 %1551
        %1553 = vrot.lane.b32.xlu0 %v1167, 126
        %v1554 = vpop.permute.xlu0 %1553
        %1555 = vrot.lane.b32.xlu0 %v1192, 126
        %v1556 = vpop.permute.xlu0 %1555
        %1557 = vrot.lane.b32.xlu0 %v1168, 126
        %v1558 = vpop.permute.xlu0 %1557
        %1559 = vrot.lane.b32.xlu0 %v1193, 126
        %v1560 = vpop.permute.xlu0 %1559
        %1561 = vrot.lane.b32.xlu0 %v1169, 126
        %v1562 = vpop.permute.xlu0 %1561
        %1563 = vrot.lane.b32.xlu0 %v1194, 126
        %v1564 = vpop.permute.xlu0 %1563
        %1565 = vrot.lane.b32.xlu0 %v1170, 126
        %v1566 = vpop.permute.xlu0 %1565
        %1567 = vrot.lane.b32.xlu0 %v1195, 126
        %v1568 = vpop.permute.xlu0 %1567
        %1569 = vrot.lane.b32.xlu0 %v1171, 126
        %v1570 = vpop.permute.xlu0 %1569
        %1571 = vrot.lane.b32.xlu0 %v1196, 126
        %v1572 = vpop.permute.xlu0 %1571
        %1573 = vrot.lane.b32.xlu0 %v1172, 126
        %v1574 = vpop.permute.xlu0 %1573
        %1575 = vrot.lane.b32.xlu0 %v1197, 126
        %v1576 = vpop.permute.xlu0 %1575
        %1577 = vrot.lane.b32.xlu0 %v1173, 126
        %v1578 = vpop.permute.xlu0 %1577
        %1579 = vrot.lane.b32.xlu0 %v1198, 126
        %v1580 = vpop.permute.xlu0 %1579
        %1581 = vrot.lane.b32.xlu0 %v1174, 126
        %v1582 = vpop.permute.xlu0 %1581
        %1583 = vrot.lane.b32.xlu0 %v1199, 126
        %v1584 = vpop.permute.xlu0 %1583
        %1585 = vrot.lane.b32.xlu0 %v1175, 126
        %v1586 = vpop.permute.xlu0 %1585
        %1587 = vrot.lane.b32.xlu0 %v1200, 126
        %v1588 = vpop.permute.xlu0 %1587
        %1589 = vrot.lane.b32.xlu0 %v1176, 126
        %v1590 = vpop.permute.xlu0 %1589
        %1591 = vrot.lane.b32.xlu0 %v1201, 126
        %v1592 = vpop.permute.xlu0 %1591
        %1593 = vrot.lane.b32.xlu0 %v1177, 126
        %v1594 = vpop.permute.xlu0 %1593
        %1595 = vrot.lane.b32.xlu0 %v1202, 126
        %v1596 = vpop.permute.xlu0 %1595
        %1597 = vrot.lane.b32.xlu0 %v1178, 126
        %v1598 = vpop.permute.xlu0 %1597
        %1599 = vrot.lane.b32.xlu0 %v1203, 126
        %v1600 = vpop.permute.xlu0 %1599
        %1601 = vrot.lane.b32.xlu0 %v1179, 126
        %v1602 = vpop.permute.xlu0 %1601
        %1603 = vrot.lane.b32.xlu0 %v1204, 126
        %v1604 = vpop.permute.xlu0 %1603
        %1605 = vrot.lane.b32.xlu0 %v1180, 126
        %v1606 = vpop.permute.xlu0 %1605
        %1607 = vrot.lane.b32.xlu0 %v1205, 126
        %v1608 = vpop.permute.xlu0 %1607
        %1609 = vrot.lane.b32.xlu0 %v1181, 126
        %v1610 = vpop.permute.xlu0 %1609
        %1611 = vrot.lane.b32.xlu0 %v1206, 126
        %v1612 = vpop.permute.xlu0 %1611
        %1613 = vrot.lane.b32.xlu0 %v1182, 126
        %v1614 = vpop.permute.xlu0 %1613
        %1615 = vrot.lane.b32.xlu0 %v1207, 126
        %v1616 = vpop.permute.xlu0 %1615
        %vm1617 = vcmask 1031168
        %v1618 = vsel %vm1617, %v1538, %v1540
        %v1619 = vsel %vm1617, %v1542, %v1544
        %v1620 = vsel %vm1617, %v1546, %v1548
        %v1621 = vsel %vm1617, %v1550, %v1552
        %v1622 = vsel %vm1617, %v1554, %v1556
        %v1623 = vsel %vm1617, %v1558, %v1560
        %v1624 = vsel %vm1617, %v1562, %v1564
        %v1625 = vsel %vm1617, %v1566, %v1568
        %v1626 = vsel %vm1617, %v1570, %v1572
        %v1627 = vsel %vm1617, %v1574, %v1576
        %v1628 = vsel %vm1617, %v1578, %v1580
        %v1629 = vsel %vm1617, %v1582, %v1584
        %v1630 = vsel %vm1617, %v1586, %v1588
        %v1631 = vsel %vm1617, %v1590, %v1592
        %v1632 = vsel %vm1617, %v1594, %v1596
        %v1633 = vsel %vm1617, %v1598, %v1600
        %v1634 = vsel %vm1617, %v1602, %v1604
        %v1635 = vsel %vm1617, %v1606, %v1608
        %v1636 = vsel %vm1617, %v1610, %v1612
        %v1637 = vsel %vm1617, %v1614, %v1616
        %v1659 = vsel %vm1369, %v1534, 0
        %v1662 = vsel %vm1369, %v1536, 0
        %1664 = vmatprep.subr.mxu0 0.0
        %1665 = vmatpush1.msra.mxu0 %v1618
        %1666 = vmatprep.subr.mxu0 0.0
        %1667 = vmatpush1.msra.mxu0 %v1619
        %1668 = vmatprep.subr.mxu0 0.0
        %1669 = vmatpush1.msra.mxu0 %v1620
        %1670 = vmatprep.subr.mxu0 0.0
        %1671 = vmatpush1.msra.mxu0 %v1621
        %1672 = vmatprep.subr.mxu0 0.0
        %1673 = vmatpush1.msra.mxu0 %v1622
        %1674 = vmatprep.subr.mxu0 0.0
        %1675 = vmatpush1.msra.mxu0 %v1623
        %1676 = vmatprep.subr.mxu0 0.0
        %1677 = vmatpush1.msra.mxu0 %v1624
        %1678 = vmatprep.subr.mxu0 0.0
        %1679 = vmatpush1.msra.mxu0 %v1625
        %1680 = vmatprep.subr.mxu0 0.0
        %1681 = vmatpush1.msra.mxu0 %v1626
        %1682 = vmatprep.subr.mxu0 0.0
        %1683 = vmatpush1.msra.mxu0 %v1627
        %1684 = vmatprep.subr.mxu0 0.0
        %1685 = vmatpush1.msra.mxu0 %v1628
        %1686 = vmatprep.subr.mxu0 0.0
        %1687 = vmatpush1.msra.mxu0 %v1629
        %1688 = vmatprep.subr.mxu0 0.0
        %1689 = vmatpush1.msra.mxu0 %v1630
        %1690 = vmatprep.subr.mxu0 0.0
        %1691 = vmatpush1.msra.mxu0 %v1631
        %1692 = vmatprep.subr.mxu0 0.0
        %1693 = vmatpush1.msra.mxu0 %v1632
        %1694 = vmatprep.subr.mxu0 0.0
        %1695 = vmatpush1.msra.mxu0 %v1633
        %1696 = vmatprep.subr.mxu0 0.0
        %1697 = vmatpush1.msra.mxu0 %v1634
        %1698 = vmatprep.subr.mxu0 0.0
        %1699 = vmatpush1.msra.mxu0 %v1635
        %1700 = vmatprep.subr.mxu0 0.0
        %1701 = vmatpush1.msra.mxu0 %v1636
        %1702 = vmatprep.subr.mxu0 0.0
        %1703 = vmatpush1.msra.mxu0 %v1637
        %1704 = vmatprep.subr.mxu0 0.0
        %1705 = vmatpush1.msra.mxu0 0.0
        %1706 = vmatprep.subr.mxu0 0.0
        %1707 = vmatpush1.msra.mxu0 0.0
        %1708 = vmatprep.subr.mxu0 0.0
        %1709 = vmatpush1.msra.mxu0 0.0
        %1710 = vmatprep.subr.mxu0 0.0
        %1711 = vmatpush1.msra.mxu0 0.0
        %1712 = vmatprep.subr.mxu0 0.0
        %1713 = vmatpush1.msra.mxu0 0.0
        %1714 = vmatprep.subr.mxu0 0.0
        %1715 = vmatpush1.msra.mxu0 0.0
        %1716 = vmatprep.subr.mxu0 0.0
        %1717 = vmatpush1.msra.mxu0 0.0
        %1718 = vmatprep.subr.mxu0 0.0
        %1719 = vmatpush1.msra.mxu0 0.0
        %1720 = vmatprep.subr.mxu0 0.0
        %1721 = vmatpush1.msra.mxu0 0.0
        %1722 = vmatprep.subr.mxu0 0.0
        %1723 = vmatpush1.msra.mxu0 0.0
        %1724 = vmatprep.subr.mxu0 0.0
        %1725 = vmatpush1.msra.mxu0 0.0
        %1726 = vmatprep.subr.mxu0 0.0
        %1727 = vmatpush1.msra.mxu0 0.0
        %1728 = vmatprep.mubr.f32.mxu0 %v1659
        %1729 = vmatmul.mubr.f32.gmra.mrb[0].mxu0 %v1533
        %v1730 = vpop.f32.mrb[0].mxu0
        %v1731 = vadd.f32 0.0, %v1730
        %v1732 = vpop.f32.mrb[0].mxu0
        %1733 = vmatprep.mubr.f32.mxu0 %v1662
        %1734 = vmatmul.mubr.f32.gmra.mrb[0].mxu0 %v1535
        %v1735 = vpop.f32.mrb[0].mxu0
        %v1736 = vadd.f32 0.0, %v1735
        %v1737 = vpop.f32.mrb[0].mxu0
        %1738 = vdwg.mxu0
        %v1739 = vadd.f32 %v1524, %v1731
        %v1740 = vadd.f32 %v1529, %v1736
        %s1741 = scalar_lea.vmem [#allocation9], 96
        %v1742 = vld [vmem:[%s1741] sm:$0xff]
        %v1743 = vld [vmem:[%s1741 + $0x8] sm:$0xff]
        %v1744 = vld [vmem:[%s1741 + $0x10] sm:$0x1]
        %v1745 = vld [vmem:[%s1741 + $0x18] sm:$0x1]
        %1746 = vrot.lane.b32.xlu0 %v1163, 125
        %v1747 = vpop.permute.xlu0 %1746
        %1748 = vrot.lane.b32.xlu0 %v1188, 125
        %v1749 = vpop.permute.xlu0 %1748
        %1750 = vrot.lane.b32.xlu0 %v1164, 125
        %v1751 = vpop.permute.xlu0 %1750
        %1752 = vrot.lane.b32.xlu0 %v1189, 125
        %v1753 = vpop.permute.xlu0 %1752
        %1754 = vrot.lane.b32.xlu0 %v1165, 125
        %v1755 = vpop.permute.xlu0 %1754
        %1756 = vrot.lane.b32.xlu0 %v1190, 125
        %v1757 = vpop.permute.xlu0 %1756
        %1758 = vrot.lane.b32.xlu0 %v1166, 125
        %v1759 = vpop.permute.xlu0 %1758
        %1760 = vrot.lane.b32.xlu0 %v1191, 125
        %v1761 = vpop.permute.xlu0 %1760
        %1762 = vrot.lane.b32.xlu0 %v1167, 125
        %v1763 = vpop.permute.xlu0 %1762
        %1764 = vrot.lane.b32.xlu0 %v1192, 125
        %v1765 = vpop.permute.xlu0 %1764
        %1766 = vrot.lane.b32.xlu0 %v1168, 125
        %v1767 = vpop.permute.xlu0 %1766
        %1768 = vrot.lane.b32.xlu0 %v1193, 125
        %v1769 = vpop.permute.xlu0 %1768
        %1770 = vrot.lane.b32.xlu0 %v1169, 125
        %v1771 = vpop.permute.xlu0 %1770
        %1772 = vrot.lane.b32.xlu0 %v1194, 125
        %v1773 = vpop.permute.xlu0 %1772
        %1774 = vrot.lane.b32.xlu0 %v1170, 125
        %v1775 = vpop.permute.xlu0 %1774
        %1776 = vrot.lane.b32.xlu0 %v1195, 125
        %v1777 = vpop.permute.xlu0 %1776
        %1778 = vrot.lane.b32.xlu0 %v1171, 125
        %v1779 = vpop.permute.xlu0 %1778
        %1780 = vrot.lane.b32.xlu0 %v1196, 125
        %v1781 = vpop.permute.xlu0 %1780
        %1782 = vrot.lane.b32.xlu0 %v1172, 125
        %v1783 = vpop.permute.xlu0 %1782
        %1784 = vrot.lane.b32.xlu0 %v1197, 125
        %v1785 = vpop.permute.xlu0 %1784
        %1786 = vrot.lane.b32.xlu0 %v1173, 125
        %v1787 = vpop.permute.xlu0 %1786
        %1788 = vrot.lane.b32.xlu0 %v1198, 125
        %v1789 = vpop.permute.xlu0 %1788
        %1790 = vrot.lane.b32.xlu0 %v1174, 125
        %v1791 = vpop.permute.xlu0 %1790
        %1792 = vrot.lane.b32.xlu0 %v1199, 125
        %v1793 = vpop.permute.xlu0 %1792
        %1794 = vrot.lane.b32.xlu0 %v1175, 125
        %v1795 = vpop.permute.xlu0 %1794
        %1796 = vrot.lane.b32.xlu0 %v1200, 125
        %v1797 = vpop.permute.xlu0 %1796
        %1798 = vrot.lane.b32.xlu0 %v1176, 125
        %v1799 = vpop.permute.xlu0 %1798
        %1800 = vrot.lane.b32.xlu0 %v1201, 125
        %v1801 = vpop.permute.xlu0 %1800
        %1802 = vrot.lane.b32.xlu0 %v1177, 125
        %v1803 = vpop.permute.xlu0 %1802
        %1804 = vrot.lane.b32.xlu0 %v1202, 125
        %v1805 = vpop.permute.xlu0 %1804
        %1806 = vrot.lane.b32.xlu0 %v1178, 125
        %v1807 = vpop.permute.xlu0 %1806
        %1808 = vrot.lane.b32.xlu0 %v1203, 125
        %v1809 = vpop.permute.xlu0 %1808
        %1810 = vrot.lane.b32.xlu0 %v1179, 125
        %v1811 = vpop.permute.xlu0 %1810
        %1812 = vrot.lane.b32.xlu0 %v1204, 125
        %v1813 = vpop.permute.xlu0 %1812
        %1814 = vrot.lane.b32.xlu0 %v1180, 125
        %v1815 = vpop.permute.xlu0 %1814
        %1816 = vrot.lane.b32.xlu0 %v1205, 125
        %v1817 = vpop.permute.xlu0 %1816
        %1818 = vrot.lane.b32.xlu0 %v1181, 125
        %v1819 = vpop.permute.xlu0 %1818
        %1820 = vrot.lane.b32.xlu0 %v1206, 125
        %v1821 = vpop.permute.xlu0 %1820
        %1822 = vrot.lane.b32.xlu0 %v1182, 125
        %v1823 = vpop.permute.xlu0 %1822
        %1824 = vrot.lane.b32.xlu0 %v1207, 125
        %v1825 = vpop.permute.xlu0 %1824
        %vm1826 = vcmask 1022976
        %v1827 = vsel %vm1826, %v1747, %v1749
        %v1828 = vsel %vm1826, %v1751, %v1753
        %v1829 = vsel %vm1826, %v1755, %v1757
        %v1830 = vsel %vm1826, %v1759, %v1761
        %v1831 = vsel %vm1826, %v1763, %v1765
        %v1832 = vsel %vm1826, %v1767, %v1769
        %v1833 = vsel %vm1826, %v1771, %v1773
        %v1834 = vsel %vm1826, %v1775, %v1777
        %v1835 = vsel %vm1826, %v1779, %v1781
        %v1836 = vsel %vm1826, %v1783, %v1785
        %v1837 = vsel %vm1826, %v1787, %v1789
        %v1838 = vsel %vm1826, %v1791, %v1793
        %v1839 = vsel %vm1826, %v1795, %v1797
        %v1840 = vsel %vm1826, %v1799, %v1801
        %v1841 = vsel %vm1826, %v1803, %v1805
        %v1842 = vsel %vm1826, %v1807, %v1809
        %v1843 = vsel %vm1826, %v1811, %v1813
        %v1844 = vsel %vm1826, %v1815, %v1817
        %v1845 = vsel %vm1826, %v1819, %v1821
        %v1846 = vsel %vm1826, %v1823, %v1825
        %v1868 = vsel %vm1369, %v1743, 0
        %v1871 = vsel %vm1369, %v1745, 0
        %1873 = vmatprep.subr.mxu0 0.0
        %1874 = vmatpush1.msra.mxu0 %v1827
        %1875 = vmatprep.subr.mxu0 0.0
        %1876 = vmatpush1.msra.mxu0 %v1828
        %1877 = vmatprep.subr.mxu0 0.0
        %1878 = vmatpush1.msra.mxu0 %v1829
        %1879 = vmatprep.subr.mxu0 0.0
        %1880 = vmatpush1.msra.mxu0 %v1830
        %1881 = vmatprep.subr.mxu0 0.0
        %1882 = vmatpush1.msra.mxu0 %v1831
        %1883 = vmatprep.subr.mxu0 0.0
        %1884 = vmatpush1.msra.mxu0 %v1832
        %1885 = vmatprep.subr.mxu0 0.0
        %1886 = vmatpush1.msra.mxu0 %v1833
        %1887 = vmatprep.subr.mxu0 0.0
        %1888 = vmatpush1.msra.mxu0 %v1834
        %1889 = vmatprep.subr.mxu0 0.0
        %1890 = vmatpush1.msra.mxu0 %v1835
        %1891 = vmatprep.subr.mxu0 0.0
        %1892 = vmatpush1.msra.mxu0 %v1836
        %1893 = vmatprep.subr.mxu0 0.0
        %1894 = vmatpush1.msra.mxu0 %v1837
        %1895 = vmatprep.subr.mxu0 0.0
        %1896 = vmatpush1.msra.mxu0 %v1838
        %1897 = vmatprep.subr.mxu0 0.0
        %1898 = vmatpush1.msra.mxu0 %v1839
        %1899 = vmatprep.subr.mxu0 0.0
        %1900 = vmatpush1.msra.mxu0 %v1840
        %1901 = vmatprep.subr.mxu0 0.0
        %1902 = vmatpush1.msra.mxu0 %v1841
        %1903 = vmatprep.subr.mxu0 0.0
        %1904 = vmatpush1.msra.mxu0 %v1842
        %1905 = vmatprep.subr.mxu0 0.0
        %1906 = vmatpush1.msra.mxu0 %v1843
        %1907 = vmatprep.subr.mxu0 0.0
        %1908 = vmatpush1.msra.mxu0 %v1844
        %1909 = vmatprep.subr.mxu0 0.0
        %1910 = vmatpush1.msra.mxu0 %v1845
        %1911 = vmatprep.subr.mxu0 0.0
        %1912 = vmatpush1.msra.mxu0 %v1846
        %1913 = vmatprep.subr.mxu0 0.0
        %1914 = vmatpush1.msra.mxu0 0.0
        %1915 = vmatprep.subr.mxu0 0.0
        %1916 = vmatpush1.msra.mxu0 0.0
        %1917 = vmatprep.subr.mxu0 0.0
        %1918 = vmatpush1.msra.mxu0 0.0
        %1919 = vmatprep.subr.mxu0 0.0
        %1920 = vmatpush1.msra.mxu0 0.0
        %1921 = vmatprep.subr.mxu0 0.0
        %1922 = vmatpush1.msra.mxu0 0.0
        %1923 = vmatprep.subr.mxu0 0.0
        %1924 = vmatpush1.msra.mxu0 0.0
        %1925 = vmatprep.subr.mxu0 0.0
        %1926 = vmatpush1.msra.mxu0 0.0
        %1927 = vmatprep.subr.mxu0 0.0
        %1928 = vmatpush1.msra.mxu0 0.0
        %1929 = vmatprep.subr.mxu0 0.0
        %1930 = vmatpush1.msra.mxu0 0.0
        %1931 = vmatprep.subr.mxu0 0.0
        %1932 = vmatpush1.msra.mxu0 0.0
        %1933 = vmatprep.subr.mxu0 0.0
        %1934 = vmatpush1.msra.mxu0 0.0
        %1935 = vmatprep.subr.mxu0 0.0
        %1936 = vmatpush1.msra.mxu0 0.0
        %1937 = vmatprep.mubr.f32.mxu0 %v1868
        %1938 = vmatmul.mubr.f32.gmra.mrb[0].mxu0 %v1742
        %v1939 = vpop.f32.mrb[0].mxu0
        %v1940 = vadd.f32 0.0, %v1939
        %v1941 = vpop.f32.mrb[0].mxu0
        %1942 = vmatprep.mubr.f32.mxu0 %v1871
        %1943 = vmatmul.mubr.f32.gmra.mrb[0].mxu0 %v1744
        %v1944 = vpop.f32.mrb[0].mxu0
        %v1945 = vadd.f32 0.0, %v1944
        %v1946 = vpop.f32.mrb[0].mxu0
        %1947 = vdwg.mxu0
        %v1948 = vadd.f32 %v1739, %v1940
        %v1949 = vadd.f32 %v1740, %v1945
        %s1950 = scalar_lea.vmem [#allocation9], 128
        %v1951 = vld [vmem:[%s1950] sm:$0xff]
        %v1952 = vld [vmem:[%s1950 + $0x8] sm:$0xff]
        %v1953 = vld [vmem:[%s1950 + $0x10] sm:$0x1]
        %v1954 = vld [vmem:[%s1950 + $0x18] sm:$0x1]
        %1955 = vrot.lane.b32.xlu0 %v1163, 124
        %v1956 = vpop.permute.xlu0 %1955
        %1957 = vrot.lane.b32.xlu0 %v1188, 124
        %v1958 = vpop.permute.xlu0 %1957
        %1959 = vrot.lane.b32.xlu0 %v1164, 124
        %v1960 = vpop.permute.xlu0 %1959
        %1961 = vrot.lane.b32.xlu0 %v1189, 124
        %v1962 = vpop.permute.xlu0 %1961
        %1963 = vrot.lane.b32.xlu0 %v1165, 124
        %v1964 = vpop.permute.xlu0 %1963
        %1965 = vrot.lane.b32.xlu0 %v1190, 124
        %v1966 = vpop.permute.xlu0 %1965
        %1967 = vrot.lane.b32.xlu0 %v1166, 124
        %v1968 = vpop.permute.xlu0 %1967
        %1969 = vrot.lane.b32.xlu0 %v1191, 124
        %v1970 = vpop.permute.xlu0 %1969
        %1971 = vrot.lane.b32.xlu0 %v1167, 124
        %v1972 = vpop.permute.xlu0 %1971
        %1973 = vrot.lane.b32.xlu0 %v1192, 124
        %v1974 = vpop.permute.xlu0 %1973
        %1975 = vrot.lane.b32.xlu0 %v1168, 124
        %v1976 = vpop.permute.xlu0 %1975
        %1977 = vrot.lane.b32.xlu0 %v1193, 124
        %v1978 = vpop.permute.xlu0 %1977
        %1979 = vrot.lane.b32.xlu0 %v1169, 124
        %v1980 = vpop.permute.xlu0 %1979
        %1981 = vrot.lane.b32.xlu0 %v1194, 124
        %v1982 = vpop.permute.xlu0 %1981
        %1983 = vrot.lane.b32.xlu0 %v1170, 124
        %v1984 = vpop.permute.xlu0 %1983
        %1985 = vrot.lane.b32.xlu0 %v1195, 124
        %v1986 = vpop.permute.xlu0 %1985
        %1987 = vrot.lane.b32.xlu0 %v1171, 124
        %v1988 = vpop.permute.xlu0 %1987
        %1989 = vrot.lane.b32.xlu0 %v1196, 124
        %v1990 = vpop.permute.xlu0 %1989
        %1991 = vrot.lane.b32.xlu0 %v1172, 124
        %v1992 = vpop.permute.xlu0 %1991
        %1993 = vrot.lane.b32.xlu0 %v1197, 124
        %v1994 = vpop.permute.xlu0 %1993
        %1995 = vrot.lane.b32.xlu0 %v1173, 124
        %v1996 = vpop.permute.xlu0 %1995
        %1997 = vrot.lane.b32.xlu0 %v1198, 124
        %v1998 = vpop.permute.xlu0 %1997
        %1999 = vrot.lane.b32.xlu0 %v1174, 124
        %v2000 = vpop.permute.xlu0 %1999
        %2001 = vrot.lane.b32.xlu0 %v1199, 124
        %v2002 = vpop.permute.xlu0 %2001
        %2003 = vrot.lane.b32.xlu0 %v1175, 124
        %v2004 = vpop.permute.xlu0 %2003
        %2005 = vrot.lane.b32.xlu0 %v1200, 124
        %v2006 = vpop.permute.xlu0 %2005
        %2007 = vrot.lane.b32.xlu0 %v1176, 124
        %v2008 = vpop.permute.xlu0 %2007
        %2009 = vrot.lane.b32.xlu0 %v1201, 124
        %v2010 = vpop.permute.xlu0 %2009
        %2011 = vrot.lane.b32.xlu0 %v1177, 124
        %v2012 = vpop.permute.xlu0 %2011
        %2013 = vrot.lane.b32.xlu0 %v1202, 124
        %v2014 = vpop.permute.xlu0 %2013
        %2015 = vrot.lane.b32.xlu0 %v1178, 124
        %v2016 = vpop.permute.xlu0 %2015
        %2017 = vrot.lane.b32.xlu0 %v1203, 124
        %v2018 = vpop.permute.xlu0 %2017
        %2019 = vrot.lane.b32.xlu0 %v1179, 124
        %v2020 = vpop.permute.xlu0 %2019
        %2021 = vrot.lane.b32.xlu0 %v1204, 124
        %v2022 = vpop.permute.xlu0 %2021
        %2023 = vrot.lane.b32.xlu0 %v1180, 124
        %v2024 = vpop.permute.xlu0 %2023
        %2025 = vrot.lane.b32.xlu0 %v1205, 124
        %v2026 = vpop.permute.xlu0 %2025
        %2027 = vrot.lane.b32.xlu0 %v1181, 124
        %v2028 = vpop.permute.xlu0 %2027
        %2029 = vrot.lane.b32.xlu0 %v1206, 124
        %v2030 = vpop.permute.xlu0 %2029
        %2031 = vrot.lane.b32.xlu0 %v1182, 124
        %v2032 = vpop.permute.xlu0 %2031
        %2033 = vrot.lane.b32.xlu0 %v1207, 124
        %v2034 = vpop.permute.xlu0 %2033
        %vm2035 = vcmask 1014784
        %v2036 = vsel %vm2035, %v1956, %v1958
        %v2037 = vsel %vm2035, %v1960, %v1962
        %v2038 = vsel %vm2035, %v1964, %v1966
        %v2039 = vsel %vm2035, %v1968, %v1970
        %v2040 = vsel %vm2035, %v1972, %v1974
        %v2041 = vsel %vm2035, %v1976, %v1978
        %v2042 = vsel %vm2035, %v1980, %v1982
        %v2043 = vsel %vm2035, %v1984, %v1986
        %v2044 = vsel %vm2035, %v1988, %v1990
        %v2045 = vsel %vm2035, %v1992, %v1994
        %v2046 = vsel %vm2035, %v1996, %v1998
        %v2047 = vsel %vm2035, %v2000, %v2002
        %v2048 = vsel %vm2035, %v2004, %v2006
        %v2049 = vsel %vm2035, %v2008, %v2010
        %v2050 = vsel %vm2035, %v2012, %v2014
        %v2051 = vsel %vm2035, %v2016, %v2018
        %v2052 = vsel %vm2035, %v2020, %v2022
        %v2053 = vsel %vm2035, %v2024, %v2026
        %v2054 = vsel %vm2035, %v2028, %v2030
        %v2055 = vsel %vm2035, %v2032, %v2034
        %v2077 = vsel %vm1369, %v1952, 0
        %v2080 = vsel %vm1369, %v1954, 0
        %2082 = vmatprep.subr.mxu0 0.0
        %2083 = vmatpush1.msra.mxu0 %v2036
        %2084 = vmatprep.subr.mxu0 0.0
        %2085 = vmatpush1.msra.mxu0 %v2037
        %2086 = vmatprep.subr.mxu0 0.0
        %2087 = vmatpush1.msra.mxu0 %v2038
        %2088 = vmatprep.subr.mxu0 0.0
        %2089 = vmatpush1.msra.mxu0 %v2039
        %2090 = vmatprep.subr.mxu0 0.0
        %2091 = vmatpush1.msra.mxu0 %v2040
        %2092 = vmatprep.subr.mxu0 0.0
        %2093 = vmatpush1.msra.mxu0 %v2041
        %2094 = vmatprep.subr.mxu0 0.0
        %2095 = vmatpush1.msra.mxu0 %v2042
        %2096 = vmatprep.subr.mxu0 0.0
        %2097 = vmatpush1.msra.mxu0 %v2043
        %2098 = vmatprep.subr.mxu0 0.0
        %2099 = vmatpush1.msra.mxu0 %v2044
        %2100 = vmatprep.subr.mxu0 0.0
        %2101 = vmatpush1.msra.mxu0 %v2045
        %2102 = vmatprep.subr.mxu0 0.0
        %2103 = vmatpush1.msra.mxu0 %v2046
        %2104 = vmatprep.subr.mxu0 0.0
        %2105 = vmatpush1.msra.mxu0 %v2047
        %2106 = vmatprep.subr.mxu0 0.0
        %2107 = vmatpush1.msra.mxu0 %v2048
        %2108 = vmatprep.subr.mxu0 0.0
        %2109 = vmatpush1.msra.mxu0 %v2049
        %2110 = vmatprep.subr.mxu0 0.0
        %2111 = vmatpush1.msra.mxu0 %v2050
        %2112 = vmatprep.subr.mxu0 0.0
        %2113 = vmatpush1.msra.mxu0 %v2051
        %2114 = vmatprep.subr.mxu0 0.0
        %2115 = vmatpush1.msra.mxu0 %v2052
        %2116 = vmatprep.subr.mxu0 0.0
        %2117 = vmatpush1.msra.mxu0 %v2053
        %2118 = vmatprep.subr.mxu0 0.0
        %2119 = vmatpush1.msra.mxu0 %v2054
        %2120 = vmatprep.subr.mxu0 0.0
        %2121 = vmatpush1.msra.mxu0 %v2055
        %2122 = vmatprep.subr.mxu0 0.0
        %2123 = vmatpush1.msra.mxu0 0.0
        %2124 = vmatprep.subr.mxu0 0.0
        %2125 = vmatpush1.msra.mxu0 0.0
        %2126 = vmatprep.subr.mxu0 0.0
        %2127 = vmatpush1.msra.mxu0 0.0
        %2128 = vmatprep.subr.mxu0 0.0
        %2129 = vmatpush1.msra.mxu0 0.0
        %2130 = vmatprep.subr.mxu0 0.0
        %2131 = vmatpush1.msra.mxu0 0.0
        %2132 = vmatprep.subr.mxu0 0.0
        %2133 = vmatpush1.msra.mxu0 0.0
        %2134 = vmatprep.subr.mxu0 0.0
        %2135 = vmatpush1.msra.mxu0 0.0
        %2136 = vmatprep.subr.mxu0 0.0
        %2137 = vmatpush1.msra.mxu0 0.0
        %2138 = vmatprep.subr.mxu0 0.0
        %2139 = vmatpush1.msra.mxu0 0.0
        %2140 = vmatprep.subr.mxu0 0.0
        %2141 = vmatpush1.msra.mxu0 0.0
        %2142 = vmatprep.subr.mxu0 0.0
        %2143 = vmatpush1.msra.mxu0 0.0
        %2144 = vmatprep.subr.mxu0 0.0
        %2145 = vmatpush1.msra.mxu0 0.0
        %2146 = vmatprep.mubr.f32.mxu0 %v2077
        %2147 = vmatmul.mubr.f32.gmra.mrb[0].mxu0 %v1951
        %v2148 = vpop.f32.mrb[0].mxu0
        %v2149 = vadd.f32 0.0, %v2148
        %v2150 = vpop.f32.mrb[0].mxu0
        %2151 = vmatprep.mubr.f32.mxu0 %v2080
        %2152 = vmatmul.mubr.f32.gmra.mrb[0].mxu0 %v1953
        %v2153 = vpop.f32.mrb[0].mxu0
        %v2154 = vadd.f32 0.0, %v2153
        %v2155 = vpop.f32.mrb[0].mxu0
        %2156 = vdwg.mxu0
        %v2157 = vadd.f32 %v1948, %v2149
        %v2158 = vadd.f32 %v1949, %v2154
        %s2159 = scalar_lea.vmem [#allocation9], 160
        %v2160 = vld [vmem:[%s2159] sm:$0xff]
        %v2161 = vld [vmem:[%s2159 + $0x8] sm:$0xff]
        %v2162 = vld [vmem:[%s2159 + $0x10] sm:$0x1]
        %v2163 = vld [vmem:[%s2159 + $0x18] sm:$0x1]
        %2164 = vrot.lane.b32.xlu0 %v1163, 123
        %v2165 = vpop.permute.xlu0 %2164
        %2166 = vrot.lane.b32.xlu0 %v1188, 123
        %v2167 = vpop.permute.xlu0 %2166
        %2168 = vrot.lane.b32.xlu0 %v1164, 123
        %v2169 = vpop.permute.xlu0 %2168
        %2170 = vrot.lane.b32.xlu0 %v1189, 123
        %v2171 = vpop.permute.xlu0 %2170
        %2172 = vrot.lane.b32.xlu0 %v1165, 123
        %v2173 = vpop.permute.xlu0 %2172
        %2174 = vrot.lane.b32.xlu0 %v1190, 123
        %v2175 = vpop.permute.xlu0 %2174
        %2176 = vrot.lane.b32.xlu0 %v1166, 123
        %v2177 = vpop.permute.xlu0 %2176
        %2178 = vrot.lane.b32.xlu0 %v1191, 123
        %v2179 = vpop.permute.xlu0 %2178
        %2180 = vrot.lane.b32.xlu0 %v1167, 123
        %v2181 = vpop.permute.xlu0 %2180
        %2182 = vrot.lane.b32.xlu0 %v1192, 123
        %v2183 = vpop.permute.xlu0 %2182
        %2184 = vrot.lane.b32.xlu0 %v1168, 123
        %v2185 = vpop.permute.xlu0 %2184
        %2186 = vrot.lane.b32.xlu0 %v1193, 123
        %v2187 = vpop.permute.xlu0 %2186
        %2188 = vrot.lane.b32.xlu0 %v1169, 123
        %v2189 = vpop.permute.xlu0 %2188
        %2190 = vrot.lane.b32.xlu0 %v1194, 123
        %v2191 = vpop.permute.xlu0 %2190
        %2192 = vrot.lane.b32.xlu0 %v1170, 123
        %v2193 = vpop.permute.xlu0 %2192
        %2194 = vrot.lane.b32.xlu0 %v1195, 123
        %v2195 = vpop.permute.xlu0 %2194
        %2196 = vrot.lane.b32.xlu0 %v1171, 123
        %v2197 = vpop.permute.xlu0 %2196
        %2198 = vrot.lane.b32.xlu0 %v1196, 123
        %v2199 = vpop.permute.xlu0 %2198
        %2200 = vrot.lane.b32.xlu0 %v1172, 123
        %v2201 = vpop.permute.xlu0 %2200
        %2202 = vrot.lane.b32.xlu0 %v1197, 123
        %v2203 = vpop.permute.xlu0 %2202
        %2204 = vrot.lane.b32.xlu0 %v1173, 123
        %v2205 = vpop.permute.xlu0 %2204
        %2206 = vrot.lane.b32.xlu0 %v1198, 123
        %v2207 = vpop.permute.xlu0 %2206
        %2208 = vrot.lane.b32.xlu0 %v1174, 123
        %v2209 = vpop.permute.xlu0 %2208
        %2210 = vrot.lane.b32.xlu0 %v1199, 123
        %v2211 = vpop.permute.xlu0 %2210
        %2212 = vrot.lane.b32.xlu0 %v1175, 123
        %v2213 = vpop.permute.xlu0 %2212
        %2214 = vrot.lane.b32.xlu0 %v1200, 123
        %v2215 = vpop.permute.xlu0 %2214
        %2216 = vrot.lane.b32.xlu0 %v1176, 123
        %v2217 = vpop.permute.xlu0 %2216
        %2218 = vrot.lane.b32.xlu0 %v1201, 123
        %v2219 = vpop.permute.xlu0 %2218
        %2220 = vrot.lane.b32.xlu0 %v1177, 123
        %v2221 = vpop.permute.xlu0 %2220
        %2222 = vrot.lane.b32.xlu0 %v1202, 123
        %v2223 = vpop.permute.xlu0 %2222
        %2224 = vrot.lane.b32.xlu0 %v1178, 123
        %v2225 = vpop.permute.xlu0 %2224
        %2226 = vrot.lane.b32.xlu0 %v1203, 123
        %v2227 = vpop.permute.xlu0 %2226
        %2228 = vrot.lane.b32.xlu0 %v1179, 123
        %v2229 = vpop.permute.xlu0 %2228
        %2230 = vrot.lane.b32.xlu0 %v1204, 123
        %v2231 = vpop.permute.xlu0 %2230
        %2232 = vrot.lane.b32.xlu0 %v1180, 123
        %v2233 = vpop.permute.xlu0 %2232
        %2234 = vrot.lane.b32.xlu0 %v1205, 123
        %v2235 = vpop.permute.xlu0 %2234
        %2236 = vrot.lane.b32.xlu0 %v1181, 123
        %v2237 = vpop.permute.xlu0 %2236
        %2238 = vrot.lane.b32.xlu0 %v1206, 123
        %v2239 = vpop.permute.xlu0 %2238
        %2240 = vrot.lane.b32.xlu0 %v1182, 123
        %v2241 = vpop.permute.xlu0 %2240
        %2242 = vrot.lane.b32.xlu0 %v1207, 123
        %v2243 = vpop.permute.xlu0 %2242
        %vm2244 = vcmask 1006592
        %v2245 = vsel %vm2244, %v2165, %v2167
        %v2246 = vsel %vm2244, %v2169, %v2171
        %v2247 = vsel %vm2244, %v2173, %v2175
        %v2248 = vsel %vm2244, %v2177, %v2179
        %v2249 = vsel %vm2244, %v2181, %v2183
        %v2250 = vsel %vm2244, %v2185, %v2187
        %v2251 = vsel %vm2244, %v2189, %v2191
        %v2252 = vsel %vm2244, %v2193, %v2195
        %v2253 = vsel %vm2244, %v2197, %v2199
        %v2254 = vsel %vm2244, %v2201, %v2203
        %v2255 = vsel %vm2244, %v2205, %v2207
        %v2256 = vsel %vm2244, %v2209, %v2211
        %v2257 = vsel %vm2244, %v2213, %v2215
        %v2258 = vsel %vm2244, %v2217, %v2219
        %v2259 = vsel %vm2244, %v2221, %v2223
        %v2260 = vsel %vm2244, %v2225, %v2227
        %v2261 = vsel %vm2244, %v2229, %v2231
        %v2262 = vsel %vm2244, %v2233, %v2235
        %v2263 = vsel %vm2244, %v2237, %v2239
        %v2264 = vsel %vm2244, %v2241, %v2243
        %v2286 = vsel %vm1369, %v2161, 0
        %v2289 = vsel %vm1369, %v2163, 0
        %2291 = vmatprep.subr.mxu0 0.0
        %2292 = vmatpush1.msra.mxu0 %v2245
        %2293 = vmatprep.subr.mxu0 0.0
        %2294 = vmatpush1.msra.mxu0 %v2246
        %2295 = vmatprep.subr.mxu0 0.0
        %2296 = vmatpush1.msra.mxu0 %v2247
        %2297 = vmatprep.subr.mxu0 0.0
        %2298 = vmatpush1.msra.mxu0 %v2248
        %2299 = vmatprep.subr.mxu0 0.0
        %2300 = vmatpush1.msra.mxu0 %v2249
        %2301 = vmatprep.subr.mxu0 0.0
        %2302 = vmatpush1.msra.mxu0 %v2250
        %2303 = vmatprep.subr.mxu0 0.0
        %2304 = vmatpush1.msra.mxu0 %v2251
        %2305 = vmatprep.subr.mxu0 0.0
        %2306 = vmatpush1.msra.mxu0 %v2252
        %2307 = vmatprep.subr.mxu0 0.0
        %2308 = vmatpush1.msra.mxu0 %v2253
        %2309 = vmatprep.subr.mxu0 0.0
        %2310 = vmatpush1.msra.mxu0 %v2254
        %2311 = vmatprep.subr.mxu0 0.0
        %2312 = vmatpush1.msra.mxu0 %v2255
        %2313 = vmatprep.subr.mxu0 0.0
        %2314 = vmatpush1.msra.mxu0 %v2256
        %2315 = vmatprep.subr.mxu0 0.0
        %2316 = vmatpush1.msra.mxu0 %v2257
        %2317 = vmatprep.subr.mxu0 0.0
        %2318 = vmatpush1.msra.mxu0 %v2258
        %2319 = vmatprep.subr.mxu0 0.0
        %2320 = vmatpush1.msra.mxu0 %v2259
        %2321 = vmatprep.subr.mxu0 0.0
        %2322 = vmatpush1.msra.mxu0 %v2260
        %2323 = vmatprep.subr.mxu0 0.0
        %2324 = vmatpush1.msra.mxu0 %v2261
        %2325 = vmatprep.subr.mxu0 0.0
        %2326 = vmatpush1.msra.mxu0 %v2262
        %2327 = vmatprep.subr.mxu0 0.0
        %2328 = vmatpush1.msra.mxu0 %v2263
        %2329 = vmatprep.subr.mxu0 0.0
        %2330 = vmatpush1.msra.mxu0 %v2264
        %2331 = vmatprep.subr.mxu0 0.0
        %2332 = vmatpush1.msra.mxu0 0.0
        %2333 = vmatprep.subr.mxu0 0.0
        %2334 = vmatpush1.msra.mxu0 0.0
        %2335 = vmatprep.subr.mxu0 0.0
        %2336 = vmatpush1.msra.mxu0 0.0
        %2337 = vmatprep.subr.mxu0 0.0
        %2338 = vmatpush1.msra.mxu0 0.0
        %2339 = vmatprep.subr.mxu0 0.0
        %2340 = vmatpush1.msra.mxu0 0.0
        %2341 = vmatprep.subr.mxu0 0.0
        %2342 = vmatpush1.msra.mxu0 0.0
        %2343 = vmatprep.subr.mxu0 0.0
        %2344 = vmatpush1.msra.mxu0 0.0
        %2345 = vmatprep.subr.mxu0 0.0
        %2346 = vmatpush1.msra.mxu0 0.0
        %2347 = vmatprep.subr.mxu0 0.0
        %2348 = vmatpush1.msra.mxu0 0.0
        %2349 = vmatprep.subr.mxu0 0.0
        %2350 = vmatpush1.msra.mxu0 0.0
        %2351 = vmatprep.subr.mxu0 0.0
        %2352 = vmatpush1.msra.mxu0 0.0
        %2353 = vmatprep.subr.mxu0 0.0
        %2354 = vmatpush1.msra.mxu0 0.0
        %2355 = vmatprep.mubr.f32.mxu0 %v2286
        %2356 = vmatmul.mubr.f32.gmra.mrb[0].mxu0 %v2160
        %v2357 = vpop.f32.mrb[0].mxu0
        %v2358 = vadd.f32 0.0, %v2357
        %v2359 = vpop.f32.mrb[0].mxu0
        %2360 = vmatprep.mubr.f32.mxu0 %v2289
        %2361 = vmatmul.mubr.f32.gmra.mrb[0].mxu0 %v2162
        %v2362 = vpop.f32.mrb[0].mxu0
        %v2363 = vadd.f32 0.0, %v2362
        %v2364 = vpop.f32.mrb[0].mxu0
        %2365 = vdwg.mxu0
        %v2366 = vadd.f32 %v2157, %v2358
        %v2367 = vadd.f32 %v2158, %v2363
        %s2368 = scalar_lea.vmem [#allocation9], 192
        %v2369 = vld [vmem:[%s2368] sm:$0xff]
        %v2370 = vld [vmem:[%s2368 + $0x8] sm:$0xff]
        %v2371 = vld [vmem:[%s2368 + $0x10] sm:$0x1]
        %v2372 = vld [vmem:[%s2368 + $0x18] sm:$0x1]
        %2373 = vrot.lane.b32.xlu0 %v1163, 122
        %v2374 = vpop.permute.xlu0 %2373
        %2375 = vrot.lane.b32.xlu0 %v1188, 122
        %v2376 = vpop.permute.xlu0 %2375
        %2377 = vrot.lane.b32.xlu0 %v1164, 122
        %v2378 = vpop.permute.xlu0 %2377
        %2379 = vrot.lane.b32.xlu0 %v1189, 122
        %v2380 = vpop.permute.xlu0 %2379
        %2381 = vrot.lane.b32.xlu0 %v1165, 122
        %v2382 = vpop.permute.xlu0 %2381
        %2383 = vrot.lane.b32.xlu0 %v1190, 122
        %v2384 = vpop.permute.xlu0 %2383
        %2385 = vrot.lane.b32.xlu0 %v1166, 122
        %v2386 = vpop.permute.xlu0 %2385
        %2387 = vrot.lane.b32.xlu0 %v1191, 122
        %v2388 = vpop.permute.xlu0 %2387
        %2389 = vrot.lane.b32.xlu0 %v1167, 122
        %v2390 = vpop.permute.xlu0 %2389
        %2391 = vrot.lane.b32.xlu0 %v1192, 122
        %v2392 = vpop.permute.xlu0 %2391
        %2393 = vrot.lane.b32.xlu0 %v1168, 122
        %v2394 = vpop.permute.xlu0 %2393
        %2395 = vrot.lane.b32.xlu0 %v1193, 122
        %v2396 = vpop.permute.xlu0 %2395
        %2397 = vrot.lane.b32.xlu0 %v1169, 122
        %v2398 = vpop.permute.xlu0 %2397
        %2399 = vrot.lane.b32.xlu0 %v1194, 122
        %v2400 = vpop.permute.xlu0 %2399
        %2401 = vrot.lane.b32.xlu0 %v1170, 122
        %v2402 = vpop.permute.xlu0 %2401
        %2403 = vrot.lane.b32.xlu0 %v1195, 122
        %v2404 = vpop.permute.xlu0 %2403
        %2405 = vrot.lane.b32.xlu0 %v1171, 122
        %v2406 = vpop.permute.xlu0 %2405
        %2407 = vrot.lane.b32.xlu0 %v1196, 122
        %v2408 = vpop.permute.xlu0 %2407
        %2409 = vrot.lane.b32.xlu0 %v1172, 122
        %v2410 = vpop.permute.xlu0 %2409
        %2411 = vrot.lane.b32.xlu0 %v1197, 122
        %v2412 = vpop.permute.xlu0 %2411
        %2413 = vrot.lane.b32.xlu0 %v1173, 122
        %v2414 = vpop.permute.xlu0 %2413
        %2415 = vrot.lane.b32.xlu0 %v1198, 122
        %v2416 = vpop.permute.xlu0 %2415
        %2417 = vrot.lane.b32.xlu0 %v1174, 122
        %v2418 = vpop.permute.xlu0 %2417
        %2419 = vrot.lane.b32.xlu0 %v1199, 122
        %v2420 = vpop.permute.xlu0 %2419
        %2421 = vrot.lane.b32.xlu0 %v1175, 122
        %v2422 = vpop.permute.xlu0 %2421
        %2423 = vrot.lane.b32.xlu0 %v1200, 122
        %v2424 = vpop.permute.xlu0 %2423
        %2425 = vrot.lane.b32.xlu0 %v1176, 122
        %v2426 = vpop.permute.xlu0 %2425
        %2427 = vrot.lane.b32.xlu0 %v1201, 122
        %v2428 = vpop.permute.xlu0 %2427
        %2429 = vrot.lane.b32.xlu0 %v1177, 122
        %v2430 = vpop.permute.xlu0 %2429
        %2431 = vrot.lane.b32.xlu0 %v1202, 122
        %v2432 = vpop.permute.xlu0 %2431
        %2433 = vrot.lane.b32.xlu0 %v1178, 122
        %v2434 = vpop.permute.xlu0 %2433
        %2435 = vrot.lane.b32.xlu0 %v1203, 122
        %v2436 = vpop.permute.xlu0 %2435
        %2437 = vrot.lane.b32.xlu0 %v1179, 122
        %v2438 = vpop.permute.xlu0 %2437
        %2439 = vrot.lane.b32.xlu0 %v1204, 122
        %v2440 = vpop.permute.xlu0 %2439
        %2441 = vrot.lane.b32.xlu0 %v1180, 122
        %v2442 = vpop.permute.xlu0 %2441
        %2443 = vrot.lane.b32.xlu0 %v1205, 122
        %v2444 = vpop.permute.xlu0 %2443
        %2445 = vrot.lane.b32.xlu0 %v1181, 122
        %v2446 = vpop.permute.xlu0 %2445
        %2447 = vrot.lane.b32.xlu0 %v1206, 122
        %v2448 = vpop.permute.xlu0 %2447
        %2449 = vrot.lane.b32.xlu0 %v1182, 122
        %v2450 = vpop.permute.xlu0 %2449
        %2451 = vrot.lane.b32.xlu0 %v1207, 122
        %v2452 = vpop.permute.xlu0 %2451
        %vm2453 = vcmask 998400
        %v2454 = vsel %vm2453, %v2374, %v2376
        %v2455 = vsel %vm2453, %v2378, %v2380
        %v2456 = vsel %vm2453, %v2382, %v2384
        %v2457 = vsel %vm2453, %v2386, %v2388
        %v2458 = vsel %vm2453, %v2390, %v2392
        %v2459 = vsel %vm2453, %v2394, %v2396
        %v2460 = vsel %vm2453, %v2398, %v2400
        %v2461 = vsel %vm2453, %v2402, %v2404
        %v2462 = vsel %vm2453, %v2406, %v2408
        %v2463 = vsel %vm2453, %v2410, %v2412
        %v2464 = vsel %vm2453, %v2414, %v2416
        %v2465 = vsel %vm2453, %v2418, %v2420
        %v2466 = vsel %vm2453, %v2422, %v2424
        %v2467 = vsel %vm2453, %v2426, %v2428
        %v2468 = vsel %vm2453, %v2430, %v2432
        %v2469 = vsel %vm2453, %v2434, %v2436
        %v2470 = vsel %vm2453, %v2438, %v2440
        %v2471 = vsel %vm2453, %v2442, %v2444
        %v2472 = vsel %vm2453, %v2446, %v2448
        %v2473 = vsel %vm2453, %v2450, %v2452
        %v2495 = vsel %vm1369, %v2370, 0
        %v2498 = vsel %vm1369, %v2372, 0
        %2500 = vmatprep.subr.mxu0 0.0
        %2501 = vmatpush1.msra.mxu0 %v2454
        %2502 = vmatprep.subr.mxu0 0.0
        %2503 = vmatpush1.msra.mxu0 %v2455
        %2504 = vmatprep.subr.mxu0 0.0
        %2505 = vmatpush1.msra.mxu0 %v2456
        %2506 = vmatprep.subr.mxu0 0.0
        %2507 = vmatpush1.msra.mxu0 %v2457
        %2508 = vmatprep.subr.mxu0 0.0
        %2509 = vmatpush1.msra.mxu0 %v2458
        %2510 = vmatprep.subr.mxu0 0.0
        %2511 = vmatpush1.msra.mxu0 %v2459
        %2512 = vmatprep.subr.mxu0 0.0
        %2513 = vmatpush1.msra.mxu0 %v2460
        %2514 = vmatprep.subr.mxu0 0.0
        %2515 = vmatpush1.msra.mxu0 %v2461
        %2516 = vmatprep.subr.mxu0 0.0
        %2517 = vmatpush1.msra.mxu0 %v2462
        %2518 = vmatprep.subr.mxu0 0.0
        %2519 = vmatpush1.msra.mxu0 %v2463
        %2520 = vmatprep.subr.mxu0 0.0
        %2521 = vmatpush1.msra.mxu0 %v2464
        %2522 = vmatprep.subr.mxu0 0.0
        %2523 = vmatpush1.msra.mxu0 %v2465
        %2524 = vmatprep.subr.mxu0 0.0
        %2525 = vmatpush1.msra.mxu0 %v2466
        %2526 = vmatprep.subr.mxu0 0.0
        %2527 = vmatpush1.msra.mxu0 %v2467
        %2528 = vmatprep.subr.mxu0 0.0
        %2529 = vmatpush1.msra.mxu0 %v2468
        %2530 = vmatprep.subr.mxu0 0.0
        %2531 = vmatpush1.msra.mxu0 %v2469
        %2532 = vmatprep.subr.mxu0 0.0
        %2533 = vmatpush1.msra.mxu0 %v2470
        %2534 = vmatprep.subr.mxu0 0.0
        %2535 = vmatpush1.msra.mxu0 %v2471
        %2536 = vmatprep.subr.mxu0 0.0
        %2537 = vmatpush1.msra.mxu0 %v2472
        %2538 = vmatprep.subr.mxu0 0.0
        %2539 = vmatpush1.msra.mxu0 %v2473
        %2540 = vmatprep.subr.mxu0 0.0
        %2541 = vmatpush1.msra.mxu0 0.0
        %2542 = vmatprep.subr.mxu0 0.0
        %2543 = vmatpush1.msra.mxu0 0.0
        %2544 = vmatprep.subr.mxu0 0.0
        %2545 = vmatpush1.msra.mxu0 0.0
        %2546 = vmatprep.subr.mxu0 0.0
        %2547 = vmatpush1.msra.mxu0 0.0
        %2548 = vmatprep.subr.mxu0 0.0
        %2549 = vmatpush1.msra.mxu0 0.0
        %2550 = vmatprep.subr.mxu0 0.0
        %2551 = vmatpush1.msra.mxu0 0.0
        %2552 = vmatprep.subr.mxu0 0.0
        %2553 = vmatpush1.msra.mxu0 0.0
        %2554 = vmatprep.subr.mxu0 0.0
        %2555 = vmatpush1.msra.mxu0 0.0
        %2556 = vmatprep.subr.mxu0 0.0
        %2557 = vmatpush1.msra.mxu0 0.0
        %2558 = vmatprep.subr.mxu0 0.0
        %2559 = vmatpush1.msra.mxu0 0.0
        %2560 = vmatprep.subr.mxu0 0.0
        %2561 = vmatpush1.msra.mxu0 0.0
        %2562 = vmatprep.subr.mxu0 0.0
        %2563 = vmatpush1.msra.mxu0 0.0
        %2564 = vmatprep.mubr.f32.mxu0 %v2495
        %2565 = vmatmul.mubr.f32.gmra.mrb[0].mxu0 %v2369
        %v2566 = vpop.f32.mrb[0].mxu0
        %v2567 = vadd.f32 0.0, %v2566
        %v2568 = vpop.f32.mrb[0].mxu0
        %2569 = vmatprep.mubr.f32.mxu0 %v2498
        %2570 = vmatmul.mubr.f32.gmra.mrb[0].mxu0 %v2371
        %v2571 = vpop.f32.mrb[0].mxu0
        %v2572 = vadd.f32 0.0, %v2571
        %v2573 = vpop.f32.mrb[0].mxu0
        %2574 = vdwg.mxu0
        %v2575 = vadd.f32 %v2366, %v2567
        %v2576 = vadd.f32 %v2367, %v2572
        %s2577 = scalar_lea.vmem [#allocation9], 224
        %v2578 = vld [vmem:[%s2577] sm:$0xff]
        %v2579 = vld [vmem:[%s2577 + $0x8] sm:$0xff]
        %v2580 = vld [vmem:[%s2577 + $0x10] sm:$0x1]
        %v2581 = vld [vmem:[%s2577 + $0x18] sm:$0x1]
        %2582 = vrot.lane.b32.xlu0 %v1163, 121
        %v2583 = vpop.permute.xlu0 %2582
        %2584 = vrot.lane.b32.xlu0 %v1188, 121
        %v2585 = vpop.permute.xlu0 %2584
        %2586 = vrot.lane.b32.xlu0 %v1164, 121
        %v2587 = vpop.permute.xlu0 %2586
        %2588 = vrot.lane.b32.xlu0 %v1189, 121
        %v2589 = vpop.permute.xlu0 %2588
        %2590 = vrot.lane.b32.xlu0 %v1165, 121
        %v2591 = vpop.permute.xlu0 %2590
        %2592 = vrot.lane.b32.xlu0 %v1190, 121
        %v2593 = vpop.permute.xlu0 %2592
        %2594 = vrot.lane.b32.xlu0 %v1166, 121
        %v2595 = vpop.permute.xlu0 %2594
        %2596 = vrot.lane.b32.xlu0 %v1191, 121
        %v2597 = vpop.permute.xlu0 %2596
        %2598 = vrot.lane.b32.xlu0 %v1167, 121
        %v2599 = vpop.permute.xlu0 %2598
        %2600 = vrot.lane.b32.xlu0 %v1192, 121
        %v2601 = vpop.permute.xlu0 %2600
        %2602 = vrot.lane.b32.xlu0 %v1168, 121
        %v2603 = vpop.permute.xlu0 %2602
        %2604 = vrot.lane.b32.xlu0 %v1193, 121
        %v2605 = vpop.permute.xlu0 %2604
        %2606 = vrot.lane.b32.xlu0 %v1169, 121
        %v2607 = vpop.permute.xlu0 %2606
        %2608 = vrot.lane.b32.xlu0 %v1194, 121
        %v2609 = vpop.permute.xlu0 %2608
        %2610 = vrot.lane.b32.xlu0 %v1170, 121
        %v2611 = vpop.permute.xlu0 %2610
        %2612 = vrot.lane.b32.xlu0 %v1195, 121
        %v2613 = vpop.permute.xlu0 %2612
        %2614 = vrot.lane.b32.xlu0 %v1171, 121
        %v2615 = vpop.permute.xlu0 %2614
        %2616 = vrot.lane.b32.xlu0 %v1196, 121
        %v2617 = vpop.permute.xlu0 %2616
        %2618 = vrot.lane.b32.xlu0 %v1172, 121
        %v2619 = vpop.permute.xlu0 %2618
        %2620 = vrot.lane.b32.xlu0 %v1197, 121
        %v2621 = vpop.permute.xlu0 %2620
        %2622 = vrot.lane.b32.xlu0 %v1173, 121
        %v2623 = vpop.permute.xlu0 %2622
        %2624 = vrot.lane.b32.xlu0 %v1198, 121
        %v2625 = vpop.permute.xlu0 %2624
        %2626 = vrot.lane.b32.xlu0 %v1174, 121
        %v2627 = vpop.permute.xlu0 %2626
        %2628 = vrot.lane.b32.xlu0 %v1199, 121
        %v2629 = vpop.permute.xlu0 %2628
        %2630 = vrot.lane.b32.xlu0 %v1175, 121
        %v2631 = vpop.permute.xlu0 %2630
        %2632 = vrot.lane.b32.xlu0 %v1200, 121
        %v2633 = vpop.permute.xlu0 %2632
        %2634 = vrot.lane.b32.xlu0 %v1176, 121
        %v2635 = vpop.permute.xlu0 %2634
        %2636 = vrot.lane.b32.xlu0 %v1201, 121
        %v2637 = vpop.permute.xlu0 %2636
        %2638 = vrot.lane.b32.xlu0 %v1177, 121
        %v2639 = vpop.permute.xlu0 %2638
        %2640 = vrot.lane.b32.xlu0 %v1202, 121
        %v2641 = vpop.permute.xlu0 %2640
        %2642 = vrot.lane.b32.xlu0 %v1178, 121
        %v2643 = vpop.permute.xlu0 %2642
        %2644 = vrot.lane.b32.xlu0 %v1203, 121
        %v2645 = vpop.permute.xlu0 %2644
        %2646 = vrot.lane.b32.xlu0 %v1179, 121
        %v2647 = vpop.permute.xlu0 %2646
        %2648 = vrot.lane.b32.xlu0 %v1204, 121
        %v2649 = vpop.permute.xlu0 %2648
        %2650 = vrot.lane.b32.xlu0 %v1180, 121
        %v2651 = vpop.permute.xlu0 %2650
        %2652 = vrot.lane.b32.xlu0 %v1205, 121
        %v2653 = vpop.permute.xlu0 %2652
        %2654 = vrot.lane.b32.xlu0 %v1181, 121
        %v2655 = vpop.permute.xlu0 %2654
        %2656 = vrot.lane.b32.xlu0 %v1206, 121
        %v2657 = vpop.permute.xlu0 %2656
        %2658 = vrot.lane.b32.xlu0 %v1182, 121
        %v2659 = vpop.permute.xlu0 %2658
        %2660 = vrot.lane.b32.xlu0 %v1207, 121
        %v2661 = vpop.permute.xlu0 %2660
        %vm2662 = vcmask 990208
        %v2663 = vsel %vm2662, %v2583, %v2585
        %v2664 = vsel %vm2662, %v2587, %v2589
        %v2665 = vsel %vm2662, %v2591, %v2593
        %v2666 = vsel %vm2662, %v2595, %v2597
        %v2667 = vsel %vm2662, %v2599, %v2601
        %v2668 = vsel %vm2662, %v2603, %v2605
        %v2669 = vsel %vm2662, %v2607, %v2609
        %v2670 = vsel %vm2662, %v2611, %v2613
        %v2671 = vsel %vm2662, %v2615, %v2617
        %v2672 = vsel %vm2662, %v2619, %v2621
        %v2673 = vsel %vm2662, %v2623, %v2625
        %v2674 = vsel %vm2662, %v2627, %v2629
        %v2675 = vsel %vm2662, %v2631, %v2633
        %v2676 = vsel %vm2662, %v2635, %v2637
        %v2677 = vsel %vm2662, %v2639, %v2641
        %v2678 = vsel %vm2662, %v2643, %v2645
        %v2679 = vsel %vm2662, %v2647, %v2649
        %v2680 = vsel %vm2662, %v2651, %v2653
        %v2681 = vsel %vm2662, %v2655, %v2657
        %v2682 = vsel %vm2662, %v2659, %v2661
        %v2704 = vsel %vm1369, %v2579, 0
        %v2707 = vsel %vm1369, %v2581, 0
        %2709 = vmatprep.subr.mxu0 0.0
        %2710 = vmatpush1.msra.mxu0 %v2663
        %2711 = vmatprep.subr.mxu0 0.0
        %2712 = vmatpush1.msra.mxu0 %v2664
        %2713 = vmatprep.subr.mxu0 0.0
        %2714 = vmatpush1.msra.mxu0 %v2665
        %2715 = vmatprep.subr.mxu0 0.0
        %2716 = vmatpush1.msra.mxu0 %v2666
        %2717 = vmatprep.subr.mxu0 0.0
        %2718 = vmatpush1.msra.mxu0 %v2667
        %2719 = vmatprep.subr.mxu0 0.0
        %2720 = vmatpush1.msra.mxu0 %v2668
        %2721 = vmatprep.subr.mxu0 0.0
        %2722 = vmatpush1.msra.mxu0 %v2669
        %2723 = vmatprep.subr.mxu0 0.0
        %2724 = vmatpush1.msra.mxu0 %v2670
        %2725 = vmatprep.subr.mxu0 0.0
        %2726 = vmatpush1.msra.mxu0 %v2671
        %2727 = vmatprep.subr.mxu0 0.0
        %2728 = vmatpush1.msra.mxu0 %v2672
        %2729 = vmatprep.subr.mxu0 0.0
        %2730 = vmatpush1.msra.mxu0 %v2673
        %2731 = vmatprep.subr.mxu0 0.0
        %2732 = vmatpush1.msra.mxu0 %v2674
        %2733 = vmatprep.subr.mxu0 0.0
        %2734 = vmatpush1.msra.mxu0 %v2675
        %2735 = vmatprep.subr.mxu0 0.0
        %2736 = vmatpush1.msra.mxu0 %v2676
        %2737 = vmatprep.subr.mxu0 0.0
        %2738 = vmatpush1.msra.mxu0 %v2677
        %2739 = vmatprep.subr.mxu0 0.0
        %2740 = vmatpush1.msra.mxu0 %v2678
        %2741 = vmatprep.subr.mxu0 0.0
        %2742 = vmatpush1.msra.mxu0 %v2679
        %2743 = vmatprep.subr.mxu0 0.0
        %2744 = vmatpush1.msra.mxu0 %v2680
        %2745 = vmatprep.subr.mxu0 0.0
        %2746 = vmatpush1.msra.mxu0 %v2681
        %2747 = vmatprep.subr.mxu0 0.0
        %2748 = vmatpush1.msra.mxu0 %v2682
        %2749 = vmatprep.subr.mxu0 0.0
        %2750 = vmatpush1.msra.mxu0 0.0
        %2751 = vmatprep.subr.mxu0 0.0
        %2752 = vmatpush1.msra.mxu0 0.0
        %2753 = vmatprep.subr.mxu0 0.0
        %2754 = vmatpush1.msra.mxu0 0.0
        %2755 = vmatprep.subr.mxu0 0.0
        %2756 = vmatpush1.msra.mxu0 0.0
        %2757 = vmatprep.subr.mxu0 0.0
        %2758 = vmatpush1.msra.mxu0 0.0
        %2759 = vmatprep.subr.mxu0 0.0
        %2760 = vmatpush1.msra.mxu0 0.0
        %2761 = vmatprep.subr.mxu0 0.0
        %2762 = vmatpush1.msra.mxu0 0.0
        %2763 = vmatprep.subr.mxu0 0.0
        %2764 = vmatpush1.msra.mxu0 0.0
        %2765 = vmatprep.subr.mxu0 0.0
        %2766 = vmatpush1.msra.mxu0 0.0
        %2767 = vmatprep.subr.mxu0 0.0
        %2768 = vmatpush1.msra.mxu0 0.0
        %2769 = vmatprep.subr.mxu0 0.0
        %2770 = vmatpush1.msra.mxu0 0.0
        %2771 = vmatprep.subr.mxu0 0.0
        %2772 = vmatpush1.msra.mxu0 0.0
        %2773 = vmatprep.mubr.f32.mxu0 %v2704
        %2774 = vmatmul.mubr.f32.gmra.mrb[0].mxu0 %v2578
        %v2775 = vpop.f32.mrb[0].mxu0
        %v2776 = vadd.f32 0.0, %v2775
        %v2777 = vpop.f32.mrb[0].mxu0
        %2778 = vmatprep.mubr.f32.mxu0 %v2707
        %2779 = vmatmul.mubr.f32.gmra.mrb[0].mxu0 %v2580
        %v2780 = vpop.f32.mrb[0].mxu0
        %v2781 = vadd.f32 0.0, %v2780
        %v2782 = vpop.f32.mrb[0].mxu0
        %2783 = vdwg.mxu0
        %v2784 = vadd.f32 %v2575, %v2776
        %v2785 = vadd.f32 %v2576, %v2781
        %s2786 = scalar_lea.vmem [#allocation9], 256
        %v2787 = vld [vmem:[%s2786] sm:$0xff]
        %v2788 = vld [vmem:[%s2786 + $0x8] sm:$0xff]
        %v2789 = vld [vmem:[%s2786 + $0x10] sm:$0x1]
        %v2790 = vld [vmem:[%s2786 + $0x18] sm:$0x1]
        %2791 = vrot.lane.b32.xlu0 %v1163, 120
        %v2792 = vpop.permute.xlu0 %2791
        %2793 = vrot.lane.b32.xlu0 %v1188, 120
        %v2794 = vpop.permute.xlu0 %2793
        %2795 = vrot.lane.b32.xlu0 %v1164, 120
        %v2796 = vpop.permute.xlu0 %2795
        %2797 = vrot.lane.b32.xlu0 %v1189, 120
        %v2798 = vpop.permute.xlu0 %2797
        %2799 = vrot.lane.b32.xlu0 %v1165, 120
        %v2800 = vpop.permute.xlu0 %2799
        %2801 = vrot.lane.b32.xlu0 %v1190, 120
        %v2802 = vpop.permute.xlu0 %2801
        %2803 = vrot.lane.b32.xlu0 %v1166, 120
        %v2804 = vpop.permute.xlu0 %2803
        %2805 = vrot.lane.b32.xlu0 %v1191, 120
        %v2806 = vpop.permute.xlu0 %2805
        %2807 = vrot.lane.b32.xlu0 %v1167, 120
        %v2808 = vpop.permute.xlu0 %2807
        %2809 = vrot.lane.b32.xlu0 %v1192, 120
        %v2810 = vpop.permute.xlu0 %2809
        %2811 = vrot.lane.b32.xlu0 %v1168, 120
        %v2812 = vpop.permute.xlu0 %2811
        %2813 = vrot.lane.b32.xlu0 %v1193, 120
        %v2814 = vpop.permute.xlu0 %2813
        %2815 = vrot.lane.b32.xlu0 %v1169, 120
        %v2816 = vpop.permute.xlu0 %2815
        %2817 = vrot.lane.b32.xlu0 %v1194, 120
        %v2818 = vpop.permute.xlu0 %2817
        %2819 = vrot.lane.b32.xlu0 %v1170, 120
        %v2820 = vpop.permute.xlu0 %2819
        %2821 = vrot.lane.b32.xlu0 %v1195, 120
        %v2822 = vpop.permute.xlu0 %2821
        %2823 = vrot.lane.b32.xlu0 %v1171, 120
        %v2824 = vpop.permute.xlu0 %2823
        %2825 = vrot.lane.b32.xlu0 %v1196, 120
        %v2826 = vpop.permute.xlu0 %2825
        %2827 = vrot.lane.b32.xlu0 %v1172, 120
        %v2828 = vpop.permute.xlu0 %2827
        %2829 = vrot.lane.b32.xlu0 %v1197, 120
        %v2830 = vpop.permute.xlu0 %2829
        %2831 = vrot.lane.b32.xlu0 %v1173, 120
        %v2832 = vpop.permute.xlu0 %2831
        %2833 = vrot.lane.b32.xlu0 %v1198, 120
        %v2834 = vpop.permute.xlu0 %2833
        %2835 = vrot.lane.b32.xlu0 %v1174, 120
        %v2836 = vpop.permute.xlu0 %2835
        %2837 = vrot.lane.b32.xlu0 %v1199, 120
        %v2838 = vpop.permute.xlu0 %2837
        %2839 = vrot.lane.b32.xlu0 %v1175, 120
        %v2840 = vpop.permute.xlu0 %2839
        %2841 = vrot.lane.b32.xlu0 %v1200, 120
        %v2842 = vpop.permute.xlu0 %2841
        %2843 = vrot.lane.b32.xlu0 %v1176, 120
        %v2844 = vpop.permute.xlu0 %2843
        %2845 = vrot.lane.b32.xlu0 %v1201, 120
        %v2846 = vpop.permute.xlu0 %2845
        %2847 = vrot.lane.b32.xlu0 %v1177, 120
        %v2848 = vpop.permute.xlu0 %2847
        %2849 = vrot.lane.b32.xlu0 %v1202, 120
        %v2850 = vpop.permute.xlu0 %2849
        %2851 = vrot.lane.b32.xlu0 %v1178, 120
        %v2852 = vpop.permute.xlu0 %2851
        %2853 = vrot.lane.b32.xlu0 %v1203, 120
        %v2854 = vpop.permute.xlu0 %2853
        %2855 = vrot.lane.b32.xlu0 %v1179, 120
        %v2856 = vpop.permute.xlu0 %2855
        %2857 = vrot.lane.b32.xlu0 %v1204, 120
        %v2858 = vpop.permute.xlu0 %2857
        %2859 = vrot.lane.b32.xlu0 %v1180, 120
        %v2860 = vpop.permute.xlu0 %2859
        %2861 = vrot.lane.b32.xlu0 %v1205, 120
        %v2862 = vpop.permute.xlu0 %2861
        %2863 = vrot.lane.b32.xlu0 %v1181, 120
        %v2864 = vpop.permute.xlu0 %2863
        %2865 = vrot.lane.b32.xlu0 %v1206, 120
        %v2866 = vpop.permute.xlu0 %2865
        %2867 = vrot.lane.b32.xlu0 %v1182, 120
        %v2868 = vpop.permute.xlu0 %2867
        %2869 = vrot.lane.b32.xlu0 %v1207, 120
        %v2870 = vpop.permute.xlu0 %2869
        %vm2871 = vcmask 982016
        %v2872 = vsel %vm2871, %v2792, %v2794
        %v2873 = vsel %vm2871, %v2796, %v2798
        %v2874 = vsel %vm2871, %v2800, %v2802
        %v2875 = vsel %vm2871, %v2804, %v2806
        %v2876 = vsel %vm2871, %v2808, %v2810
        %v2877 = vsel %vm2871, %v2812, %v2814
        %v2878 = vsel %vm2871, %v2816, %v2818
        %v2879 = vsel %vm2871, %v2820, %v2822
        %v2880 = vsel %vm2871, %v2824, %v2826
        %v2881 = vsel %vm2871, %v2828, %v2830
        %v2882 = vsel %vm2871, %v2832, %v2834
        %v2883 = vsel %vm2871, %v2836, %v2838
        %v2884 = vsel %vm2871, %v2840, %v2842
        %v2885 = vsel %vm2871, %v2844, %v2846
        %v2886 = vsel %vm2871, %v2848, %v2850
        %v2887 = vsel %vm2871, %v2852, %v2854
        %v2888 = vsel %vm2871, %v2856, %v2858
        %v2889 = vsel %vm2871, %v2860, %v2862
        %v2890 = vsel %vm2871, %v2864, %v2866
        %v2891 = vsel %vm2871, %v2868, %v2870
        %v2913 = vsel %vm1369, %v2788, 0
        %v2916 = vsel %vm1369, %v2790, 0
        %2918 = vmatprep.subr.mxu0 0.0
        %2919 = vmatpush1.msra.mxu0 %v2872
        %2920 = vmatprep.subr.mxu0 0.0
        %2921 = vmatpush1.msra.mxu0 %v2873
        %2922 = vmatprep.subr.mxu0 0.0
        %2923 = vmatpush1.msra.mxu0 %v2874
        %2924 = vmatprep.subr.mxu0 0.0
        %2925 = vmatpush1.msra.mxu0 %v2875
        %2926 = vmatprep.subr.mxu0 0.0
        %2927 = vmatpush1.msra.mxu0 %v2876
        %2928 = vmatprep.subr.mxu0 0.0
        %2929 = vmatpush1.msra.mxu0 %v2877
        %2930 = vmatprep.subr.mxu0 0.0
        %2931 = vmatpush1.msra.mxu0 %v2878
        %2932 = vmatprep.subr.mxu0 0.0
        %2933 = vmatpush1.msra.mxu0 %v2879
        %2934 = vmatprep.subr.mxu0 0.0
        %2935 = vmatpush1.msra.mxu0 %v2880
        %2936 = vmatprep.subr.mxu0 0.0
        %2937 = vmatpush1.msra.mxu0 %v2881
        %2938 = vmatprep.subr.mxu0 0.0
        %2939 = vmatpush1.msra.mxu0 %v2882
        %2940 = vmatprep.subr.mxu0 0.0
        %2941 = vmatpush1.msra.mxu0 %v2883
        %2942 = vmatprep.subr.mxu0 0.0
        %2943 = vmatpush1.msra.mxu0 %v2884
        %2944 = vmatprep.subr.mxu0 0.0
        %2945 = vmatpush1.msra.mxu0 %v2885
        %2946 = vmatprep.subr.mxu0 0.0
        %2947 = vmatpush1.msra.mxu0 %v2886
        %2948 = vmatprep.subr.mxu0 0.0
        %2949 = vmatpush1.msra.mxu0 %v2887
        %2950 = vmatprep.subr.mxu0 0.0
        %2951 = vmatpush1.msra.mxu0 %v2888
        %2952 = vmatprep.subr.mxu0 0.0
        %2953 = vmatpush1.msra.mxu0 %v2889
        %2954 = vmatprep.subr.mxu0 0.0
        %2955 = vmatpush1.msra.mxu0 %v2890
        %2956 = vmatprep.subr.mxu0 0.0
        %2957 = vmatpush1.msra.mxu0 %v2891
        %2958 = vmatprep.subr.mxu0 0.0
        %2959 = vmatpush1.msra.mxu0 0.0
        %2960 = vmatprep.subr.mxu0 0.0
        %2961 = vmatpush1.msra.mxu0 0.0
        %2962 = vmatprep.subr.mxu0 0.0
        %2963 = vmatpush1.msra.mxu0 0.0
        %2964 = vmatprep.subr.mxu0 0.0
        %2965 = vmatpush1.msra.mxu0 0.0
        %2966 = vmatprep.subr.mxu0 0.0
        %2967 = vmatpush1.msra.mxu0 0.0
        %2968 = vmatprep.subr.mxu0 0.0
        %2969 = vmatpush1.msra.mxu0 0.0
        %2970 = vmatprep.subr.mxu0 0.0
        %2971 = vmatpush1.msra.mxu0 0.0
        %2972 = vmatprep.subr.mxu0 0.0
        %2973 = vmatpush1.msra.mxu0 0.0
        %2974 = vmatprep.subr.mxu0 0.0
        %2975 = vmatpush1.msra.mxu0 0.0
        %2976 = vmatprep.subr.mxu0 0.0
        %2977 = vmatpush1.msra.mxu0 0.0
        %2978 = vmatprep.subr.mxu0 0.0
        %2979 = vmatpush1.msra.mxu0 0.0
        %2980 = vmatprep.subr.mxu0 0.0
        %2981 = vmatpush1.msra.mxu0 0.0
        %2982 = vmatprep.mubr.f32.mxu0 %v2913
        %2983 = vmatmul.mubr.f32.gmra.mrb[0].mxu0 %v2787
        %v2984 = vpop.f32.mrb[0].mxu0
        %v2985 = vadd.f32 0.0, %v2984
        %v2986 = vpop.f32.mrb[0].mxu0
        %2987 = vmatprep.mubr.f32.mxu0 %v2916
        %2988 = vmatmul.mubr.f32.gmra.mrb[0].mxu0 %v2789
        %v2989 = vpop.f32.mrb[0].mxu0
        %v2990 = vadd.f32 0.0, %v2989
        %v2991 = vpop.f32.mrb[0].mxu0
        %2992 = vdwg.mxu0
        %v2993 = vadd.f32 %v2784, %v2985
        %v2994 = vadd.f32 %v2785, %v2990
        %v2995 = vld [vmem:[%s4] sm:$0xff]
        %v2996 = vld [vmem:[%s4 + $0x8] sm:$0x1]
        %2998 = vset.pattern.permute.xlu0 0
        %2999 = vperm.xlu0 %2998, %v2995
        %v3000 = vpop.permute.xlu0 %2999
        %3003 = vset.pattern.permute.xlu0 0
        %3004 = vperm.xlu0 %3003, %v2996
        %v3005 = vpop.permute.xlu0 %3004
        %v3007 = vadd.f32 %v2993, %v3000
        %v3008 = vadd.f32 %v2994, %v3005
        %v3009 = vmax.f32 %v3007, 0.0
        %v3010 = vmax.f32 %v3008, 0.0
        %v3011 = vld [vmem:[%s2] sm:$0xff]
        %v3012 = vld [vmem:[%s2 + $0x8] sm:$0xff]
        %v3013 = vld [vmem:[%s2 + $0x10] sm:$0xff]
        %v3014 = vld [vmem:[%s2 + $0x18] sm:$0xff]
        %v3015 = vld [vmem:[%s3] sm:$0xff]
        %v3016 = vld [vmem:[%s3 + $0x8] sm:$0xff]
        %v3017 = vld [vmem:[%s3 + $0x10] sm:$0xff]
        %v3018 = vld [vmem:[%s3 + $0x18] sm:$0xff]
        %v3019 = vld [vmem:[%s398] sm:$0xff]
        %v3020 = vld [vmem:[%s398 + $0x8] sm:$0xff]
        %v3021 = vld [vmem:[%s398 + $0x10] sm:$0xff]
        %v3022 = vld [vmem:[%s398 + $0x18] sm:$0xff]
        %v3023 = vlaneseq
        %v3024 = vshrl.u32 %v3023, 7
        %v3025 = vsub.s32 0, %v3024
        %v3026 = vrot.slane %v3009, %v3025
        %v3027 = vmul.f32 %v3019, %v3026
        %v3028 = vmul.f32 %v3020, %v3026
        %v3029 = vmul.f32 %v3021, %v3026
        %v3030 = vmul.f32 %v3022, %v3026
        %3032 = vset.pattern.permute.xlu0 0
        %3033 = vperm.xlu0 %3032, %v3015
        %v3034 = vpop.permute.xlu0 %3033
        %3037 = vset.pattern.permute.xlu0 0
        %3038 = vperm.xlu0 %3037, %v3016
        %v3039 = vpop.permute.xlu0 %3038
        %3042 = vset.pattern.permute.xlu0 0
        %3043 = vperm.xlu0 %3042, %v3017
        %v3044 = vpop.permute.xlu0 %3043
        %3047 = vset.pattern.permute.xlu0 0
        %3048 = vperm.xlu0 %3047, %v3018
        %v3049 = vpop.permute.xlu0 %3048
        %v3052 = vsel %vm1369, %v3011, 0
        %v3055 = vsel %vm1369, %v3012, 0
        %v3058 = vsel %vm1369, %v3013, 0
        %v3061 = vsel %vm1369, %v3014, 0
        %3063 = vmatprep.subr.mxu0 0.0
        %3064 = vmatpush1.msra.mxu0 %v3027
        %3065 = vmatprep.subr.mxu0 0.0
        %3066 = vmatpush1.msra.mxu0 %v3028
        %3067 = vmatprep.subr.mxu0 0.0
        %3068 = vmatpush1.msra.mxu0 %v3029
        %3069 = vmatprep.subr.mxu0 0.0
        %3070 = vmatpush1.msra.mxu0 %v3030
        %3071 = vmatprep.subr.mxu0 0.0
        %3072 = vmatpush1.msra.mxu0 0.0
        %3073 = vmatprep.subr.mxu0 0.0
        %3074 = vmatpush1.msra.mxu0 0.0
        %3075 = vmatprep.subr.mxu0 0.0
        %3076 = vmatpush1.msra.mxu0 0.0
        %3077 = vmatprep.subr.mxu0 0.0
        %3078 = vmatpush1.msra.mxu0 0.0
        %3079 = vmatprep.subr.mxu0 0.0
        %3080 = vmatpush1.msra.mxu0 0.0
        %3081 = vmatprep.subr.mxu0 0.0
        %3082 = vmatpush1.msra.mxu0 0.0
        %3083 = vmatprep.subr.mxu0 0.0
        %3084 = vmatpush1.msra.mxu0 0.0
        %3085 = vmatprep.subr.mxu0 0.0
        %3086 = vmatpush1.msra.mxu0 0.0
        %3087 = vmatprep.subr.mxu0 0.0
        %3088 = vmatpush1.msra.mxu0 0.0
        %3089 = vmatprep.subr.mxu0 0.0
        %3090 = vmatpush1.msra.mxu0 0.0
        %3091 = vmatprep.subr.mxu0 0.0
        %3092 = vmatpush1.msra.mxu0 0.0
        %3093 = vmatprep.subr.mxu0 0.0
        %3094 = vmatpush1.msra.mxu0 0.0
        %3095 = vmatprep.subr.mxu0 0.0
        %3096 = vmatpush1.msra.mxu0 0.0
        %3097 = vmatprep.subr.mxu0 0.0
        %3098 = vmatpush1.msra.mxu0 0.0
        %3099 = vmatprep.subr.mxu0 0.0
        %3100 = vmatpush1.msra.mxu0 0.0
        %3101 = vmatprep.subr.mxu0 0.0
        %3102 = vmatpush1.msra.mxu0 0.0
        %3103 = vmatprep.subr.mxu0 0.0
        %3104 = vmatpush1.msra.mxu0 0.0
        %3105 = vmatprep.subr.mxu0 0.0
        %3106 = vmatpush1.msra.mxu0 0.0
        %3107 = vmatprep.subr.mxu0 0.0
        %3108 = vmatpush1.msra.mxu0 0.0
        %3109 = vmatprep.subr.mxu0 0.0
        %3110 = vmatpush1.msra.mxu0 0.0
        %3111 = vmatprep.subr.mxu0 0.0
        %3112 = vmatpush1.msra.mxu0 0.0
        %3113 = vmatprep.subr.mxu0 0.0
        %3114 = vmatpush1.msra.mxu0 0.0
        %3115 = vmatprep.subr.mxu0 0.0
        %3116 = vmatpush1.msra.mxu0 0.0
        %3117 = vmatprep.subr.mxu0 0.0
        %3118 = vmatpush1.msra.mxu0 0.0
        %3119 = vmatprep.subr.mxu0 0.0
        %3120 = vmatpush1.msra.mxu0 0.0
        %3121 = vmatprep.subr.mxu0 0.0
        %3122 = vmatpush1.msra.mxu0 0.0
        %3123 = vmatprep.subr.mxu0 0.0
        %3124 = vmatpush1.msra.mxu0 0.0
        %3125 = vmatprep.subr.mxu0 0.0
        %3126 = vmatpush1.msra.mxu0 0.0
        %3127 = vmatprep.mubr.f32.mxu0 0.0
        %3128 = vmatmul.mubr.f32.gmra.mrb[0].mxu0 %v3052
        %v3129 = vpop.f32.mrb[0].mxu0
        %v3130 = vadd.f32 %v3034, %v3129
        %v3131 = vpop.f32.mrb[0].mxu0
        %3132 = vmatprep.mubr.f32.mxu0 0.0
        %3133 = vmatmul.mubr.f32.gmra.mrb[0].mxu0 %v3055
        %v3134 = vpop.f32.mrb[0].mxu0
        %v3135 = vadd.f32 %v3039, %v3134
        %v3136 = vpop.f32.mrb[0].mxu0
        %3137 = vmatprep.mubr.f32.mxu0 0.0
        %3138 = vmatmul.mubr.f32.gmra.mrb[0].mxu0 %v3058
        %v3139 = vpop.f32.mrb[0].mxu0
        %v3140 = vadd.f32 %v3044, %v3139
        %v3141 = vpop.f32.mrb[0].mxu0
        %3142 = vmatprep.mubr.f32.mxu0 0.0
        %3143 = vmatmul.mubr.f32.gmra.mrb[0].mxu0 %v3061
        %v3144 = vpop.f32.mrb[0].mxu0
        %v3145 = vadd.f32 %v3049, %v3144
        %v3146 = vpop.f32.mrb[0].mxu0
        %3147 = vdwg.mxu0
        %3148 = vst [vmem:[#allocation3] sm:$0xff] %v3130
        %3149 = vst [vmem:[#allocation3 + $0x8] sm:$0xff] %v3135
        %3150 = vst [vmem:[#allocation3 + $0x10] sm:$0xff] %v3140
        %3151 = vst [vmem:[#allocation3 + $0x18] sm:$0xff] %v3145
        %v3152 = vld [vmem:[%s398 + $0x20] sm:$0xff]
        %v3153 = vld [vmem:[%s398 + $0x28] sm:$0xff]
        %v3154 = vld [vmem:[%s398 + $0x30] sm:$0xff]
        %v3155 = vld [vmem:[%s398 + $0x38] sm:$0xff]
        %v3156 = vlaneseq
        %v3157 = vshrl.u32 %v3156, 7
        %v3158 = vsub.s32 1, %v3157
        %v3159 = vrot.slane %v3009, %v3158
        %v3160 = vmul.f32 %v3152, %v3159
        %v3161 = vmul.f32 %v3153, %v3159
        %v3162 = vmul.f32 %v3154, %v3159
        %v3163 = vmul.f32 %v3155, %v3159
        %3164 = vmatprep.subr.mxu0 0.0
        %3165 = vmatpush1.msra.mxu0 %v3160
        %3166 = vmatprep.subr.mxu0 0.0
        %3167 = vmatpush1.msra.mxu0 %v3161
        %3168 = vmatprep.subr.mxu0 0.0
        %3169 = vmatpush1.msra.mxu0 %v3162
        %3170 = vmatprep.subr.mxu0 0.0
        %3171 = vmatpush1.msra.mxu0 %v3163
        %3172 = vmatprep.subr.mxu0 0.0
        %3173 = vmatpush1.msra.mxu0 0.0
        %3174 = vmatprep.subr.mxu0 0.0
        %3175 = vmatpush1.msra.mxu0 0.0
        %3176 = vmatprep.subr.mxu0 0.0
        %3177 = vmatpush1.msra.mxu0 0.0
        %3178 = vmatprep.subr.mxu0 0.0
        %3179 = vmatpush1.msra.mxu0 0.0
        %3180 = vmatprep.subr.mxu0 0.0
        %3181 = vmatpush1.msra.mxu0 0.0
        %3182 = vmatprep.subr.mxu0 0.0
        %3183 = vmatpush1.msra.mxu0 0.0
        %3184 = vmatprep.subr.mxu0 0.0
        %3185 = vmatpush1.msra.mxu0 0.0
        %3186 = vmatprep.subr.mxu0 0.0
        %3187 = vmatpush1.msra.mxu0 0.0
        %3188 = vmatprep.subr.mxu0 0.0
        %3189 = vmatpush1.msra.mxu0 0.0
        %3190 = vmatprep.subr.mxu0 0.0
        %3191 = vmatpush1.msra.mxu0 0.0
        %3192 = vmatprep.subr.mxu0 0.0
        %3193 = vmatpush1.msra.mxu0 0.0
        %3194 = vmatprep.subr.mxu0 0.0
        %3195 = vmatpush1.msra.mxu0 0.0
        %3196 = vmatprep.subr.mxu0 0.0
        %3197 = vmatpush1.msra.mxu0 0.0
        %3198 = vmatprep.subr.mxu0 0.0
        %3199 = vmatpush1.msra.mxu0 0.0
        %3200 = vmatprep.subr.mxu0 0.0
        %3201 = vmatpush1.msra.mxu0 0.0
        %3202 = vmatprep.subr.mxu0 0.0
        %3203 = vmatpush1.msra.mxu0 0.0
        %3204 = vmatprep.subr.mxu0 0.0
        %3205 = vmatpush1.msra.mxu0 0.0
        %3206 = vmatprep.subr.mxu0 0.0
        %3207 = vmatpush1.msra.mxu0 0.0
        %3208 = vmatprep.subr.mxu0 0.0
        %3209 = vmatpush1.msra.mxu0 0.0
        %3210 = vmatprep.subr.mxu0 0.0
        %3211 = vmatpush1.msra.mxu0 0.0
        %3212 = vmatprep.subr.mxu0 0.0
        %3213 = vmatpush1.msra.mxu0 0.0
        %3214 = vmatprep.subr.mxu0 0.0
        %3215 = vmatpush1.msra.mxu0 0.0
        %3216 = vmatprep.subr.mxu0 0.0
        %3217 = vmatpush1.msra.mxu0 0.0
        %3218 = vmatprep.subr.mxu0 0.0
        %3219 = vmatpush1.msra.mxu0 0.0
        %3220 = vmatprep.subr.mxu0 0.0
        %3221 = vmatpush1.msra.mxu0 0.0
        %3222 = vmatprep.subr.mxu0 0.0
        %3223 = vmatpush1.msra.mxu0 0.0
        %3224 = vmatprep.subr.mxu0 0.0
        %3225 = vmatpush1.msra.mxu0 0.0
        %3226 = vmatprep.subr.mxu0 0.0
        %3227 = vmatpush1.msra.mxu0 0.0
        %3228 = vmatprep.mubr.f32.mxu0 0.0
        %3229 = vmatmul.mubr.f32.gmra.mrb[0].mxu0 %v3052
        %v3230 = vpop.f32.mrb[0].mxu0
        %v3231 = vadd.f32 %v3034, %v3230
        %v3232 = vpop.f32.mrb[0].mxu0
        %3233 = vmatprep.mubr.f32.mxu0 0.0
        %3234 = vmatmul.mubr.f32.gmra.mrb[0].mxu0 %v3055
        %v3235 = vpop.f32.mrb[0].mxu0
        %v3236 = vadd.f32 %v3039, %v3235
        %v3237 = vpop.f32.mrb[0].mxu0
        %3238 = vmatprep.mubr.f32.mxu0 0.0
        %3239 = vmatmul.mubr.f32.gmra.mrb[0].mxu0 %v3058
        %v3240 = vpop.f32.mrb[0].mxu0
        %v3241 = vadd.f32 %v3044, %v3240
        %v3242 = vpop.f32.mrb[0].mxu0
        %3243 = vmatprep.mubr.f32.mxu0 0.0
        %3244 = vmatmul.mubr.f32.gmra.mrb[0].mxu0 %v3061
        %v3245 = vpop.f32.mrb[0].mxu0
        %v3246 = vadd.f32 %v3049, %v3245
        %v3247 = vpop.f32.mrb[0].mxu0
        %3248 = vdwg.mxu0
        %3249 = vst [vmem:[#allocation3 + $0x20] sm:$0xff] %v3231
        %3250 = vst [vmem:[#allocation3 + $0x28] sm:$0xff] %v3236
        %3251 = vst [vmem:[#allocation3 + $0x30] sm:$0xff] %v3241
        %3252 = vst [vmem:[#allocation3 + $0x38] sm:$0xff] %v3246
        %v3253 = vld [vmem:[%s398 + $0x40] sm:$0xff]
        %v3254 = vld [vmem:[%s398 + $0x48] sm:$0xff]
        %v3255 = vld [vmem:[%s398 + $0x50] sm:$0xff]
        %v3256 = vld [vmem:[%s398 + $0x58] sm:$0xff]
        %v3257 = vlaneseq
        %v3258 = vshrl.u32 %v3257, 7
        %v3259 = vsub.s32 2, %v3258
        %v3260 = vrot.slane %v3009, %v3259
        %v3261 = vmul.f32 %v3253, %v3260
        %v3262 = vmul.f32 %v3254, %v3260
        %v3263 = vmul.f32 %v3255, %v3260
        %v3264 = vmul.f32 %v3256, %v3260
        %3265 = vmatprep.subr.mxu0 0.0
        %3266 = vmatpush1.msra.mxu0 %v3261
        %3267 = vmatprep.subr.mxu0 0.0
        %3268 = vmatpush1.msra.mxu0 %v3262
        %3269 = vmatprep.subr.mxu0 0.0
        %3270 = vmatpush1.msra.mxu0 %v3263
        %3271 = vmatprep.subr.mxu0 0.0
        %3272 = vmatpush1.msra.mxu0 %v3264
        %3273 = vmatprep.subr.mxu0 0.0
        %3274 = vmatpush1.msra.mxu0 0.0
        %3275 = vmatprep.subr.mxu0 0.0
        %3276 = vmatpush1.msra.mxu0 0.0
        %3277 = vmatprep.subr.mxu0 0.0
        %3278 = vmatpush1.msra.mxu0 0.0
        %3279 = vmatprep.subr.mxu0 0.0
        %3280 = vmatpush1.msra.mxu0 0.0
        %3281 = vmatprep.subr.mxu0 0.0
        %3282 = vmatpush1.msra.mxu0 0.0
        %3283 = vmatprep.subr.mxu0 0.0
        %3284 = vmatpush1.msra.mxu0 0.0
        %3285 = vmatprep.subr.mxu0 0.0
        %3286 = vmatpush1.msra.mxu0 0.0
        %3287 = vmatprep.subr.mxu0 0.0
        %3288 = vmatpush1.msra.mxu0 0.0
        %3289 = vmatprep.subr.mxu0 0.0
        %3290 = vmatpush1.msra.mxu0 0.0
        %3291 = vmatprep.subr.mxu0 0.0
        %3292 = vmatpush1.msra.mxu0 0.0
        %3293 = vmatprep.subr.mxu0 0.0
        %3294 = vmatpush1.msra.mxu0 0.0
        %3295 = vmatprep.subr.mxu0 0.0
        %3296 = vmatpush1.msra.mxu0 0.0
        %3297 = vmatprep.subr.mxu0 0.0
        %3298 = vmatpush1.msra.mxu0 0.0
        %3299 = vmatprep.subr.mxu0 0.0
        %3300 = vmatpush1.msra.mxu0 0.0
        %3301 = vmatprep.subr.mxu0 0.0
        %3302 = vmatpush1.msra.mxu0 0.0
        %3303 = vmatprep.subr.mxu0 0.0
        %3304 = vmatpush1.msra.mxu0 0.0
        %3305 = vmatprep.subr.mxu0 0.0
        %3306 = vmatpush1.msra.mxu0 0.0
        %3307 = vmatprep.subr.mxu0 0.0
        %3308 = vmatpush1.msra.mxu0 0.0
        %3309 = vmatprep.subr.mxu0 0.0
        %3310 = vmatpush1.msra.mxu0 0.0
        %3311 = vmatprep.subr.mxu0 0.0
        %3312 = vmatpush1.msra.mxu0 0.0
        %3313 = vmatprep.subr.mxu0 0.0
        %3314 = vmatpush1.msra.mxu0 0.0
        %3315 = vmatprep.subr.mxu0 0.0
        %3316 = vmatpush1.msra.mxu0 0.0
        %3317 = vmatprep.subr.mxu0 0.0
        %3318 = vmatpush1.msra.mxu0 0.0
        %3319 = vmatprep.subr.mxu0 0.0
        %3320 = vmatpush1.msra.mxu0 0.0
        %3321 = vmatprep.subr.mxu0 0.0
        %3322 = vmatpush1.msra.mxu0 0.0
        %3323 = vmatprep.subr.mxu0 0.0
        %3324 = vmatpush1.msra.mxu0 0.0
        %3325 = vmatprep.subr.mxu0 0.0
        %3326 = vmatpush1.msra.mxu0 0.0
        %3327 = vmatprep.subr.mxu0 0.0
        %3328 = vmatpush1.msra.mxu0 0.0
        %3329 = vmatprep.mubr.f32.mxu0 0.0
        %3330 = vmatmul.mubr.f32.gmra.mrb[0].mxu0 %v3052
        %v3331 = vpop.f32.mrb[0].mxu0
        %v3332 = vadd.f32 %v3034, %v3331
        %v3333 = vpop.f32.mrb[0].mxu0
        %3334 = vmatprep.mubr.f32.mxu0 0.0
        %3335 = vmatmul.mubr.f32.gmra.mrb[0].mxu0 %v3055
        %v3336 = vpop.f32.mrb[0].mxu0
        %v3337 = vadd.f32 %v3039, %v3336
        %v3338 = vpop.f32.mrb[0].mxu0
        %3339 = vmatprep.mubr.f32.mxu0 0.0
        %3340 = vmatmul.mubr.f32.gmra.mrb[0].mxu0 %v3058
        %v3341 = vpop.f32.mrb[0].mxu0
        %v3342 = vadd.f32 %v3044, %v3341
        %v3343 = vpop.f32.mrb[0].mxu0
        %3344 = vmatprep.mubr.f32.mxu0 0.0
        %3345 = vmatmul.mubr.f32.gmra.mrb[0].mxu0 %v3061
        %v3346 = vpop.f32.mrb[0].mxu0
        %v3347 = vadd.f32 %v3049, %v3346
        %v3348 = vpop.f32.mrb[0].mxu0
        %3349 = vdwg.mxu0
        %3350 = vst [vmem:[#allocation3 + $0x40] sm:$0xff] %v3332
        %3351 = vst [vmem:[#allocation3 + $0x48] sm:$0xff] %v3337
        %3352 = vst [vmem:[#allocation3 + $0x50] sm:$0xff] %v3342
        %3353 = vst [vmem:[#allocation3 + $0x58] sm:$0xff] %v3347
        %v3354 = vld [vmem:[%s398 + $0x60] sm:$0xff]
        %v3355 = vld [vmem:[%s398 + $0x68] sm:$0xff]
        %v3356 = vld [vmem:[%s398 + $0x70] sm:$0xff]
        %v3357 = vld [vmem:[%s398 + $0x78] sm:$0xff]
        %v3358 = vlaneseq
        %v3359 = vshrl.u32 %v3358, 7
        %v3360 = vsub.s32 3, %v3359
        %v3361 = vrot.slane %v3009, %v3360
        %v3362 = vmul.f32 %v3354, %v3361
        %v3363 = vmul.f32 %v3355, %v3361
        %v3364 = vmul.f32 %v3356, %v3361
        %v3365 = vmul.f32 %v3357, %v3361
        %3366 = vmatprep.subr.mxu0 0.0
        %3367 = vmatpush1.msra.mxu0 %v3362
        %3368 = vmatprep.subr.mxu0 0.0
        %3369 = vmatpush1.msra.mxu0 %v3363
        %3370 = vmatprep.subr.mxu0 0.0
        %3371 = vmatpush1.msra.mxu0 %v3364
        %3372 = vmatprep.subr.mxu0 0.0
        %3373 = vmatpush1.msra.mxu0 %v3365
        %3374 = vmatprep.subr.mxu0 0.0
        %3375 = vmatpush1.msra.mxu0 0.0
        %3376 = vmatprep.subr.mxu0 0.0
        %3377 = vmatpush1.msra.mxu0 0.0
        %3378 = vmatprep.subr.mxu0 0.0
        %3379 = vmatpush1.msra.mxu0 0.0
        %3380 = vmatprep.subr.mxu0 0.0
        %3381 = vmatpush1.msra.mxu0 0.0
        %3382 = vmatprep.subr.mxu0 0.0
        %3383 = vmatpush1.msra.mxu0 0.0
        %3384 = vmatprep.subr.mxu0 0.0
        %3385 = vmatpush1.msra.mxu0 0.0
        %3386 = vmatprep.subr.mxu0 0.0
        %3387 = vmatpush1.msra.mxu0 0.0
        %3388 = vmatprep.subr.mxu0 0.0
        %3389 = vmatpush1.msra.mxu0 0.0
        %3390 = vmatprep.subr.mxu0 0.0
        %3391 = vmatpush1.msra.mxu0 0.0
        %3392 = vmatprep.subr.mxu0 0.0
        %3393 = vmatpush1.msra.mxu0 0.0
        %3394 = vmatprep.subr.mxu0 0.0
        %3395 = vmatpush1.msra.mxu0 0.0
        %3396 = vmatprep.subr.mxu0 0.0
        %3397 = vmatpush1.msra.mxu0 0.0
        %3398 = vmatprep.subr.mxu0 0.0
        %3399 = vmatpush1.msra.mxu0 0.0
        %3400 = vmatprep.subr.mxu0 0.0
        %3401 = vmatpush1.msra.mxu0 0.0
        %3402 = vmatprep.subr.mxu0 0.0
        %3403 = vmatpush1.msra.mxu0 0.0
        %3404 = vmatprep.subr.mxu0 0.0
        %3405 = vmatpush1.msra.mxu0 0.0
        %3406 = vmatprep.subr.mxu0 0.0
        %3407 = vmatpush1.msra.mxu0 0.0
        %3408 = vmatprep.subr.mxu0 0.0
        %3409 = vmatpush1.msra.mxu0 0.0
        %3410 = vmatprep.subr.mxu0 0.0
        %3411 = vmatpush1.msra.mxu0 0.0
        %3412 = vmatprep.subr.mxu0 0.0
        %3413 = vmatpush1.msra.mxu0 0.0
        %3414 = vmatprep.subr.mxu0 0.0
        %3415 = vmatpush1.msra.mxu0 0.0
        %3416 = vmatprep.subr.mxu0 0.0
        %3417 = vmatpush1.msra.mxu0 0.0
        %3418 = vmatprep.subr.mxu0 0.0
        %3419 = vmatpush1.msra.mxu0 0.0
        %3420 = vmatprep.subr.mxu0 0.0
        %3421 = vmatpush1.msra.mxu0 0.0
        %3422 = vmatprep.subr.mxu0 0.0
        %3423 = vmatpush1.msra.mxu0 0.0
        %3424 = vmatprep.subr.mxu0 0.0
        %3425 = vmatpush1.msra.mxu0 0.0
        %3426 = vmatprep.subr.mxu0 0.0
        %3427 = vmatpush1.msra.mxu0 0.0
        %3428 = vmatprep.subr.mxu0 0.0
        %3429 = vmatpush1.msra.mxu0 0.0
        %3430 = vmatprep.mubr.f32.mxu0 0.0
        %3431 = vmatmul.mubr.f32.gmra.mrb[0].mxu0 %v3052
        %v3432 = vpop.f32.mrb[0].mxu0
        %v3433 = vadd.f32 %v3034, %v3432
        %v3434 = vpop.f32.mrb[0].mxu0
        %3435 = vmatprep.mubr.f32.mxu0 0.0
        %3436 = vmatmul.mubr.f32.gmra.mrb[0].mxu0 %v3055
        %v3437 = vpop.f32.mrb[0].mxu0
        %v3438 = vadd.f32 %v3039, %v3437
        %v3439 = vpop.f32.mrb[0].mxu0
        %3440 = vmatprep.mubr.f32.mxu0 0.0
        %3441 = vmatmul.mubr.f32.gmra.mrb[0].mxu0 %v3058
        %v3442 = vpop.f32.mrb[0].mxu0
        %v3443 = vadd.f32 %v3044, %v3442
        %v3444 = vpop.f32.mrb[0].mxu0
        %3445 = vmatprep.mubr.f32.mxu0 0.0
        %3446 = vmatmul.mubr.f32.gmra.mrb[0].mxu0 %v3061
        %v3447 = vpop.f32.mrb[0].mxu0
        %v3448 = vadd.f32 %v3049, %v3447
        %v3449 = vpop.f32.mrb[0].mxu0
        %3450 = vdwg.mxu0
        %3451 = vst [vmem:[#allocation3 + $0x60] sm:$0xff] %v3433
        %3452 = vst [vmem:[#allocation3 + $0x68] sm:$0xff] %v3438
        %3453 = vst [vmem:[#allocation3 + $0x70] sm:$0xff] %v3443
        %3454 = vst [vmem:[#allocation3 + $0x78] sm:$0xff] %v3448
        %v3455 = vld [vmem:[%s398 + $0x80] sm:$0xff]
        %v3456 = vld [vmem:[%s398 + $0x88] sm:$0xff]
        %v3457 = vld [vmem:[%s398 + $0x90] sm:$0xff]
        %v3458 = vld [vmem:[%s398 + $0x98] sm:$0xff]
        %v3459 = vlaneseq
        %v3460 = vshrl.u32 %v3459, 7
        %v3461 = vsub.s32 4, %v3460
        %v3462 = vrot.slane %v3009, %v3461
        %v3463 = vmul.f32 %v3455, %v3462
        %v3464 = vmul.f32 %v3456, %v3462
        %v3465 = vmul.f32 %v3457, %v3462
        %v3466 = vmul.f32 %v3458, %v3462
        %3467 = vmatprep.subr.mxu0 0.0
        %3468 = vmatpush1.msra.mxu0 %v3463
        %3469 = vmatprep.subr.mxu0 0.0
        %3470 = vmatpush1.msra.mxu0 %v3464
        %3471 = vmatprep.subr.mxu0 0.0
        %3472 = vmatpush1.msra.mxu0 %v3465
        %3473 = vmatprep.subr.mxu0 0.0
        %3474 = vmatpush1.msra.mxu0 %v3466
        %3475 = vmatprep.subr.mxu0 0.0
        %3476 = vmatpush1.msra.mxu0 0.0
        %3477 = vmatprep.subr.mxu0 0.0
        %3478 = vmatpush1.msra.mxu0 0.0
        %3479 = vmatprep.subr.mxu0 0.0
        %3480 = vmatpush1.msra.mxu0 0.0
        %3481 = vmatprep.subr.mxu0 0.0
        %3482 = vmatpush1.msra.mxu0 0.0
        %3483 = vmatprep.subr.mxu0 0.0
        %3484 = vmatpush1.msra.mxu0 0.0
        %3485 = vmatprep.subr.mxu0 0.0
        %3486 = vmatpush1.msra.mxu0 0.0
        %3487 = vmatprep.subr.mxu0 0.0
        %3488 = vmatpush1.msra.mxu0 0.0
        %3489 = vmatprep.subr.mxu0 0.0
        %3490 = vmatpush1.msra.mxu0 0.0
        %3491 = vmatprep.subr.mxu0 0.0
        %3492 = vmatpush1.msra.mxu0 0.0
        %3493 = vmatprep.subr.mxu0 0.0
        %3494 = vmatpush1.msra.mxu0 0.0
        %3495 = vmatprep.subr.mxu0 0.0
        %3496 = vmatpush1.msra.mxu0 0.0
        %3497 = vmatprep.subr.mxu0 0.0
        %3498 = vmatpush1.msra.mxu0 0.0
        %3499 = vmatprep.subr.mxu0 0.0
        %3500 = vmatpush1.msra.mxu0 0.0
        %3501 = vmatprep.subr.mxu0 0.0
        %3502 = vmatpush1.msra.mxu0 0.0
        %3503 = vmatprep.subr.mxu0 0.0
        %3504 = vmatpush1.msra.mxu0 0.0
        %3505 = vmatprep.subr.mxu0 0.0
        %3506 = vmatpush1.msra.mxu0 0.0
        %3507 = vmatprep.subr.mxu0 0.0
        %3508 = vmatpush1.msra.mxu0 0.0
        %3509 = vmatprep.subr.mxu0 0.0
        %3510 = vmatpush1.msra.mxu0 0.0
        %3511 = vmatprep.subr.mxu0 0.0
        %3512 = vmatpush1.msra.mxu0 0.0
        %3513 = vmatprep.subr.mxu0 0.0
        %3514 = vmatpush1.msra.mxu0 0.0
        %3515 = vmatprep.subr.mxu0 0.0
        %3516 = vmatpush1.msra.mxu0 0.0
        %3517 = vmatprep.subr.mxu0 0.0
        %3518 = vmatpush1.msra.mxu0 0.0
        %3519 = vmatprep.subr.mxu0 0.0
        %3520 = vmatpush1.msra.mxu0 0.0
        %3521 = vmatprep.subr.mxu0 0.0
        %3522 = vmatpush1.msra.mxu0 0.0
        %3523 = vmatprep.subr.mxu0 0.0
        %3524 = vmatpush1.msra.mxu0 0.0
        %3525 = vmatprep.subr.mxu0 0.0
        %3526 = vmatpush1.msra.mxu0 0.0
        %3527 = vmatprep.subr.mxu0 0.0
        %3528 = vmatpush1.msra.mxu0 0.0
        %3529 = vmatprep.subr.mxu0 0.0
        %3530 = vmatpush1.msra.mxu0 0.0
        %3531 = vmatprep.mubr.f32.mxu0 0.0
        %3532 = vmatmul.mubr.f32.gmra.mrb[0].mxu0 %v3052
        %v3533 = vpop.f32.mrb[0].mxu0
        %v3534 = vadd.f32 %v3034, %v3533
        %v3535 = vpop.f32.mrb[0].mxu0
        %3536 = vmatprep.mubr.f32.mxu0 0.0
        %3537 = vmatmul.mubr.f32.gmra.mrb[0].mxu0 %v3055
        %v3538 = vpop.f32.mrb[0].mxu0
        %v3539 = vadd.f32 %v3039, %v3538
        %v3540 = vpop.f32.mrb[0].mxu0
        %3541 = vmatprep.mubr.f32.mxu0 0.0
        %3542 = vmatmul.mubr.f32.gmra.mrb[0].mxu0 %v3058
        %v3543 = vpop.f32.mrb[0].mxu0
        %v3544 = vadd.f32 %v3044, %v3543
        %v3545 = vpop.f32.mrb[0].mxu0
        %3546 = vmatprep.mubr.f32.mxu0 0.0
        %3547 = vmatmul.mubr.f32.gmra.mrb[0].mxu0 %v3061
        %v3548 = vpop.f32.mrb[0].mxu0
        %v3549 = vadd.f32 %v3049, %v3548
        %v3550 = vpop.f32.mrb[0].mxu0
        %3551 = vdwg.mxu0
        %3552 = vst [vmem:[#allocation3 + $0x80] sm:$0xff] %v3534
        %3553 = vst [vmem:[#allocation3 + $0x88] sm:$0xff] %v3539
        %3554 = vst [vmem:[#allocation3 + $0x90] sm:$0xff] %v3544
        %3555 = vst [vmem:[#allocation3 + $0x98] sm:$0xff] %v3549
        %v3556 = vld [vmem:[%s398 + $0xa0] sm:$0xff]
        %v3557 = vld [vmem:[%s398 + $0xa8] sm:$0xff]
        %v3558 = vld [vmem:[%s398 + $0xb0] sm:$0xff]
        %v3559 = vld [vmem:[%s398 + $0xb8] sm:$0xff]
        %v3560 = vlaneseq
        %v3561 = vshrl.u32 %v3560, 7
        %v3562 = vsub.s32 5, %v3561
        %v3563 = vrot.slane %v3009, %v3562
        %v3564 = vmul.f32 %v3556, %v3563
        %v3565 = vmul.f32 %v3557, %v3563
        %v3566 = vmul.f32 %v3558, %v3563
        %v3567 = vmul.f32 %v3559, %v3563
        %3568 = vmatprep.subr.mxu0 0.0
        %3569 = vmatpush1.msra.mxu0 %v3564
        %3570 = vmatprep.subr.mxu0 0.0
        %3571 = vmatpush1.msra.mxu0 %v3565
        %3572 = vmatprep.subr.mxu0 0.0
        %3573 = vmatpush1.msra.mxu0 %v3566
        %3574 = vmatprep.subr.mxu0 0.0
        %3575 = vmatpush1.msra.mxu0 %v3567
        %3576 = vmatprep.subr.mxu0 0.0
        %3577 = vmatpush1.msra.mxu0 0.0
        %3578 = vmatprep.subr.mxu0 0.0
        %3579 = vmatpush1.msra.mxu0 0.0
        %3580 = vmatprep.subr.mxu0 0.0
        %3581 = vmatpush1.msra.mxu0 0.0
        %3582 = vmatprep.subr.mxu0 0.0
        %3583 = vmatpush1.msra.mxu0 0.0
        %3584 = vmatprep.subr.mxu0 0.0
        %3585 = vmatpush1.msra.mxu0 0.0
        %3586 = vmatprep.subr.mxu0 0.0
        %3587 = vmatpush1.msra.mxu0 0.0
        %3588 = vmatprep.subr.mxu0 0.0
        %3589 = vmatpush1.msra.mxu0 0.0
        %3590 = vmatprep.subr.mxu0 0.0
        %3591 = vmatpush1.msra.mxu0 0.0
        %3592 = vmatprep.subr.mxu0 0.0
        %3593 = vmatpush1.msra.mxu0 0.0
        %3594 = vmatprep.subr.mxu0 0.0
        %3595 = vmatpush1.msra.mxu0 0.0
        %3596 = vmatprep.subr.mxu0 0.0
        %3597 = vmatpush1.msra.mxu0 0.0
        %3598 = vmatprep.subr.mxu0 0.0
        %3599 = vmatpush1.msra.mxu0 0.0
        %3600 = vmatprep.subr.mxu0 0.0
        %3601 = vmatpush1.msra.mxu0 0.0
        %3602 = vmatprep.subr.mxu0 0.0
        %3603 = vmatpush1.msra.mxu0 0.0
        %3604 = vmatprep.subr.mxu0 0.0
        %3605 = vmatpush1.msra.mxu0 0.0
        %3606 = vmatprep.subr.mxu0 0.0
        %3607 = vmatpush1.msra.mxu0 0.0
        %3608 = vmatprep.subr.mxu0 0.0
        %3609 = vmatpush1.msra.mxu0 0.0
        %3610 = vmatprep.subr.mxu0 0.0
        %3611 = vmatpush1.msra.mxu0 0.0
        %3612 = vmatprep.subr.mxu0 0.0
        %3613 = vmatpush1.msra.mxu0 0.0
        %3614 = vmatprep.subr.mxu0 0.0
        %3615 = vmatpush1.msra.mxu0 0.0
        %3616 = vmatprep.subr.mxu0 0.0
        %3617 = vmatpush1.msra.mxu0 0.0
        %3618 = vmatprep.subr.mxu0 0.0
        %3619 = vmatpush1.msra.mxu0 0.0
        %3620 = vmatprep.subr.mxu0 0.0
        %3621 = vmatpush1.msra.mxu0 0.0
        %3622 = vmatprep.subr.mxu0 0.0
        %3623 = vmatpush1.msra.mxu0 0.0
        %3624 = vmatprep.subr.mxu0 0.0
        %3625 = vmatpush1.msra.mxu0 0.0
        %3626 = vmatprep.subr.mxu0 0.0
        %3627 = vmatpush1.msra.mxu0 0.0
        %3628 = vmatprep.subr.mxu0 0.0
        %3629 = vmatpush1.msra.mxu0 0.0
        %3630 = vmatprep.subr.mxu0 0.0
        %3631 = vmatpush1.msra.mxu0 0.0
        %3632 = vmatprep.mubr.f32.mxu0 0.0
        %3633 = vmatmul.mubr.f32.gmra.mrb[0].mxu0 %v3052
        %v3634 = vpop.f32.mrb[0].mxu0
        %v3635 = vadd.f32 %v3034, %v3634
        %v3636 = vpop.f32.mrb[0].mxu0
        %3637 = vmatprep.mubr.f32.mxu0 0.0
        %3638 = vmatmul.mubr.f32.gmra.mrb[0].mxu0 %v3055
        %v3639 = vpop.f32.mrb[0].mxu0
        %v3640 = vadd.f32 %v3039, %v3639
        %v3641 = vpop.f32.mrb[0].mxu0
        %3642 = vmatprep.mubr.f32.mxu0 0.0
        %3643 = vmatmul.mubr.f32.gmra.mrb[0].mxu0 %v3058
        %v3644 = vpop.f32.mrb[0].mxu0
        %v3645 = vadd.f32 %v3044, %v3644
        %v3646 = vpop.f32.mrb[0].mxu0
        %3647 = vmatprep.mubr.f32.mxu0 0.0
        %3648 = vmatmul.mubr.f32.gmra.mrb[0].mxu0 %v3061
        %v3649 = vpop.f32.mrb[0].mxu0
        %v3650 = vadd.f32 %v3049, %v3649
        %v3651 = vpop.f32.mrb[0].mxu0
        %3652 = vdwg.mxu0
        %3653 = vst [vmem:[#allocation3 + $0xa0] sm:$0xff] %v3635
        %3654 = vst [vmem:[#allocation3 + $0xa8] sm:$0xff] %v3640
        %3655 = vst [vmem:[#allocation3 + $0xb0] sm:$0xff] %v3645
        %3656 = vst [vmem:[#allocation3 + $0xb8] sm:$0xff] %v3650
        %v3657 = vld [vmem:[%s398 + $0xc0] sm:$0xff]
        %v3658 = vld [vmem:[%s398 + $0xc8] sm:$0xff]
        %v3659 = vld [vmem:[%s398 + $0xd0] sm:$0xff]
        %v3660 = vld [vmem:[%s398 + $0xd8] sm:$0xff]
        %v3661 = vlaneseq
        %v3662 = vshrl.u32 %v3661, 7
        %v3663 = vsub.s32 6, %v3662
        %v3664 = vrot.slane %v3009, %v3663
        %v3665 = vmul.f32 %v3657, %v3664
        %v3666 = vmul.f32 %v3658, %v3664
        %v3667 = vmul.f32 %v3659, %v3664
        %v3668 = vmul.f32 %v3660, %v3664
        %3669 = vmatprep.subr.mxu0 0.0
        %3670 = vmatpush1.msra.mxu0 %v3665
        %3671 = vmatprep.subr.mxu0 0.0
        %3672 = vmatpush1.msra.mxu0 %v3666
        %3673 = vmatprep.subr.mxu0 0.0
        %3674 = vmatpush1.msra.mxu0 %v3667
        %3675 = vmatprep.subr.mxu0 0.0
        %3676 = vmatpush1.msra.mxu0 %v3668
        %3677 = vmatprep.subr.mxu0 0.0
        %3678 = vmatpush1.msra.mxu0 0.0
        %3679 = vmatprep.subr.mxu0 0.0
        %3680 = vmatpush1.msra.mxu0 0.0
        %3681 = vmatprep.subr.mxu0 0.0
        %3682 = vmatpush1.msra.mxu0 0.0
        %3683 = vmatprep.subr.mxu0 0.0
        %3684 = vmatpush1.msra.mxu0 0.0
        %3685 = vmatprep.subr.mxu0 0.0
        %3686 = vmatpush1.msra.mxu0 0.0
        %3687 = vmatprep.subr.mxu0 0.0
        %3688 = vmatpush1.msra.mxu0 0.0
        %3689 = vmatprep.subr.mxu0 0.0
        %3690 = vmatpush1.msra.mxu0 0.0
        %3691 = vmatprep.subr.mxu0 0.0
        %3692 = vmatpush1.msra.mxu0 0.0
        %3693 = vmatprep.subr.mxu0 0.0
        %3694 = vmatpush1.msra.mxu0 0.0
        %3695 = vmatprep.subr.mxu0 0.0
        %3696 = vmatpush1.msra.mxu0 0.0
        %3697 = vmatprep.subr.mxu0 0.0
        %3698 = vmatpush1.msra.mxu0 0.0
        %3699 = vmatprep.subr.mxu0 0.0
        %3700 = vmatpush1.msra.mxu0 0.0
        %3701 = vmatprep.subr.mxu0 0.0
        %3702 = vmatpush1.msra.mxu0 0.0
        %3703 = vmatprep.subr.mxu0 0.0
        %3704 = vmatpush1.msra.mxu0 0.0
        %3705 = vmatprep.subr.mxu0 0.0
        %3706 = vmatpush1.msra.mxu0 0.0
        %3707 = vmatprep.subr.mxu0 0.0
        %3708 = vmatpush1.msra.mxu0 0.0
        %3709 = vmatprep.subr.mxu0 0.0
        %3710 = vmatpush1.msra.mxu0 0.0
        %3711 = vmatprep.subr.mxu0 0.0
        %3712 = vmatpush1.msra.mxu0 0.0
        %3713 = vmatprep.subr.mxu0 0.0
        %3714 = vmatpush1.msra.mxu0 0.0
        %3715 = vmatprep.subr.mxu0 0.0
        %3716 = vmatpush1.msra.mxu0 0.0
        %3717 = vmatprep.subr.mxu0 0.0
        %3718 = vmatpush1.msra.mxu0 0.0
        %3719 = vmatprep.subr.mxu0 0.0
        %3720 = vmatpush1.msra.mxu0 0.0
        %3721 = vmatprep.subr.mxu0 0.0
        %3722 = vmatpush1.msra.mxu0 0.0
        %3723 = vmatprep.subr.mxu0 0.0
        %3724 = vmatpush1.msra.mxu0 0.0
        %3725 = vmatprep.subr.mxu0 0.0
        %3726 = vmatpush1.msra.mxu0 0.0
        %3727 = vmatprep.subr.mxu0 0.0
        %3728 = vmatpush1.msra.mxu0 0.0
        %3729 = vmatprep.subr.mxu0 0.0
        %3730 = vmatpush1.msra.mxu0 0.0
        %3731 = vmatprep.subr.mxu0 0.0
        %3732 = vmatpush1.msra.mxu0 0.0
        %3733 = vmatprep.mubr.f32.mxu0 0.0
        %3734 = vmatmul.mubr.f32.gmra.mrb[0].mxu0 %v3052
        %v3735 = vpop.f32.mrb[0].mxu0
        %v3736 = vadd.f32 %v3034, %v3735
        %v3737 = vpop.f32.mrb[0].mxu0
        %3738 = vmatprep.mubr.f32.mxu0 0.0
        %3739 = vmatmul.mubr.f32.gmra.mrb[0].mxu0 %v3055
        %v3740 = vpop.f32.mrb[0].mxu0
        %v3741 = vadd.f32 %v3039, %v3740
        %v3742 = vpop.f32.mrb[0].mxu0
        %3743 = vmatprep.mubr.f32.mxu0 0.0
        %3744 = vmatmul.mubr.f32.gmra.mrb[0].mxu0 %v3058
        %v3745 = vpop.f32.mrb[0].mxu0
        %v3746 = vadd.f32 %v3044, %v3745
        %v3747 = vpop.f32.mrb[0].mxu0
        %3748 = vmatprep.mubr.f32.mxu0 0.0
        %3749 = vmatmul.mubr.f32.gmra.mrb[0].mxu0 %v3061
        %v3750 = vpop.f32.mrb[0].mxu0
        %v3751 = vadd.f32 %v3049, %v3750
        %v3752 = vpop.f32.mrb[0].mxu0
        %3753 = vdwg.mxu0
        %3754 = vst [vmem:[#allocation3 + $0xc0] sm:$0xff] %v3736
        %3755 = vst [vmem:[#allocation3 + $0xc8] sm:$0xff] %v3741
        %3756 = vst [vmem:[#allocation3 + $0xd0] sm:$0xff] %v3746
        %3757 = vst [vmem:[#allocation3 + $0xd8] sm:$0xff] %v3751
        %v3758 = vld [vmem:[%s398 + $0xe0] sm:$0xff]
        %v3759 = vld [vmem:[%s398 + $0xe8] sm:$0xff]
        %v3760 = vld [vmem:[%s398 + $0xf0] sm:$0xff]
        %v3761 = vld [vmem:[%s398 + $0xf8] sm:$0xff]
        %v3762 = vlaneseq
        %v3763 = vshrl.u32 %v3762, 7
        %v3764 = vsub.s32 7, %v3763
        %v3765 = vrot.slane %v3009, %v3764
        %v3766 = vmul.f32 %v3758, %v3765
        %v3767 = vmul.f32 %v3759, %v3765
        %v3768 = vmul.f32 %v3760, %v3765
        %v3769 = vmul.f32 %v3761, %v3765
        %3770 = vmatprep.subr.mxu0 0.0
        %3771 = vmatpush1.msra.mxu0 %v3766
        %3772 = vmatprep.subr.mxu0 0.0
        %3773 = vmatpush1.msra.mxu0 %v3767
        %3774 = vmatprep.subr.mxu0 0.0
        %3775 = vmatpush1.msra.mxu0 %v3768
        %3776 = vmatprep.subr.mxu0 0.0
        %3777 = vmatpush1.msra.mxu0 %v3769
        %3778 = vmatprep.subr.mxu0 0.0
        %3779 = vmatpush1.msra.mxu0 0.0
        %3780 = vmatprep.subr.mxu0 0.0
        %3781 = vmatpush1.msra.mxu0 0.0
        %3782 = vmatprep.subr.mxu0 0.0
        %3783 = vmatpush1.msra.mxu0 0.0
        %3784 = vmatprep.subr.mxu0 0.0
        %3785 = vmatpush1.msra.mxu0 0.0
        %3786 = vmatprep.subr.mxu0 0.0
        %3787 = vmatpush1.msra.mxu0 0.0
        %3788 = vmatprep.subr.mxu0 0.0
        %3789 = vmatpush1.msra.mxu0 0.0
        %3790 = vmatprep.subr.mxu0 0.0
        %3791 = vmatpush1.msra.mxu0 0.0
        %3792 = vmatprep.subr.mxu0 0.0
        %3793 = vmatpush1.msra.mxu0 0.0
        %3794 = vmatprep.subr.mxu0 0.0
        %3795 = vmatpush1.msra.mxu0 0.0
        %3796 = vmatprep.subr.mxu0 0.0
        %3797 = vmatpush1.msra.mxu0 0.0
        %3798 = vmatprep.subr.mxu0 0.0
        %3799 = vmatpush1.msra.mxu0 0.0
        %3800 = vmatprep.subr.mxu0 0.0
        %3801 = vmatpush1.msra.mxu0 0.0
        %3802 = vmatprep.subr.mxu0 0.0
        %3803 = vmatpush1.msra.mxu0 0.0
        %3804 = vmatprep.subr.mxu0 0.0
        %3805 = vmatpush1.msra.mxu0 0.0
        %3806 = vmatprep.subr.mxu0 0.0
        %3807 = vmatpush1.msra.mxu0 0.0
        %3808 = vmatprep.subr.mxu0 0.0
        %3809 = vmatpush1.msra.mxu0 0.0
        %3810 = vmatprep.subr.mxu0 0.0
        %3811 = vmatpush1.msra.mxu0 0.0
        %3812 = vmatprep.subr.mxu0 0.0
        %3813 = vmatpush1.msra.mxu0 0.0
        %3814 = vmatprep.subr.mxu0 0.0
        %3815 = vmatpush1.msra.mxu0 0.0
        %3816 = vmatprep.subr.mxu0 0.0
        %3817 = vmatpush1.msra.mxu0 0.0
        %3818 = vmatprep.subr.mxu0 0.0
        %3819 = vmatpush1.msra.mxu0 0.0
        %3820 = vmatprep.subr.mxu0 0.0
        %3821 = vmatpush1.msra.mxu0 0.0
        %3822 = vmatprep.subr.mxu0 0.0
        %3823 = vmatpush1.msra.mxu0 0.0
        %3824 = vmatprep.subr.mxu0 0.0
        %3825 = vmatpush1.msra.mxu0 0.0
        %3826 = vmatprep.subr.mxu0 0.0
        %3827 = vmatpush1.msra.mxu0 0.0
        %3828 = vmatprep.subr.mxu0 0.0
        %3829 = vmatpush1.msra.mxu0 0.0
        %3830 = vmatprep.subr.mxu0 0.0
        %3831 = vmatpush1.msra.mxu0 0.0
        %3832 = vmatprep.subr.mxu0 0.0
        %3833 = vmatpush1.msra.mxu0 0.0
        %3834 = vmatprep.mubr.f32.mxu0 0.0
        %3835 = vmatmul.mubr.f32.gmra.mrb[0].mxu0 %v3052
        %v3836 = vpop.f32.mrb[0].mxu0
        %v3837 = vadd.f32 %v3034, %v3836
        %v3838 = vpop.f32.mrb[0].mxu0
        %3839 = vmatprep.mubr.f32.mxu0 0.0
        %3840 = vmatmul.mubr.f32.gmra.mrb[0].mxu0 %v3055
        %v3841 = vpop.f32.mrb[0].mxu0
        %v3842 = vadd.f32 %v3039, %v3841
        %v3843 = vpop.f32.mrb[0].mxu0
        %3844 = vmatprep.mubr.f32.mxu0 0.0
        %3845 = vmatmul.mubr.f32.gmra.mrb[0].mxu0 %v3058
        %v3846 = vpop.f32.mrb[0].mxu0
        %v3847 = vadd.f32 %v3044, %v3846
        %v3848 = vpop.f32.mrb[0].mxu0
        %3849 = vmatprep.mubr.f32.mxu0 0.0
        %3850 = vmatmul.mubr.f32.gmra.mrb[0].mxu0 %v3061
        %v3851 = vpop.f32.mrb[0].mxu0
        %v3852 = vadd.f32 %v3049, %v3851
        %v3853 = vpop.f32.mrb[0].mxu0
        %3854 = vdwg.mxu0
        %3855 = vst [vmem:[#allocation3 + $0xe0] sm:$0xff] %v3837
        %3856 = vst [vmem:[#allocation3 + $0xe8] sm:$0xff] %v3842
        %3857 = vst [vmem:[#allocation3 + $0xf0] sm:$0xff] %v3847
        %3858 = vst [vmem:[#allocation3 + $0xf8] sm:$0xff] %v3852
        %v3859 = vld [vmem:[%s398 + $0x100] sm:$0xff]
        %v3860 = vld [vmem:[%s398 + $0x108] sm:$0xff]
        %v3861 = vld [vmem:[%s398 + $0x110] sm:$0xff]
        %v3862 = vld [vmem:[%s398 + $0x118] sm:$0xff]
        %v3863 = vlaneseq
        %v3864 = vshrl.u32 %v3863, 7
        %v3865 = vsub.s32 0, %v3864
        %v3866 = vrot.slane %v3010, %v3865
        %v3867 = vmul.f32 %v3859, %v3866
        %v3868 = vmul.f32 %v3860, %v3866
        %v3869 = vmul.f32 %v3861, %v3866
        %v3870 = vmul.f32 %v3862, %v3866
        %3871 = vmatprep.subr.mxu0 0.0
        %3872 = vmatpush1.msra.mxu0 %v3867
        %3873 = vmatprep.subr.mxu0 0.0
        %3874 = vmatpush1.msra.mxu0 %v3868
        %3875 = vmatprep.subr.mxu0 0.0
        %3876 = vmatpush1.msra.mxu0 %v3869
        %3877 = vmatprep.subr.mxu0 0.0
        %3878 = vmatpush1.msra.mxu0 %v3870
        %3879 = vmatprep.subr.mxu0 0.0
        %3880 = vmatpush1.msra.mxu0 0.0
        %3881 = vmatprep.subr.mxu0 0.0
        %3882 = vmatpush1.msra.mxu0 0.0
        %3883 = vmatprep.subr.mxu0 0.0
        %3884 = vmatpush1.msra.mxu0 0.0
        %3885 = vmatprep.subr.mxu0 0.0
        %3886 = vmatpush1.msra.mxu0 0.0
        %3887 = vmatprep.subr.mxu0 0.0
        %3888 = vmatpush1.msra.mxu0 0.0
        %3889 = vmatprep.subr.mxu0 0.0
        %3890 = vmatpush1.msra.mxu0 0.0
        %3891 = vmatprep.subr.mxu0 0.0
        %3892 = vmatpush1.msra.mxu0 0.0
        %3893 = vmatprep.subr.mxu0 0.0
        %3894 = vmatpush1.msra.mxu0 0.0
        %3895 = vmatprep.subr.mxu0 0.0
        %3896 = vmatpush1.msra.mxu0 0.0
        %3897 = vmatprep.subr.mxu0 0.0
        %3898 = vmatpush1.msra.mxu0 0.0
        %3899 = vmatprep.subr.mxu0 0.0
        %3900 = vmatpush1.msra.mxu0 0.0
        %3901 = vmatprep.subr.mxu0 0.0
        %3902 = vmatpush1.msra.mxu0 0.0
        %3903 = vmatprep.subr.mxu0 0.0
        %3904 = vmatpush1.msra.mxu0 0.0
        %3905 = vmatprep.subr.mxu0 0.0
        %3906 = vmatpush1.msra.mxu0 0.0
        %3907 = vmatprep.subr.mxu0 0.0
        %3908 = vmatpush1.msra.mxu0 0.0
        %3909 = vmatprep.subr.mxu0 0.0
        %3910 = vmatpush1.msra.mxu0 0.0
        %3911 = vmatprep.subr.mxu0 0.0
        %3912 = vmatpush1.msra.mxu0 0.0
        %3913 = vmatprep.subr.mxu0 0.0
        %3914 = vmatpush1.msra.mxu0 0.0
        %3915 = vmatprep.subr.mxu0 0.0
        %3916 = vmatpush1.msra.mxu0 0.0
        %3917 = vmatprep.subr.mxu0 0.0
        %3918 = vmatpush1.msra.mxu0 0.0
        %3919 = vmatprep.subr.mxu0 0.0
        %3920 = vmatpush1.msra.mxu0 0.0
        %3921 = vmatprep.subr.mxu0 0.0
        %3922 = vmatpush1.msra.mxu0 0.0
        %3923 = vmatprep.subr.mxu0 0.0
        %3924 = vmatpush1.msra.mxu0 0.0
        %3925 = vmatprep.subr.mxu0 0.0
        %3926 = vmatpush1.msra.mxu0 0.0
        %3927 = vmatprep.subr.mxu0 0.0
        %3928 = vmatpush1.msra.mxu0 0.0
        %3929 = vmatprep.subr.mxu0 0.0
        %3930 = vmatpush1.msra.mxu0 0.0
        %3931 = vmatprep.subr.mxu0 0.0
        %3932 = vmatpush1.msra.mxu0 0.0
        %3933 = vmatprep.subr.mxu0 0.0
        %3934 = vmatpush1.msra.mxu0 0.0
        %3935 = vmatprep.mubr.f32.mxu0 0.0
        %3936 = vmatmul.mubr.f32.gmra.mrb[0].mxu0 %v3052
        %v3937 = vpop.f32.mrb[0].mxu0
        %v3938 = vadd.f32 %v3034, %v3937
        %v3939 = vpop.f32.mrb[0].mxu0
        %3940 = vmatprep.mubr.f32.mxu0 0.0
        %3941 = vmatmul.mubr.f32.gmra.mrb[0].mxu0 %v3055
        %v3942 = vpop.f32.mrb[0].mxu0
        %v3943 = vadd.f32 %v3039, %v3942
        %v3944 = vpop.f32.mrb[0].mxu0
        %3945 = vmatprep.mubr.f32.mxu0 0.0
        %3946 = vmatmul.mubr.f32.gmra.mrb[0].mxu0 %v3058
        %v3947 = vpop.f32.mrb[0].mxu0
        %v3948 = vadd.f32 %v3044, %v3947
        %v3949 = vpop.f32.mrb[0].mxu0
        %3950 = vmatprep.mubr.f32.mxu0 0.0
        %3951 = vmatmul.mubr.f32.gmra.mrb[0].mxu0 %v3061
        %v3952 = vpop.f32.mrb[0].mxu0
        %v3953 = vadd.f32 %v3049, %v3952
        %v3954 = vpop.f32.mrb[0].mxu0
        %3955 = vdwg.mxu0
        %3956 = vst [vmem:[#allocation3 + $0x100] sm:$0xff] %v3938
        %3957 = vst [vmem:[#allocation3 + $0x108] sm:$0xff] %v3943
        %3958 = vst [vmem:[#allocation3 + $0x110] sm:$0xff] %v3948
        %3959 = vst [vmem:[#allocation3 + $0x118] sm:$0xff] %v3953
        %s3960 = sld [smem:[#allocation13]]
        %v3961 = vld [vmem:[#allocation3] sm:$0xff]
        %v3962 = vld [vmem:[#allocation3 + $0x8] sm:$0xff]
        %v3963 = vld [vmem:[#allocation3 + $0x10] sm:$0xff]
        %v3964 = vld [vmem:[#allocation3 + $0x18] sm:$0xff]
        %v3965 = vstv %s3960
        %v3966 = vmul.f32 %v3965, %v3961
        %v3967 = vmul.f32 %v3965, %v3962
        %v3968 = vmul.f32 %v3965, %v3963
        %v3969 = vmul.f32 %v3965, %v3964
        %v3970 = vadd.f32 %v3966, 0.0
        %v3971 = vadd.f32 %v3967, 0.0
        %v3972 = vadd.f32 %v3968, 0.0
        %v3973 = vadd.f32 %v3969, 0.0
        %s3974 = sld [smem:[#allocation15]]
        %v3975 = vld [vmem:[%s398] sm:$0xff]
        %v3976 = vld [vmem:[%s398 + $0x8] sm:$0xff]
        %v3977 = vld [vmem:[%s398 + $0x10] sm:$0xff]
        %v3978 = vld [vmem:[%s398 + $0x18] sm:$0xff]
        %v3979 = vstv %s3974
        %v3980 = vmul.f32 %v3979, %v3975
        %v3981 = vmul.f32 %v3979, %v3976
        %v3982 = vmul.f32 %v3979, %v3977
        %v3983 = vmul.f32 %v3979, %v3978
        %v3984 = vadd.f32 %v3970, %v3980
        %v3985 = vadd.f32 %v3971, %v3981
        %v3986 = vadd.f32 %v3972, %v3982
        %v3987 = vadd.f32 %v3973, %v3983
        %s3988 = sld [smem:[#allocation13 + $0x1]]
        %v3989 = vld [vmem:[#allocation3 + $0x20] sm:$0xff]
        %v3990 = vld [vmem:[#allocation3 + $0x28] sm:$0xff]
        %v3991 = vld [vmem:[#allocation3 + $0x30] sm:$0xff]
        %v3992 = vld [vmem:[#allocation3 + $0x38] sm:$0xff]
        %v3993 = vstv %s3988
        %v3994 = vmul.f32 %v3993, %v3989
        %v3995 = vmul.f32 %v3993, %v3990
        %v3996 = vmul.f32 %v3993, %v3991
        %v3997 = vmul.f32 %v3993, %v3992
        %v3998 = vadd.f32 %v3984, %v3994
        %v3999 = vadd.f32 %v3985, %v3995
        %v4000 = vadd.f32 %v3986, %v3996
        %v4001 = vadd.f32 %v3987, %v3997
        %s4002 = sld [smem:[#allocation15 + $0x1]]
        %v4003 = vld [vmem:[%s398 + $0x20] sm:$0xff]
        %v4004 = vld [vmem:[%s398 + $0x28] sm:$0xff]
        %v4005 = vld [vmem:[%s398 + $0x30] sm:$0xff]
        %v4006 = vld [vmem:[%s398 + $0x38] sm:$0xff]
        %v4007 = vstv %s4002
        %v4008 = vmul.f32 %v4007, %v4003
        %v4009 = vmul.f32 %v4007, %v4004
        %v4010 = vmul.f32 %v4007, %v4005
        %v4011 = vmul.f32 %v4007, %v4006
        %v4012 = vadd.f32 %v3998, %v4008
        %v4013 = vadd.f32 %v3999, %v4009
        %v4014 = vadd.f32 %v4000, %v4010
        %v4015 = vadd.f32 %v4001, %v4011
        %s4016 = sld [smem:[#allocation13 + $0x2]]
        %v4017 = vld [vmem:[#allocation3 + $0x40] sm:$0xff]
        %v4018 = vld [vmem:[#allocation3 + $0x48] sm:$0xff]
        %v4019 = vld [vmem:[#allocation3 + $0x50] sm:$0xff]
        %v4020 = vld [vmem:[#allocation3 + $0x58] sm:$0xff]
        %v4021 = vstv %s4016
        %v4022 = vmul.f32 %v4021, %v4017
        %v4023 = vmul.f32 %v4021, %v4018
        %v4024 = vmul.f32 %v4021, %v4019
        %v4025 = vmul.f32 %v4021, %v4020
        %v4026 = vadd.f32 %v4012, %v4022
        %v4027 = vadd.f32 %v4013, %v4023
        %v4028 = vadd.f32 %v4014, %v4024
        %v4029 = vadd.f32 %v4015, %v4025
        %s4030 = sld [smem:[#allocation15 + $0x2]]
        %v4031 = vld [vmem:[%s398 + $0x40] sm:$0xff]
        %v4032 = vld [vmem:[%s398 + $0x48] sm:$0xff]
        %v4033 = vld [vmem:[%s398 + $0x50] sm:$0xff]
        %v4034 = vld [vmem:[%s398 + $0x58] sm:$0xff]
        %v4035 = vstv %s4030
        %v4036 = vmul.f32 %v4035, %v4031
        %v4037 = vmul.f32 %v4035, %v4032
        %v4038 = vmul.f32 %v4035, %v4033
        %v4039 = vmul.f32 %v4035, %v4034
        %v4040 = vadd.f32 %v4026, %v4036
        %v4041 = vadd.f32 %v4027, %v4037
        %v4042 = vadd.f32 %v4028, %v4038
        %v4043 = vadd.f32 %v4029, %v4039
        %s4044 = sld [smem:[#allocation13 + $0x3]]
        %v4045 = vld [vmem:[#allocation3 + $0x60] sm:$0xff]
        %v4046 = vld [vmem:[#allocation3 + $0x68] sm:$0xff]
        %v4047 = vld [vmem:[#allocation3 + $0x70] sm:$0xff]
        %v4048 = vld [vmem:[#allocation3 + $0x78] sm:$0xff]
        %v4049 = vstv %s4044
        %v4050 = vmul.f32 %v4049, %v4045
        %v4051 = vmul.f32 %v4049, %v4046
        %v4052 = vmul.f32 %v4049, %v4047
        %v4053 = vmul.f32 %v4049, %v4048
        %v4054 = vadd.f32 %v4040, %v4050
        %v4055 = vadd.f32 %v4041, %v4051
        %v4056 = vadd.f32 %v4042, %v4052
        %v4057 = vadd.f32 %v4043, %v4053
        %s4058 = sld [smem:[#allocation15 + $0x3]]
        %v4059 = vld [vmem:[%s398 + $0x60] sm:$0xff]
        %v4060 = vld [vmem:[%s398 + $0x68] sm:$0xff]
        %v4061 = vld [vmem:[%s398 + $0x70] sm:$0xff]
        %v4062 = vld [vmem:[%s398 + $0x78] sm:$0xff]
        %v4063 = vstv %s4058
        %v4064 = vmul.f32 %v4063, %v4059
        %v4065 = vmul.f32 %v4063, %v4060
        %v4066 = vmul.f32 %v4063, %v4061
        %v4067 = vmul.f32 %v4063, %v4062
        %v4068 = vadd.f32 %v4054, %v4064
        %v4069 = vadd.f32 %v4055, %v4065
        %v4070 = vadd.f32 %v4056, %v4066
        %v4071 = vadd.f32 %v4057, %v4067
        %s4072 = sld [smem:[#allocation13 + $0x4]]
        %v4073 = vld [vmem:[#allocation3 + $0x80] sm:$0xff]
        %v4074 = vld [vmem:[#allocation3 + $0x88] sm:$0xff]
        %v4075 = vld [vmem:[#allocation3 + $0x90] sm:$0xff]
        %v4076 = vld [vmem:[#allocation3 + $0x98] sm:$0xff]
        %v4077 = vstv %s4072
        %v4078 = vmul.f32 %v4077, %v4073
        %v4079 = vmul.f32 %v4077, %v4074
        %v4080 = vmul.f32 %v4077, %v4075
        %v4081 = vmul.f32 %v4077, %v4076
        %v4082 = vadd.f32 %v4068, %v4078
        %v4083 = vadd.f32 %v4069, %v4079
        %v4084 = vadd.f32 %v4070, %v4080
        %v4085 = vadd.f32 %v4071, %v4081
        %s4086 = sld [smem:[#allocation15 + $0x4]]
        %v4087 = vld [vmem:[%s398 + $0x80] sm:$0xff]
        %v4088 = vld [vmem:[%s398 + $0x88] sm:$0xff]
        %v4089 = vld [vmem:[%s398 + $0x90] sm:$0xff]
        %v4090 = vld [vmem:[%s398 + $0x98] sm:$0xff]
        %v4091 = vstv %s4086
        %v4092 = vmul.f32 %v4091, %v4087
        %v4093 = vmul.f32 %v4091, %v4088
        %v4094 = vmul.f32 %v4091, %v4089
        %v4095 = vmul.f32 %v4091, %v4090
        %v4096 = vadd.f32 %v4082, %v4092
        %v4097 = vadd.f32 %v4083, %v4093
        %v4098 = vadd.f32 %v4084, %v4094
        %v4099 = vadd.f32 %v4085, %v4095
        %s4100 = sld [smem:[#allocation13 + $0x5]]
        %v4101 = vld [vmem:[#allocation3 + $0xa0] sm:$0xff]
        %v4102 = vld [vmem:[#allocation3 + $0xa8] sm:$0xff]
        %v4103 = vld [vmem:[#allocation3 + $0xb0] sm:$0xff]
        %v4104 = vld [vmem:[#allocation3 + $0xb8] sm:$0xff]
        %v4105 = vstv %s4100
        %v4106 = vmul.f32 %v4105, %v4101
        %v4107 = vmul.f32 %v4105, %v4102
        %v4108 = vmul.f32 %v4105, %v4103
        %v4109 = vmul.f32 %v4105, %v4104
        %v4110 = vadd.f32 %v4096, %v4106
        %v4111 = vadd.f32 %v4097, %v4107
        %v4112 = vadd.f32 %v4098, %v4108
        %v4113 = vadd.f32 %v4099, %v4109
        %s4114 = sld [smem:[#allocation15 + $0x5]]
        %v4115 = vld [vmem:[%s398 + $0xa0] sm:$0xff]
        %v4116 = vld [vmem:[%s398 + $0xa8] sm:$0xff]
        %v4117 = vld [vmem:[%s398 + $0xb0] sm:$0xff]
        %v4118 = vld [vmem:[%s398 + $0xb8] sm:$0xff]
        %v4119 = vstv %s4114
        %v4120 = vmul.f32 %v4119, %v4115
        %v4121 = vmul.f32 %v4119, %v4116
        %v4122 = vmul.f32 %v4119, %v4117
        %v4123 = vmul.f32 %v4119, %v4118
        %v4124 = vadd.f32 %v4110, %v4120
        %v4125 = vadd.f32 %v4111, %v4121
        %v4126 = vadd.f32 %v4112, %v4122
        %v4127 = vadd.f32 %v4113, %v4123
        %s4128 = sld [smem:[#allocation13 + $0x6]]
        %v4129 = vld [vmem:[#allocation3 + $0xc0] sm:$0xff]
        %v4130 = vld [vmem:[#allocation3 + $0xc8] sm:$0xff]
        %v4131 = vld [vmem:[#allocation3 + $0xd0] sm:$0xff]
        %v4132 = vld [vmem:[#allocation3 + $0xd8] sm:$0xff]
        %v4133 = vstv %s4128
        %v4134 = vmul.f32 %v4133, %v4129
        %v4135 = vmul.f32 %v4133, %v4130
        %v4136 = vmul.f32 %v4133, %v4131
        %v4137 = vmul.f32 %v4133, %v4132
        %v4138 = vadd.f32 %v4124, %v4134
        %v4139 = vadd.f32 %v4125, %v4135
        %v4140 = vadd.f32 %v4126, %v4136
        %v4141 = vadd.f32 %v4127, %v4137
        %s4142 = sld [smem:[#allocation15 + $0x6]]
        %v4143 = vld [vmem:[%s398 + $0xc0] sm:$0xff]
        %v4144 = vld [vmem:[%s398 + $0xc8] sm:$0xff]
        %v4145 = vld [vmem:[%s398 + $0xd0] sm:$0xff]
        %v4146 = vld [vmem:[%s398 + $0xd8] sm:$0xff]
        %v4147 = vstv %s4142
        %v4148 = vmul.f32 %v4147, %v4143
        %v4149 = vmul.f32 %v4147, %v4144
        %v4150 = vmul.f32 %v4147, %v4145
        %v4151 = vmul.f32 %v4147, %v4146
        %v4152 = vadd.f32 %v4138, %v4148
        %v4153 = vadd.f32 %v4139, %v4149
        %v4154 = vadd.f32 %v4140, %v4150
        %v4155 = vadd.f32 %v4141, %v4151
        %s4156 = sld [smem:[#allocation13 + $0x7]]
        %v4157 = vld [vmem:[#allocation3 + $0xe0] sm:$0xff]
        %v4158 = vld [vmem:[#allocation3 + $0xe8] sm:$0xff]
        %v4159 = vld [vmem:[#allocation3 + $0xf0] sm:$0xff]
        %v4160 = vld [vmem:[#allocation3 + $0xf8] sm:$0xff]
        %v4161 = vstv %s4156
        %v4162 = vmul.f32 %v4161, %v4157
        %v4163 = vmul.f32 %v4161, %v4158
        %v4164 = vmul.f32 %v4161, %v4159
        %v4165 = vmul.f32 %v4161, %v4160
        %v4166 = vadd.f32 %v4152, %v4162
        %v4167 = vadd.f32 %v4153, %v4163
        %v4168 = vadd.f32 %v4154, %v4164
        %v4169 = vadd.f32 %v4155, %v4165
        %s4170 = sld [smem:[#allocation15 + $0x7]]
        %v4171 = vld [vmem:[%s398 + $0xe0] sm:$0xff]
        %v4172 = vld [vmem:[%s398 + $0xe8] sm:$0xff]
        %v4173 = vld [vmem:[%s398 + $0xf0] sm:$0xff]
        %v4174 = vld [vmem:[%s398 + $0xf8] sm:$0xff]
        %v4175 = vstv %s4170
        %v4176 = vmul.f32 %v4175, %v4171
        %v4177 = vmul.f32 %v4175, %v4172
        %v4178 = vmul.f32 %v4175, %v4173
        %v4179 = vmul.f32 %v4175, %v4174
        %v4180 = vadd.f32 %v4166, %v4176
        %v4181 = vadd.f32 %v4167, %v4177
        %v4182 = vadd.f32 %v4168, %v4178
        %v4183 = vadd.f32 %v4169, %v4179
        %s4184 = sld [smem:[#allocation13 + $0x8]]
        %v4185 = vld [vmem:[#allocation3 + $0x100] sm:$0xff]
        %v4186 = vld [vmem:[#allocation3 + $0x108] sm:$0xff]
        %v4187 = vld [vmem:[#allocation3 + $0x110] sm:$0xff]
        %v4188 = vld [vmem:[#allocation3 + $0x118] sm:$0xff]
        %v4189 = vstv %s4184
        %v4190 = vmul.f32 %v4189, %v4185
        %v4191 = vmul.f32 %v4189, %v4186
        %v4192 = vmul.f32 %v4189, %v4187
        %v4193 = vmul.f32 %v4189, %v4188
        %v4194 = vadd.f32 %v4180, %v4190
        %v4195 = vadd.f32 %v4181, %v4191
        %v4196 = vadd.f32 %v4182, %v4192
        %v4197 = vadd.f32 %v4183, %v4193
        %s4198 = sld [smem:[#allocation15 + $0x8]]
        %v4199 = vld [vmem:[%s398 + $0x100] sm:$0xff]
        %v4200 = vld [vmem:[%s398 + $0x108] sm:$0xff]
        %v4201 = vld [vmem:[%s398 + $0x110] sm:$0xff]
        %v4202 = vld [vmem:[%s398 + $0x118] sm:$0xff]
        %v4203 = vstv %s4198
        %v4204 = vmul.f32 %v4203, %v4199
        %v4205 = vmul.f32 %v4203, %v4200
        %v4206 = vmul.f32 %v4203, %v4201
        %v4207 = vmul.f32 %v4203, %v4202
        %v4208 = vadd.f32 %v4194, %v4204
        %v4209 = vadd.f32 %v4195, %v4205
        %v4210 = vadd.f32 %v4196, %v4206
        %v4211 = vadd.f32 %v4197, %v4207
        %s4212 = sld [smem:[#allocation16]]
        %v4213 = vstv %s4212
        %v4214 = vadd.f32 %v4208, %v4213
        %v4215 = vadd.f32 %v4209, %v4213
        %v4216 = vadd.f32 %v4210, %v4213
        %v4217 = vadd.f32 %v4211, %v4213
        %v4218 = vmax.f32 %v4214, 0.0
        %v4219 = vmax.f32 %v4215, 0.0
        %v4220 = vmax.f32 %v4216, 0.0
        %v4221 = vmax.f32 %v4217, 0.0
        %4222 = vst [vmem:[%s459] sm:$0xff] %v4218
        %4223 = vst [vmem:[%s459 + $0x8] sm:$0xff] %v4219
        %4224 = vst [vmem:[%s459 + $0x10] sm:$0xff] %v4220
        %4225 = vst [vmem:[%s459 + $0x18] sm:$0xff] %v4221
        %s4226 = sld [smem:[#allocation13 + $0x80]]
        %v4227 = vld [vmem:[#allocation3] sm:$0xff]
        %v4228 = vld [vmem:[#allocation3 + $0x8] sm:$0xff]
        %v4229 = vld [vmem:[#allocation3 + $0x10] sm:$0xff]
        %v4230 = vld [vmem:[#allocation3 + $0x18] sm:$0xff]
        %v4231 = vstv %s4226
        %v4232 = vmul.f32 %v4231, %v4227
        %v4233 = vmul.f32 %v4231, %v4228
        %v4234 = vmul.f32 %v4231, %v4229
        %v4235 = vmul.f32 %v4231, %v4230
        %v4236 = vadd.f32 %v4232, 0.0
        %v4237 = vadd.f32 %v4233, 0.0
        %v4238 = vadd.f32 %v4234, 0.0
        %v4239 = vadd.f32 %v4235, 0.0
        %s4240 = sld [smem:[#allocation15 + $0x80]]
        %v4241 = vld [vmem:[%s398] sm:$0xff]
        %v4242 = vld [vmem:[%s398 + $0x8] sm:$0xff]
        %v4243 = vld [vmem:[%s398 + $0x10] sm:$0xff]
        %v4244 = vld [vmem:[%s398 + $0x18] sm:$0xff]
        %v4245 = vstv %s4240
        %v4246 = vmul.f32 %v4245, %v4241
        %v4247 = vmul.f32 %v4245, %v4242
        %v4248 = vmul.f32 %v4245, %v4243
        %v4249 = vmul.f32 %v4245, %v4244
        %v4250 = vadd.f32 %v4236, %v4246
        %v4251 = vadd.f32 %v4237, %v4247
        %v4252 = vadd.f32 %v4238, %v4248
        %v4253 = vadd.f32 %v4239, %v4249
        %s4254 = sld [smem:[#allocation13 + $0x81]]
        %v4255 = vld [vmem:[#allocation3 + $0x20] sm:$0xff]
        %v4256 = vld [vmem:[#allocation3 + $0x28] sm:$0xff]
        %v4257 = vld [vmem:[#allocation3 + $0x30] sm:$0xff]
        %v4258 = vld [vmem:[#allocation3 + $0x38] sm:$0xff]
        %v4259 = vstv %s4254
        %v4260 = vmul.f32 %v4259, %v4255
        %v4261 = vmul.f32 %v4259, %v4256
        %v4262 = vmul.f32 %v4259, %v4257
        %v4263 = vmul.f32 %v4259, %v4258
        %v4264 = vadd.f32 %v4250, %v4260
        %v4265 = vadd.f32 %v4251, %v4261
        %v4266 = vadd.f32 %v4252, %v4262
        %v4267 = vadd.f32 %v4253, %v4263
        %s4268 = sld [smem:[#allocation15 + $0x81]]
        %v4269 = vld [vmem:[%s398 + $0x20] sm:$0xff]
        %v4270 = vld [vmem:[%s398 + $0x28] sm:$0xff]
        %v4271 = vld [vmem:[%s398 + $0x30] sm:$0xff]
        %v4272 = vld [vmem:[%s398 + $0x38] sm:$0xff]
        %v4273 = vstv %s4268
        %v4274 = vmul.f32 %v4273, %v4269
        %v4275 = vmul.f32 %v4273, %v4270
        %v4276 = vmul.f32 %v4273, %v4271
        %v4277 = vmul.f32 %v4273, %v4272
        %v4278 = vadd.f32 %v4264, %v4274
        %v4279 = vadd.f32 %v4265, %v4275
        %v4280 = vadd.f32 %v4266, %v4276
        %v4281 = vadd.f32 %v4267, %v4277
        %s4282 = sld [smem:[#allocation13 + $0x82]]
        %v4283 = vld [vmem:[#allocation3 + $0x40] sm:$0xff]
        %v4284 = vld [vmem:[#allocation3 + $0x48] sm:$0xff]
        %v4285 = vld [vmem:[#allocation3 + $0x50] sm:$0xff]
        %v4286 = vld [vmem:[#allocation3 + $0x58] sm:$0xff]
        %v4287 = vstv %s4282
        %v4288 = vmul.f32 %v4287, %v4283
        %v4289 = vmul.f32 %v4287, %v4284
        %v4290 = vmul.f32 %v4287, %v4285
        %v4291 = vmul.f32 %v4287, %v4286
        %v4292 = vadd.f32 %v4278, %v4288
        %v4293 = vadd.f32 %v4279, %v4289
        %v4294 = vadd.f32 %v4280, %v4290
        %v4295 = vadd.f32 %v4281, %v4291
        %s4296 = sld [smem:[#allocation15 + $0x82]]
        %v4297 = vld [vmem:[%s398 + $0x40] sm:$0xff]
        %v4298 = vld [vmem:[%s398 + $0x48] sm:$0xff]
        %v4299 = vld [vmem:[%s398 + $0x50] sm:$0xff]
        %v4300 = vld [vmem:[%s398 + $0x58] sm:$0xff]
        %v4301 = vstv %s4296
        %v4302 = vmul.f32 %v4301, %v4297
        %v4303 = vmul.f32 %v4301, %v4298
        %v4304 = vmul.f32 %v4301, %v4299
        %v4305 = vmul.f32 %v4301, %v4300
        %v4306 = vadd.f32 %v4292, %v4302
        %v4307 = vadd.f32 %v4293, %v4303
        %v4308 = vadd.f32 %v4294, %v4304
        %v4309 = vadd.f32 %v4295, %v4305
        %s4310 = sld [smem:[#allocation13 + $0x83]]
        %v4311 = vld [vmem:[#allocation3 + $0x60] sm:$0xff]
        %v4312 = vld [vmem:[#allocation3 + $0x68] sm:$0xff]
        %v4313 = vld [vmem:[#allocation3 + $0x70] sm:$0xff]
        %v4314 = vld [vmem:[#allocation3 + $0x78] sm:$0xff]
        %v4315 = vstv %s4310
        %v4316 = vmul.f32 %v4315, %v4311
        %v4317 = vmul.f32 %v4315, %v4312
        %v4318 = vmul.f32 %v4315, %v4313
        %v4319 = vmul.f32 %v4315, %v4314
        %v4320 = vadd.f32 %v4306, %v4316
        %v4321 = vadd.f32 %v4307, %v4317
        %v4322 = vadd.f32 %v4308, %v4318
        %v4323 = vadd.f32 %v4309, %v4319
        %s4324 = sld [smem:[#allocation15 + $0x83]]
        %v4325 = vld [vmem:[%s398 + $0x60] sm:$0xff]
        %v4326 = vld [vmem:[%s398 + $0x68] sm:$0xff]
        %v4327 = vld [vmem:[%s398 + $0x70] sm:$0xff]
        %v4328 = vld [vmem:[%s398 + $0x78] sm:$0xff]
        %v4329 = vstv %s4324
        %v4330 = vmul.f32 %v4329, %v4325
        %v4331 = vmul.f32 %v4329, %v4326
        %v4332 = vmul.f32 %v4329, %v4327
        %v4333 = vmul.f32 %v4329, %v4328
        %v4334 = vadd.f32 %v4320, %v4330
        %v4335 = vadd.f32 %v4321, %v4331
        %v4336 = vadd.f32 %v4322, %v4332
        %v4337 = vadd.f32 %v4323, %v4333
        %s4338 = sld [smem:[#allocation13 + $0x84]]
        %v4339 = vld [vmem:[#allocation3 + $0x80] sm:$0xff]
        %v4340 = vld [vmem:[#allocation3 + $0x88] sm:$0xff]
        %v4341 = vld [vmem:[#allocation3 + $0x90] sm:$0xff]
        %v4342 = vld [vmem:[#allocation3 + $0x98] sm:$0xff]
        %v4343 = vstv %s4338
        %v4344 = vmul.f32 %v4343, %v4339
        %v4345 = vmul.f32 %v4343, %v4340
        %v4346 = vmul.f32 %v4343, %v4341
        %v4347 = vmul.f32 %v4343, %v4342
        %v4348 = vadd.f32 %v4334, %v4344
        %v4349 = vadd.f32 %v4335, %v4345
        %v4350 = vadd.f32 %v4336, %v4346
        %v4351 = vadd.f32 %v4337, %v4347
        %s4352 = sld [smem:[#allocation15 + $0x84]]
        %v4353 = vld [vmem:[%s398 + $0x80] sm:$0xff]
        %v4354 = vld [vmem:[%s398 + $0x88] sm:$0xff]
        %v4355 = vld [vmem:[%s398 + $0x90] sm:$0xff]
        %v4356 = vld [vmem:[%s398 + $0x98] sm:$0xff]
        %v4357 = vstv %s4352
        %v4358 = vmul.f32 %v4357, %v4353
        %v4359 = vmul.f32 %v4357, %v4354
        %v4360 = vmul.f32 %v4357, %v4355
        %v4361 = vmul.f32 %v4357, %v4356
        %v4362 = vadd.f32 %v4348, %v4358
        %v4363 = vadd.f32 %v4349, %v4359
        %v4364 = vadd.f32 %v4350, %v4360
        %v4365 = vadd.f32 %v4351, %v4361
        %s4366 = sld [smem:[#allocation13 + $0x85]]
        %v4367 = vld [vmem:[#allocation3 + $0xa0] sm:$0xff]
        %v4368 = vld [vmem:[#allocation3 + $0xa8] sm:$0xff]
        %v4369 = vld [vmem:[#allocation3 + $0xb0] sm:$0xff]
        %v4370 = vld [vmem:[#allocation3 + $0xb8] sm:$0xff]
        %v4371 = vstv %s4366
        %v4372 = vmul.f32 %v4371, %v4367
        %v4373 = vmul.f32 %v4371, %v4368
        %v4374 = vmul.f32 %v4371, %v4369
        %v4375 = vmul.f32 %v4371, %v4370
        %v4376 = vadd.f32 %v4362, %v4372
        %v4377 = vadd.f32 %v4363, %v4373
        %v4378 = vadd.f32 %v4364, %v4374
        %v4379 = vadd.f32 %v4365, %v4375
        %s4380 = sld [smem:[#allocation15 + $0x85]]
        %v4381 = vld [vmem:[%s398 + $0xa0] sm:$0xff]
        %v4382 = vld [vmem:[%s398 + $0xa8] sm:$0xff]
        %v4383 = vld [vmem:[%s398 + $0xb0] sm:$0xff]
        %v4384 = vld [vmem:[%s398 + $0xb8] sm:$0xff]
        %v4385 = vstv %s4380
        %v4386 = vmul.f32 %v4385, %v4381
        %v4387 = vmul.f32 %v4385, %v4382
        %v4388 = vmul.f32 %v4385, %v4383
        %v4389 = vmul.f32 %v4385, %v4384
        %v4390 = vadd.f32 %v4376, %v4386
        %v4391 = vadd.f32 %v4377, %v4387
        %v4392 = vadd.f32 %v4378, %v4388
        %v4393 = vadd.f32 %v4379, %v4389
        %s4394 = sld [smem:[#allocation13 + $0x86]]
        %v4395 = vld [vmem:[#allocation3 + $0xc0] sm:$0xff]
        %v4396 = vld [vmem:[#allocation3 + $0xc8] sm:$0xff]
        %v4397 = vld [vmem:[#allocation3 + $0xd0] sm:$0xff]
        %v4398 = vld [vmem:[#allocation3 + $0xd8] sm:$0xff]
        %v4399 = vstv %s4394
        %v4400 = vmul.f32 %v4399, %v4395
        %v4401 = vmul.f32 %v4399, %v4396
        %v4402 = vmul.f32 %v4399, %v4397
        %v4403 = vmul.f32 %v4399, %v4398
        %v4404 = vadd.f32 %v4390, %v4400
        %v4405 = vadd.f32 %v4391, %v4401
        %v4406 = vadd.f32 %v4392, %v4402
        %v4407 = vadd.f32 %v4393, %v4403
        %s4408 = sld [smem:[#allocation15 + $0x86]]
        %v4409 = vld [vmem:[%s398 + $0xc0] sm:$0xff]
        %v4410 = vld [vmem:[%s398 + $0xc8] sm:$0xff]
        %v4411 = vld [vmem:[%s398 + $0xd0] sm:$0xff]
        %v4412 = vld [vmem:[%s398 + $0xd8] sm:$0xff]
        %v4413 = vstv %s4408
        %v4414 = vmul.f32 %v4413, %v4409
        %v4415 = vmul.f32 %v4413, %v4410
        %v4416 = vmul.f32 %v4413, %v4411
        %v4417 = vmul.f32 %v4413, %v4412
        %v4418 = vadd.f32 %v4404, %v4414
        %v4419 = vadd.f32 %v4405, %v4415
        %v4420 = vadd.f32 %v4406, %v4416
        %v4421 = vadd.f32 %v4407, %v4417
        %s4422 = sld [smem:[#allocation13 + $0x87]]
        %v4423 = vld [vmem:[#allocation3 + $0xe0] sm:$0xff]
        %v4424 = vld [vmem:[#allocation3 + $0xe8] sm:$0xff]
        %v4425 = vld [vmem:[#allocation3 + $0xf0] sm:$0xff]
        %v4426 = vld [vmem:[#allocation3 + $0xf8] sm:$0xff]
        %v4427 = vstv %s4422
        %v4428 = vmul.f32 %v4427, %v4423
        %v4429 = vmul.f32 %v4427, %v4424
        %v4430 = vmul.f32 %v4427, %v4425
        %v4431 = vmul.f32 %v4427, %v4426
        %v4432 = vadd.f32 %v4418, %v4428
        %v4433 = vadd.f32 %v4419, %v4429
        %v4434 = vadd.f32 %v4420, %v4430
        %v4435 = vadd.f32 %v4421, %v4431
        %s4436 = sld [smem:[#allocation15 + $0x87]]
        %v4437 = vld [vmem:[%s398 + $0xe0] sm:$0xff]
        %v4438 = vld [vmem:[%s398 + $0xe8] sm:$0xff]
        %v4439 = vld [vmem:[%s398 + $0xf0] sm:$0xff]
        %v4440 = vld [vmem:[%s398 + $0xf8] sm:$0xff]
        %v4441 = vstv %s4436
        %v4442 = vmul.f32 %v4441, %v4437
        %v4443 = vmul.f32 %v4441, %v4438
        %v4444 = vmul.f32 %v4441, %v4439
        %v4445 = vmul.f32 %v4441, %v4440
        %v4446 = vadd.f32 %v4432, %v4442
        %v4447 = vadd.f32 %v4433, %v4443
        %v4448 = vadd.f32 %v4434, %v4444
        %v4449 = vadd.f32 %v4435, %v4445
        %s4450 = sld [smem:[#allocation13 + $0x88]]
        %v4451 = vld [vmem:[#allocation3 + $0x100] sm:$0xff]
        %v4452 = vld [vmem:[#allocation3 + $0x108] sm:$0xff]
        %v4453 = vld [vmem:[#allocation3 + $0x110] sm:$0xff]
        %v4454 = vld [vmem:[#allocation3 + $0x118] sm:$0xff]
        %v4455 = vstv %s4450
        %v4456 = vmul.f32 %v4455, %v4451
        %v4457 = vmul.f32 %v4455, %v4452
        %v4458 = vmul.f32 %v4455, %v4453
        %v4459 = vmul.f32 %v4455, %v4454
        %v4460 = vadd.f32 %v4446, %v4456
        %v4461 = vadd.f32 %v4447, %v4457
        %v4462 = vadd.f32 %v4448, %v4458
        %v4463 = vadd.f32 %v4449, %v4459
        %s4464 = sld [smem:[#allocation15 + $0x88]]
        %v4465 = vld [vmem:[%s398 + $0x100] sm:$0xff]
        %v4466 = vld [vmem:[%s398 + $0x108] sm:$0xff]
        %v4467 = vld [vmem:[%s398 + $0x110] sm:$0xff]
        %v4468 = vld [vmem:[%s398 + $0x118] sm:$0xff]
        %v4469 = vstv %s4464
        %v4470 = vmul.f32 %v4469, %v4465
        %v4471 = vmul.f32 %v4469, %v4466
        %v4472 = vmul.f32 %v4469, %v4467
        %v4473 = vmul.f32 %v4469, %v4468
        %v4474 = vadd.f32 %v4460, %v4470
        %v4475 = vadd.f32 %v4461, %v4471
        %v4476 = vadd.f32 %v4462, %v4472
        %v4477 = vadd.f32 %v4463, %v4473
        %s4478 = sld [smem:[#allocation16 + $0x1]]
        %v4479 = vstv %s4478
        %v4480 = vadd.f32 %v4474, %v4479
        %v4481 = vadd.f32 %v4475, %v4479
        %v4482 = vadd.f32 %v4476, %v4479
        %v4483 = vadd.f32 %v4477, %v4479
        %v4484 = vmax.f32 %v4480, 0.0
        %v4485 = vmax.f32 %v4481, 0.0
        %v4486 = vmax.f32 %v4482, 0.0
        %v4487 = vmax.f32 %v4483, 0.0
        %4488 = vst [vmem:[%s459 + $0x20] sm:$0xff] %v4484
        %4489 = vst [vmem:[%s459 + $0x28] sm:$0xff] %v4485
        %4490 = vst [vmem:[%s459 + $0x30] sm:$0xff] %v4486
        %4491 = vst [vmem:[%s459 + $0x38] sm:$0xff] %v4487
        %s4492 = sld [smem:[#allocation13 + $0x100]]
        %v4493 = vld [vmem:[#allocation3] sm:$0xff]
        %v4494 = vld [vmem:[#allocation3 + $0x8] sm:$0xff]
        %v4495 = vld [vmem:[#allocation3 + $0x10] sm:$0xff]
        %v4496 = vld [vmem:[#allocation3 + $0x18] sm:$0xff]
        %v4497 = vstv %s4492
        %v4498 = vmul.f32 %v4497, %v4493
        %v4499 = vmul.f32 %v4497, %v4494
        %v4500 = vmul.f32 %v4497, %v4495
        %v4501 = vmul.f32 %v4497, %v4496
        %v4502 = vadd.f32 %v4498, 0.0
        %v4503 = vadd.f32 %v4499, 0.0
        %v4504 = vadd.f32 %v4500, 0.0
        %v4505 = vadd.f32 %v4501, 0.0
        %s4506 = sld [smem:[#allocation15 + $0x100]]
        %v4507 = vld [vmem:[%s398] sm:$0xff]
        %v4508 = vld [vmem:[%s398 + $0x8] sm:$0xff]
        %v4509 = vld [vmem:[%s398 + $0x10] sm:$0xff]
        %v4510 = vld [vmem:[%s398 + $0x18] sm:$0xff]
        %v4511 = vstv %s4506
        %v4512 = vmul.f32 %v4511, %v4507
        %v4513 = vmul.f32 %v4511, %v4508
        %v4514 = vmul.f32 %v4511, %v4509
        %v4515 = vmul.f32 %v4511, %v4510
        %v4516 = vadd.f32 %v4502, %v4512
        %v4517 = vadd.f32 %v4503, %v4513
        %v4518 = vadd.f32 %v4504, %v4514
        %v4519 = vadd.f32 %v4505, %v4515
        %s4520 = sld [smem:[#allocation13 + $0x101]]
        %v4521 = vld [vmem:[#allocation3 + $0x20] sm:$0xff]
        %v4522 = vld [vmem:[#allocation3 + $0x28] sm:$0xff]
        %v4523 = vld [vmem:[#allocation3 + $0x30] sm:$0xff]
        %v4524 = vld [vmem:[#allocation3 + $0x38] sm:$0xff]
        %v4525 = vstv %s4520
        %v4526 = vmul.f32 %v4525, %v4521
        %v4527 = vmul.f32 %v4525, %v4522
        %v4528 = vmul.f32 %v4525, %v4523
        %v4529 = vmul.f32 %v4525, %v4524
        %v4530 = vadd.f32 %v4516, %v4526
        %v4531 = vadd.f32 %v4517, %v4527
        %v4532 = vadd.f32 %v4518, %v4528
        %v4533 = vadd.f32 %v4519, %v4529
        %s4534 = sld [smem:[#allocation15 + $0x101]]
        %v4535 = vld [vmem:[%s398 + $0x20] sm:$0xff]
        %v4536 = vld [vmem:[%s398 + $0x28] sm:$0xff]
        %v4537 = vld [vmem:[%s398 + $0x30] sm:$0xff]
        %v4538 = vld [vmem:[%s398 + $0x38] sm:$0xff]
        %v4539 = vstv %s4534
        %v4540 = vmul.f32 %v4539, %v4535
        %v4541 = vmul.f32 %v4539, %v4536
        %v4542 = vmul.f32 %v4539, %v4537
        %v4543 = vmul.f32 %v4539, %v4538
        %v4544 = vadd.f32 %v4530, %v4540
        %v4545 = vadd.f32 %v4531, %v4541
        %v4546 = vadd.f32 %v4532, %v4542
        %v4547 = vadd.f32 %v4533, %v4543
        %s4548 = sld [smem:[#allocation13 + $0x102]]
        %v4549 = vld [vmem:[#allocation3 + $0x40] sm:$0xff]
        %v4550 = vld [vmem:[#allocation3 + $0x48] sm:$0xff]
        %v4551 = vld [vmem:[#allocation3 + $0x50] sm:$0xff]
        %v4552 = vld [vmem:[#allocation3 + $0x58] sm:$0xff]
        %v4553 = vstv %s4548
        %v4554 = vmul.f32 %v4553, %v4549
        %v4555 = vmul.f32 %v4553, %v4550
        %v4556 = vmul.f32 %v4553, %v4551
        %v4557 = vmul.f32 %v4553, %v4552
        %v4558 = vadd.f32 %v4544, %v4554
        %v4559 = vadd.f32 %v4545, %v4555
        %v4560 = vadd.f32 %v4546, %v4556
        %v4561 = vadd.f32 %v4547, %v4557
        %s4562 = sld [smem:[#allocation15 + $0x102]]
        %v4563 = vld [vmem:[%s398 + $0x40] sm:$0xff]
        %v4564 = vld [vmem:[%s398 + $0x48] sm:$0xff]
        %v4565 = vld [vmem:[%s398 + $0x50] sm:$0xff]
        %v4566 = vld [vmem:[%s398 + $0x58] sm:$0xff]
        %v4567 = vstv %s4562
        %v4568 = vmul.f32 %v4567, %v4563
        %v4569 = vmul.f32 %v4567, %v4564
        %v4570 = vmul.f32 %v4567, %v4565
        %v4571 = vmul.f32 %v4567, %v4566
        %v4572 = vadd.f32 %v4558, %v4568
        %v4573 = vadd.f32 %v4559, %v4569
        %v4574 = vadd.f32 %v4560, %v4570
        %v4575 = vadd.f32 %v4561, %v4571
        %s4576 = sld [smem:[#allocation13 + $0x103]]
        %v4577 = vld [vmem:[#allocation3 + $0x60] sm:$0xff]
        %v4578 = vld [vmem:[#allocation3 + $0x68] sm:$0xff]
        %v4579 = vld [vmem:[#allocation3 + $0x70] sm:$0xff]
        %v4580 = vld [vmem:[#allocation3 + $0x78] sm:$0xff]
        %v4581 = vstv %s4576
        %v4582 = vmul.f32 %v4581, %v4577
        %v4583 = vmul.f32 %v4581, %v4578
        %v4584 = vmul.f32 %v4581, %v4579
        %v4585 = vmul.f32 %v4581, %v4580
        %v4586 = vadd.f32 %v4572, %v4582
        %v4587 = vadd.f32 %v4573, %v4583
        %v4588 = vadd.f32 %v4574, %v4584
        %v4589 = vadd.f32 %v4575, %v4585
        %s4590 = sld [smem:[#allocation15 + $0x103]]
        %v4591 = vld [vmem:[%s398 + $0x60] sm:$0xff]
        %v4592 = vld [vmem:[%s398 + $0x68] sm:$0xff]
        %v4593 = vld [vmem:[%s398 + $0x70] sm:$0xff]
        %v4594 = vld [vmem:[%s398 + $0x78] sm:$0xff]
        %v4595 = vstv %s4590
        %v4596 = vmul.f32 %v4595, %v4591
        %v4597 = vmul.f32 %v4595, %v4592
        %v4598 = vmul.f32 %v4595, %v4593
        %v4599 = vmul.f32 %v4595, %v4594
        %v4600 = vadd.f32 %v4586, %v4596
        %v4601 = vadd.f32 %v4587, %v4597
        %v4602 = vadd.f32 %v4588, %v4598
        %v4603 = vadd.f32 %v4589, %v4599
        %s4604 = sld [smem:[#allocation13 + $0x104]]
        %v4605 = vld [vmem:[#allocation3 + $0x80] sm:$0xff]
        %v4606 = vld [vmem:[#allocation3 + $0x88] sm:$0xff]
        %v4607 = vld [vmem:[#allocation3 + $0x90] sm:$0xff]
        %v4608 = vld [vmem:[#allocation3 + $0x98] sm:$0xff]
        %v4609 = vstv %s4604
        %v4610 = vmul.f32 %v4609, %v4605
        %v4611 = vmul.f32 %v4609, %v4606
        %v4612 = vmul.f32 %v4609, %v4607
        %v4613 = vmul.f32 %v4609, %v4608
        %v4614 = vadd.f32 %v4600, %v4610
        %v4615 = vadd.f32 %v4601, %v4611
        %v4616 = vadd.f32 %v4602, %v4612
        %v4617 = vadd.f32 %v4603, %v4613
        %s4618 = sld [smem:[#allocation15 + $0x104]]
        %v4619 = vld [vmem:[%s398 + $0x80] sm:$0xff]
        %v4620 = vld [vmem:[%s398 + $0x88] sm:$0xff]
        %v4621 = vld [vmem:[%s398 + $0x90] sm:$0xff]
        %v4622 = vld [vmem:[%s398 + $0x98] sm:$0xff]
        %v4623 = vstv %s4618
        %v4624 = vmul.f32 %v4623, %v4619
        %v4625 = vmul.f32 %v4623, %v4620
        %v4626 = vmul.f32 %v4623, %v4621
        %v4627 = vmul.f32 %v4623, %v4622
        %v4628 = vadd.f32 %v4614, %v4624
        %v4629 = vadd.f32 %v4615, %v4625
        %v4630 = vadd.f32 %v4616, %v4626
        %v4631 = vadd.f32 %v4617, %v4627
        %s4632 = sld [smem:[#allocation13 + $0x105]]
        %v4633 = vld [vmem:[#allocation3 + $0xa0] sm:$0xff]
        %v4634 = vld [vmem:[#allocation3 + $0xa8] sm:$0xff]
        %v4635 = vld [vmem:[#allocation3 + $0xb0] sm:$0xff]
        %v4636 = vld [vmem:[#allocation3 + $0xb8] sm:$0xff]
        %v4637 = vstv %s4632
        %v4638 = vmul.f32 %v4637, %v4633
        %v4639 = vmul.f32 %v4637, %v4634
        %v4640 = vmul.f32 %v4637, %v4635
        %v4641 = vmul.f32 %v4637, %v4636
        %v4642 = vadd.f32 %v4628, %v4638
        %v4643 = vadd.f32 %v4629, %v4639
        %v4644 = vadd.f32 %v4630, %v4640
        %v4645 = vadd.f32 %v4631, %v4641
        %s4646 = sld [smem:[#allocation15 + $0x105]]
        %v4647 = vld [vmem:[%s398 + $0xa0] sm:$0xff]
        %v4648 = vld [vmem:[%s398 + $0xa8] sm:$0xff]
        %v4649 = vld [vmem:[%s398 + $0xb0] sm:$0xff]
        %v4650 = vld [vmem:[%s398 + $0xb8] sm:$0xff]
        %v4651 = vstv %s4646
        %v4652 = vmul.f32 %v4651, %v4647
        %v4653 = vmul.f32 %v4651, %v4648
        %v4654 = vmul.f32 %v4651, %v4649
        %v4655 = vmul.f32 %v4651, %v4650
        %v4656 = vadd.f32 %v4642, %v4652
        %v4657 = vadd.f32 %v4643, %v4653
        %v4658 = vadd.f32 %v4644, %v4654
        %v4659 = vadd.f32 %v4645, %v4655
        %s4660 = sld [smem:[#allocation13 + $0x106]]
        %v4661 = vld [vmem:[#allocation3 + $0xc0] sm:$0xff]
        %v4662 = vld [vmem:[#allocation3 + $0xc8] sm:$0xff]
        %v4663 = vld [vmem:[#allocation3 + $0xd0] sm:$0xff]
        %v4664 = vld [vmem:[#allocation3 + $0xd8] sm:$0xff]
        %v4665 = vstv %s4660
        %v4666 = vmul.f32 %v4665, %v4661
        %v4667 = vmul.f32 %v4665, %v4662
        %v4668 = vmul.f32 %v4665, %v4663
        %v4669 = vmul.f32 %v4665, %v4664
        %v4670 = vadd.f32 %v4656, %v4666
        %v4671 = vadd.f32 %v4657, %v4667
        %v4672 = vadd.f32 %v4658, %v4668
        %v4673 = vadd.f32 %v4659, %v4669
        %s4674 = sld [smem:[#allocation15 + $0x106]]
        %v4675 = vld [vmem:[%s398 + $0xc0] sm:$0xff]
        %v4676 = vld [vmem:[%s398 + $0xc8] sm:$0xff]
        %v4677 = vld [vmem:[%s398 + $0xd0] sm:$0xff]
        %v4678 = vld [vmem:[%s398 + $0xd8] sm:$0xff]
        %v4679 = vstv %s4674
        %v4680 = vmul.f32 %v4679, %v4675
        %v4681 = vmul.f32 %v4679, %v4676
        %v4682 = vmul.f32 %v4679, %v4677
        %v4683 = vmul.f32 %v4679, %v4678
        %v4684 = vadd.f32 %v4670, %v4680
        %v4685 = vadd.f32 %v4671, %v4681
        %v4686 = vadd.f32 %v4672, %v4682
        %v4687 = vadd.f32 %v4673, %v4683
        %s4688 = sld [smem:[#allocation13 + $0x107]]
        %v4689 = vld [vmem:[#allocation3 + $0xe0] sm:$0xff]
        %v4690 = vld [vmem:[#allocation3 + $0xe8] sm:$0xff]
        %v4691 = vld [vmem:[#allocation3 + $0xf0] sm:$0xff]
        %v4692 = vld [vmem:[#allocation3 + $0xf8] sm:$0xff]
        %v4693 = vstv %s4688
        %v4694 = vmul.f32 %v4693, %v4689
        %v4695 = vmul.f32 %v4693, %v4690
        %v4696 = vmul.f32 %v4693, %v4691
        %v4697 = vmul.f32 %v4693, %v4692
        %v4698 = vadd.f32 %v4684, %v4694
        %v4699 = vadd.f32 %v4685, %v4695
        %v4700 = vadd.f32 %v4686, %v4696
        %v4701 = vadd.f32 %v4687, %v4697
        %s4702 = sld [smem:[#allocation15 + $0x107]]
        %v4703 = vld [vmem:[%s398 + $0xe0] sm:$0xff]
        %v4704 = vld [vmem:[%s398 + $0xe8] sm:$0xff]
        %v4705 = vld [vmem:[%s398 + $0xf0] sm:$0xff]
        %v4706 = vld [vmem:[%s398 + $0xf8] sm:$0xff]
        %v4707 = vstv %s4702
        %v4708 = vmul.f32 %v4707, %v4703
        %v4709 = vmul.f32 %v4707, %v4704
        %v4710 = vmul.f32 %v4707, %v4705
        %v4711 = vmul.f32 %v4707, %v4706
        %v4712 = vadd.f32 %v4698, %v4708
        %v4713 = vadd.f32 %v4699, %v4709
        %v4714 = vadd.f32 %v4700, %v4710
        %v4715 = vadd.f32 %v4701, %v4711
        %s4716 = sld [smem:[#allocation13 + $0x108]]
        %v4717 = vld [vmem:[#allocation3 + $0x100] sm:$0xff]
        %v4718 = vld [vmem:[#allocation3 + $0x108] sm:$0xff]
        %v4719 = vld [vmem:[#allocation3 + $0x110] sm:$0xff]
        %v4720 = vld [vmem:[#allocation3 + $0x118] sm:$0xff]
        %v4721 = vstv %s4716
        %v4722 = vmul.f32 %v4721, %v4717
        %v4723 = vmul.f32 %v4721, %v4718
        %v4724 = vmul.f32 %v4721, %v4719
        %v4725 = vmul.f32 %v4721, %v4720
        %v4726 = vadd.f32 %v4712, %v4722
        %v4727 = vadd.f32 %v4713, %v4723
        %v4728 = vadd.f32 %v4714, %v4724
        %v4729 = vadd.f32 %v4715, %v4725
        %s4730 = sld [smem:[#allocation15 + $0x108]]
        %v4731 = vld [vmem:[%s398 + $0x100] sm:$0xff]
        %v4732 = vld [vmem:[%s398 + $0x108] sm:$0xff]
        %v4733 = vld [vmem:[%s398 + $0x110] sm:$0xff]
        %v4734 = vld [vmem:[%s398 + $0x118] sm:$0xff]
        %v4735 = vstv %s4730
        %v4736 = vmul.f32 %v4735, %v4731
        %v4737 = vmul.f32 %v4735, %v4732
        %v4738 = vmul.f32 %v4735, %v4733
        %v4739 = vmul.f32 %v4735, %v4734
        %v4740 = vadd.f32 %v4726, %v4736
        %v4741 = vadd.f32 %v4727, %v4737
        %v4742 = vadd.f32 %v4728, %v4738
        %v4743 = vadd.f32 %v4729, %v4739
        %s4744 = sld [smem:[#allocation16 + $0x2]]
        %v4745 = vstv %s4744
        %v4746 = vadd.f32 %v4740, %v4745
        %v4747 = vadd.f32 %v4741, %v4745
        %v4748 = vadd.f32 %v4742, %v4745
        %v4749 = vadd.f32 %v4743, %v4745
        %v4750 = vmax.f32 %v4746, 0.0
        %v4751 = vmax.f32 %v4747, 0.0
        %v4752 = vmax.f32 %v4748, 0.0
        %v4753 = vmax.f32 %v4749, 0.0
        %4754 = vst [vmem:[%s459 + $0x40] sm:$0xff] %v4750
        %4755 = vst [vmem:[%s459 + $0x48] sm:$0xff] %v4751
        %4756 = vst [vmem:[%s459 + $0x50] sm:$0xff] %v4752
        %4757 = vst [vmem:[%s459 + $0x58] sm:$0xff] %v4753
        %s4758 = sld [smem:[#allocation13 + $0x180]]
        %v4759 = vld [vmem:[#allocation3] sm:$0xff]
        %v4760 = vld [vmem:[#allocation3 + $0x8] sm:$0xff]
        %v4761 = vld [vmem:[#allocation3 + $0x10] sm:$0xff]
        %v4762 = vld [vmem:[#allocation3 + $0x18] sm:$0xff]
        %v4763 = vstv %s4758
        %v4764 = vmul.f32 %v4763, %v4759
        %v4765 = vmul.f32 %v4763, %v4760
        %v4766 = vmul.f32 %v4763, %v4761
        %v4767 = vmul.f32 %v4763, %v4762
        %v4768 = vadd.f32 %v4764, 0.0
        %v4769 = vadd.f32 %v4765, 0.0
        %v4770 = vadd.f32 %v4766, 0.0
        %v4771 = vadd.f32 %v4767, 0.0
        %s4772 = sld [smem:[#allocation15 + $0x180]]
        %v4773 = vld [vmem:[%s398] sm:$0xff]
        %v4774 = vld [vmem:[%s398 + $0x8] sm:$0xff]
        %v4775 = vld [vmem:[%s398 + $0x10] sm:$0xff]
        %v4776 = vld [vmem:[%s398 + $0x18] sm:$0xff]
        %v4777 = vstv %s4772
        %v4778 = vmul.f32 %v4777, %v4773
        %v4779 = vmul.f32 %v4777, %v4774
        %v4780 = vmul.f32 %v4777, %v4775
        %v4781 = vmul.f32 %v4777, %v4776
        %v4782 = vadd.f32 %v4768, %v4778
        %v4783 = vadd.f32 %v4769, %v4779
        %v4784 = vadd.f32 %v4770, %v4780
        %v4785 = vadd.f32 %v4771, %v4781
        %s4786 = sld [smem:[#allocation13 + $0x181]]
        %v4787 = vld [vmem:[#allocation3 + $0x20] sm:$0xff]
        %v4788 = vld [vmem:[#allocation3 + $0x28] sm:$0xff]
        %v4789 = vld [vmem:[#allocation3 + $0x30] sm:$0xff]
        %v4790 = vld [vmem:[#allocation3 + $0x38] sm:$0xff]
        %v4791 = vstv %s4786
        %v4792 = vmul.f32 %v4791, %v4787
        %v4793 = vmul.f32 %v4791, %v4788
        %v4794 = vmul.f32 %v4791, %v4789
        %v4795 = vmul.f32 %v4791, %v4790
        %v4796 = vadd.f32 %v4782, %v4792
        %v4797 = vadd.f32 %v4783, %v4793
        %v4798 = vadd.f32 %v4784, %v4794
        %v4799 = vadd.f32 %v4785, %v4795
        %s4800 = sld [smem:[#allocation15 + $0x181]]
        %v4801 = vld [vmem:[%s398 + $0x20] sm:$0xff]
        %v4802 = vld [vmem:[%s398 + $0x28] sm:$0xff]
        %v4803 = vld [vmem:[%s398 + $0x30] sm:$0xff]
        %v4804 = vld [vmem:[%s398 + $0x38] sm:$0xff]
        %v4805 = vstv %s4800
        %v4806 = vmul.f32 %v4805, %v4801
        %v4807 = vmul.f32 %v4805, %v4802
        %v4808 = vmul.f32 %v4805, %v4803
        %v4809 = vmul.f32 %v4805, %v4804
        %v4810 = vadd.f32 %v4796, %v4806
        %v4811 = vadd.f32 %v4797, %v4807
        %v4812 = vadd.f32 %v4798, %v4808
        %v4813 = vadd.f32 %v4799, %v4809
        %s4814 = sld [smem:[#allocation13 + $0x182]]
        %v4815 = vld [vmem:[#allocation3 + $0x40] sm:$0xff]
        %v4816 = vld [vmem:[#allocation3 + $0x48] sm:$0xff]
        %v4817 = vld [vmem:[#allocation3 + $0x50] sm:$0xff]
        %v4818 = vld [vmem:[#allocation3 + $0x58] sm:$0xff]
        %v4819 = vstv %s4814
        %v4820 = vmul.f32 %v4819, %v4815
        %v4821 = vmul.f32 %v4819, %v4816
        %v4822 = vmul.f32 %v4819, %v4817
        %v4823 = vmul.f32 %v4819, %v4818
        %v4824 = vadd.f32 %v4810, %v4820
        %v4825 = vadd.f32 %v4811, %v4821
        %v4826 = vadd.f32 %v4812, %v4822
        %v4827 = vadd.f32 %v4813, %v4823
        %s4828 = sld [smem:[#allocation15 + $0x182]]
        %v4829 = vld [vmem:[%s398 + $0x40] sm:$0xff]
        %v4830 = vld [vmem:[%s398 + $0x48] sm:$0xff]
        %v4831 = vld [vmem:[%s398 + $0x50] sm:$0xff]
        %v4832 = vld [vmem:[%s398 + $0x58] sm:$0xff]
        %v4833 = vstv %s4828
        %v4834 = vmul.f32 %v4833, %v4829
        %v4835 = vmul.f32 %v4833, %v4830
        %v4836 = vmul.f32 %v4833, %v4831
        %v4837 = vmul.f32 %v4833, %v4832
        %v4838 = vadd.f32 %v4824, %v4834
        %v4839 = vadd.f32 %v4825, %v4835
        %v4840 = vadd.f32 %v4826, %v4836
        %v4841 = vadd.f32 %v4827, %v4837
        %s4842 = sld [smem:[#allocation13 + $0x183]]
        %v4843 = vld [vmem:[#allocation3 + $0x60] sm:$0xff]
        %v4844 = vld [vmem:[#allocation3 + $0x68] sm:$0xff]
        %v4845 = vld [vmem:[#allocation3 + $0x70] sm:$0xff]
        %v4846 = vld [vmem:[#allocation3 + $0x78] sm:$0xff]
        %v4847 = vstv %s4842
        %v4848 = vmul.f32 %v4847, %v4843
        %v4849 = vmul.f32 %v4847, %v4844
        %v4850 = vmul.f32 %v4847, %v4845
        %v4851 = vmul.f32 %v4847, %v4846
        %v4852 = vadd.f32 %v4838, %v4848
        %v4853 = vadd.f32 %v4839, %v4849
        %v4854 = vadd.f32 %v4840, %v4850
        %v4855 = vadd.f32 %v4841, %v4851
        %s4856 = sld [smem:[#allocation15 + $0x183]]
        %v4857 = vld [vmem:[%s398 + $0x60] sm:$0xff]
        %v4858 = vld [vmem:[%s398 + $0x68] sm:$0xff]
        %v4859 = vld [vmem:[%s398 + $0x70] sm:$0xff]
        %v4860 = vld [vmem:[%s398 + $0x78] sm:$0xff]
        %v4861 = vstv %s4856
        %v4862 = vmul.f32 %v4861, %v4857
        %v4863 = vmul.f32 %v4861, %v4858
        %v4864 = vmul.f32 %v4861, %v4859
        %v4865 = vmul.f32 %v4861, %v4860
        %v4866 = vadd.f32 %v4852, %v4862
        %v4867 = vadd.f32 %v4853, %v4863
        %v4868 = vadd.f32 %v4854, %v4864
        %v4869 = vadd.f32 %v4855, %v4865
        %s4870 = sld [smem:[#allocation13 + $0x184]]
        %v4871 = vld [vmem:[#allocation3 + $0x80] sm:$0xff]
        %v4872 = vld [vmem:[#allocation3 + $0x88] sm:$0xff]
        %v4873 = vld [vmem:[#allocation3 + $0x90] sm:$0xff]
        %v4874 = vld [vmem:[#allocation3 + $0x98] sm:$0xff]
        %v4875 = vstv %s4870
        %v4876 = vmul.f32 %v4875, %v4871
        %v4877 = vmul.f32 %v4875, %v4872
        %v4878 = vmul.f32 %v4875, %v4873
        %v4879 = vmul.f32 %v4875, %v4874
        %v4880 = vadd.f32 %v4866, %v4876
        %v4881 = vadd.f32 %v4867, %v4877
        %v4882 = vadd.f32 %v4868, %v4878
        %v4883 = vadd.f32 %v4869, %v4879
        %s4884 = sld [smem:[#allocation15 + $0x184]]
        %v4885 = vld [vmem:[%s398 + $0x80] sm:$0xff]
        %v4886 = vld [vmem:[%s398 + $0x88] sm:$0xff]
        %v4887 = vld [vmem:[%s398 + $0x90] sm:$0xff]
        %v4888 = vld [vmem:[%s398 + $0x98] sm:$0xff]
        %v4889 = vstv %s4884
        %v4890 = vmul.f32 %v4889, %v4885
        %v4891 = vmul.f32 %v4889, %v4886
        %v4892 = vmul.f32 %v4889, %v4887
        %v4893 = vmul.f32 %v4889, %v4888
        %v4894 = vadd.f32 %v4880, %v4890
        %v4895 = vadd.f32 %v4881, %v4891
        %v4896 = vadd.f32 %v4882, %v4892
        %v4897 = vadd.f32 %v4883, %v4893
        %s4898 = sld [smem:[#allocation13 + $0x185]]
        %v4899 = vld [vmem:[#allocation3 + $0xa0] sm:$0xff]
        %v4900 = vld [vmem:[#allocation3 + $0xa8] sm:$0xff]
        %v4901 = vld [vmem:[#allocation3 + $0xb0] sm:$0xff]
        %v4902 = vld [vmem:[#allocation3 + $0xb8] sm:$0xff]
        %v4903 = vstv %s4898
        %v4904 = vmul.f32 %v4903, %v4899
        %v4905 = vmul.f32 %v4903, %v4900
        %v4906 = vmul.f32 %v4903, %v4901
        %v4907 = vmul.f32 %v4903, %v4902
        %v4908 = vadd.f32 %v4894, %v4904
        %v4909 = vadd.f32 %v4895, %v4905
        %v4910 = vadd.f32 %v4896, %v4906
        %v4911 = vadd.f32 %v4897, %v4907
        %s4912 = sld [smem:[#allocation15 + $0x185]]
        %v4913 = vld [vmem:[%s398 + $0xa0] sm:$0xff]
        %v4914 = vld [vmem:[%s398 + $0xa8] sm:$0xff]
        %v4915 = vld [vmem:[%s398 + $0xb0] sm:$0xff]
        %v4916 = vld [vmem:[%s398 + $0xb8] sm:$0xff]
        %v4917 = vstv %s4912
        %v4918 = vmul.f32 %v4917, %v4913
        %v4919 = vmul.f32 %v4917, %v4914
        %v4920 = vmul.f32 %v4917, %v4915
        %v4921 = vmul.f32 %v4917, %v4916
        %v4922 = vadd.f32 %v4908, %v4918
        %v4923 = vadd.f32 %v4909, %v4919
        %v4924 = vadd.f32 %v4910, %v4920
        %v4925 = vadd.f32 %v4911, %v4921
        %s4926 = sld [smem:[#allocation13 + $0x186]]
        %v4927 = vld [vmem:[#allocation3 + $0xc0] sm:$0xff]
        %v4928 = vld [vmem:[#allocation3 + $0xc8] sm:$0xff]
        %v4929 = vld [vmem:[#allocation3 + $0xd0] sm:$0xff]
        %v4930 = vld [vmem:[#allocation3 + $0xd8] sm:$0xff]
        %v4931 = vstv %s4926
        %v4932 = vmul.f32 %v4931, %v4927
        %v4933 = vmul.f32 %v4931, %v4928
        %v4934 = vmul.f32 %v4931, %v4929
        %v4935 = vmul.f32 %v4931, %v4930
        %v4936 = vadd.f32 %v4922, %v4932
        %v4937 = vadd.f32 %v4923, %v4933
        %v4938 = vadd.f32 %v4924, %v4934
        %v4939 = vadd.f32 %v4925, %v4935
        %s4940 = sld [smem:[#allocation15 + $0x186]]
        %v4941 = vld [vmem:[%s398 + $0xc0] sm:$0xff]
        %v4942 = vld [vmem:[%s398 + $0xc8] sm:$0xff]
        %v4943 = vld [vmem:[%s398 + $0xd0] sm:$0xff]
        %v4944 = vld [vmem:[%s398 + $0xd8] sm:$0xff]
        %v4945 = vstv %s4940
        %v4946 = vmul.f32 %v4945, %v4941
        %v4947 = vmul.f32 %v4945, %v4942
        %v4948 = vmul.f32 %v4945, %v4943
        %v4949 = vmul.f32 %v4945, %v4944
        %v4950 = vadd.f32 %v4936, %v4946
        %v4951 = vadd.f32 %v4937, %v4947
        %v4952 = vadd.f32 %v4938, %v4948
        %v4953 = vadd.f32 %v4939, %v4949
        %s4954 = sld [smem:[#allocation13 + $0x187]]
        %v4955 = vld [vmem:[#allocation3 + $0xe0] sm:$0xff]
        %v4956 = vld [vmem:[#allocation3 + $0xe8] sm:$0xff]
        %v4957 = vld [vmem:[#allocation3 + $0xf0] sm:$0xff]
        %v4958 = vld [vmem:[#allocation3 + $0xf8] sm:$0xff]
        %v4959 = vstv %s4954
        %v4960 = vmul.f32 %v4959, %v4955
        %v4961 = vmul.f32 %v4959, %v4956
        %v4962 = vmul.f32 %v4959, %v4957
        %v4963 = vmul.f32 %v4959, %v4958
        %v4964 = vadd.f32 %v4950, %v4960
        %v4965 = vadd.f32 %v4951, %v4961
        %v4966 = vadd.f32 %v4952, %v4962
        %v4967 = vadd.f32 %v4953, %v4963
        %s4968 = sld [smem:[#allocation15 + $0x187]]
        %v4969 = vld [vmem:[%s398 + $0xe0] sm:$0xff]
        %v4970 = vld [vmem:[%s398 + $0xe8] sm:$0xff]
        %v4971 = vld [vmem:[%s398 + $0xf0] sm:$0xff]
        %v4972 = vld [vmem:[%s398 + $0xf8] sm:$0xff]
        %v4973 = vstv %s4968
        %v4974 = vmul.f32 %v4973, %v4969
        %v4975 = vmul.f32 %v4973, %v4970
        %v4976 = vmul.f32 %v4973, %v4971
        %v4977 = vmul.f32 %v4973, %v4972
        %v4978 = vadd.f32 %v4964, %v4974
        %v4979 = vadd.f32 %v4965, %v4975
        %v4980 = vadd.f32 %v4966, %v4976
        %v4981 = vadd.f32 %v4967, %v4977
        %s4982 = sld [smem:[#allocation13 + $0x188]]
        %v4983 = vld [vmem:[#allocation3 + $0x100] sm:$0xff]
        %v4984 = vld [vmem:[#allocation3 + $0x108] sm:$0xff]
        %v4985 = vld [vmem:[#allocation3 + $0x110] sm:$0xff]
        %v4986 = vld [vmem:[#allocation3 + $0x118] sm:$0xff]
        %v4987 = vstv %s4982
        %v4988 = vmul.f32 %v4987, %v4983
        %v4989 = vmul.f32 %v4987, %v4984
        %v4990 = vmul.f32 %v4987, %v4985
        %v4991 = vmul.f32 %v4987, %v4986
        %v4992 = vadd.f32 %v4978, %v4988
        %v4993 = vadd.f32 %v4979, %v4989
        %v4994 = vadd.f32 %v4980, %v4990
        %v4995 = vadd.f32 %v4981, %v4991
        %s4996 = sld [smem:[#allocation15 + $0x188]]
        %v4997 = vld [vmem:[%s398 + $0x100] sm:$0xff]
        %v4998 = vld [vmem:[%s398 + $0x108] sm:$0xff]
        %v4999 = vld [vmem:[%s398 + $0x110] sm:$0xff]
        %v5000 = vld [vmem:[%s398 + $0x118] sm:$0xff]
        %v5001 = vstv %s4996
        %v5002 = vmul.f32 %v5001, %v4997
        %v5003 = vmul.f32 %v5001, %v4998
        %v5004 = vmul.f32 %v5001, %v4999
        %v5005 = vmul.f32 %v5001, %v5000
        %v5006 = vadd.f32 %v4992, %v5002
        %v5007 = vadd.f32 %v4993, %v5003
        %v5008 = vadd.f32 %v4994, %v5004
        %v5009 = vadd.f32 %v4995, %v5005
        %s5010 = sld [smem:[#allocation16 + $0x3]]
        %v5011 = vstv %s5010
        %v5012 = vadd.f32 %v5006, %v5011
        %v5013 = vadd.f32 %v5007, %v5011
        %v5014 = vadd.f32 %v5008, %v5011
        %v5015 = vadd.f32 %v5009, %v5011
        %v5016 = vmax.f32 %v5012, 0.0
        %v5017 = vmax.f32 %v5013, 0.0
        %v5018 = vmax.f32 %v5014, 0.0
        %v5019 = vmax.f32 %v5015, 0.0
        %5020 = vst [vmem:[%s459 + $0x60] sm:$0xff] %v5016
        %5021 = vst [vmem:[%s459 + $0x68] sm:$0xff] %v5017
        %5022 = vst [vmem:[%s459 + $0x70] sm:$0xff] %v5018
        %5023 = vst [vmem:[%s459 + $0x78] sm:$0xff] %v5019
        %s5024 = sld [smem:[#allocation13 + $0x200]]
        %v5025 = vld [vmem:[#allocation3] sm:$0xff]
        %v5026 = vld [vmem:[#allocation3 + $0x8] sm:$0xff]
        %v5027 = vld [vmem:[#allocation3 + $0x10] sm:$0xff]
        %v5028 = vld [vmem:[#allocation3 + $0x18] sm:$0xff]
        %v5029 = vstv %s5024
        %v5030 = vmul.f32 %v5029, %v5025
        %v5031 = vmul.f32 %v5029, %v5026
        %v5032 = vmul.f32 %v5029, %v5027
        %v5033 = vmul.f32 %v5029, %v5028
        %v5034 = vadd.f32 %v5030, 0.0
        %v5035 = vadd.f32 %v5031, 0.0
        %v5036 = vadd.f32 %v5032, 0.0
        %v5037 = vadd.f32 %v5033, 0.0
        %s5038 = sld [smem:[#allocation15 + $0x200]]
        %v5039 = vld [vmem:[%s398] sm:$0xff]
        %v5040 = vld [vmem:[%s398 + $0x8] sm:$0xff]
        %v5041 = vld [vmem:[%s398 + $0x10] sm:$0xff]
        %v5042 = vld [vmem:[%s398 + $0x18] sm:$0xff]
        %v5043 = vstv %s5038
        %v5044 = vmul.f32 %v5043, %v5039
        %v5045 = vmul.f32 %v5043, %v5040
        %v5046 = vmul.f32 %v5043, %v5041
        %v5047 = vmul.f32 %v5043, %v5042
        %v5048 = vadd.f32 %v5034, %v5044
        %v5049 = vadd.f32 %v5035, %v5045
        %v5050 = vadd.f32 %v5036, %v5046
        %v5051 = vadd.f32 %v5037, %v5047
        %s5052 = sld [smem:[#allocation13 + $0x201]]
        %v5053 = vld [vmem:[#allocation3 + $0x20] sm:$0xff]
        %v5054 = vld [vmem:[#allocation3 + $0x28] sm:$0xff]
        %v5055 = vld [vmem:[#allocation3 + $0x30] sm:$0xff]
        %v5056 = vld [vmem:[#allocation3 + $0x38] sm:$0xff]
        %v5057 = vstv %s5052
        %v5058 = vmul.f32 %v5057, %v5053
        %v5059 = vmul.f32 %v5057, %v5054
        %v5060 = vmul.f32 %v5057, %v5055
        %v5061 = vmul.f32 %v5057, %v5056
        %v5062 = vadd.f32 %v5048, %v5058
        %v5063 = vadd.f32 %v5049, %v5059
        %v5064 = vadd.f32 %v5050, %v5060
        %v5065 = vadd.f32 %v5051, %v5061
        %s5066 = sld [smem:[#allocation15 + $0x201]]
        %v5067 = vld [vmem:[%s398 + $0x20] sm:$0xff]
        %v5068 = vld [vmem:[%s398 + $0x28] sm:$0xff]
        %v5069 = vld [vmem:[%s398 + $0x30] sm:$0xff]
        %v5070 = vld [vmem:[%s398 + $0x38] sm:$0xff]
        %v5071 = vstv %s5066
        %v5072 = vmul.f32 %v5071, %v5067
        %v5073 = vmul.f32 %v5071, %v5068
        %v5074 = vmul.f32 %v5071, %v5069
        %v5075 = vmul.f32 %v5071, %v5070
        %v5076 = vadd.f32 %v5062, %v5072
        %v5077 = vadd.f32 %v5063, %v5073
        %v5078 = vadd.f32 %v5064, %v5074
        %v5079 = vadd.f32 %v5065, %v5075
        %s5080 = sld [smem:[#allocation13 + $0x202]]
        %v5081 = vld [vmem:[#allocation3 + $0x40] sm:$0xff]
        %v5082 = vld [vmem:[#allocation3 + $0x48] sm:$0xff]
        %v5083 = vld [vmem:[#allocation3 + $0x50] sm:$0xff]
        %v5084 = vld [vmem:[#allocation3 + $0x58] sm:$0xff]
        %v5085 = vstv %s5080
        %v5086 = vmul.f32 %v5085, %v5081
        %v5087 = vmul.f32 %v5085, %v5082
        %v5088 = vmul.f32 %v5085, %v5083
        %v5089 = vmul.f32 %v5085, %v5084
        %v5090 = vadd.f32 %v5076, %v5086
        %v5091 = vadd.f32 %v5077, %v5087
        %v5092 = vadd.f32 %v5078, %v5088
        %v5093 = vadd.f32 %v5079, %v5089
        %s5094 = sld [smem:[#allocation15 + $0x202]]
        %v5095 = vld [vmem:[%s398 + $0x40] sm:$0xff]
        %v5096 = vld [vmem:[%s398 + $0x48] sm:$0xff]
        %v5097 = vld [vmem:[%s398 + $0x50] sm:$0xff]
        %v5098 = vld [vmem:[%s398 + $0x58] sm:$0xff]
        %v5099 = vstv %s5094
        %v5100 = vmul.f32 %v5099, %v5095
        %v5101 = vmul.f32 %v5099, %v5096
        %v5102 = vmul.f32 %v5099, %v5097
        %v5103 = vmul.f32 %v5099, %v5098
        %v5104 = vadd.f32 %v5090, %v5100
        %v5105 = vadd.f32 %v5091, %v5101
        %v5106 = vadd.f32 %v5092, %v5102
        %v5107 = vadd.f32 %v5093, %v5103
        %s5108 = sld [smem:[#allocation13 + $0x203]]
        %v5109 = vld [vmem:[#allocation3 + $0x60] sm:$0xff]
        %v5110 = vld [vmem:[#allocation3 + $0x68] sm:$0xff]
        %v5111 = vld [vmem:[#allocation3 + $0x70] sm:$0xff]
        %v5112 = vld [vmem:[#allocation3 + $0x78] sm:$0xff]
        %v5113 = vstv %s5108
        %v5114 = vmul.f32 %v5113, %v5109
        %v5115 = vmul.f32 %v5113, %v5110
        %v5116 = vmul.f32 %v5113, %v5111
        %v5117 = vmul.f32 %v5113, %v5112
        %v5118 = vadd.f32 %v5104, %v5114
        %v5119 = vadd.f32 %v5105, %v5115
        %v5120 = vadd.f32 %v5106, %v5116
        %v5121 = vadd.f32 %v5107, %v5117
        %s5122 = sld [smem:[#allocation15 + $0x203]]
        %v5123 = vld [vmem:[%s398 + $0x60] sm:$0xff]
        %v5124 = vld [vmem:[%s398 + $0x68] sm:$0xff]
        %v5125 = vld [vmem:[%s398 + $0x70] sm:$0xff]
        %v5126 = vld [vmem:[%s398 + $0x78] sm:$0xff]
        %v5127 = vstv %s5122
        %v5128 = vmul.f32 %v5127, %v5123
        %v5129 = vmul.f32 %v5127, %v5124
        %v5130 = vmul.f32 %v5127, %v5125
        %v5131 = vmul.f32 %v5127, %v5126
        %v5132 = vadd.f32 %v5118, %v5128
        %v5133 = vadd.f32 %v5119, %v5129
        %v5134 = vadd.f32 %v5120, %v5130
        %v5135 = vadd.f32 %v5121, %v5131
        %s5136 = sld [smem:[#allocation13 + $0x204]]
        %v5137 = vld [vmem:[#allocation3 + $0x80] sm:$0xff]
        %v5138 = vld [vmem:[#allocation3 + $0x88] sm:$0xff]
        %v5139 = vld [vmem:[#allocation3 + $0x90] sm:$0xff]
        %v5140 = vld [vmem:[#allocation3 + $0x98] sm:$0xff]
        %v5141 = vstv %s5136
        %v5142 = vmul.f32 %v5141, %v5137
        %v5143 = vmul.f32 %v5141, %v5138
        %v5144 = vmul.f32 %v5141, %v5139
        %v5145 = vmul.f32 %v5141, %v5140
        %v5146 = vadd.f32 %v5132, %v5142
        %v5147 = vadd.f32 %v5133, %v5143
        %v5148 = vadd.f32 %v5134, %v5144
        %v5149 = vadd.f32 %v5135, %v5145
        %s5150 = sld [smem:[#allocation15 + $0x204]]
        %v5151 = vld [vmem:[%s398 + $0x80] sm:$0xff]
        %v5152 = vld [vmem:[%s398 + $0x88] sm:$0xff]
        %v5153 = vld [vmem:[%s398 + $0x90] sm:$0xff]
        %v5154 = vld [vmem:[%s398 + $0x98] sm:$0xff]
        %v5155 = vstv %s5150
        %v5156 = vmul.f32 %v5155, %v5151
        %v5157 = vmul.f32 %v5155, %v5152
        %v5158 = vmul.f32 %v5155, %v5153
        %v5159 = vmul.f32 %v5155, %v5154
        %v5160 = vadd.f32 %v5146, %v5156
        %v5161 = vadd.f32 %v5147, %v5157
        %v5162 = vadd.f32 %v5148, %v5158
        %v5163 = vadd.f32 %v5149, %v5159
        %s5164 = sld [smem:[#allocation13 + $0x205]]
        %v5165 = vld [vmem:[#allocation3 + $0xa0] sm:$0xff]
        %v5166 = vld [vmem:[#allocation3 + $0xa8] sm:$0xff]
        %v5167 = vld [vmem:[#allocation3 + $0xb0] sm:$0xff]
        %v5168 = vld [vmem:[#allocation3 + $0xb8] sm:$0xff]
        %v5169 = vstv %s5164
        %v5170 = vmul.f32 %v5169, %v5165
        %v5171 = vmul.f32 %v5169, %v5166
        %v5172 = vmul.f32 %v5169, %v5167
        %v5173 = vmul.f32 %v5169, %v5168
        %v5174 = vadd.f32 %v5160, %v5170
        %v5175 = vadd.f32 %v5161, %v5171
        %v5176 = vadd.f32 %v5162, %v5172
        %v5177 = vadd.f32 %v5163, %v5173
        %s5178 = sld [smem:[#allocation15 + $0x205]]
        %v5179 = vld [vmem:[%s398 + $0xa0] sm:$0xff]
        %v5180 = vld [vmem:[%s398 + $0xa8] sm:$0xff]
        %v5181 = vld [vmem:[%s398 + $0xb0] sm:$0xff]
        %v5182 = vld [vmem:[%s398 + $0xb8] sm:$0xff]
        %v5183 = vstv %s5178
        %v5184 = vmul.f32 %v5183, %v5179
        %v5185 = vmul.f32 %v5183, %v5180
        %v5186 = vmul.f32 %v5183, %v5181
        %v5187 = vmul.f32 %v5183, %v5182
        %v5188 = vadd.f32 %v5174, %v5184
        %v5189 = vadd.f32 %v5175, %v5185
        %v5190 = vadd.f32 %v5176, %v5186
        %v5191 = vadd.f32 %v5177, %v5187
        %s5192 = sld [smem:[#allocation13 + $0x206]]
        %v5193 = vld [vmem:[#allocation3 + $0xc0] sm:$0xff]
        %v5194 = vld [vmem:[#allocation3 + $0xc8] sm:$0xff]
        %v5195 = vld [vmem:[#allocation3 + $0xd0] sm:$0xff]
        %v5196 = vld [vmem:[#allocation3 + $0xd8] sm:$0xff]
        %v5197 = vstv %s5192
        %v5198 = vmul.f32 %v5197, %v5193
        %v5199 = vmul.f32 %v5197, %v5194
        %v5200 = vmul.f32 %v5197, %v5195
        %v5201 = vmul.f32 %v5197, %v5196
        %v5202 = vadd.f32 %v5188, %v5198
        %v5203 = vadd.f32 %v5189, %v5199
        %v5204 = vadd.f32 %v5190, %v5200
        %v5205 = vadd.f32 %v5191, %v5201
        %s5206 = sld [smem:[#allocation15 + $0x206]]
        %v5207 = vld [vmem:[%s398 + $0xc0] sm:$0xff]
        %v5208 = vld [vmem:[%s398 + $0xc8] sm:$0xff]
        %v5209 = vld [vmem:[%s398 + $0xd0] sm:$0xff]
        %v5210 = vld [vmem:[%s398 + $0xd8] sm:$0xff]
        %v5211 = vstv %s5206
        %v5212 = vmul.f32 %v5211, %v5207
        %v5213 = vmul.f32 %v5211, %v5208
        %v5214 = vmul.f32 %v5211, %v5209
        %v5215 = vmul.f32 %v5211, %v5210
        %v5216 = vadd.f32 %v5202, %v5212
        %v5217 = vadd.f32 %v5203, %v5213
        %v5218 = vadd.f32 %v5204, %v5214
        %v5219 = vadd.f32 %v5205, %v5215
        %s5220 = sld [smem:[#allocation13 + $0x207]]
        %v5221 = vld [vmem:[#allocation3 + $0xe0] sm:$0xff]
        %v5222 = vld [vmem:[#allocation3 + $0xe8] sm:$0xff]
        %v5223 = vld [vmem:[#allocation3 + $0xf0] sm:$0xff]
        %v5224 = vld [vmem:[#allocation3 + $0xf8] sm:$0xff]
        %v5225 = vstv %s5220
        %v5226 = vmul.f32 %v5225, %v5221
        %v5227 = vmul.f32 %v5225, %v5222
        %v5228 = vmul.f32 %v5225, %v5223
        %v5229 = vmul.f32 %v5225, %v5224
        %v5230 = vadd.f32 %v5216, %v5226
        %v5231 = vadd.f32 %v5217, %v5227
        %v5232 = vadd.f32 %v5218, %v5228
        %v5233 = vadd.f32 %v5219, %v5229
        %s5234 = sld [smem:[#allocation15 + $0x207]]
        %v5235 = vld [vmem:[%s398 + $0xe0] sm:$0xff]
        %v5236 = vld [vmem:[%s398 + $0xe8] sm:$0xff]
        %v5237 = vld [vmem:[%s398 + $0xf0] sm:$0xff]
        %v5238 = vld [vmem:[%s398 + $0xf8] sm:$0xff]
        %v5239 = vstv %s5234
        %v5240 = vmul.f32 %v5239, %v5235
        %v5241 = vmul.f32 %v5239, %v5236
        %v5242 = vmul.f32 %v5239, %v5237
        %v5243 = vmul.f32 %v5239, %v5238
        %v5244 = vadd.f32 %v5230, %v5240
        %v5245 = vadd.f32 %v5231, %v5241
        %v5246 = vadd.f32 %v5232, %v5242
        %v5247 = vadd.f32 %v5233, %v5243
        %s5248 = sld [smem:[#allocation13 + $0x208]]
        %v5249 = vld [vmem:[#allocation3 + $0x100] sm:$0xff]
        %v5250 = vld [vmem:[#allocation3 + $0x108] sm:$0xff]
        %v5251 = vld [vmem:[#allocation3 + $0x110] sm:$0xff]
        %v5252 = vld [vmem:[#allocation3 + $0x118] sm:$0xff]
        %v5253 = vstv %s5248
        %v5254 = vmul.f32 %v5253, %v5249
        %v5255 = vmul.f32 %v5253, %v5250
        %v5256 = vmul.f32 %v5253, %v5251
        %v5257 = vmul.f32 %v5253, %v5252
        %v5258 = vadd.f32 %v5244, %v5254
        %v5259 = vadd.f32 %v5245, %v5255
        %v5260 = vadd.f32 %v5246, %v5256
        %v5261 = vadd.f32 %v5247, %v5257
        %s5262 = sld [smem:[#allocation15 + $0x208]]
        %v5263 = vld [vmem:[%s398 + $0x100] sm:$0xff]
        %v5264 = vld [vmem:[%s398 + $0x108] sm:$0xff]
        %v5265 = vld [vmem:[%s398 + $0x110] sm:$0xff]
        %v5266 = vld [vmem:[%s398 + $0x118] sm:$0xff]
        %v5267 = vstv %s5262
        %v5268 = vmul.f32 %v5267, %v5263
        %v5269 = vmul.f32 %v5267, %v5264
        %v5270 = vmul.f32 %v5267, %v5265
        %v5271 = vmul.f32 %v5267, %v5266
        %v5272 = vadd.f32 %v5258, %v5268
        %v5273 = vadd.f32 %v5259, %v5269
        %v5274 = vadd.f32 %v5260, %v5270
        %v5275 = vadd.f32 %v5261, %v5271
        %s5276 = sld [smem:[#allocation16 + $0x4]]
        %v5277 = vstv %s5276
        %v5278 = vadd.f32 %v5272, %v5277
        %v5279 = vadd.f32 %v5273, %v5277
        %v5280 = vadd.f32 %v5274, %v5277
        %v5281 = vadd.f32 %v5275, %v5277
        %v5282 = vmax.f32 %v5278, 0.0
        %v5283 = vmax.f32 %v5279, 0.0
        %v5284 = vmax.f32 %v5280, 0.0
        %v5285 = vmax.f32 %v5281, 0.0
        %5286 = vst [vmem:[%s459 + $0x80] sm:$0xff] %v5282
        %5287 = vst [vmem:[%s459 + $0x88] sm:$0xff] %v5283
        %5288 = vst [vmem:[%s459 + $0x90] sm:$0xff] %v5284
        %5289 = vst [vmem:[%s459 + $0x98] sm:$0xff] %v5285
        %s5290 = sld [smem:[#allocation13 + $0x280]]
        %v5291 = vld [vmem:[#allocation3] sm:$0xff]
        %v5292 = vld [vmem:[#allocation3 + $0x8] sm:$0xff]
        %v5293 = vld [vmem:[#allocation3 + $0x10] sm:$0xff]
        %v5294 = vld [vmem:[#allocation3 + $0x18] sm:$0xff]
        %v5295 = vstv %s5290
        %v5296 = vmul.f32 %v5295, %v5291
        %v5297 = vmul.f32 %v5295, %v5292
        %v5298 = vmul.f32 %v5295, %v5293
        %v5299 = vmul.f32 %v5295, %v5294
        %v5300 = vadd.f32 %v5296, 0.0
        %v5301 = vadd.f32 %v5297, 0.0
        %v5302 = vadd.f32 %v5298, 0.0
        %v5303 = vadd.f32 %v5299, 0.0
        %s5304 = sld [smem:[#allocation15 + $0x280]]
        %v5305 = vld [vmem:[%s398] sm:$0xff]
        %v5306 = vld [vmem:[%s398 + $0x8] sm:$0xff]
        %v5307 = vld [vmem:[%s398 + $0x10] sm:$0xff]
        %v5308 = vld [vmem:[%s398 + $0x18] sm:$0xff]
        %v5309 = vstv %s5304
        %v5310 = vmul.f32 %v5309, %v5305
        %v5311 = vmul.f32 %v5309, %v5306
        %v5312 = vmul.f32 %v5309, %v5307
        %v5313 = vmul.f32 %v5309, %v5308
        %v5314 = vadd.f32 %v5300, %v5310
        %v5315 = vadd.f32 %v5301, %v5311
        %v5316 = vadd.f32 %v5302, %v5312
        %v5317 = vadd.f32 %v5303, %v5313
        %s5318 = sld [smem:[#allocation13 + $0x281]]
        %v5319 = vld [vmem:[#allocation3 + $0x20] sm:$0xff]
        %v5320 = vld [vmem:[#allocation3 + $0x28] sm:$0xff]
        %v5321 = vld [vmem:[#allocation3 + $0x30] sm:$0xff]
        %v5322 = vld [vmem:[#allocation3 + $0x38] sm:$0xff]
        %v5323 = vstv %s5318
        %v5324 = vmul.f32 %v5323, %v5319
        %v5325 = vmul.f32 %v5323, %v5320
        %v5326 = vmul.f32 %v5323, %v5321
        %v5327 = vmul.f32 %v5323, %v5322
        %v5328 = vadd.f32 %v5314, %v5324
        %v5329 = vadd.f32 %v5315, %v5325
        %v5330 = vadd.f32 %v5316, %v5326
        %v5331 = vadd.f32 %v5317, %v5327
        %s5332 = sld [smem:[#allocation15 + $0x281]]
        %v5333 = vld [vmem:[%s398 + $0x20] sm:$0xff]
        %v5334 = vld [vmem:[%s398 + $0x28] sm:$0xff]
        %v5335 = vld [vmem:[%s398 + $0x30] sm:$0xff]
        %v5336 = vld [vmem:[%s398 + $0x38] sm:$0xff]
        %v5337 = vstv %s5332
        %v5338 = vmul.f32 %v5337, %v5333
        %v5339 = vmul.f32 %v5337, %v5334
        %v5340 = vmul.f32 %v5337, %v5335
        %v5341 = vmul.f32 %v5337, %v5336
        %v5342 = vadd.f32 %v5328, %v5338
        %v5343 = vadd.f32 %v5329, %v5339
        %v5344 = vadd.f32 %v5330, %v5340
        %v5345 = vadd.f32 %v5331, %v5341
        %s5346 = sld [smem:[#allocation13 + $0x282]]
        %v5347 = vld [vmem:[#allocation3 + $0x40] sm:$0xff]
        %v5348 = vld [vmem:[#allocation3 + $0x48] sm:$0xff]
        %v5349 = vld [vmem:[#allocation3 + $0x50] sm:$0xff]
        %v5350 = vld [vmem:[#allocation3 + $0x58] sm:$0xff]
        %v5351 = vstv %s5346
        %v5352 = vmul.f32 %v5351, %v5347
        %v5353 = vmul.f32 %v5351, %v5348
        %v5354 = vmul.f32 %v5351, %v5349
        %v5355 = vmul.f32 %v5351, %v5350
        %v5356 = vadd.f32 %v5342, %v5352
        %v5357 = vadd.f32 %v5343, %v5353
        %v5358 = vadd.f32 %v5344, %v5354
        %v5359 = vadd.f32 %v5345, %v5355
        %s5360 = sld [smem:[#allocation15 + $0x282]]
        %v5361 = vld [vmem:[%s398 + $0x40] sm:$0xff]
        %v5362 = vld [vmem:[%s398 + $0x48] sm:$0xff]
        %v5363 = vld [vmem:[%s398 + $0x50] sm:$0xff]
        %v5364 = vld [vmem:[%s398 + $0x58] sm:$0xff]
        %v5365 = vstv %s5360
        %v5366 = vmul.f32 %v5365, %v5361
        %v5367 = vmul.f32 %v5365, %v5362
        %v5368 = vmul.f32 %v5365, %v5363
        %v5369 = vmul.f32 %v5365, %v5364
        %v5370 = vadd.f32 %v5356, %v5366
        %v5371 = vadd.f32 %v5357, %v5367
        %v5372 = vadd.f32 %v5358, %v5368
        %v5373 = vadd.f32 %v5359, %v5369
        %s5374 = sld [smem:[#allocation13 + $0x283]]
        %v5375 = vld [vmem:[#allocation3 + $0x60] sm:$0xff]
        %v5376 = vld [vmem:[#allocation3 + $0x68] sm:$0xff]
        %v5377 = vld [vmem:[#allocation3 + $0x70] sm:$0xff]
        %v5378 = vld [vmem:[#allocation3 + $0x78] sm:$0xff]
        %v5379 = vstv %s5374
        %v5380 = vmul.f32 %v5379, %v5375
        %v5381 = vmul.f32 %v5379, %v5376
        %v5382 = vmul.f32 %v5379, %v5377
        %v5383 = vmul.f32 %v5379, %v5378
        %v5384 = vadd.f32 %v5370, %v5380
        %v5385 = vadd.f32 %v5371, %v5381
        %v5386 = vadd.f32 %v5372, %v5382
        %v5387 = vadd.f32 %v5373, %v5383
        %s5388 = sld [smem:[#allocation15 + $0x283]]
        %v5389 = vld [vmem:[%s398 + $0x60] sm:$0xff]
        %v5390 = vld [vmem:[%s398 + $0x68] sm:$0xff]
        %v5391 = vld [vmem:[%s398 + $0x70] sm:$0xff]
        %v5392 = vld [vmem:[%s398 + $0x78] sm:$0xff]
        %v5393 = vstv %s5388
        %v5394 = vmul.f32 %v5393, %v5389
        %v5395 = vmul.f32 %v5393, %v5390
        %v5396 = vmul.f32 %v5393, %v5391
        %v5397 = vmul.f32 %v5393, %v5392
        %v5398 = vadd.f32 %v5384, %v5394
        %v5399 = vadd.f32 %v5385, %v5395
        %v5400 = vadd.f32 %v5386, %v5396
        %v5401 = vadd.f32 %v5387, %v5397
        %s5402 = sld [smem:[#allocation13 + $0x284]]
        %v5403 = vld [vmem:[#allocation3 + $0x80] sm:$0xff]
        %v5404 = vld [vmem:[#allocation3 + $0x88] sm:$0xff]
        %v5405 = vld [vmem:[#allocation3 + $0x90] sm:$0xff]
        %v5406 = vld [vmem:[#allocation3 + $0x98] sm:$0xff]
        %v5407 = vstv %s5402
        %v5408 = vmul.f32 %v5407, %v5403
        %v5409 = vmul.f32 %v5407, %v5404
        %v5410 = vmul.f32 %v5407, %v5405
        %v5411 = vmul.f32 %v5407, %v5406
        %v5412 = vadd.f32 %v5398, %v5408
        %v5413 = vadd.f32 %v5399, %v5409
        %v5414 = vadd.f32 %v5400, %v5410
        %v5415 = vadd.f32 %v5401, %v5411
        %s5416 = sld [smem:[#allocation15 + $0x284]]
        %v5417 = vld [vmem:[%s398 + $0x80] sm:$0xff]
        %v5418 = vld [vmem:[%s398 + $0x88] sm:$0xff]
        %v5419 = vld [vmem:[%s398 + $0x90] sm:$0xff]
        %v5420 = vld [vmem:[%s398 + $0x98] sm:$0xff]
        %v5421 = vstv %s5416
        %v5422 = vmul.f32 %v5421, %v5417
        %v5423 = vmul.f32 %v5421, %v5418
        %v5424 = vmul.f32 %v5421, %v5419
        %v5425 = vmul.f32 %v5421, %v5420
        %v5426 = vadd.f32 %v5412, %v5422
        %v5427 = vadd.f32 %v5413, %v5423
        %v5428 = vadd.f32 %v5414, %v5424
        %v5429 = vadd.f32 %v5415, %v5425
        %s5430 = sld [smem:[#allocation13 + $0x285]]
        %v5431 = vld [vmem:[#allocation3 + $0xa0] sm:$0xff]
        %v5432 = vld [vmem:[#allocation3 + $0xa8] sm:$0xff]
        %v5433 = vld [vmem:[#allocation3 + $0xb0] sm:$0xff]
        %v5434 = vld [vmem:[#allocation3 + $0xb8] sm:$0xff]
        %v5435 = vstv %s5430
        %v5436 = vmul.f32 %v5435, %v5431
        %v5437 = vmul.f32 %v5435, %v5432
        %v5438 = vmul.f32 %v5435, %v5433
        %v5439 = vmul.f32 %v5435, %v5434
        %v5440 = vadd.f32 %v5426, %v5436
        %v5441 = vadd.f32 %v5427, %v5437
        %v5442 = vadd.f32 %v5428, %v5438
        %v5443 = vadd.f32 %v5429, %v5439
        %s5444 = sld [smem:[#allocation15 + $0x285]]
        %v5445 = vld [vmem:[%s398 + $0xa0] sm:$0xff]
        %v5446 = vld [vmem:[%s398 + $0xa8] sm:$0xff]
        %v5447 = vld [vmem:[%s398 + $0xb0] sm:$0xff]
        %v5448 = vld [vmem:[%s398 + $0xb8] sm:$0xff]
        %v5449 = vstv %s5444
        %v5450 = vmul.f32 %v5449, %v5445
        %v5451 = vmul.f32 %v5449, %v5446
        %v5452 = vmul.f32 %v5449, %v5447
        %v5453 = vmul.f32 %v5449, %v5448
        %v5454 = vadd.f32 %v5440, %v5450
        %v5455 = vadd.f32 %v5441, %v5451
        %v5456 = vadd.f32 %v5442, %v5452
        %v5457 = vadd.f32 %v5443, %v5453
        %s5458 = sld [smem:[#allocation13 + $0x286]]
        %v5459 = vld [vmem:[#allocation3 + $0xc0] sm:$0xff]
        %v5460 = vld [vmem:[#allocation3 + $0xc8] sm:$0xff]
        %v5461 = vld [vmem:[#allocation3 + $0xd0] sm:$0xff]
        %v5462 = vld [vmem:[#allocation3 + $0xd8] sm:$0xff]
        %v5463 = vstv %s5458
        %v5464 = vmul.f32 %v5463, %v5459
        %v5465 = vmul.f32 %v5463, %v5460
        %v5466 = vmul.f32 %v5463, %v5461
        %v5467 = vmul.f32 %v5463, %v5462
        %v5468 = vadd.f32 %v5454, %v5464
        %v5469 = vadd.f32 %v5455, %v5465
        %v5470 = vadd.f32 %v5456, %v5466
        %v5471 = vadd.f32 %v5457, %v5467
        %s5472 = sld [smem:[#allocation15 + $0x286]]
        %v5473 = vld [vmem:[%s398 + $0xc0] sm:$0xff]
        %v5474 = vld [vmem:[%s398 + $0xc8] sm:$0xff]
        %v5475 = vld [vmem:[%s398 + $0xd0] sm:$0xff]
        %v5476 = vld [vmem:[%s398 + $0xd8] sm:$0xff]
        %v5477 = vstv %s5472
        %v5478 = vmul.f32 %v5477, %v5473
        %v5479 = vmul.f32 %v5477, %v5474
        %v5480 = vmul.f32 %v5477, %v5475
        %v5481 = vmul.f32 %v5477, %v5476
        %v5482 = vadd.f32 %v5468, %v5478
        %v5483 = vadd.f32 %v5469, %v5479
        %v5484 = vadd.f32 %v5470, %v5480
        %v5485 = vadd.f32 %v5471, %v5481
        %s5486 = sld [smem:[#allocation13 + $0x287]]
        %v5487 = vld [vmem:[#allocation3 + $0xe0] sm:$0xff]
        %v5488 = vld [vmem:[#allocation3 + $0xe8] sm:$0xff]
        %v5489 = vld [vmem:[#allocation3 + $0xf0] sm:$0xff]
        %v5490 = vld [vmem:[#allocation3 + $0xf8] sm:$0xff]
        %v5491 = vstv %s5486
        %v5492 = vmul.f32 %v5491, %v5487
        %v5493 = vmul.f32 %v5491, %v5488
        %v5494 = vmul.f32 %v5491, %v5489
        %v5495 = vmul.f32 %v5491, %v5490
        %v5496 = vadd.f32 %v5482, %v5492
        %v5497 = vadd.f32 %v5483, %v5493
        %v5498 = vadd.f32 %v5484, %v5494
        %v5499 = vadd.f32 %v5485, %v5495
        %s5500 = sld [smem:[#allocation15 + $0x287]]
        %v5501 = vld [vmem:[%s398 + $0xe0] sm:$0xff]
        %v5502 = vld [vmem:[%s398 + $0xe8] sm:$0xff]
        %v5503 = vld [vmem:[%s398 + $0xf0] sm:$0xff]
        %v5504 = vld [vmem:[%s398 + $0xf8] sm:$0xff]
        %v5505 = vstv %s5500
        %v5506 = vmul.f32 %v5505, %v5501
        %v5507 = vmul.f32 %v5505, %v5502
        %v5508 = vmul.f32 %v5505, %v5503
        %v5509 = vmul.f32 %v5505, %v5504
        %v5510 = vadd.f32 %v5496, %v5506
        %v5511 = vadd.f32 %v5497, %v5507
        %v5512 = vadd.f32 %v5498, %v5508
        %v5513 = vadd.f32 %v5499, %v5509
        %s5514 = sld [smem:[#allocation13 + $0x288]]
        %v5515 = vld [vmem:[#allocation3 + $0x100] sm:$0xff]
        %v5516 = vld [vmem:[#allocation3 + $0x108] sm:$0xff]
        %v5517 = vld [vmem:[#allocation3 + $0x110] sm:$0xff]
        %v5518 = vld [vmem:[#allocation3 + $0x118] sm:$0xff]
        %v5519 = vstv %s5514
        %v5520 = vmul.f32 %v5519, %v5515
        %v5521 = vmul.f32 %v5519, %v5516
        %v5522 = vmul.f32 %v5519, %v5517
        %v5523 = vmul.f32 %v5519, %v5518
        %v5524 = vadd.f32 %v5510, %v5520
        %v5525 = vadd.f32 %v5511, %v5521
        %v5526 = vadd.f32 %v5512, %v5522
        %v5527 = vadd.f32 %v5513, %v5523
        %s5528 = sld [smem:[#allocation15 + $0x288]]
        %v5529 = vld [vmem:[%s398 + $0x100] sm:$0xff]
        %v5530 = vld [vmem:[%s398 + $0x108] sm:$0xff]
        %v5531 = vld [vmem:[%s398 + $0x110] sm:$0xff]
        %v5532 = vld [vmem:[%s398 + $0x118] sm:$0xff]
        %v5533 = vstv %s5528
        %v5534 = vmul.f32 %v5533, %v5529
        %v5535 = vmul.f32 %v5533, %v5530
        %v5536 = vmul.f32 %v5533, %v5531
        %v5537 = vmul.f32 %v5533, %v5532
        %v5538 = vadd.f32 %v5524, %v5534
        %v5539 = vadd.f32 %v5525, %v5535
        %v5540 = vadd.f32 %v5526, %v5536
        %v5541 = vadd.f32 %v5527, %v5537
        %s5542 = sld [smem:[#allocation16 + $0x5]]
        %v5543 = vstv %s5542
        %v5544 = vadd.f32 %v5538, %v5543
        %v5545 = vadd.f32 %v5539, %v5543
        %v5546 = vadd.f32 %v5540, %v5543
        %v5547 = vadd.f32 %v5541, %v5543
        %v5548 = vmax.f32 %v5544, 0.0
        %v5549 = vmax.f32 %v5545, 0.0
        %v5550 = vmax.f32 %v5546, 0.0
        %v5551 = vmax.f32 %v5547, 0.0
        %5552 = vst [vmem:[%s459 + $0xa0] sm:$0xff] %v5548
        %5553 = vst [vmem:[%s459 + $0xa8] sm:$0xff] %v5549
        %5554 = vst [vmem:[%s459 + $0xb0] sm:$0xff] %v5550
        %5555 = vst [vmem:[%s459 + $0xb8] sm:$0xff] %v5551
        %s5556 = sld [smem:[#allocation13 + $0x300]]
        %v5557 = vld [vmem:[#allocation3] sm:$0xff]
        %v5558 = vld [vmem:[#allocation3 + $0x8] sm:$0xff]
        %v5559 = vld [vmem:[#allocation3 + $0x10] sm:$0xff]
        %v5560 = vld [vmem:[#allocation3 + $0x18] sm:$0xff]
        %v5561 = vstv %s5556
        %v5562 = vmul.f32 %v5561, %v5557
        %v5563 = vmul.f32 %v5561, %v5558
        %v5564 = vmul.f32 %v5561, %v5559
        %v5565 = vmul.f32 %v5561, %v5560
        %v5566 = vadd.f32 %v5562, 0.0
        %v5567 = vadd.f32 %v5563, 0.0
        %v5568 = vadd.f32 %v5564, 0.0
        %v5569 = vadd.f32 %v5565, 0.0
        %s5570 = sld [smem:[#allocation15 + $0x300]]
        %v5571 = vld [vmem:[%s398] sm:$0xff]
        %v5572 = vld [vmem:[%s398 + $0x8] sm:$0xff]
        %v5573 = vld [vmem:[%s398 + $0x10] sm:$0xff]
        %v5574 = vld [vmem:[%s398 + $0x18] sm:$0xff]
        %v5575 = vstv %s5570
        %v5576 = vmul.f32 %v5575, %v5571
        %v5577 = vmul.f32 %v5575, %v5572
        %v5578 = vmul.f32 %v5575, %v5573
        %v5579 = vmul.f32 %v5575, %v5574
        %v5580 = vadd.f32 %v5566, %v5576
        %v5581 = vadd.f32 %v5567, %v5577
        %v5582 = vadd.f32 %v5568, %v5578
        %v5583 = vadd.f32 %v5569, %v5579
        %s5584 = sld [smem:[#allocation13 + $0x301]]
        %v5585 = vld [vmem:[#allocation3 + $0x20] sm:$0xff]
        %v5586 = vld [vmem:[#allocation3 + $0x28] sm:$0xff]
        %v5587 = vld [vmem:[#allocation3 + $0x30] sm:$0xff]
        %v5588 = vld [vmem:[#allocation3 + $0x38] sm:$0xff]
        %v5589 = vstv %s5584
        %v5590 = vmul.f32 %v5589, %v5585
        %v5591 = vmul.f32 %v5589, %v5586
        %v5592 = vmul.f32 %v5589, %v5587
        %v5593 = vmul.f32 %v5589, %v5588
        %v5594 = vadd.f32 %v5580, %v5590
        %v5595 = vadd.f32 %v5581, %v5591
        %v5596 = vadd.f32 %v5582, %v5592
        %v5597 = vadd.f32 %v5583, %v5593
        %s5598 = sld [smem:[#allocation15 + $0x301]]
        %v5599 = vld [vmem:[%s398 + $0x20] sm:$0xff]
        %v5600 = vld [vmem:[%s398 + $0x28] sm:$0xff]
        %v5601 = vld [vmem:[%s398 + $0x30] sm:$0xff]
        %v5602 = vld [vmem:[%s398 + $0x38] sm:$0xff]
        %v5603 = vstv %s5598
        %v5604 = vmul.f32 %v5603, %v5599
        %v5605 = vmul.f32 %v5603, %v5600
        %v5606 = vmul.f32 %v5603, %v5601
        %v5607 = vmul.f32 %v5603, %v5602
        %v5608 = vadd.f32 %v5594, %v5604
        %v5609 = vadd.f32 %v5595, %v5605
        %v5610 = vadd.f32 %v5596, %v5606
        %v5611 = vadd.f32 %v5597, %v5607
        %s5612 = sld [smem:[#allocation13 + $0x302]]
        %v5613 = vld [vmem:[#allocation3 + $0x40] sm:$0xff]
        %v5614 = vld [vmem:[#allocation3 + $0x48] sm:$0xff]
        %v5615 = vld [vmem:[#allocation3 + $0x50] sm:$0xff]
        %v5616 = vld [vmem:[#allocation3 + $0x58] sm:$0xff]
        %v5617 = vstv %s5612
        %v5618 = vmul.f32 %v5617, %v5613
        %v5619 = vmul.f32 %v5617, %v5614
        %v5620 = vmul.f32 %v5617, %v5615
        %v5621 = vmul.f32 %v5617, %v5616
        %v5622 = vadd.f32 %v5608, %v5618
        %v5623 = vadd.f32 %v5609, %v5619
        %v5624 = vadd.f32 %v5610, %v5620
        %v5625 = vadd.f32 %v5611, %v5621
        %s5626 = sld [smem:[#allocation15 + $0x302]]
        %v5627 = vld [vmem:[%s398 + $0x40] sm:$0xff]
        %v5628 = vld [vmem:[%s398 + $0x48] sm:$0xff]
        %v5629 = vld [vmem:[%s398 + $0x50] sm:$0xff]
        %v5630 = vld [vmem:[%s398 + $0x58] sm:$0xff]
        %v5631 = vstv %s5626
        %v5632 = vmul.f32 %v5631, %v5627
        %v5633 = vmul.f32 %v5631, %v5628
        %v5634 = vmul.f32 %v5631, %v5629
        %v5635 = vmul.f32 %v5631, %v5630
        %v5636 = vadd.f32 %v5622, %v5632
        %v5637 = vadd.f32 %v5623, %v5633
        %v5638 = vadd.f32 %v5624, %v5634
        %v5639 = vadd.f32 %v5625, %v5635
        %s5640 = sld [smem:[#allocation13 + $0x303]]
        %v5641 = vld [vmem:[#allocation3 + $0x60] sm:$0xff]
        %v5642 = vld [vmem:[#allocation3 + $0x68] sm:$0xff]
        %v5643 = vld [vmem:[#allocation3 + $0x70] sm:$0xff]
        %v5644 = vld [vmem:[#allocation3 + $0x78] sm:$0xff]
        %v5645 = vstv %s5640
        %v5646 = vmul.f32 %v5645, %v5641
        %v5647 = vmul.f32 %v5645, %v5642
        %v5648 = vmul.f32 %v5645, %v5643
        %v5649 = vmul.f32 %v5645, %v5644
        %v5650 = vadd.f32 %v5636, %v5646
        %v5651 = vadd.f32 %v5637, %v5647
        %v5652 = vadd.f32 %v5638, %v5648
        %v5653 = vadd.f32 %v5639, %v5649
        %s5654 = sld [smem:[#allocation15 + $0x303]]
        %v5655 = vld [vmem:[%s398 + $0x60] sm:$0xff]
        %v5656 = vld [vmem:[%s398 + $0x68] sm:$0xff]
        %v5657 = vld [vmem:[%s398 + $0x70] sm:$0xff]
        %v5658 = vld [vmem:[%s398 + $0x78] sm:$0xff]
        %v5659 = vstv %s5654
        %v5660 = vmul.f32 %v5659, %v5655
        %v5661 = vmul.f32 %v5659, %v5656
        %v5662 = vmul.f32 %v5659, %v5657
        %v5663 = vmul.f32 %v5659, %v5658
        %v5664 = vadd.f32 %v5650, %v5660
        %v5665 = vadd.f32 %v5651, %v5661
        %v5666 = vadd.f32 %v5652, %v5662
        %v5667 = vadd.f32 %v5653, %v5663
        %s5668 = sld [smem:[#allocation13 + $0x304]]
        %v5669 = vld [vmem:[#allocation3 + $0x80] sm:$0xff]
        %v5670 = vld [vmem:[#allocation3 + $0x88] sm:$0xff]
        %v5671 = vld [vmem:[#allocation3 + $0x90] sm:$0xff]
        %v5672 = vld [vmem:[#allocation3 + $0x98] sm:$0xff]
        %v5673 = vstv %s5668
        %v5674 = vmul.f32 %v5673, %v5669
        %v5675 = vmul.f32 %v5673, %v5670
        %v5676 = vmul.f32 %v5673, %v5671
        %v5677 = vmul.f32 %v5673, %v5672
        %v5678 = vadd.f32 %v5664, %v5674
        %v5679 = vadd.f32 %v5665, %v5675
        %v5680 = vadd.f32 %v5666, %v5676
        %v5681 = vadd.f32 %v5667, %v5677
        %s5682 = sld [smem:[#allocation15 + $0x304]]
        %v5683 = vld [vmem:[%s398 + $0x80] sm:$0xff]
        %v5684 = vld [vmem:[%s398 + $0x88] sm:$0xff]
        %v5685 = vld [vmem:[%s398 + $0x90] sm:$0xff]
        %v5686 = vld [vmem:[%s398 + $0x98] sm:$0xff]
        %v5687 = vstv %s5682
        %v5688 = vmul.f32 %v5687, %v5683
        %v5689 = vmul.f32 %v5687, %v5684
        %v5690 = vmul.f32 %v5687, %v5685
        %v5691 = vmul.f32 %v5687, %v5686
        %v5692 = vadd.f32 %v5678, %v5688
        %v5693 = vadd.f32 %v5679, %v5689
        %v5694 = vadd.f32 %v5680, %v5690
        %v5695 = vadd.f32 %v5681, %v5691
        %s5696 = sld [smem:[#allocation13 + $0x305]]
        %v5697 = vld [vmem:[#allocation3 + $0xa0] sm:$0xff]
        %v5698 = vld [vmem:[#allocation3 + $0xa8] sm:$0xff]
        %v5699 = vld [vmem:[#allocation3 + $0xb0] sm:$0xff]
        %v5700 = vld [vmem:[#allocation3 + $0xb8] sm:$0xff]
        %v5701 = vstv %s5696
        %v5702 = vmul.f32 %v5701, %v5697
        %v5703 = vmul.f32 %v5701, %v5698
        %v5704 = vmul.f32 %v5701, %v5699
        %v5705 = vmul.f32 %v5701, %v5700
        %v5706 = vadd.f32 %v5692, %v5702
        %v5707 = vadd.f32 %v5693, %v5703
        %v5708 = vadd.f32 %v5694, %v5704
        %v5709 = vadd.f32 %v5695, %v5705
        %s5710 = sld [smem:[#allocation15 + $0x305]]
        %v5711 = vld [vmem:[%s398 + $0xa0] sm:$0xff]
        %v5712 = vld [vmem:[%s398 + $0xa8] sm:$0xff]
        %v5713 = vld [vmem:[%s398 + $0xb0] sm:$0xff]
        %v5714 = vld [vmem:[%s398 + $0xb8] sm:$0xff]
        %v5715 = vstv %s5710
        %v5716 = vmul.f32 %v5715, %v5711
        %v5717 = vmul.f32 %v5715, %v5712
        %v5718 = vmul.f32 %v5715, %v5713
        %v5719 = vmul.f32 %v5715, %v5714
        %v5720 = vadd.f32 %v5706, %v5716
        %v5721 = vadd.f32 %v5707, %v5717
        %v5722 = vadd.f32 %v5708, %v5718
        %v5723 = vadd.f32 %v5709, %v5719
        %s5724 = sld [smem:[#allocation13 + $0x306]]
        %v5725 = vld [vmem:[#allocation3 + $0xc0] sm:$0xff]
        %v5726 = vld [vmem:[#allocation3 + $0xc8] sm:$0xff]
        %v5727 = vld [vmem:[#allocation3 + $0xd0] sm:$0xff]
        %v5728 = vld [vmem:[#allocation3 + $0xd8] sm:$0xff]
        %v5729 = vstv %s5724
        %v5730 = vmul.f32 %v5729, %v5725
        %v5731 = vmul.f32 %v5729, %v5726
        %v5732 = vmul.f32 %v5729, %v5727
        %v5733 = vmul.f32 %v5729, %v5728
        %v5734 = vadd.f32 %v5720, %v5730
        %v5735 = vadd.f32 %v5721, %v5731
        %v5736 = vadd.f32 %v5722, %v5732
        %v5737 = vadd.f32 %v5723, %v5733
        %s5738 = sld [smem:[#allocation15 + $0x306]]
        %v5739 = vld [vmem:[%s398 + $0xc0] sm:$0xff]
        %v5740 = vld [vmem:[%s398 + $0xc8] sm:$0xff]
        %v5741 = vld [vmem:[%s398 + $0xd0] sm:$0xff]
        %v5742 = vld [vmem:[%s398 + $0xd8] sm:$0xff]
        %v5743 = vstv %s5738
        %v5744 = vmul.f32 %v5743, %v5739
        %v5745 = vmul.f32 %v5743, %v5740
        %v5746 = vmul.f32 %v5743, %v5741
        %v5747 = vmul.f32 %v5743, %v5742
        %v5748 = vadd.f32 %v5734, %v5744
        %v5749 = vadd.f32 %v5735, %v5745
        %v5750 = vadd.f32 %v5736, %v5746
        %v5751 = vadd.f32 %v5737, %v5747
        %s5752 = sld [smem:[#allocation13 + $0x307]]
        %v5753 = vld [vmem:[#allocation3 + $0xe0] sm:$0xff]
        %v5754 = vld [vmem:[#allocation3 + $0xe8] sm:$0xff]
        %v5755 = vld [vmem:[#allocation3 + $0xf0] sm:$0xff]
        %v5756 = vld [vmem:[#allocation3 + $0xf8] sm:$0xff]
        %v5757 = vstv %s5752
        %v5758 = vmul.f32 %v5757, %v5753
        %v5759 = vmul.f32 %v5757, %v5754
        %v5760 = vmul.f32 %v5757, %v5755
        %v5761 = vmul.f32 %v5757, %v5756
        %v5762 = vadd.f32 %v5748, %v5758
        %v5763 = vadd.f32 %v5749, %v5759
        %v5764 = vadd.f32 %v5750, %v5760
        %v5765 = vadd.f32 %v5751, %v5761
        %s5766 = sld [smem:[#allocation15 + $0x307]]
        %v5767 = vld [vmem:[%s398 + $0xe0] sm:$0xff]
        %v5768 = vld [vmem:[%s398 + $0xe8] sm:$0xff]
        %v5769 = vld [vmem:[%s398 + $0xf0] sm:$0xff]
        %v5770 = vld [vmem:[%s398 + $0xf8] sm:$0xff]
        %v5771 = vstv %s5766
        %v5772 = vmul.f32 %v5771, %v5767
        %v5773 = vmul.f32 %v5771, %v5768
        %v5774 = vmul.f32 %v5771, %v5769
        %v5775 = vmul.f32 %v5771, %v5770
        %v5776 = vadd.f32 %v5762, %v5772
        %v5777 = vadd.f32 %v5763, %v5773
        %v5778 = vadd.f32 %v5764, %v5774
        %v5779 = vadd.f32 %v5765, %v5775
        %s5780 = sld [smem:[#allocation13 + $0x308]]
        %v5781 = vld [vmem:[#allocation3 + $0x100] sm:$0xff]
        %v5782 = vld [vmem:[#allocation3 + $0x108] sm:$0xff]
        %v5783 = vld [vmem:[#allocation3 + $0x110] sm:$0xff]
        %v5784 = vld [vmem:[#allocation3 + $0x118] sm:$0xff]
        %v5785 = vstv %s5780
        %v5786 = vmul.f32 %v5785, %v5781
        %v5787 = vmul.f32 %v5785, %v5782
        %v5788 = vmul.f32 %v5785, %v5783
        %v5789 = vmul.f32 %v5785, %v5784
        %v5790 = vadd.f32 %v5776, %v5786
        %v5791 = vadd.f32 %v5777, %v5787
        %v5792 = vadd.f32 %v5778, %v5788
        %v5793 = vadd.f32 %v5779, %v5789
        %s5794 = sld [smem:[#allocation15 + $0x308]]
        %v5795 = vld [vmem:[%s398 + $0x100] sm:$0xff]
        %v5796 = vld [vmem:[%s398 + $0x108] sm:$0xff]
        %v5797 = vld [vmem:[%s398 + $0x110] sm:$0xff]
        %v5798 = vld [vmem:[%s398 + $0x118] sm:$0xff]
        %v5799 = vstv %s5794
        %v5800 = vmul.f32 %v5799, %v5795
        %v5801 = vmul.f32 %v5799, %v5796
        %v5802 = vmul.f32 %v5799, %v5797
        %v5803 = vmul.f32 %v5799, %v5798
        %v5804 = vadd.f32 %v5790, %v5800
        %v5805 = vadd.f32 %v5791, %v5801
        %v5806 = vadd.f32 %v5792, %v5802
        %v5807 = vadd.f32 %v5793, %v5803
        %s5808 = sld [smem:[#allocation16 + $0x6]]
        %v5809 = vstv %s5808
        %v5810 = vadd.f32 %v5804, %v5809
        %v5811 = vadd.f32 %v5805, %v5809
        %v5812 = vadd.f32 %v5806, %v5809
        %v5813 = vadd.f32 %v5807, %v5809
        %v5814 = vmax.f32 %v5810, 0.0
        %v5815 = vmax.f32 %v5811, 0.0
        %v5816 = vmax.f32 %v5812, 0.0
        %v5817 = vmax.f32 %v5813, 0.0
        %5818 = vst [vmem:[%s459 + $0xc0] sm:$0xff] %v5814
        %5819 = vst [vmem:[%s459 + $0xc8] sm:$0xff] %v5815
        %5820 = vst [vmem:[%s459 + $0xd0] sm:$0xff] %v5816
        %5821 = vst [vmem:[%s459 + $0xd8] sm:$0xff] %v5817
        %s5822 = sld [smem:[#allocation13 + $0x380]]
        %v5823 = vld [vmem:[#allocation3] sm:$0xff]
        %v5824 = vld [vmem:[#allocation3 + $0x8] sm:$0xff]
        %v5825 = vld [vmem:[#allocation3 + $0x10] sm:$0xff]
        %v5826 = vld [vmem:[#allocation3 + $0x18] sm:$0xff]
        %v5827 = vstv %s5822
        %v5828 = vmul.f32 %v5827, %v5823
        %v5829 = vmul.f32 %v5827, %v5824
        %v5830 = vmul.f32 %v5827, %v5825
        %v5831 = vmul.f32 %v5827, %v5826
        %v5832 = vadd.f32 %v5828, 0.0
        %v5833 = vadd.f32 %v5829, 0.0
        %v5834 = vadd.f32 %v5830, 0.0
        %v5835 = vadd.f32 %v5831, 0.0
        %s5836 = sld [smem:[#allocation15 + $0x380]]
        %v5837 = vld [vmem:[%s398] sm:$0xff]
        %v5838 = vld [vmem:[%s398 + $0x8] sm:$0xff]
        %v5839 = vld [vmem:[%s398 + $0x10] sm:$0xff]
        %v5840 = vld [vmem:[%s398 + $0x18] sm:$0xff]
        %v5841 = vstv %s5836
        %v5842 = vmul.f32 %v5841, %v5837
        %v5843 = vmul.f32 %v5841, %v5838
        %v5844 = vmul.f32 %v5841, %v5839
        %v5845 = vmul.f32 %v5841, %v5840
        %v5846 = vadd.f32 %v5832, %v5842
        %v5847 = vadd.f32 %v5833, %v5843
        %v5848 = vadd.f32 %v5834, %v5844
        %v5849 = vadd.f32 %v5835, %v5845
        %s5850 = sld [smem:[#allocation13 + $0x381]]
        %v5851 = vld [vmem:[#allocation3 + $0x20] sm:$0xff]
        %v5852 = vld [vmem:[#allocation3 + $0x28] sm:$0xff]
        %v5853 = vld [vmem:[#allocation3 + $0x30] sm:$0xff]
        %v5854 = vld [vmem:[#allocation3 + $0x38] sm:$0xff]
        %v5855 = vstv %s5850
        %v5856 = vmul.f32 %v5855, %v5851
        %v5857 = vmul.f32 %v5855, %v5852
        %v5858 = vmul.f32 %v5855, %v5853
        %v5859 = vmul.f32 %v5855, %v5854
        %v5860 = vadd.f32 %v5846, %v5856
        %v5861 = vadd.f32 %v5847, %v5857
        %v5862 = vadd.f32 %v5848, %v5858
        %v5863 = vadd.f32 %v5849, %v5859
        %s5864 = sld [smem:[#allocation15 + $0x381]]
        %v5865 = vld [vmem:[%s398 + $0x20] sm:$0xff]
        %v5866 = vld [vmem:[%s398 + $0x28] sm:$0xff]
        %v5867 = vld [vmem:[%s398 + $0x30] sm:$0xff]
        %v5868 = vld [vmem:[%s398 + $0x38] sm:$0xff]
        %v5869 = vstv %s5864
        %v5870 = vmul.f32 %v5869, %v5865
        %v5871 = vmul.f32 %v5869, %v5866
        %v5872 = vmul.f32 %v5869, %v5867
        %v5873 = vmul.f32 %v5869, %v5868
        %v5874 = vadd.f32 %v5860, %v5870
        %v5875 = vadd.f32 %v5861, %v5871
        %v5876 = vadd.f32 %v5862, %v5872
        %v5877 = vadd.f32 %v5863, %v5873
        %s5878 = sld [smem:[#allocation13 + $0x382]]
        %v5879 = vld [vmem:[#allocation3 + $0x40] sm:$0xff]
        %v5880 = vld [vmem:[#allocation3 + $0x48] sm:$0xff]
        %v5881 = vld [vmem:[#allocation3 + $0x50] sm:$0xff]
        %v5882 = vld [vmem:[#allocation3 + $0x58] sm:$0xff]
        %v5883 = vstv %s5878
        %v5884 = vmul.f32 %v5883, %v5879
        %v5885 = vmul.f32 %v5883, %v5880
        %v5886 = vmul.f32 %v5883, %v5881
        %v5887 = vmul.f32 %v5883, %v5882
        %v5888 = vadd.f32 %v5874, %v5884
        %v5889 = vadd.f32 %v5875, %v5885
        %v5890 = vadd.f32 %v5876, %v5886
        %v5891 = vadd.f32 %v5877, %v5887
        %s5892 = sld [smem:[#allocation15 + $0x382]]
        %v5893 = vld [vmem:[%s398 + $0x40] sm:$0xff]
        %v5894 = vld [vmem:[%s398 + $0x48] sm:$0xff]
        %v5895 = vld [vmem:[%s398 + $0x50] sm:$0xff]
        %v5896 = vld [vmem:[%s398 + $0x58] sm:$0xff]
        %v5897 = vstv %s5892
        %v5898 = vmul.f32 %v5897, %v5893
        %v5899 = vmul.f32 %v5897, %v5894
        %v5900 = vmul.f32 %v5897, %v5895
        %v5901 = vmul.f32 %v5897, %v5896
        %v5902 = vadd.f32 %v5888, %v5898
        %v5903 = vadd.f32 %v5889, %v5899
        %v5904 = vadd.f32 %v5890, %v5900
        %v5905 = vadd.f32 %v5891, %v5901
        %s5906 = sld [smem:[#allocation13 + $0x383]]
        %v5907 = vld [vmem:[#allocation3 + $0x60] sm:$0xff]
        %v5908 = vld [vmem:[#allocation3 + $0x68] sm:$0xff]
        %v5909 = vld [vmem:[#allocation3 + $0x70] sm:$0xff]
        %v5910 = vld [vmem:[#allocation3 + $0x78] sm:$0xff]
        %v5911 = vstv %s5906
        %v5912 = vmul.f32 %v5911, %v5907
        %v5913 = vmul.f32 %v5911, %v5908
        %v5914 = vmul.f32 %v5911, %v5909
        %v5915 = vmul.f32 %v5911, %v5910
        %v5916 = vadd.f32 %v5902, %v5912
        %v5917 = vadd.f32 %v5903, %v5913
        %v5918 = vadd.f32 %v5904, %v5914
        %v5919 = vadd.f32 %v5905, %v5915
        %s5920 = sld [smem:[#allocation15 + $0x383]]
        %v5921 = vld [vmem:[%s398 + $0x60] sm:$0xff]
        %v5922 = vld [vmem:[%s398 + $0x68] sm:$0xff]
        %v5923 = vld [vmem:[%s398 + $0x70] sm:$0xff]
        %v5924 = vld [vmem:[%s398 + $0x78] sm:$0xff]
        %v5925 = vstv %s5920
        %v5926 = vmul.f32 %v5925, %v5921
        %v5927 = vmul.f32 %v5925, %v5922
        %v5928 = vmul.f32 %v5925, %v5923
        %v5929 = vmul.f32 %v5925, %v5924
        %v5930 = vadd.f32 %v5916, %v5926
        %v5931 = vadd.f32 %v5917, %v5927
        %v5932 = vadd.f32 %v5918, %v5928
        %v5933 = vadd.f32 %v5919, %v5929
        %s5934 = sld [smem:[#allocation13 + $0x384]]
        %v5935 = vld [vmem:[#allocation3 + $0x80] sm:$0xff]
        %v5936 = vld [vmem:[#allocation3 + $0x88] sm:$0xff]
        %v5937 = vld [vmem:[#allocation3 + $0x90] sm:$0xff]
        %v5938 = vld [vmem:[#allocation3 + $0x98] sm:$0xff]
        %v5939 = vstv %s5934
        %v5940 = vmul.f32 %v5939, %v5935
        %v5941 = vmul.f32 %v5939, %v5936
        %v5942 = vmul.f32 %v5939, %v5937
        %v5943 = vmul.f32 %v5939, %v5938
        %v5944 = vadd.f32 %v5930, %v5940
        %v5945 = vadd.f32 %v5931, %v5941
        %v5946 = vadd.f32 %v5932, %v5942
        %v5947 = vadd.f32 %v5933, %v5943
        %s5948 = sld [smem:[#allocation15 + $0x384]]
        %v5949 = vld [vmem:[%s398 + $0x80] sm:$0xff]
        %v5950 = vld [vmem:[%s398 + $0x88] sm:$0xff]
        %v5951 = vld [vmem:[%s398 + $0x90] sm:$0xff]
        %v5952 = vld [vmem:[%s398 + $0x98] sm:$0xff]
        %v5953 = vstv %s5948
        %v5954 = vmul.f32 %v5953, %v5949
        %v5955 = vmul.f32 %v5953, %v5950
        %v5956 = vmul.f32 %v5953, %v5951
        %v5957 = vmul.f32 %v5953, %v5952
        %v5958 = vadd.f32 %v5944, %v5954
        %v5959 = vadd.f32 %v5945, %v5955
        %v5960 = vadd.f32 %v5946, %v5956
        %v5961 = vadd.f32 %v5947, %v5957
        %s5962 = sld [smem:[#allocation13 + $0x385]]
        %v5963 = vld [vmem:[#allocation3 + $0xa0] sm:$0xff]
        %v5964 = vld [vmem:[#allocation3 + $0xa8] sm:$0xff]
        %v5965 = vld [vmem:[#allocation3 + $0xb0] sm:$0xff]
        %v5966 = vld [vmem:[#allocation3 + $0xb8] sm:$0xff]
        %v5967 = vstv %s5962
        %v5968 = vmul.f32 %v5967, %v5963
        %v5969 = vmul.f32 %v5967, %v5964
        %v5970 = vmul.f32 %v5967, %v5965
        %v5971 = vmul.f32 %v5967, %v5966
        %v5972 = vadd.f32 %v5958, %v5968
        %v5973 = vadd.f32 %v5959, %v5969
        %v5974 = vadd.f32 %v5960, %v5970
        %v5975 = vadd.f32 %v5961, %v5971
        %s5976 = sld [smem:[#allocation15 + $0x385]]
        %v5977 = vld [vmem:[%s398 + $0xa0] sm:$0xff]
        %v5978 = vld [vmem:[%s398 + $0xa8] sm:$0xff]
        %v5979 = vld [vmem:[%s398 + $0xb0] sm:$0xff]
        %v5980 = vld [vmem:[%s398 + $0xb8] sm:$0xff]
        %v5981 = vstv %s5976
        %v5982 = vmul.f32 %v5981, %v5977
        %v5983 = vmul.f32 %v5981, %v5978
        %v5984 = vmul.f32 %v5981, %v5979
        %v5985 = vmul.f32 %v5981, %v5980
        %v5986 = vadd.f32 %v5972, %v5982
        %v5987 = vadd.f32 %v5973, %v5983
        %v5988 = vadd.f32 %v5974, %v5984
        %v5989 = vadd.f32 %v5975, %v5985
        %s5990 = sld [smem:[#allocation13 + $0x386]]
        %v5991 = vld [vmem:[#allocation3 + $0xc0] sm:$0xff]
        %v5992 = vld [vmem:[#allocation3 + $0xc8] sm:$0xff]
        %v5993 = vld [vmem:[#allocation3 + $0xd0] sm:$0xff]
        %v5994 = vld [vmem:[#allocation3 + $0xd8] sm:$0xff]
        %v5995 = vstv %s5990
        %v5996 = vmul.f32 %v5995, %v5991
        %v5997 = vmul.f32 %v5995, %v5992
        %v5998 = vmul.f32 %v5995, %v5993
        %v5999 = vmul.f32 %v5995, %v5994
        %v6000 = vadd.f32 %v5986, %v5996
        %v6001 = vadd.f32 %v5987, %v5997
        %v6002 = vadd.f32 %v5988, %v5998
        %v6003 = vadd.f32 %v5989, %v5999
        %s6004 = sld [smem:[#allocation15 + $0x386]]
        %v6005 = vld [vmem:[%s398 + $0xc0] sm:$0xff]
        %v6006 = vld [vmem:[%s398 + $0xc8] sm:$0xff]
        %v6007 = vld [vmem:[%s398 + $0xd0] sm:$0xff]
        %v6008 = vld [vmem:[%s398 + $0xd8] sm:$0xff]
        %v6009 = vstv %s6004
        %v6010 = vmul.f32 %v6009, %v6005
        %v6011 = vmul.f32 %v6009, %v6006
        %v6012 = vmul.f32 %v6009, %v6007
        %v6013 = vmul.f32 %v6009, %v6008
        %v6014 = vadd.f32 %v6000, %v6010
        %v6015 = vadd.f32 %v6001, %v6011
        %v6016 = vadd.f32 %v6002, %v6012
        %v6017 = vadd.f32 %v6003, %v6013
        %s6018 = sld [smem:[#allocation13 + $0x387]]
        %v6019 = vld [vmem:[#allocation3 + $0xe0] sm:$0xff]
        %v6020 = vld [vmem:[#allocation3 + $0xe8] sm:$0xff]
        %v6021 = vld [vmem:[#allocation3 + $0xf0] sm:$0xff]
        %v6022 = vld [vmem:[#allocation3 + $0xf8] sm:$0xff]
        %v6023 = vstv %s6018
        %v6024 = vmul.f32 %v6023, %v6019
        %v6025 = vmul.f32 %v6023, %v6020
        %v6026 = vmul.f32 %v6023, %v6021
        %v6027 = vmul.f32 %v6023, %v6022
        %v6028 = vadd.f32 %v6014, %v6024
        %v6029 = vadd.f32 %v6015, %v6025
        %v6030 = vadd.f32 %v6016, %v6026
        %v6031 = vadd.f32 %v6017, %v6027
        %s6032 = sld [smem:[#allocation15 + $0x387]]
        %v6033 = vld [vmem:[%s398 + $0xe0] sm:$0xff]
        %v6034 = vld [vmem:[%s398 + $0xe8] sm:$0xff]
        %v6035 = vld [vmem:[%s398 + $0xf0] sm:$0xff]
        %v6036 = vld [vmem:[%s398 + $0xf8] sm:$0xff]
        %v6037 = vstv %s6032
        %v6038 = vmul.f32 %v6037, %v6033
        %v6039 = vmul.f32 %v6037, %v6034
        %v6040 = vmul.f32 %v6037, %v6035
        %v6041 = vmul.f32 %v6037, %v6036
        %v6042 = vadd.f32 %v6028, %v6038
        %v6043 = vadd.f32 %v6029, %v6039
        %v6044 = vadd.f32 %v6030, %v6040
        %v6045 = vadd.f32 %v6031, %v6041
        %s6046 = sld [smem:[#allocation13 + $0x388]]
        %v6047 = vld [vmem:[#allocation3 + $0x100] sm:$0xff]
        %v6048 = vld [vmem:[#allocation3 + $0x108] sm:$0xff]
        %v6049 = vld [vmem:[#allocation3 + $0x110] sm:$0xff]
        %v6050 = vld [vmem:[#allocation3 + $0x118] sm:$0xff]
        %v6051 = vstv %s6046
        %v6052 = vmul.f32 %v6051, %v6047
        %v6053 = vmul.f32 %v6051, %v6048
        %v6054 = vmul.f32 %v6051, %v6049
        %v6055 = vmul.f32 %v6051, %v6050
        %v6056 = vadd.f32 %v6042, %v6052
        %v6057 = vadd.f32 %v6043, %v6053
        %v6058 = vadd.f32 %v6044, %v6054
        %v6059 = vadd.f32 %v6045, %v6055
        %s6060 = sld [smem:[#allocation15 + $0x388]]
        %v6061 = vld [vmem:[%s398 + $0x100] sm:$0xff]
        %v6062 = vld [vmem:[%s398 + $0x108] sm:$0xff]
        %v6063 = vld [vmem:[%s398 + $0x110] sm:$0xff]
        %v6064 = vld [vmem:[%s398 + $0x118] sm:$0xff]
        %v6065 = vstv %s6060
        %v6066 = vmul.f32 %v6065, %v6061
        %v6067 = vmul.f32 %v6065, %v6062
        %v6068 = vmul.f32 %v6065, %v6063
        %v6069 = vmul.f32 %v6065, %v6064
        %v6070 = vadd.f32 %v6056, %v6066
        %v6071 = vadd.f32 %v6057, %v6067
        %v6072 = vadd.f32 %v6058, %v6068
        %v6073 = vadd.f32 %v6059, %v6069
        %s6074 = sld [smem:[#allocation16 + $0x7]]
        %v6075 = vstv %s6074
        %v6076 = vadd.f32 %v6070, %v6075
        %v6077 = vadd.f32 %v6071, %v6075
        %v6078 = vadd.f32 %v6072, %v6075
        %v6079 = vadd.f32 %v6073, %v6075
        %v6080 = vmax.f32 %v6076, 0.0
        %v6081 = vmax.f32 %v6077, 0.0
        %v6082 = vmax.f32 %v6078, 0.0
        %v6083 = vmax.f32 %v6079, 0.0
        %6084 = vst [vmem:[%s459 + $0xe0] sm:$0xff] %v6080
        %6085 = vst [vmem:[%s459 + $0xe8] sm:$0xff] %v6081
        %6086 = vst [vmem:[%s459 + $0xf0] sm:$0xff] %v6082
        %6087 = vst [vmem:[%s459 + $0xf8] sm:$0xff] %v6083
        %s6088 = sld [smem:[#allocation13 + $0x400]]
        %v6089 = vld [vmem:[#allocation3] sm:$0xff]
        %v6090 = vld [vmem:[#allocation3 + $0x8] sm:$0xff]
        %v6091 = vld [vmem:[#allocation3 + $0x10] sm:$0xff]
        %v6092 = vld [vmem:[#allocation3 + $0x18] sm:$0xff]
        %v6093 = vstv %s6088
        %v6094 = vmul.f32 %v6093, %v6089
        %v6095 = vmul.f32 %v6093, %v6090
        %v6096 = vmul.f32 %v6093, %v6091
        %v6097 = vmul.f32 %v6093, %v6092
        %v6098 = vadd.f32 %v6094, 0.0
        %v6099 = vadd.f32 %v6095, 0.0
        %v6100 = vadd.f32 %v6096, 0.0
        %v6101 = vadd.f32 %v6097, 0.0
        %s6102 = sld [smem:[#allocation15 + $0x400]]
        %v6103 = vld [vmem:[%s398] sm:$0xff]
        %v6104 = vld [vmem:[%s398 + $0x8] sm:$0xff]
        %v6105 = vld [vmem:[%s398 + $0x10] sm:$0xff]
        %v6106 = vld [vmem:[%s398 + $0x18] sm:$0xff]
        %v6107 = vstv %s6102
        %v6108 = vmul.f32 %v6107, %v6103
        %v6109 = vmul.f32 %v6107, %v6104
        %v6110 = vmul.f32 %v6107, %v6105
        %v6111 = vmul.f32 %v6107, %v6106
        %v6112 = vadd.f32 %v6098, %v6108
        %v6113 = vadd.f32 %v6099, %v6109
        %v6114 = vadd.f32 %v6100, %v6110
        %v6115 = vadd.f32 %v6101, %v6111
        %s6116 = sld [smem:[#allocation13 + $0x401]]
        %v6117 = vld [vmem:[#allocation3 + $0x20] sm:$0xff]
        %v6118 = vld [vmem:[#allocation3 + $0x28] sm:$0xff]
        %v6119 = vld [vmem:[#allocation3 + $0x30] sm:$0xff]
        %v6120 = vld [vmem:[#allocation3 + $0x38] sm:$0xff]
        %v6121 = vstv %s6116
        %v6122 = vmul.f32 %v6121, %v6117
        %v6123 = vmul.f32 %v6121, %v6118
        %v6124 = vmul.f32 %v6121, %v6119
        %v6125 = vmul.f32 %v6121, %v6120
        %v6126 = vadd.f32 %v6112, %v6122
        %v6127 = vadd.f32 %v6113, %v6123
        %v6128 = vadd.f32 %v6114, %v6124
        %v6129 = vadd.f32 %v6115, %v6125
        %s6130 = sld [smem:[#allocation15 + $0x401]]
        %v6131 = vld [vmem:[%s398 + $0x20] sm:$0xff]
        %v6132 = vld [vmem:[%s398 + $0x28] sm:$0xff]
        %v6133 = vld [vmem:[%s398 + $0x30] sm:$0xff]
        %v6134 = vld [vmem:[%s398 + $0x38] sm:$0xff]
        %v6135 = vstv %s6130
        %v6136 = vmul.f32 %v6135, %v6131
        %v6137 = vmul.f32 %v6135, %v6132
        %v6138 = vmul.f32 %v6135, %v6133
        %v6139 = vmul.f32 %v6135, %v6134
        %v6140 = vadd.f32 %v6126, %v6136
        %v6141 = vadd.f32 %v6127, %v6137
        %v6142 = vadd.f32 %v6128, %v6138
        %v6143 = vadd.f32 %v6129, %v6139
        %s6144 = sld [smem:[#allocation13 + $0x402]]
        %v6145 = vld [vmem:[#allocation3 + $0x40] sm:$0xff]
        %v6146 = vld [vmem:[#allocation3 + $0x48] sm:$0xff]
        %v6147 = vld [vmem:[#allocation3 + $0x50] sm:$0xff]
        %v6148 = vld [vmem:[#allocation3 + $0x58] sm:$0xff]
        %v6149 = vstv %s6144
        %v6150 = vmul.f32 %v6149, %v6145
        %v6151 = vmul.f32 %v6149, %v6146
        %v6152 = vmul.f32 %v6149, %v6147
        %v6153 = vmul.f32 %v6149, %v6148
        %v6154 = vadd.f32 %v6140, %v6150
        %v6155 = vadd.f32 %v6141, %v6151
        %v6156 = vadd.f32 %v6142, %v6152
        %v6157 = vadd.f32 %v6143, %v6153
        %s6158 = sld [smem:[#allocation15 + $0x402]]
        %v6159 = vld [vmem:[%s398 + $0x40] sm:$0xff]
        %v6160 = vld [vmem:[%s398 + $0x48] sm:$0xff]
        %v6161 = vld [vmem:[%s398 + $0x50] sm:$0xff]
        %v6162 = vld [vmem:[%s398 + $0x58] sm:$0xff]
        %v6163 = vstv %s6158
        %v6164 = vmul.f32 %v6163, %v6159
        %v6165 = vmul.f32 %v6163, %v6160
        %v6166 = vmul.f32 %v6163, %v6161
        %v6167 = vmul.f32 %v6163, %v6162
        %v6168 = vadd.f32 %v6154, %v6164
        %v6169 = vadd.f32 %v6155, %v6165
        %v6170 = vadd.f32 %v6156, %v6166
        %v6171 = vadd.f32 %v6157, %v6167
        %s6172 = sld [smem:[#allocation13 + $0x403]]
        %v6173 = vld [vmem:[#allocation3 + $0x60] sm:$0xff]
        %v6174 = vld [vmem:[#allocation3 + $0x68] sm:$0xff]
        %v6175 = vld [vmem:[#allocation3 + $0x70] sm:$0xff]
        %v6176 = vld [vmem:[#allocation3 + $0x78] sm:$0xff]
        %v6177 = vstv %s6172
        %v6178 = vmul.f32 %v6177, %v6173
        %v6179 = vmul.f32 %v6177, %v6174
        %v6180 = vmul.f32 %v6177, %v6175
        %v6181 = vmul.f32 %v6177, %v6176
        %v6182 = vadd.f32 %v6168, %v6178
        %v6183 = vadd.f32 %v6169, %v6179
        %v6184 = vadd.f32 %v6170, %v6180
        %v6185 = vadd.f32 %v6171, %v6181
        %s6186 = sld [smem:[#allocation15 + $0x403]]
        %v6187 = vld [vmem:[%s398 + $0x60] sm:$0xff]
        %v6188 = vld [vmem:[%s398 + $0x68] sm:$0xff]
        %v6189 = vld [vmem:[%s398 + $0x70] sm:$0xff]
        %v6190 = vld [vmem:[%s398 + $0x78] sm:$0xff]
        %v6191 = vstv %s6186
        %v6192 = vmul.f32 %v6191, %v6187
        %v6193 = vmul.f32 %v6191, %v6188
        %v6194 = vmul.f32 %v6191, %v6189
        %v6195 = vmul.f32 %v6191, %v6190
        %v6196 = vadd.f32 %v6182, %v6192
        %v6197 = vadd.f32 %v6183, %v6193
        %v6198 = vadd.f32 %v6184, %v6194
        %v6199 = vadd.f32 %v6185, %v6195
        %s6200 = sld [smem:[#allocation13 + $0x404]]
        %v6201 = vld [vmem:[#allocation3 + $0x80] sm:$0xff]
        %v6202 = vld [vmem:[#allocation3 + $0x88] sm:$0xff]
        %v6203 = vld [vmem:[#allocation3 + $0x90] sm:$0xff]
        %v6204 = vld [vmem:[#allocation3 + $0x98] sm:$0xff]
        %v6205 = vstv %s6200
        %v6206 = vmul.f32 %v6205, %v6201
        %v6207 = vmul.f32 %v6205, %v6202
        %v6208 = vmul.f32 %v6205, %v6203
        %v6209 = vmul.f32 %v6205, %v6204
        %v6210 = vadd.f32 %v6196, %v6206
        %v6211 = vadd.f32 %v6197, %v6207
        %v6212 = vadd.f32 %v6198, %v6208
        %v6213 = vadd.f32 %v6199, %v6209
        %s6214 = sld [smem:[#allocation15 + $0x404]]
        %v6215 = vld [vmem:[%s398 + $0x80] sm:$0xff]
        %v6216 = vld [vmem:[%s398 + $0x88] sm:$0xff]
        %v6217 = vld [vmem:[%s398 + $0x90] sm:$0xff]
        %v6218 = vld [vmem:[%s398 + $0x98] sm:$0xff]
        %v6219 = vstv %s6214
        %v6220 = vmul.f32 %v6219, %v6215
        %v6221 = vmul.f32 %v6219, %v6216
        %v6222 = vmul.f32 %v6219, %v6217
        %v6223 = vmul.f32 %v6219, %v6218
        %v6224 = vadd.f32 %v6210, %v6220
        %v6225 = vadd.f32 %v6211, %v6221
        %v6226 = vadd.f32 %v6212, %v6222
        %v6227 = vadd.f32 %v6213, %v6223
        %s6228 = sld [smem:[#allocation13 + $0x405]]
        %v6229 = vld [vmem:[#allocation3 + $0xa0] sm:$0xff]
        %v6230 = vld [vmem:[#allocation3 + $0xa8] sm:$0xff]
        %v6231 = vld [vmem:[#allocation3 + $0xb0] sm:$0xff]
        %v6232 = vld [vmem:[#allocation3 + $0xb8] sm:$0xff]
        %v6233 = vstv %s6228
        %v6234 = vmul.f32 %v6233, %v6229
        %v6235 = vmul.f32 %v6233, %v6230
        %v6236 = vmul.f32 %v6233, %v6231
        %v6237 = vmul.f32 %v6233, %v6232
        %v6238 = vadd.f32 %v6224, %v6234
        %v6239 = vadd.f32 %v6225, %v6235
        %v6240 = vadd.f32 %v6226, %v6236
        %v6241 = vadd.f32 %v6227, %v6237
        %s6242 = sld [smem:[#allocation15 + $0x405]]
        %v6243 = vld [vmem:[%s398 + $0xa0] sm:$0xff]
        %v6244 = vld [vmem:[%s398 + $0xa8] sm:$0xff]
        %v6245 = vld [vmem:[%s398 + $0xb0] sm:$0xff]
        %v6246 = vld [vmem:[%s398 + $0xb8] sm:$0xff]
        %v6247 = vstv %s6242
        %v6248 = vmul.f32 %v6247, %v6243
        %v6249 = vmul.f32 %v6247, %v6244
        %v6250 = vmul.f32 %v6247, %v6245
        %v6251 = vmul.f32 %v6247, %v6246
        %v6252 = vadd.f32 %v6238, %v6248
        %v6253 = vadd.f32 %v6239, %v6249
        %v6254 = vadd.f32 %v6240, %v6250
        %v6255 = vadd.f32 %v6241, %v6251
        %s6256 = sld [smem:[#allocation13 + $0x406]]
        %v6257 = vld [vmem:[#allocation3 + $0xc0] sm:$0xff]
        %v6258 = vld [vmem:[#allocation3 + $0xc8] sm:$0xff]
        %v6259 = vld [vmem:[#allocation3 + $0xd0] sm:$0xff]
        %v6260 = vld [vmem:[#allocation3 + $0xd8] sm:$0xff]
        %v6261 = vstv %s6256
        %v6262 = vmul.f32 %v6261, %v6257
        %v6263 = vmul.f32 %v6261, %v6258
        %v6264 = vmul.f32 %v6261, %v6259
        %v6265 = vmul.f32 %v6261, %v6260
        %v6266 = vadd.f32 %v6252, %v6262
        %v6267 = vadd.f32 %v6253, %v6263
        %v6268 = vadd.f32 %v6254, %v6264
        %v6269 = vadd.f32 %v6255, %v6265
        %s6270 = sld [smem:[#allocation15 + $0x406]]
        %v6271 = vld [vmem:[%s398 + $0xc0] sm:$0xff]
        %v6272 = vld [vmem:[%s398 + $0xc8] sm:$0xff]
        %v6273 = vld [vmem:[%s398 + $0xd0] sm:$0xff]
        %v6274 = vld [vmem:[%s398 + $0xd8] sm:$0xff]
        %v6275 = vstv %s6270
        %v6276 = vmul.f32 %v6275, %v6271
        %v6277 = vmul.f32 %v6275, %v6272
        %v6278 = vmul.f32 %v6275, %v6273
        %v6279 = vmul.f32 %v6275, %v6274
        %v6280 = vadd.f32 %v6266, %v6276
        %v6281 = vadd.f32 %v6267, %v6277
        %v6282 = vadd.f32 %v6268, %v6278
        %v6283 = vadd.f32 %v6269, %v6279
        %s6284 = sld [smem:[#allocation13 + $0x407]]
        %v6285 = vld [vmem:[#allocation3 + $0xe0] sm:$0xff]
        %v6286 = vld [vmem:[#allocation3 + $0xe8] sm:$0xff]
        %v6287 = vld [vmem:[#allocation3 + $0xf0] sm:$0xff]
        %v6288 = vld [vmem:[#allocation3 + $0xf8] sm:$0xff]
        %v6289 = vstv %s6284
        %v6290 = vmul.f32 %v6289, %v6285
        %v6291 = vmul.f32 %v6289, %v6286
        %v6292 = vmul.f32 %v6289, %v6287
        %v6293 = vmul.f32 %v6289, %v6288
        %v6294 = vadd.f32 %v6280, %v6290
        %v6295 = vadd.f32 %v6281, %v6291
        %v6296 = vadd.f32 %v6282, %v6292
        %v6297 = vadd.f32 %v6283, %v6293
        %s6298 = sld [smem:[#allocation15 + $0x407]]
        %v6299 = vld [vmem:[%s398 + $0xe0] sm:$0xff]
        %v6300 = vld [vmem:[%s398 + $0xe8] sm:$0xff]
        %v6301 = vld [vmem:[%s398 + $0xf0] sm:$0xff]
        %v6302 = vld [vmem:[%s398 + $0xf8] sm:$0xff]
        %v6303 = vstv %s6298
        %v6304 = vmul.f32 %v6303, %v6299
        %v6305 = vmul.f32 %v6303, %v6300
        %v6306 = vmul.f32 %v6303, %v6301
        %v6307 = vmul.f32 %v6303, %v6302
        %v6308 = vadd.f32 %v6294, %v6304
        %v6309 = vadd.f32 %v6295, %v6305
        %v6310 = vadd.f32 %v6296, %v6306
        %v6311 = vadd.f32 %v6297, %v6307
        %s6312 = sld [smem:[#allocation13 + $0x408]]
        %v6313 = vld [vmem:[#allocation3 + $0x100] sm:$0xff]
        %v6314 = vld [vmem:[#allocation3 + $0x108] sm:$0xff]
        %v6315 = vld [vmem:[#allocation3 + $0x110] sm:$0xff]
        %v6316 = vld [vmem:[#allocation3 + $0x118] sm:$0xff]
        %v6317 = vstv %s6312
        %v6318 = vmul.f32 %v6317, %v6313
        %v6319 = vmul.f32 %v6317, %v6314
        %v6320 = vmul.f32 %v6317, %v6315
        %v6321 = vmul.f32 %v6317, %v6316
        %v6322 = vadd.f32 %v6308, %v6318
        %v6323 = vadd.f32 %v6309, %v6319
        %v6324 = vadd.f32 %v6310, %v6320
        %v6325 = vadd.f32 %v6311, %v6321
        %s6326 = sld [smem:[#allocation15 + $0x408]]
        %v6327 = vld [vmem:[%s398 + $0x100] sm:$0xff]
        %v6328 = vld [vmem:[%s398 + $0x108] sm:$0xff]
        %v6329 = vld [vmem:[%s398 + $0x110] sm:$0xff]
        %v6330 = vld [vmem:[%s398 + $0x118] sm:$0xff]
        %v6331 = vstv %s6326
        %v6332 = vmul.f32 %v6331, %v6327
        %v6333 = vmul.f32 %v6331, %v6328
        %v6334 = vmul.f32 %v6331, %v6329
        %v6335 = vmul.f32 %v6331, %v6330
        %v6336 = vadd.f32 %v6322, %v6332
        %v6337 = vadd.f32 %v6323, %v6333
        %v6338 = vadd.f32 %v6324, %v6334
        %v6339 = vadd.f32 %v6325, %v6335
        %s6340 = sld [smem:[#allocation16 + $0x8]]
        %v6341 = vstv %s6340
        %v6342 = vadd.f32 %v6336, %v6341
        %v6343 = vadd.f32 %v6337, %v6341
        %v6344 = vadd.f32 %v6338, %v6341
        %v6345 = vadd.f32 %v6339, %v6341
        %v6346 = vmax.f32 %v6342, 0.0
        %v6347 = vmax.f32 %v6343, 0.0
        %v6348 = vmax.f32 %v6344, 0.0
        %v6349 = vmax.f32 %v6345, 0.0
        %6350 = vst [vmem:[%s459 + $0x100] sm:$0xff] %v6346
        %6351 = vst [vmem:[%s459 + $0x108] sm:$0xff] %v6347
        %6352 = vst [vmem:[%s459 + $0x110] sm:$0xff] %v6348
        %6353 = vst [vmem:[%s459 + $0x118] sm:$0xff] %v6349
        %s6354 = sand.u32 %s255, 1
        %s6355 = scalar_lea.sflag [#allocation6], %s6354
        %s6356 = sand.u32 %s255, 1
        %s6357 = smul.addr %s6356, 288
        %s6358 = scalar_lea.vmem [#allocation18], %s6357
        // Predicated region
        $region89: #{ftb_forward.1} parent=59 // pred_check
          %p6359 = pneg %p265
        $region90: #{ftb_forward.1} parent=59 // pred_check_branch
          %6361 = sbr.rel (%p6359) target = $region92
        $region91: #{ftb_forward.1} parent=59 // pred_region
          %s6363 = ssub.s32 4608, 4608
          %6364 = vsyncadd %s6355, %s6363
          %s6365 = smul.addr %s32, 36
          %s6366 = smul.addr %s6365, 128
          %s6367 = scalar_lea.hbm %s10, %s6366
          %s6368 = sshll.u32 %s6358, 4
          %s6369 = int_to_ptr.vmem [resolvable:$true] %s6368
          %6374 = dma.vmem_to_hbm [thread:$0]  %s6369, 4608, %s6367, %s6355, 128, 128, 8
        $region92: #{ftb_forward.1} parent=59 // pred_fallthru
          _
      $region60: #{ftb_forward.1} parent=5 // pred_fallthru
        _
      %p6375 = scmp.le.s32.totalorder 2, %s27
      // Predicated region
      $region93: #{ftb_forward.1} parent=5 // pred_check
        %p6376 = pneg %p6375
      $region94: #{ftb_forward.1} parent=5 // pred_check_branch
        %6378 = sbr.rel (%p6376) target = $region96
      $region95: #{ftb_forward.1} parent=5 // pred_region
        %s6379 = ssub.s32 %s27, 2
        // Predicated region
        $region97: #{ftb_forward.1} parent=95 // pred_check
          %p6380 = pneg %p271
        $region98: #{ftb_forward.1} parent=95 // pred_check_branch
          %6382 = sbr.rel (%p6380) target = $region100
        $region99: #{ftb_forward.1} parent=95 // pred_region
          %s6383 = sand.u32 %s256, 1
          %s6384 = scalar_lea.sflag [#allocation6], %s6383
          %s6385 = sand.u32 %s256, 1
          %s6386 = smul.addr %s6385, 288
          %s6387 = scalar_lea.vmem [#allocation18], %s6386
          %6388 = dma.done %s6384, 4608
        $region100: #{ftb_forward.1} parent=95 // pred_fallthru
          _
      $region96: #{ftb_forward.1} parent=5 // pred_fallthru
        _
    $region6: #{ftb_forward.1} parent=1 // loop_footer
      %s31 = sadd.s32 1, %s27
    $region7: #{ftb_forward.1} parent=1 // loop_footer_branch
      %26 = sbr.rel target = $region3
    $region8: #{ftb_forward.1} parent=1 // loop_exit
      _
    %6389 = vsyncpa [#allocation5], 1
    %s6390 = scalar_lea.sflag [#allocation5], 1
    %6391 = vsyncpa %s6390, 1
    %6392 = vsyncpa [#allocation10], 1
    %6393 = vsyncpa [#allocation6], 1
    %s6394 = scalar_lea.sflag [#allocation6], 1
    %6395 = vsyncpa %s6394, 1
    %6396 = vsyncpa [#allocation7], 1
    %s6397 = scalar_lea.sflag [#allocation7], 1
    %6398 = vsyncpa %s6397, 1
    %6399 = vsyncpa [#allocation8], 1
    %s6400 = scalar_lea.sflag [#allocation8], 1
    %6401 = vsyncpa %s6400, 1
    %6402 = vsyncpa [#allocation14], 1
    %6403 = vsyncpa [#allocation17], 1

</llo_original>
